<compile_context>
chip_gen: v5e
topology: v5e:2x2
jax: 0.10.0
libtpu: 0.0.40
codegen_flags: <defaults>
</compile_context>

<pallas_src>
import functools
import numpy as np
import jax
import jax.numpy as jnp
from jax.experimental import pallas as pl
from jax.experimental.pallas import tpu as pltpu

# ----------------------------- small config ---------------------------------
CFG = dict(
    img_size=16, patch_size=4,
    embed_dim=32, num_layer=2, num_heads=4,
    dec_embed_dim=16, dec_num_layer=2, dec_num_heads=2,
    mlp_ratio=4.0,
)

# -------------------- sincos positional embedding (init-time) ---------------
def _sincos_1d(embed_dim, pos):
    omega = np.arange(embed_dim // 2, dtype=np.float32)
    omega /= embed_dim / 2.0
    omega = 1.0 / 10000 ** omega
    pos = pos.reshape(-1)
    out = np.einsum("m,d->md", pos, omega)
    return np.concatenate([np.sin(out), np.cos(out)], axis=1)


def get_2d_sincos_pos_embed(embed_dim, grid_size, cls_token=False):
    grid_h = np.arange(grid_size, dtype=np.float32)
    grid_w = np.arange(grid_size, dtype=np.float32)
    grid = np.meshgrid(grid_w, grid_h)
    grid = np.stack(grid, axis=0).reshape([2, 1, grid_size, grid_size])
    emb = np.concatenate(
        [_sincos_1d(embed_dim // 2, grid[0]), _sincos_1d(embed_dim // 2, grid[1])],
        axis=1,
    )
    if cls_token:
        emb = np.concatenate([np.zeros([1, embed_dim]), emb], axis=0)
    return emb.astype(np.float32)


# ------------------------------ Pallas helpers -------------------------------
_VMEM = pl.BlockSpec(memory_space=pltpu.MemorySpace.VMEM)

# stacked per-layer weight tensors, in the order kernels expect them
_STACK_ORDER = ("ln1g", "ln1b", "qkvw", "qkvb", "projw", "projb",
                "ln2g", "ln2b", "f1w", "f1b", "f2w", "f2b")


def _ln(x, g, b):
    """LayerNorm over the last dim.  g/b broadcast as (1, E)."""
    mu = jnp.mean(x, axis=-1, keepdims=True)
    xc = x - mu
    var = jnp.mean(xc * xc, axis=-1, keepdims=True)
    return xc * jax.lax.rsqrt(var + 1e-5) * g + b


def _gelu_tanh(x):
    # TODO(synk): exact-erf GELU would match nn.GELU() bit-for-bit; Mosaic erf
    # lowering is not guaranteed, so the (numerically very close) tanh form is
    # used in-kernel (runs on the otherwise-idle EUP slot).
    c = 0.7978845608028654  # sqrt(2/pi)
    return 0.5 * x * (1.0 + jnp.tanh(c * (x + 0.044715 * x * x * x)))


def _run_block(x2, layer, blk, *, batch, n_tok, num_heads):
    """One timm-style ViT block on a (B*Nk, E) VMEM-resident slab.

    blk = tuple of 12 stacked-weight Refs in _STACK_ORDER order.  Per-head
    q/k/v/proj weights are addressed via the leading Ref dim (free), so there
    are no non-128-aligned lane slices and no head concat.
    """
    (ln1g, ln1b, qkvw, qkvb, projw, projb,
     ln2g, ln2b, f1w, f1b, f2w, f2b) = blk
    bn, emb = x2.shape
    H = num_heads
    hd = emb // H
    scale = float(hd) ** -0.5
    Nk = n_tok

    # --- attention branch ---
    h2 = _ln(x2, ln1g[layer], ln1b[layer])
    attn_parts = [None] * batch
    for hh in range(H):
        base = layer * 3 * H
        wq = qkvw[base + hh];         bq = qkvb[base + hh]
        wk = qkvw[base + H + hh];     bk = qkvb[base + H + hh]
        wv = qkvw[base + 2 * H + hh]; bv = qkvb[base + 2 * H + hh]
        q2 = jnp.dot(h2, wq, preferred_element_type=jnp.float32) + bq   # (BN, hd)
        k2 = jnp.dot(h2, wk, preferred_element_type=jnp.float32) + bk
        v2 = jnp.dot(h2, wv, preferred_element_type=jnp.float32) + bv
        w_proj_h = projw[layer * H + hh]                                 # (hd, E)
        for b in range(batch):                    # static unroll over (b, head)
            qb = q2[b * Nk:(b + 1) * Nk]
            kb = k2[b * Nk:(b + 1) * Nk]
            vb = v2[b * Nk:(b + 1) * Nk]
            s = jax.lax.dot_general(
                qb, kb, (((1,), (1,)), ((), ())),
                preferred_element_type=jnp.float32) * scale
            s = s - jnp.max(s, axis=-1, keepdims=True)
            pexp = jnp.exp(s)
            pexp = pexp * pl.reciprocal(jnp.sum(pexp, axis=-1, keepdims=True),
                                        approx=True)
            ctx = jnp.dot(pexp, vb, preferred_element_type=jnp.float32)  # (Nk, hd)
            contrib = jnp.dot(ctx, w_proj_h,
                              preferred_element_type=jnp.float32)        # (Nk, E)
            attn_parts[b] = contrib if attn_parts[b] is None else attn_parts[b] + contrib
    attn2 = jnp.concatenate(attn_parts, axis=0)                          # (BN, E)
    x2 = x2 + attn2 + projb[layer]

    # --- MLP branch (fc1 -> GELU -> fc2) ---
    h2 = _ln(x2, ln2g[layer], ln2b[layer])
    h2 = jnp.dot(h2, f1w[layer], preferred_element_type=jnp.float32) + f1b[layer]
    h2 = _gelu_tanh(h2)
    h2 = jnp.dot(h2, f2w[layer], preferred_element_type=jnp.float32) + f2b[layer]
    return x2 + h2


# --------------------------- fused encoder kernel ----------------------------
def _encoder_kernel(patches_ref, pos_ref, cls_ref, pw_ref, pb_ref,
                    ln1g, ln1b, qkvw, qkvb, projw, projb, ln2g, ln2b,
                    f1w, f1b, f2w, f2b, ng, nb, dew, deb, o_ref,
                    *, batch, n_keep, num_heads, num_layers):
    Lk = n_keep
    Nk = Lk + 1
    blk = (ln1g, ln1b, qkvw, qkvb, projw, projb, ln2g, ln2b, f1w, f1b, f2w, f2b)

    # patch embed (Conv2d-as-matmul) + bias + positional embedding (kept tokens)
    tok2 = (jnp.dot(patches_ref[...], pw_ref[...],
                    preferred_element_type=jnp.float32)
            + pb_ref[...] + pos_ref[...])                  # (B*Lk, E)

    # prepend cls(+pos0) per batch element -> (B*Nk, E) slab
    rows = []
    for b in range(batch):
        rows.append(cls_ref[...])
        rows.append(tok2[b * Lk:(b + 1) * Lk])
    x2 = jnp.concatenate(rows, axis=0)

    for layer in range(num_layers):
        x2 = _run_block(x2, layer, blk, batch=batch, n_tok=Nk,
                        num_heads=num_heads)

    # encoder final LN fused with decoder embed linear
    h2 = _ln(x2, ng[...], nb[...])
    o_ref[...] = (jnp.dot(h2, dew[...], preferred_element_type=jnp.float32)
                  + deb[...])


def encoder_forward(enc, dec_embed_w, dec_embed_b, patches_keep, pos_keep,
                    cls_row, *, num_heads, num_layers):
    B, Lk, K = patches_keep.shape
    E = enc["patch_w"].shape[1]
    D = dec_embed_w.shape[1]
    Nk = Lk + 1
    stacked = [enc["blocks"][n] for n in _STACK_ORDER]
    args = [patches_keep.reshape(B * Lk, K), pos_keep.reshape(B * Lk, E),
            cls_row, enc["patch_w"], enc["patch_b"], *stacked,
            enc["norm_g"], enc["norm_b"], dec_embed_w, dec_embed_b]
    out = pl.pallas_call(
        functools.partial(_encoder_kernel, batch=B, n_keep=Lk,
                          num_heads=num_heads, num_layers=num_layers),
        out_shape=jax.ShapeDtypeStruct((B * Nk, D), jnp.float32),
        in_specs=[_VMEM] * len(args),
        out_specs=_VMEM,
    )(*args)
    return out.reshape(B, Nk, D)


# ---------------------- fused decoder (+ loss) kernel -------------------------
def _decoder_kernel(x_ref, ln1g, ln1b, qkvw, qkvb, projw, projb, ln2g, ln2b,
                    f1w, f1b, f2w, f2b, ng, nb, pw_ref, pb_ref, tgt_ref, msk_ref,
                    out_ref, loss_ref, *, batch, n_tok, num_heads, num_layers):
    blk = (ln1g, ln1b, qkvw, qkvb, projw, projb, ln2g, ln2b, f1w, f1b, f2w, f2b)
    x2 = x_ref[...]                                         # (B*(N+1), D)
    for layer in range(num_layers):
        x2 = _run_block(x2, layer, blk, batch=batch, n_tok=n_tok,
                        num_heads=num_heads)

    # decoder final LN fused with output projection
    h2 = _ln(x2, ng[...], nb[...])
    out2 = (jnp.dot(h2, pw_ref[...], preferred_element_type=jnp.float32)
            + pb_ref[...])                                  # (B*(N+1), P)
    out_ref[...] = out2

    # fused masked MSE (cls rows carry mask 0, so they contribute nothing)
    err = (out2 - tgt_ref[...]) ** 2
    per_patch = jnp.mean(err, axis=-1, keepdims=True)       # (B*(N+1), 1)
    m = msk_ref[...]
    num = jnp.sum(per_patch * m, keepdims=True)             # (1, 1)
    den = jnp.sum(m, keepdims=True)                         # (1, 1)
    loss_ref[...] = num / jnp.maximum(den, 1.0)


def decoder_forward(dec, xd_full, target, mask, *, num_heads, num_layers):
    B, Ntok, D = xd_full.shape                              # Ntok = N + 1
    P = dec["proj_w"].shape[1]
    stacked = [dec["blocks"][n] for n in _STACK_ORDER]
    # pad target/mask with a zero cls row so the kernel needs no row slicing
    target_full = jnp.concatenate(
        [jnp.zeros((B, 1, P), jnp.float32), target], axis=1)
    mask_full = jnp.concatenate(
        [jnp.zeros((B, 1), jnp.float32), mask], axis=1)
    args = [xd_full.reshape(B * Ntok, D), *stacked,
            dec["norm_g"], dec["norm_b"], dec["proj_w"], dec["proj_b"],
            target_full.reshape(B * Ntok, P), mask_full.reshape(B * Ntok, 1)]
    out2, loss = pl.pallas_call(
        functools.partial(_decoder_kernel, batch=B, n_tok=Ntok,
                          num_heads=num_heads, num_layers=num_layers),
        out_shape=(jax.ShapeDtypeStruct((B * Ntok, P), jnp.float32),
                   jax.ShapeDtypeStruct((1, 1), jnp.float32)),
        in_specs=[_VMEM] * len(args),
        out_specs=(_VMEM, _VMEM),
    )(*args)
    pred_patch = out2.reshape(B, Ntok, P)[:, 1:, :]
    return pred_patch, loss[0, 0]


# ------------------------------ init -----------------------------------------
def _xavier(key, fan_in, fan_out):
    bound = float(np.sqrt(6.0 / (fan_in + fan_out)))
    return jax.random.uniform(key, (fan_in, fan_out), jnp.float32, -bound, bound)


def _init_block(key, dim, mlp_ratio):
    hidden = int(dim * mlp_ratio)
    ks = jax.random.split(key, 4)
    return dict(
        norm1_g=jnp.ones((dim,), jnp.float32), norm1_b=jnp.zeros((dim,), jnp.float32),
        qkv_w=_xavier(ks[0], dim, 3 * dim), qkv_b=jnp.zeros((3 * dim,), jnp.float32),
        proj_w=_xavier(ks[1], dim, dim), proj_b=jnp.zeros((dim,), jnp.float32),
        norm2_g=jnp.ones((dim,), jnp.float32), norm2_b=jnp.zeros((dim,), jnp.float32),
        fc1_w=_xavier(ks[2], dim, hidden), fc1_b=jnp.zeros((hidden,), jnp.float32),
        fc2_w=_xavier(ks[3], hidden, dim), fc2_b=jnp.zeros((dim,), jnp.float32),
    )


def _stack_blocks(blocks, num_heads):
    """Stack per-layer weights with the qkv/proj matrices pre-split per head."""
    L = len(blocks)
    E = blocks[0]["qkv_w"].shape[0]
    hidden = blocks[0]["fc1_w"].shape[1]
    H = num_heads
    hd = E // H
    st = lambda name: jnp.stack([blk[name] for blk in blocks], axis=0)
    # columns of qkv_w are ordered (q|k|v) x head x head_dim
    qkv_w = (st("qkv_w").reshape(L, E, 3, H, hd)
             .transpose(0, 2, 3, 1, 4).reshape(L * 3 * H, E, hd))
    qkv_b = st("qkv_b").reshape(L, 3, H, hd).reshape(L * 3 * H, 1, hd)
    proj_w = st("proj_w").reshape(L * H, hd, E)           # rows grouped per head
    return dict(
        ln1g=st("norm1_g").reshape(L, 1, E), ln1b=st("norm1_b").reshape(L, 1, E),
        qkvw=qkv_w, qkvb=qkv_b,
        projw=proj_w, projb=st("proj_b").reshape(L, 1, E),
        ln2g=st("norm2_g").reshape(L, 1, E), ln2b=st("norm2_b").reshape(L, 1, E),
        f1w=st("fc1_w"), f1b=st("fc1_b").reshape(L, 1, hidden),
        f2w=st("fc2_w"), f2b=st("fc2_b").reshape(L, 1, E),
    )


def init_params(key, cfg):
    p, img = cfg["patch_size"], cfg["img_size"]
    E, D = cfg["embed_dim"], cfg["dec_embed_dim"]
    P = p * p * 3
    gh = img // p
    k_enc, k_dec = jax.random.split(key)
    ke = jax.random.split(k_enc, 2 + cfg["num_layer"])
    kd = jax.random.split(k_dec, 3 + cfg["dec_num_layer"])
    enc_blocks = [_init_block(ke[2 + i], E, cfg["mlp_ratio"])
                  for i in range(cfg["num_layer"])]
    dec_blocks = [_init_block(kd[3 + i], D, cfg["mlp_ratio"])
                  for i in range(cfg["dec_num_layer"])]
    enc = dict(
        # Conv2d(3, E, k=p, s=p) weight, xavier on its (E, 3*p*p) view, stored
        # transposed as (3*p*p, E) for the patch-embed matmul.
        patch_w=_xavier(ke[0], 3 * p * p, E),
        patch_b=jnp.zeros((1, E), jnp.float32),
        cls_token=0.02 * jax.random.normal(ke[1], (1, 1, E), jnp.float32),
        pos_embed=jnp.asarray(get_2d_sincos_pos_embed(E, gh, cls_token=True))[None],
        norm_g=jnp.ones((1, E), jnp.float32), norm_b=jnp.zeros((1, E), jnp.float32),
        blocks=_stack_blocks(enc_blocks, cfg["num_heads"]),
    )
    dec = dict(
        embed_w=_xavier(kd[0], E, D), embed_b=jnp.zeros((1, D), jnp.float32),
        mask_token=0.02 * jax.random.normal(kd[1], (1, 1, D), jnp.float32),
        pos_embed=jnp.asarray(get_2d_sincos_pos_embed(D, gh, cls_token=True))[None],
        norm_g=jnp.ones((1, D), jnp.float32), norm_b=jnp.zeros((1, D), jnp.float32),
        proj_w=_xavier(kd[2], D, P), proj_b=jnp.zeros((1, P), jnp.float32),
        blocks=_stack_blocks(dec_blocks, cfg["dec_num_heads"]),
    )
    return dict(enc=enc, dec=dec)


# ------------------------------- MAE forward ---------------------------------
def mae_forward(params, x, mask_key, *, cfg, mask_ratio=0.75):
    p, img = cfg["patch_size"], cfg["img_size"]
    E, D = cfg["embed_dim"], cfg["dec_embed_dim"]
    gh = img // p
    N = gh * gh
    P = p * p * 3
    B = x.shape[0]
    enc, dec = params["enc"], params["dec"]

    # conv-as-matmul patch extraction, (c, p1, p2) fastest (matches Conv2d weight.view)
    patches = (
        x.reshape(B, 3, gh, p, gh, p)
        .transpose(0, 2, 4, 1, 3, 5)
        .reshape(B, N, 3 * p * p)
    )

    # ---- random masking (RNG/argsort/gather are plain-JAX glue) ----
    len_keep = int(N * (1.0 - mask_ratio))
    noise = jax.random.uniform(mask_key, (B, N))
    ids_shuffle = jnp.argsort(noise, axis=1)
    ids_restore = jnp.argsort(ids_shuffle, axis=1)
    ids_keep = ids_shuffle[:, :len_keep]
    # masking commutes with the per-token patch embed, so gather BEFORE the kernel
    patches_keep = jnp.take_along_axis(patches, ids_keep[:, :, None], axis=1)
    mask = jnp.ones((B, N), jnp.float32).at[:, :len_keep].set(0.0)
    mask = jnp.take_along_axis(mask, ids_restore, axis=1)

    pos_patch = enc["pos_embed"][0, 1:, :]                         # (N, E)
    pos_keep = jnp.take(pos_patch, ids_keep, axis=0)               # (B, Lk, E)
    cls_row = (enc["cls_token"][0, 0, :] + enc["pos_embed"][0, 0, :]).reshape(1, E)

    # ---- ONE pallas_call: patch embed + encoder blocks + LN + decoder embed ----
    xd_vis = encoder_forward(enc, dec["embed_w"], dec["embed_b"],
                             patches_keep, pos_keep, cls_row,
                             num_heads=cfg["num_heads"],
                             num_layers=cfg["num_layer"])          # (B, 1+Lk, D)

    # ---- decoder glue: append mask tokens, unshuffle, prepend cls, add pos ----
    Nk = xd_vis.shape[1]
    n_mask = N + 1 - Nk
    mask_tokens = jnp.broadcast_to(dec["mask_token"], (B, n_mask, D))
    x_ = jnp.concatenate([xd_vis[:, 1:, :], mask_tokens], axis=1)
    x_ = jnp.take_along_axis(x_, ids_restore[:, :, None], axis=1)
    xd_full = jnp.concatenate([xd_vis[:, :1, :], x_], axis=1) + dec["pos_embed"]

    # patchify target: 'b c ph p1 pw p2 -> b (ph pw) (p1 p2 c)'
    target = (
        x.reshape(B, 3, gh, p, gh, p)
        .transpose(0, 2, 4, 3, 5, 1)
        .reshape(B, N, P)
    )

    # ---- ONE pallas_call: decoder blocks + LN + output proj + masked MSE ----
    pred_patch, loss = decoder_forward(dec, xd_full, target, mask,
                                       num_heads=cfg["dec_num_heads"],
                                       num_layers=cfg["dec_num_layer"])

    # unpatchify prediction: 'b ph pw p1 p2 c -> b c (ph p1) (pw p2)'
    pred_img = (
        pred_patch.reshape(B, gh, gh, p, p, 3)
        .transpose(0, 5, 1, 3, 2, 4)
        .reshape(B, 3, img, img)
    )
    return loss, x, pred_img


# ---------------------------------- main -------------------------------------
if __name__ == "__main__":
    key = jax.random.PRNGKey(0)
    k_params, k_x, k_mask = jax.random.split(key, 3)
    params = init_params(k_params, CFG)
    x = jax.random.normal(k_x, (2, 3, CFG["img_size"], CFG["img_size"]), jnp.float32)

    fwd = jax.jit(functools.partial(mae_forward, cfg=CFG, mask_ratio=0.75))
    loss, origin_img, pred_img = fwd(params, x, k_mask)
    jax.block_until_ready((loss, origin_img, pred_img))

    assert origin_img.shape == x.shape
    assert pred_img.shape == x.shape
    assert bool(jnp.isfinite(loss))
    print("KERNEL_OK")
</pallas_src>

<mosaic_0001>
module attributes {stable_mosaic.version = 11 : i64} {
  func.func @_encoder_kernel(%arg0: memref<8x48xf32, #tpu.memory_space<vmem>>, %arg1: memref<8x32xf32, #tpu.memory_space<vmem>>, %arg2: memref<1x32xf32, #tpu.memory_space<vmem>>, %arg3: memref<48x32xf32, #tpu.memory_space<vmem>>, %arg4: memref<1x32xf32, #tpu.memory_space<vmem>>, %arg5: memref<2x1x32xf32, #tpu.memory_space<vmem>>, %arg6: memref<2x1x32xf32, #tpu.memory_space<vmem>>, %arg7: memref<24x32x8xf32, #tpu.memory_space<vmem>>, %arg8: memref<24x1x8xf32, #tpu.memory_space<vmem>>, %arg9: memref<8x8x32xf32, #tpu.memory_space<vmem>>, %arg10: memref<2x1x32xf32, #tpu.memory_space<vmem>>, %arg11: memref<2x1x32xf32, #tpu.memory_space<vmem>>, %arg12: memref<2x1x32xf32, #tpu.memory_space<vmem>>, %arg13: memref<2x32x128xf32, #tpu.memory_space<vmem>>, %arg14: memref<2x1x128xf32, #tpu.memory_space<vmem>>, %arg15: memref<2x128x32xf32, #tpu.memory_space<vmem>>, %arg16: memref<2x1x32xf32, #tpu.memory_space<vmem>>, %arg17: memref<1x32xf32, #tpu.memory_space<vmem>>, %arg18: memref<1x32xf32, #tpu.memory_space<vmem>>, %arg19: memref<32x16xf32, #tpu.memory_space<vmem>>, %arg20: memref<1x16xf32, #tpu.memory_space<vmem>>, %arg21: memref<10x16xf32, #tpu.memory_space<vmem>>) attributes {dimension_semantics = [], scalar_prefetch = 0 : i64, scratch_operands = 0 : i64, tpu.core_type = #tpu.core_type<tc>} {
    %c0 = arith.constant 0 : index
    %c0_0 = arith.constant 0 : index
    %0 = vector.load %arg0[%c0, %c0_0] : memref<8x48xf32, #tpu.memory_space<vmem>>, vector<8x48xf32>
    %c0_1 = arith.constant 0 : index
    %c0_2 = arith.constant 0 : index
    %1 = vector.load %arg3[%c0_1, %c0_2] : memref<48x32xf32, #tpu.memory_space<vmem>>, vector<48x32xf32>
    %cst = arith.constant dense<0.000000e+00> : vector<8x32xf32>
    %2 = tpu.matmul %0, %1, %cst {dimension_numbers = #tpu.dot_dimension_numbers<[1], [0], [0], [1], [0, 0, 1, 1], [], []>} : vector<8x48xf32>, vector<48x32xf32>, vector<8x32xf32> -> vector<8x32xf32>
    %c0_3 = arith.constant 0 : index
    %c0_4 = arith.constant 0 : index
    %3 = vector.load %arg4[%c0_3, %c0_4] : memref<1x32xf32, #tpu.memory_space<vmem>>, vector<1x32xf32>
    %4 = vector.broadcast %3 : vector<1x32xf32> to vector<8x32xf32>
    %5 = arith.addf %2, %4 : vector<8x32xf32>
    %c0_5 = arith.constant 0 : index
    %c0_6 = arith.constant 0 : index
    %6 = vector.load %arg1[%c0_5, %c0_6] : memref<8x32xf32, #tpu.memory_space<vmem>>, vector<8x32xf32>
    %7 = arith.addf %5, %6 : vector<8x32xf32>
    %c0_7 = arith.constant 0 : index
    %c0_8 = arith.constant 0 : index
    %8 = vector.load %arg2[%c0_7, %c0_8] : memref<1x32xf32, #tpu.memory_space<vmem>>, vector<1x32xf32>
    %9 = vector.extract_strided_slice %7 {offsets = [0, 0], sizes = [4, 32], strides = [1, 1]} : vector<8x32xf32> to vector<4x32xf32>
    %c0_9 = arith.constant 0 : index
    %c0_10 = arith.constant 0 : index
    %10 = vector.load %arg2[%c0_9, %c0_10] : memref<1x32xf32, #tpu.memory_space<vmem>>, vector<1x32xf32>
    %11 = vector.extract_strided_slice %7 {offsets = [4, 0], sizes = [4, 32], strides = [1, 1]} : vector<8x32xf32> to vector<4x32xf32>
    %12 = tpu.concatenate %8, %9, %10, %11 in 0 : vector<1x32xf32>, vector<4x32xf32>, vector<1x32xf32>, vector<4x32xf32> -> vector<10x32xf32>
    %c0_11 = arith.constant 0 : index
    %c0_12 = arith.constant 0 : index
    %c0_13 = arith.constant 0 : index
    %13 = vector.load %arg5[%c0_11, %c0_12, %c0_13] : memref<2x1x32xf32, #tpu.memory_space<vmem>>, vector<1x1x32xf32>
    %14 = vector.shape_cast %13 : vector<1x1x32xf32> to vector<1x32xf32>
    %c0_14 = arith.constant 0 : index
    %c0_15 = arith.constant 0 : index
    %c0_16 = arith.constant 0 : index
    %15 = vector.load %arg6[%c0_14, %c0_15, %c0_16] : memref<2x1x32xf32, #tpu.memory_space<vmem>>, vector<1x1x32xf32>
    %16 = vector.shape_cast %15 : vector<1x1x32xf32> to vector<1x32xf32>
    %cst_17 = arith.constant dense<0.000000e+00> : vector<10xf32>
    %17 = vector.multi_reduction <add>, %12, %cst_17 [1] : vector<10x32xf32> to vector<10xf32>
    %18 = vector.shape_cast %17 : vector<10xf32> to vector<10x1xf32>
    %cst_18 = arith.constant 3.200000e+01 : f32
    %19 = vector.broadcast %cst_18 : f32 to vector<10x1xf32>
    %20 = arith.divf %18, %19 : vector<10x1xf32>
    %21 = vector.broadcast %20 : vector<10x1xf32> to vector<10x32xf32>
    %22 = arith.subf %12, %21 : vector<10x32xf32>
    %23 = arith.mulf %22, %22 : vector<10x32xf32>
    %cst_19 = arith.constant dense<0.000000e+00> : vector<10xf32>
    %24 = vector.multi_reduction <add>, %23, %cst_19 [1] : vector<10x32xf32> to vector<10xf32>
    %25 = vector.shape_cast %24 : vector<10xf32> to vector<10x1xf32>
    %cst_20 = arith.constant 3.200000e+01 : f32
    %26 = vector.broadcast %cst_20 : f32 to vector<10x1xf32>
    %27 = arith.divf %25, %26 : vector<10x1xf32>
    %cst_21 = arith.constant 9.99999974E-6 : f32
    %28 = vector.broadcast %cst_21 : f32 to vector<10x1xf32>
    %29 = arith.addf %27, %28 : vector<10x1xf32>
    %30 = math.rsqrt %29 : vector<10x1xf32>
    %31 = vector.broadcast %30 : vector<10x1xf32> to vector<10x32xf32>
    %32 = arith.mulf %22, %31 : vector<10x32xf32>
    %33 = vector.broadcast %14 : vector<1x32xf32> to vector<10x32xf32>
    %34 = arith.mulf %32, %33 : vector<10x32xf32>
    %35 = vector.broadcast %16 : vector<1x32xf32> to vector<10x32xf32>
    %36 = arith.addf %34, %35 : vector<10x32xf32>
    %c0_22 = arith.constant 0 : index
    %c0_23 = arith.constant 0 : index
    %c0_24 = arith.constant 0 : index
    %37 = vector.load %arg7[%c0_22, %c0_23, %c0_24] : memref<24x32x8xf32, #tpu.memory_space<vmem>>, vector<1x32x8xf32>
    %38 = vector.shape_cast %37 : vector<1x32x8xf32> to vector<32x8xf32>
    %c0_25 = arith.constant 0 : index
    %c0_26 = arith.constant 0 : index
    %c0_27 = arith.constant 0 : index
    %39 = vector.load %arg8[%c0_25, %c0_26, %c0_27] : memref<24x1x8xf32, #tpu.memory_space<vmem>>, vector<1x1x8xf32>
    %40 = vector.shape_cast %39 : vector<1x1x8xf32> to vector<1x8xf32>
    %c4 = arith.constant 4 : index
    %c0_28 = arith.constant 0 : index
    %c0_29 = arith.constant 0 : index
    %41 = vector.load %arg7[%c4, %c0_28, %c0_29] : memref<24x32x8xf32, #tpu.memory_space<vmem>>, vector<1x32x8xf32>
    %42 = vector.shape_cast %41 : vector<1x32x8xf32> to vector<32x8xf32>
    %c4_30 = arith.constant 4 : index
    %c0_31 = arith.constant 0 : index
    %c0_32 = arith.constant 0 : index
    %43 = vector.load %arg8[%c4_30, %c0_31, %c0_32] : memref<24x1x8xf32, #tpu.memory_space<vmem>>, vector<1x1x8xf32>
    %44 = vector.shape_cast %43 : vector<1x1x8xf32> to vector<1x8xf32>
    %c8 = arith.constant 8 : index
    %c0_33 = arith.constant 0 : index
    %c0_34 = arith.constant 0 : index
    %45 = vector.load %arg7[%c8, %c0_33, %c0_34] : memref<24x32x8xf32, #tpu.memory_space<vmem>>, vector<1x32x8xf32>
    %46 = vector.shape_cast %45 : vector<1x32x8xf32> to vector<32x8xf32>
    %c8_35 = arith.constant 8 : index
    %c0_36 = arith.constant 0 : index
    %c0_37 = arith.constant 0 : index
    %47 = vector.load %arg8[%c8_35, %c0_36, %c0_37] : memref<24x1x8xf32, #tpu.memory_space<vmem>>, vector<1x1x8xf32>
    %48 = vector.shape_cast %47 : vector<1x1x8xf32> to vector<1x8xf32>
    %cst_38 = arith.constant dense<0.000000e+00> : vector<10x8xf32>
    %49 = tpu.matmul %36, %38, %cst_38 {dimension_numbers = #tpu.dot_dimension_numbers<[1], [0], [0], [1], [0, 0, 1, 1], [], []>} : vector<10x32xf32>, vector<32x8xf32>, vector<10x8xf32> -> vector<10x8xf32>
    %50 = vector.broadcast %40 : vector<1x8xf32> to vector<10x8xf32>
    %51 = arith.addf %49, %50 : vector<10x8xf32>
    %cst_39 = arith.constant dense<0.000000e+00> : vector<10x8xf32>
    %52 = tpu.matmul %36, %42, %cst_39 {dimension_numbers = #tpu.dot_dimension_numbers<[1], [0], [0], [1], [0, 0, 1, 1], [], []>} : vector<10x32xf32>, vector<32x8xf32>, vector<10x8xf32> -> vector<10x8xf32>
    %53 = vector.broadcast %44 : vector<1x8xf32> to vector<10x8xf32>
    %54 = arith.addf %52, %53 : vector<10x8xf32>
    %cst_40 = arith.constant dense<0.000000e+00> : vector<10x8xf32>
    %55 = tpu.matmul %36, %46, %cst_40 {dimension_numbers = #tpu.dot_dimension_numbers<[1], [0], [0], [1], [0, 0, 1, 1], [], []>} : vector<10x32xf32>, vector<32x8xf32>, vector<10x8xf32> -> vector<10x8xf32>
    %56 = vector.broadcast %48 : vector<1x8xf32> to vector<10x8xf32>
    %57 = arith.addf %55, %56 : vector<10x8xf32>
    %c0_41 = arith.constant 0 : index
    %c0_42 = arith.constant 0 : index
    %c0_43 = arith.constant 0 : index
    %58 = vector.load %arg9[%c0_41, %c0_42, %c0_43] : memref<8x8x32xf32, #tpu.memory_space<vmem>>, vector<1x8x32xf32>
    %59 = vector.shape_cast %58 : vector<1x8x32xf32> to vector<8x32xf32>
    %60 = vector.extract_strided_slice %51 {offsets = [0, 0], sizes = [5, 8], strides = [1, 1]} : vector<10x8xf32> to vector<5x8xf32>
    %61 = vector.extract_strided_slice %54 {offsets = [0, 0], sizes = [5, 8], strides = [1, 1]} : vector<10x8xf32> to vector<5x8xf32>
    %62 = vector.extract_strided_slice %57 {offsets = [0, 0], sizes = [5, 8], strides = [1, 1]} : vector<10x8xf32> to vector<5x8xf32>
    %cst_44 = arith.constant dense<0.000000e+00> : vector<5x5xf32>
    %63 = tpu.matmul %60, %61, %cst_44 {dimension_numbers = #tpu.dot_dimension_numbers<[1], [1], [0], [0], [0, 0, 1, 0], [], []>} : vector<5x8xf32>, vector<5x8xf32>, vector<5x5xf32> -> vector<5x5xf32>
    %cst_45 = arith.constant 0.353553385 : f32
    %64 = vector.broadcast %cst_45 : f32 to vector<5x5xf32>
    %65 = arith.mulf %63, %64 : vector<5x5xf32>
    %cst_46 = arith.constant dense<0xFF800000> : vector<5xf32>
    %66 = vector.multi_reduction <maximumf>, %65, %cst_46 [1] : vector<5x5xf32> to vector<5xf32>
    %67 = vector.shape_cast %66 : vector<5xf32> to vector<5x1xf32>
    %68 = vector.broadcast %67 : vector<5x1xf32> to vector<5x5xf32>
    %69 = arith.subf %65, %68 : vector<5x5xf32>
    %70 = math.exp %69 : vector<5x5xf32>
    %cst_47 = arith.constant dense<0.000000e+00> : vector<5xf32>
    %71 = vector.multi_reduction <add>, %70, %cst_47 [1] : vector<5x5xf32> to vector<5xf32>
    %72 = vector.shape_cast %71 : vector<5xf32> to vector<5x1xf32>
    %73 = tpu.reciprocal %72 {approx = true} : vector<5x1xf32> -> vector<5x1xf32>
    %74 = vector.broadcast %73 : vector<5x1xf32> to vector<5x5xf32>
    %75 = arith.mulf %70, %74 : vector<5x5xf32>
    %cst_48 = arith.constant dense<0.000000e+00> : vector<5x8xf32>
    %76 = tpu.matmul %75, %62, %cst_48 {dimension_numbers = #tpu.dot_dimension_numbers<[1], [0], [0], [1], [0, 0, 1, 1], [], []>} : vector<5x5xf32>, vector<5x8xf32>, vector<5x8xf32> -> vector<5x8xf32>
    %cst_49 = arith.constant dense<0.000000e+00> : vector<5x32xf32>
    %77 = tpu.matmul %76, %59, %cst_49 {dimension_numbers = #tpu.dot_dimension_numbers<[1], [0], [0], [1], [0, 0, 1, 1], [], []>} : vector<5x8xf32>, vector<8x32xf32>, vector<5x32xf32> -> vector<5x32xf32>
    %78 = vector.extract_strided_slice %51 {offsets = [5, 0], sizes = [5, 8], strides = [1, 1]} : vector<10x8xf32> to vector<5x8xf32>
    %79 = vector.extract_strided_slice %54 {offsets = [5, 0], sizes = [5, 8], strides = [1, 1]} : vector<10x8xf32> to vector<5x8xf32>
    %80 = vector.extract_strided_slice %57 {offsets = [5, 0], sizes = [5, 8], strides = [1, 1]} : vector<10x8xf32> to vector<5x8xf32>
    %cst_50 = arith.constant dense<0.000000e+00> : vector<5x5xf32>
    %81 = tpu.matmul %78, %79, %cst_50 {dimension_numbers = #tpu.dot_dimension_numbers<[1], [1], [0], [0], [0, 0, 1, 0], [], []>} : vector<5x8xf32>, vector<5x8xf32>, vector<5x5xf32> -> vector<5x5xf32>
    %cst_51 = arith.constant 0.353553385 : f32
    %82 = vector.broadcast %cst_51 : f32 to vector<5x5xf32>
    %83 = arith.mulf %81, %82 : vector<5x5xf32>
    %cst_52 = arith.constant dense<0xFF800000> : vector<5xf32>
    %84 = vector.multi_reduction <maximumf>, %83, %cst_52 [1] : vector<5x5xf32> to vector<5xf32>
    %85 = vector.shape_cast %84 : vector<5xf32> to vector<5x1xf32>
    %86 = vector.broadcast %85 : vector<5x1xf32> to vector<5x5xf32>
    %87 = arith.subf %83, %86 : vector<5x5xf32>
    %88 = math.exp %87 : vector<5x5xf32>
    %cst_53 = arith.constant dense<0.000000e+00> : vector<5xf32>
    %89 = vector.multi_reduction <add>, %88, %cst_53 [1] : vector<5x5xf32> to vector<5xf32>
    %90 = vector.shape_cast %89 : vector<5xf32> to vector<5x1xf32>
    %91 = tpu.reciprocal %90 {approx = true} : vector<5x1xf32> -> vector<5x1xf32>
    %92 = vector.broadcast %91 : vector<5x1xf32> to vector<5x5xf32>
    %93 = arith.mulf %88, %92 : vector<5x5xf32>
    %cst_54 = arith.constant dense<0.000000e+00> : vector<5x8xf32>
    %94 = tpu.matmul %93, %80, %cst_54 {dimension_numbers = #tpu.dot_dimension_numbers<[1], [0], [0], [1], [0, 0, 1, 1], [], []>} : vector<5x5xf32>, vector<5x8xf32>, vector<5x8xf32> -> vector<5x8xf32>
    %cst_55 = arith.constant dense<0.000000e+00> : vector<5x32xf32>
    %95 = tpu.matmul %94, %59, %cst_55 {dimension_numbers = #tpu.dot_dimension_numbers<[1], [0], [0], [1], [0, 0, 1, 1], [], []>} : vector<5x8xf32>, vector<8x32xf32>, vector<5x32xf32> -> vector<5x32xf32>
    %c1 = arith.constant 1 : index
    %c0_56 = arith.constant 0 : index
    %c0_57 = arith.constant 0 : index
    %96 = vector.load %arg7[%c1, %c0_56, %c0_57] : memref<24x32x8xf32, #tpu.memory_space<vmem>>, vector<1x32x8xf32>
    %97 = vector.shape_cast %96 : vector<1x32x8xf32> to vector<32x8xf32>
    %c1_58 = arith.constant 1 : index
    %c0_59 = arith.constant 0 : index
    %c0_60 = arith.constant 0 : index
    %98 = vector.load %arg8[%c1_58, %c0_59, %c0_60] : memref<24x1x8xf32, #tpu.memory_space<vmem>>, vector<1x1x8xf32>
    %99 = vector.shape_cast %98 : vector<1x1x8xf32> to vector<1x8xf32>
    %c5 = arith.constant 5 : index
    %c0_61 = arith.constant 0 : index
    %c0_62 = arith.constant 0 : index
    %100 = vector.load %arg7[%c5, %c0_61, %c0_62] : memref<24x32x8xf32, #tpu.memory_space<vmem>>, vector<1x32x8xf32>
    %101 = vector.shape_cast %100 : vector<1x32x8xf32> to vector<32x8xf32>
    %c5_63 = arith.constant 5 : index
    %c0_64 = arith.constant 0 : index
    %c0_65 = arith.constant 0 : index
    %102 = vector.load %arg8[%c5_63, %c0_64, %c0_65] : memref<24x1x8xf32, #tpu.memory_space<vmem>>, vector<1x1x8xf32>
    %103 = vector.shape_cast %102 : vector<1x1x8xf32> to vector<1x8xf32>
    %c9 = arith.constant 9 : index
    %c0_66 = arith.constant 0 : index
    %c0_67 = arith.constant 0 : index
    %104 = vector.load %arg7[%c9, %c0_66, %c0_67] : memref<24x32x8xf32, #tpu.memory_space<vmem>>, vector<1x32x8xf32>
    %105 = vector.shape_cast %104 : vector<1x32x8xf32> to vector<32x8xf32>
    %c9_68 = arith.constant 9 : index
    %c0_69 = arith.constant 0 : index
    %c0_70 = arith.constant 0 : index
    %106 = vector.load %arg8[%c9_68, %c0_69, %c0_70] : memref<24x1x8xf32, #tpu.memory_space<vmem>>, vector<1x1x8xf32>
    %107 = vector.shape_cast %106 : vector<1x1x8xf32> to vector<1x8xf32>
    %cst_71 = arith.constant dense<0.000000e+00> : vector<10x8xf32>
    %108 = tpu.matmul %36, %97, %cst_71 {dimension_numbers = #tpu.dot_dimension_numbers<[1], [0], [0], [1], [0, 0, 1, 1], [], []>} : vector<10x32xf32>, vector<32x8xf32>, vector<10x8xf32> -> vector<10x8xf32>
    %109 = vector.broadcast %99 : vector<1x8xf32> to vector<10x8xf32>
    %110 = arith.addf %108, %109 : vector<10x8xf32>
    %cst_72 = arith.constant dense<0.000000e+00> : vector<10x8xf32>
    %111 = tpu.matmul %36, %101, %cst_72 {dimension_numbers = #tpu.dot_dimension_numbers<[1], [0], [0], [1], [0, 0, 1, 1], [], []>} : vector<10x32xf32>, vector<32x8xf32>, vector<10x8xf32> -> vector<10x8xf32>
    %112 = vector.broadcast %103 : vector<1x8xf32> to vector<10x8xf32>
    %113 = arith.addf %111, %112 : vector<10x8xf32>
    %cst_73 = arith.constant dense<0.000000e+00> : vector<10x8xf32>
    %114 = tpu.matmul %36, %105, %cst_73 {dimension_numbers = #tpu.dot_dimension_numbers<[1], [0], [0], [1], [0, 0, 1, 1], [], []>} : vector<10x32xf32>, vector<32x8xf32>, vector<10x8xf32> -> vector<10x8xf32>
    %115 = vector.broadcast %107 : vector<1x8xf32> to vector<10x8xf32>
    %116 = arith.addf %114, %115 : vector<10x8xf32>
    %c1_74 = arith.constant 1 : index
    %c0_75 = arith.constant 0 : index
    %c0_76 = arith.constant 0 : index
    %117 = vector.load %arg9[%c1_74, %c0_75, %c0_76] : memref<8x8x32xf32, #tpu.memory_space<vmem>>, vector<1x8x32xf32>
    %118 = vector.shape_cast %117 : vector<1x8x32xf32> to vector<8x32xf32>
    %119 = vector.extract_strided_slice %110 {offsets = [0, 0], sizes = [5, 8], strides = [1, 1]} : vector<10x8xf32> to vector<5x8xf32>
    %120 = vector.extract_strided_slice %113 {offsets = [0, 0], sizes = [5, 8], strides = [1, 1]} : vector<10x8xf32> to vector<5x8xf32>
    %121 = vector.extract_strided_slice %116 {offsets = [0, 0], sizes = [5, 8], strides = [1, 1]} : vector<10x8xf32> to vector<5x8xf32>
    %cst_77 = arith.constant dense<0.000000e+00> : vector<5x5xf32>
    %122 = tpu.matmul %119, %120, %cst_77 {dimension_numbers = #tpu.dot_dimension_numbers<[1], [1], [0], [0], [0, 0, 1, 0], [], []>} : vector<5x8xf32>, vector<5x8xf32>, vector<5x5xf32> -> vector<5x5xf32>
    %cst_78 = arith.constant 0.353553385 : f32
    %123 = vector.broadcast %cst_78 : f32 to vector<5x5xf32>
    %124 = arith.mulf %122, %123 : vector<5x5xf32>
    %cst_79 = arith.constant dense<0xFF800000> : vector<5xf32>
    %125 = vector.multi_reduction <maximumf>, %124, %cst_79 [1] : vector<5x5xf32> to vector<5xf32>
    %126 = vector.shape_cast %125 : vector<5xf32> to vector<5x1xf32>
    %127 = vector.broadcast %126 : vector<5x1xf32> to vector<5x5xf32>
    %128 = arith.subf %124, %127 : vector<5x5xf32>
    %129 = math.exp %128 : vector<5x5xf32>
    %cst_80 = arith.constant dense<0.000000e+00> : vector<5xf32>
    %130 = vector.multi_reduction <add>, %129, %cst_80 [1] : vector<5x5xf32> to vector<5xf32>
    %131 = vector.shape_cast %130 : vector<5xf32> to vector<5x1xf32>
    %132 = tpu.reciprocal %131 {approx = true} : vector<5x1xf32> -> vector<5x1xf32>
    %133 = vector.broadcast %132 : vector<5x1xf32> to vector<5x5xf32>
    %134 = arith.mulf %129, %133 : vector<5x5xf32>
    %cst_81 = arith.constant dense<0.000000e+00> : vector<5x8xf32>
    %135 = tpu.matmul %134, %121, %cst_81 {dimension_numbers = #tpu.dot_dimension_numbers<[1], [0], [0], [1], [0, 0, 1, 1], [], []>} : vector<5x5xf32>, vector<5x8xf32>, vector<5x8xf32> -> vector<5x8xf32>
    %cst_82 = arith.constant dense<0.000000e+00> : vector<5x32xf32>
    %136 = tpu.matmul %135, %118, %cst_82 {dimension_numbers = #tpu.dot_dimension_numbers<[1], [0], [0], [1], [0, 0, 1, 1], [], []>} : vector<5x8xf32>, vector<8x32xf32>, vector<5x32xf32> -> vector<5x32xf32>
    %137 = arith.addf %77, %136 : vector<5x32xf32>
    %138 = vector.extract_strided_slice %110 {offsets = [5, 0], sizes = [5, 8], strides = [1, 1]} : vector<10x8xf32> to vector<5x8xf32>
    %139 = vector.extract_strided_slice %113 {offsets = [5, 0], sizes = [5, 8], strides = [1, 1]} : vector<10x8xf32> to vector<5x8xf32>
    %140 = vector.extract_strided_slice %116 {offsets = [5, 0], sizes = [5, 8], strides = [1, 1]} : vector<10x8xf32> to vector<5x8xf32>
    %cst_83 = arith.constant dense<0.000000e+00> : vector<5x5xf32>
    %141 = tpu.matmul %138, %139, %cst_83 {dimension_numbers = #tpu.dot_dimension_numbers<[1], [1], [0], [0], [0, 0, 1, 0], [], []>} : vector<5x8xf32>, vector<5x8xf32>, vector<5x5xf32> -> vector<5x5xf32>
    %cst_84 = arith.constant 0.353553385 : f32
    %142 = vector.broadcast %cst_84 : f32 to vector<5x5xf32>
    %143 = arith.mulf %141, %142 : vector<5x5xf32>
    %cst_85 = arith.constant dense<0xFF800000> : vector<5xf32>
    %144 = vector.multi_reduction <maximumf>, %143, %cst_85 [1] : vector<5x5xf32> to vector<5xf32>
    %145 = vector.shape_cast %144 : vector<5xf32> to vector<5x1xf32>
    %146 = vector.broadcast %145 : vector<5x1xf32> to vector<5x5xf32>
    %147 = arith.subf %143, %146 : vector<5x5xf32>
    %148 = math.exp %147 : vector<5x5xf32>
    %cst_86 = arith.constant dense<0.000000e+00> : vector<5xf32>
    %149 = vector.multi_reduction <add>, %148, %cst_86 [1] : vector<5x5xf32> to vector<5xf32>
    %150 = vector.shape_cast %149 : vector<5xf32> to vector<5x1xf32>
    %151 = tpu.reciprocal %150 {approx = true} : vector<5x1xf32> -> vector<5x1xf32>
    %152 = vector.broadcast %151 : vector<5x1xf32> to vector<5x5xf32>
    %153 = arith.mulf %148, %152 : vector<5x5xf32>
    %cst_87 = arith.constant dense<0.000000e+00> : vector<5x8xf32>
    %154 = tpu.matmul %153, %140, %cst_87 {dimension_numbers = #tpu.dot_dimension_numbers<[1], [0], [0], [1], [0, 0, 1, 1], [], []>} : vector<5x5xf32>, vector<5x8xf32>, vector<5x8xf32> -> vector<5x8xf32>
    %cst_88 = arith.constant dense<0.000000e+00> : vector<5x32xf32>
    %155 = tpu.matmul %154, %118, %cst_88 {dimension_numbers = #tpu.dot_dimension_numbers<[1], [0], [0], [1], [0, 0, 1, 1], [], []>} : vector<5x8xf32>, vector<8x32xf32>, vector<5x32xf32> -> vector<5x32xf32>
    %156 = arith.addf %95, %155 : vector<5x32xf32>
    %c2 = arith.constant 2 : index
    %c0_89 = arith.constant 0 : index
    %c0_90 = arith.constant 0 : index
    %157 = vector.load %arg7[%c2, %c0_89, %c0_90] : memref<24x32x8xf32, #tpu.memory_space<vmem>>, vector<1x32x8xf32>
    %158 = vector.shape_cast %157 : vector<1x32x8xf32> to vector<32x8xf32>
    %c2_91 = arith.constant 2 : index
    %c0_92 = arith.constant 0 : index
    %c0_93 = arith.constant 0 : index
    %159 = vector.load %arg8[%c2_91, %c0_92, %c0_93] : memref<24x1x8xf32, #tpu.memory_space<vmem>>, vector<1x1x8xf32>
    %160 = vector.shape_cast %159 : vector<1x1x8xf32> to vector<1x8xf32>
    %c6 = arith.constant 6 : index
    %c0_94 = arith.constant 0 : index
    %c0_95 = arith.constant 0 : index
    %161 = vector.load %arg7[%c6, %c0_94, %c0_95] : memref<24x32x8xf32, #tpu.memory_space<vmem>>, vector<1x32x8xf32>
    %162 = vector.shape_cast %161 : vector<1x32x8xf32> to vector<32x8xf32>
    %c6_96 = arith.constant 6 : index
    %c0_97 = arith.constant 0 : index
    %c0_98 = arith.constant 0 : index
    %163 = vector.load %arg8[%c6_96, %c0_97, %c0_98] : memref<24x1x8xf32, #tpu.memory_space<vmem>>, vector<1x1x8xf32>
    %164 = vector.shape_cast %163 : vector<1x1x8xf32> to vector<1x8xf32>
    %c10 = arith.constant 10 : index
    %c0_99 = arith.constant 0 : index
    %c0_100 = arith.constant 0 : index
    %165 = vector.load %arg7[%c10, %c0_99, %c0_100] : memref<24x32x8xf32, #tpu.memory_space<vmem>>, vector<1x32x8xf32>
    %166 = vector.shape_cast %165 : vector<1x32x8xf32> to vector<32x8xf32>
    %c10_101 = arith.constant 10 : index
    %c0_102 = arith.constant 0 : index
    %c0_103 = arith.constant 0 : index
    %167 = vector.load %arg8[%c10_101, %c0_102, %c0_103] : memref<24x1x8xf32, #tpu.memory_space<vmem>>, vector<1x1x8xf32>
    %168 = vector.shape_cast %167 : vector<1x1x8xf32> to vector<1x8xf32>
    %cst_104 = arith.constant dense<0.000000e+00> : vector<10x8xf32>
    %169 = tpu.matmul %36, %158, %cst_104 {dimension_numbers = #tpu.dot_dimension_numbers<[1], [0], [0], [1], [0, 0, 1, 1], [], []>} : vector<10x32xf32>, vector<32x8xf32>, vector<10x8xf32> -> vector<10x8xf32>
    %170 = vector.broadcast %160 : vector<1x8xf32> to vector<10x8xf32>
    %171 = arith.addf %169, %170 : vector<10x8xf32>
    %cst_105 = arith.constant dense<0.000000e+00> : vector<10x8xf32>
    %172 = tpu.matmul %36, %162, %cst_105 {dimension_numbers = #tpu.dot_dimension_numbers<[1], [0], [0], [1], [0, 0, 1, 1], [], []>} : vector<10x32xf32>, vector<32x8xf32>, vector<10x8xf32> -> vector<10x8xf32>
    %173 = vector.broadcast %164 : vector<1x8xf32> to vector<10x8xf32>
    %174 = arith.addf %172, %173 : vector<10x8xf32>
    %cst_106 = arith.constant dense<0.000000e+00> : vector<10x8xf32>
    %175 = tpu.matmul %36, %166, %cst_106 {dimension_numbers = #tpu.dot_dimension_numbers<[1], [0], [0], [1], [0, 0, 1, 1], [], []>} : vector<10x32xf32>, vector<32x8xf32>, vector<10x8xf32> -> vector<10x8xf32>
    %176 = vector.broadcast %168 : vector<1x8xf32> to vector<10x8xf32>
    %177 = arith.addf %175, %176 : vector<10x8xf32>
    %c2_107 = arith.constant 2 : index
    %c0_108 = arith.constant 0 : index
    %c0_109 = arith.constant 0 : index
    %178 = vector.load %arg9[%c2_107, %c0_108, %c0_109] : memref<8x8x32xf32, #tpu.memory_space<vmem>>, vector<1x8x32xf32>
    %179 = vector.shape_cast %178 : vector<1x8x32xf32> to vector<8x32xf32>
    %180 = vector.extract_strided_slice %171 {offsets = [0, 0], sizes = [5, 8], strides = [1, 1]} : vector<10x8xf32> to vector<5x8xf32>
    %181 = vector.extract_strided_slice %174 {offsets = [0, 0], sizes = [5, 8], strides = [1, 1]} : vector<10x8xf32> to vector<5x8xf32>
    %182 = vector.extract_strided_slice %177 {offsets = [0, 0], sizes = [5, 8], strides = [1, 1]} : vector<10x8xf32> to vector<5x8xf32>
    %cst_110 = arith.constant dense<0.000000e+00> : vector<5x5xf32>
    %183 = tpu.matmul %180, %181, %cst_110 {dimension_numbers = #tpu.dot_dimension_numbers<[1], [1], [0], [0], [0, 0, 1, 0], [], []>} : vector<5x8xf32>, vector<5x8xf32>, vector<5x5xf32> -> vector<5x5xf32>
    %cst_111 = arith.constant 0.353553385 : f32
    %184 = vector.broadcast %cst_111 : f32 to vector<5x5xf32>
    %185 = arith.mulf %183, %184 : vector<5x5xf32>
    %cst_112 = arith.constant dense<0xFF800000> : vector<5xf32>
    %186 = vector.multi_reduction <maximumf>, %185, %cst_112 [1] : vector<5x5xf32> to vector<5xf32>
    %187 = vector.shape_cast %186 : vector<5xf32> to vector<5x1xf32>
    %188 = vector.broadcast %187 : vector<5x1xf32> to vector<5x5xf32>
    %189 = arith.subf %185, %188 : vector<5x5xf32>
    %190 = math.exp %189 : vector<5x5xf32>
    %cst_113 = arith.constant dense<0.000000e+00> : vector<5xf32>
    %191 = vector.multi_reduction <add>, %190, %cst_113 [1] : vector<5x5xf32> to vector<5xf32>
    %192 = vector.shape_cast %191 : vector<5xf32> to vector<5x1xf32>
    %193 = tpu.reciprocal %192 {approx = true} : vector<5x1xf32> -> vector<5x1xf32>
    %194 = vector.broadcast %193 : vector<5x1xf32> to vector<5x5xf32>
    %195 = arith.mulf %190, %194 : vector<5x5xf32>
    %cst_114 = arith.constant dense<0.000000e+00> : vector<5x8xf32>
    %196 = tpu.matmul %195, %182, %cst_114 {dimension_numbers = #tpu.dot_dimension_numbers<[1], [0], [0], [1], [0, 0, 1, 1], [], []>} : vector<5x5xf32>, vector<5x8xf32>, vector<5x8xf32> -> vector<5x8xf32>
    %cst_115 = arith.constant dense<0.000000e+00> : vector<5x32xf32>
    %197 = tpu.matmul %196, %179, %cst_115 {dimension_numbers = #tpu.dot_dimension_numbers<[1], [0], [0], [1], [0, 0, 1, 1], [], []>} : vector<5x8xf32>, vector<8x32xf32>, vector<5x32xf32> -> vector<5x32xf32>
    %198 = arith.addf %137, %197 : vector<5x32xf32>
    %199 = vector.extract_strided_slice %171 {offsets = [5, 0], sizes = [5, 8], strides = [1, 1]} : vector<10x8xf32> to vector<5x8xf32>
    %200 = vector.extract_strided_slice %174 {offsets = [5, 0], sizes = [5, 8], strides = [1, 1]} : vector<10x8xf32> to vector<5x8xf32>
    %201 = vector.extract_strided_slice %177 {offsets = [5, 0], sizes = [5, 8], strides = [1, 1]} : vector<10x8xf32> to vector<5x8xf32>
    %cst_116 = arith.constant dense<0.000000e+00> : vector<5x5xf32>
    %202 = tpu.matmul %199, %200, %cst_116 {dimension_numbers = #tpu.dot_dimension_numbers<[1], [1], [0], [0], [0, 0, 1, 0], [], []>} : vector<5x8xf32>, vector<5x8xf32>, vector<5x5xf32> -> vector<5x5xf32>
    %cst_117 = arith.constant 0.353553385 : f32
    %203 = vector.broadcast %cst_117 : f32 to vector<5x5xf32>
    %204 = arith.mulf %202, %203 : vector<5x5xf32>
    %cst_118 = arith.constant dense<0xFF800000> : vector<5xf32>
    %205 = vector.multi_reduction <maximumf>, %204, %cst_118 [1] : vector<5x5xf32> to vector<5xf32>
    %206 = vector.shape_cast %205 : vector<5xf32> to vector<5x1xf32>
    %207 = vector.broadcast %206 : vector<5x1xf32> to vector<5x5xf32>
    %208 = arith.subf %204, %207 : vector<5x5xf32>
    %209 = math.exp %208 : vector<5x5xf32>
    %cst_119 = arith.constant dense<0.000000e+00> : vector<5xf32>
    %210 = vector.multi_reduction <add>, %209, %cst_119 [1] : vector<5x5xf32> to vector<5xf32>
    %211 = vector.shape_cast %210 : vector<5xf32> to vector<5x1xf32>
    %212 = tpu.reciprocal %211 {approx = true} : vector<5x1xf32> -> vector<5x1xf32>
    %213 = vector.broadcast %212 : vector<5x1xf32> to vector<5x5xf32>
    %214 = arith.mulf %209, %213 : vector<5x5xf32>
    %cst_120 = arith.constant dense<0.000000e+00> : vector<5x8xf32>
    %215 = tpu.matmul %214, %201, %cst_120 {dimension_numbers = #tpu.dot_dimension_numbers<[1], [0], [0], [1], [0, 0, 1, 1], [], []>} : vector<5x5xf32>, vector<5x8xf32>, vector<5x8xf32> -> vector<5x8xf32>
    %cst_121 = arith.constant dense<0.000000e+00> : vector<5x32xf32>
    %216 = tpu.matmul %215, %179, %cst_121 {dimension_numbers = #tpu.dot_dimension_numbers<[1], [0], [0], [1], [0, 0, 1, 1], [], []>} : vector<5x8xf32>, vector<8x32xf32>, vector<5x32xf32> -> vector<5x32xf32>
    %217 = arith.addf %156, %216 : vector<5x32xf32>
    %c3 = arith.constant 3 : index
    %c0_122 = arith.constant 0 : index
    %c0_123 = arith.constant 0 : index
    %218 = vector.load %arg7[%c3, %c0_122, %c0_123] : memref<24x32x8xf32, #tpu.memory_space<vmem>>, vector<1x32x8xf32>
    %219 = vector.shape_cast %218 : vector<1x32x8xf32> to vector<32x8xf32>
    %c3_124 = arith.constant 3 : index
    %c0_125 = arith.constant 0 : index
    %c0_126 = arith.constant 0 : index
    %220 = vector.load %arg8[%c3_124, %c0_125, %c0_126] : memref<24x1x8xf32, #tpu.memory_space<vmem>>, vector<1x1x8xf32>
    %221 = vector.shape_cast %220 : vector<1x1x8xf32> to vector<1x8xf32>
    %c7 = arith.constant 7 : index
    %c0_127 = arith.constant 0 : index
    %c0_128 = arith.constant 0 : index
    %222 = vector.load %arg7[%c7, %c0_127, %c0_128] : memref<24x32x8xf32, #tpu.memory_space<vmem>>, vector<1x32x8xf32>
    %223 = vector.shape_cast %222 : vector<1x32x8xf32> to vector<32x8xf32>
    %c7_129 = arith.constant 7 : index
    %c0_130 = arith.constant 0 : index
    %c0_131 = arith.constant 0 : index
    %224 = vector.load %arg8[%c7_129, %c0_130, %c0_131] : memref<24x1x8xf32, #tpu.memory_space<vmem>>, vector<1x1x8xf32>
    %225 = vector.shape_cast %224 : vector<1x1x8xf32> to vector<1x8xf32>
    %c11 = arith.constant 11 : index
    %c0_132 = arith.constant 0 : index
    %c0_133 = arith.constant 0 : index
    %226 = vector.load %arg7[%c11, %c0_132, %c0_133] : memref<24x32x8xf32, #tpu.memory_space<vmem>>, vector<1x32x8xf32>
    %227 = vector.shape_cast %226 : vector<1x32x8xf32> to vector<32x8xf32>
    %c11_134 = arith.constant 11 : index
    %c0_135 = arith.constant 0 : index
    %c0_136 = arith.constant 0 : index
    %228 = vector.load %arg8[%c11_134, %c0_135, %c0_136] : memref<24x1x8xf32, #tpu.memory_space<vmem>>, vector<1x1x8xf32>
    %229 = vector.shape_cast %228 : vector<1x1x8xf32> to vector<1x8xf32>
    %cst_137 = arith.constant dense<0.000000e+00> : vector<10x8xf32>
    %230 = tpu.matmul %36, %219, %cst_137 {dimension_numbers = #tpu.dot_dimension_numbers<[1], [0], [0], [1], [0, 0, 1, 1], [], []>} : vector<10x32xf32>, vector<32x8xf32>, vector<10x8xf32> -> vector<10x8xf32>
    %231 = vector.broadcast %221 : vector<1x8xf32> to vector<10x8xf32>
    %232 = arith.addf %230, %231 : vector<10x8xf32>
    %cst_138 = arith.constant dense<0.000000e+00> : vector<10x8xf32>
    %233 = tpu.matmul %36, %223, %cst_138 {dimension_numbers = #tpu.dot_dimension_numbers<[1], [0], [0], [1], [0, 0, 1, 1], [], []>} : vector<10x32xf32>, vector<32x8xf32>, vector<10x8xf32> -> vector<10x8xf32>
    %234 = vector.broadcast %225 : vector<1x8xf32> to vector<10x8xf32>
    %235 = arith.addf %233, %234 : vector<10x8xf32>
    %cst_139 = arith.constant dense<0.000000e+00> : vector<10x8xf32>
    %236 = tpu.matmul %36, %227, %cst_139 {dimension_numbers = #tpu.dot_dimension_numbers<[1], [0], [0], [1], [0, 0, 1, 1], [], []>} : vector<10x32xf32>, vector<32x8xf32>, vector<10x8xf32> -> vector<10x8xf32>
    %237 = vector.broadcast %229 : vector<1x8xf32> to vector<10x8xf32>
    %238 = arith.addf %236, %237 : vector<10x8xf32>
    %c3_140 = arith.constant 3 : index
    %c0_141 = arith.constant 0 : index
    %c0_142 = arith.constant 0 : index
    %239 = vector.load %arg9[%c3_140, %c0_141, %c0_142] : memref<8x8x32xf32, #tpu.memory_space<vmem>>, vector<1x8x32xf32>
    %240 = vector.shape_cast %239 : vector<1x8x32xf32> to vector<8x32xf32>
    %241 = vector.extract_strided_slice %232 {offsets = [0, 0], sizes = [5, 8], strides = [1, 1]} : vector<10x8xf32> to vector<5x8xf32>
    %242 = vector.extract_strided_slice %235 {offsets = [0, 0], sizes = [5, 8], strides = [1, 1]} : vector<10x8xf32> to vector<5x8xf32>
    %243 = vector.extract_strided_slice %238 {offsets = [0, 0], sizes = [5, 8], strides = [1, 1]} : vector<10x8xf32> to vector<5x8xf32>
    %cst_143 = arith.constant dense<0.000000e+00> : vector<5x5xf32>
    %244 = tpu.matmul %241, %242, %cst_143 {dimension_numbers = #tpu.dot_dimension_numbers<[1], [1], [0], [0], [0, 0, 1, 0], [], []>} : vector<5x8xf32>, vector<5x8xf32>, vector<5x5xf32> -> vector<5x5xf32>
    %cst_144 = arith.constant 0.353553385 : f32
    %245 = vector.broadcast %cst_144 : f32 to vector<5x5xf32>
    %246 = arith.mulf %244, %245 : vector<5x5xf32>
    %cst_145 = arith.constant dense<0xFF800000> : vector<5xf32>
    %247 = vector.multi_reduction <maximumf>, %246, %cst_145 [1] : vector<5x5xf32> to vector<5xf32>
    %248 = vector.shape_cast %247 : vector<5xf32> to vector<5x1xf32>
    %249 = vector.broadcast %248 : vector<5x1xf32> to vector<5x5xf32>
    %250 = arith.subf %246, %249 : vector<5x5xf32>
    %251 = math.exp %250 : vector<5x5xf32>
    %cst_146 = arith.constant dense<0.000000e+00> : vector<5xf32>
    %252 = vector.multi_reduction <add>, %251, %cst_146 [1] : vector<5x5xf32> to vector<5xf32>
    %253 = vector.shape_cast %252 : vector<5xf32> to vector<5x1xf32>
    %254 = tpu.reciprocal %253 {approx = true} : vector<5x1xf32> -> vector<5x1xf32>
    %255 = vector.broadcast %254 : vector<5x1xf32> to vector<5x5xf32>
    %256 = arith.mulf %251, %255 : vector<5x5xf32>
    %cst_147 = arith.constant dense<0.000000e+00> : vector<5x8xf32>
    %257 = tpu.matmul %256, %243, %cst_147 {dimension_numbers = #tpu.dot_dimension_numbers<[1], [0], [0], [1], [0, 0, 1, 1], [], []>} : vector<5x5xf32>, vector<5x8xf32>, vector<5x8xf32> -> vector<5x8xf32>
    %cst_148 = arith.constant dense<0.000000e+00> : vector<5x32xf32>
    %258 = tpu.matmul %257, %240, %cst_148 {dimension_numbers = #tpu.dot_dimension_numbers<[1], [0], [0], [1], [0, 0, 1, 1], [], []>} : vector<5x8xf32>, vector<8x32xf32>, vector<5x32xf32> -> vector<5x32xf32>
    %259 = arith.addf %198, %258 : vector<5x32xf32>
    %260 = vector.extract_strided_slice %232 {offsets = [5, 0], sizes = [5, 8], strides = [1, 1]} : vector<10x8xf32> to vector<5x8xf32>
    %261 = vector.extract_strided_slice %235 {offsets = [5, 0], sizes = [5, 8], strides = [1, 1]} : vector<10x8xf32> to vector<5x8xf32>
    %262 = vector.extract_strided_slice %238 {offsets = [5, 0], sizes = [5, 8], strides = [1, 1]} : vector<10x8xf32> to vector<5x8xf32>
    %cst_149 = arith.constant dense<0.000000e+00> : vector<5x5xf32>
    %263 = tpu.matmul %260, %261, %cst_149 {dimension_numbers = #tpu.dot_dimension_numbers<[1], [1], [0], [0], [0, 0, 1, 0], [], []>} : vector<5x8xf32>, vector<5x8xf32>, vector<5x5xf32> -> vector<5x5xf32>
    %cst_150 = arith.constant 0.353553385 : f32
    %264 = vector.broadcast %cst_150 : f32 to vector<5x5xf32>
    %265 = arith.mulf %263, %264 : vector<5x5xf32>
    %cst_151 = arith.constant dense<0xFF800000> : vector<5xf32>
    %266 = vector.multi_reduction <maximumf>, %265, %cst_151 [1] : vector<5x5xf32> to vector<5xf32>
    %267 = vector.shape_cast %266 : vector<5xf32> to vector<5x1xf32>
    %268 = vector.broadcast %267 : vector<5x1xf32> to vector<5x5xf32>
    %269 = arith.subf %265, %268 : vector<5x5xf32>
    %270 = math.exp %269 : vector<5x5xf32>
    %cst_152 = arith.constant dense<0.000000e+00> : vector<5xf32>
    %271 = vector.multi_reduction <add>, %270, %cst_152 [1] : vector<5x5xf32> to vector<5xf32>
    %272 = vector.shape_cast %271 : vector<5xf32> to vector<5x1xf32>
    %273 = tpu.reciprocal %272 {approx = true} : vector<5x1xf32> -> vector<5x1xf32>
    %274 = vector.broadcast %273 : vector<5x1xf32> to vector<5x5xf32>
    %275 = arith.mulf %270, %274 : vector<5x5xf32>
    %cst_153 = arith.constant dense<0.000000e+00> : vector<5x8xf32>
    %276 = tpu.matmul %275, %262, %cst_153 {dimension_numbers = #tpu.dot_dimension_numbers<[1], [0], [0], [1], [0, 0, 1, 1], [], []>} : vector<5x5xf32>, vector<5x8xf32>, vector<5x8xf32> -> vector<5x8xf32>
    %cst_154 = arith.constant dense<0.000000e+00> : vector<5x32xf32>
    %277 = tpu.matmul %276, %240, %cst_154 {dimension_numbers = #tpu.dot_dimension_numbers<[1], [0], [0], [1], [0, 0, 1, 1], [], []>} : vector<5x8xf32>, vector<8x32xf32>, vector<5x32xf32> -> vector<5x32xf32>
    %278 = arith.addf %217, %277 : vector<5x32xf32>
    %279 = tpu.concatenate %259, %278 in 0 : vector<5x32xf32>, vector<5x32xf32> -> vector<10x32xf32>
    %280 = arith.addf %12, %279 : vector<10x32xf32>
    %c0_155 = arith.constant 0 : index
    %c0_156 = arith.constant 0 : index
    %c0_157 = arith.constant 0 : index
    %281 = vector.load %arg10[%c0_155, %c0_156, %c0_157] : memref<2x1x32xf32, #tpu.memory_space<vmem>>, vector<1x1x32xf32>
    %282 = vector.shape_cast %281 : vector<1x1x32xf32> to vector<1x32xf32>
    %283 = vector.broadcast %282 : vector<1x32xf32> to vector<10x32xf32>
    %284 = arith.addf %280, %283 : vector<10x32xf32>
    %c0_158 = arith.constant 0 : index
    %c0_159 = arith.constant 0 : index
    %c0_160 = arith.constant 0 : index
    %285 = vector.load %arg11[%c0_158, %c0_159, %c0_160] : memref<2x1x32xf32, #tpu.memory_space<vmem>>, vector<1x1x32xf32>
    %286 = vector.shape_cast %285 : vector<1x1x32xf32> to vector<1x32xf32>
    %c0_161 = arith.constant 0 : index
    %c0_162 = arith.constant 0 : index
    %c0_163 = arith.constant 0 : index
    %287 = vector.load %arg12[%c0_161, %c0_162, %c0_163] : memref<2x1x32xf32, #tpu.memory_space<vmem>>, vector<1x1x32xf32>
    %288 = vector.shape_cast %287 : vector<1x1x32xf32> to vector<1x32xf32>
    %cst_164 = arith.constant dense<0.000000e+00> : vector<10xf32>
    %289 = vector.multi_reduction <add>, %284, %cst_164 [1] : vector<10x32xf32> to vector<10xf32>
    %290 = vector.shape_cast %289 : vector<10xf32> to vector<10x1xf32>
    %cst_165 = arith.constant 3.200000e+01 : f32
    %291 = vector.broadcast %cst_165 : f32 to vector<10x1xf32>
    %292 = arith.divf %290, %291 : vector<10x1xf32>
    %293 = vector.broadcast %292 : vector<10x1xf32> to vector<10x32xf32>
    %294 = arith.subf %284, %293 : vector<10x32xf32>
    %295 = arith.mulf %294, %294 : vector<10x32xf32>
    %cst_166 = arith.constant dense<0.000000e+00> : vector<10xf32>
    %296 = vector.multi_reduction <add>, %295, %cst_166 [1] : vector<10x32xf32> to vector<10xf32>
    %297 = vector.shape_cast %296 : vector<10xf32> to vector<10x1xf32>
    %cst_167 = arith.constant 3.200000e+01 : f32
    %298 = vector.broadcast %cst_167 : f32 to vector<10x1xf32>
    %299 = arith.divf %297, %298 : vector<10x1xf32>
    %cst_168 = arith.constant 9.99999974E-6 : f32
    %300 = vector.broadcast %cst_168 : f32 to vector<10x1xf32>
    %301 = arith.addf %299, %300 : vector<10x1xf32>
    %302 = math.rsqrt %301 : vector<10x1xf32>
    %303 = vector.broadcast %302 : vector<10x1xf32> to vector<10x32xf32>
    %304 = arith.mulf %294, %303 : vector<10x32xf32>
    %305 = vector.broadcast %286 : vector<1x32xf32> to vector<10x32xf32>
    %306 = arith.mulf %304, %305 : vector<10x32xf32>
    %307 = vector.broadcast %288 : vector<1x32xf32> to vector<10x32xf32>
    %308 = arith.addf %306, %307 : vector<10x32xf32>
    %c0_169 = arith.constant 0 : index
    %c0_170 = arith.constant 0 : index
    %c0_171 = arith.constant 0 : index
    %309 = vector.load %arg13[%c0_169, %c0_170, %c0_171] : memref<2x32x128xf32, #tpu.memory_space<vmem>>, vector<1x32x128xf32>
    %310 = vector.shape_cast %309 : vector<1x32x128xf32> to vector<32x128xf32>
    %cst_172 = arith.constant dense<0.000000e+00> : vector<10x128xf32>
    %311 = tpu.matmul %308, %310, %cst_172 {dimension_numbers = #tpu.dot_dimension_numbers<[1], [0], [0], [1], [0, 0, 1, 1], [], []>} : vector<10x32xf32>, vector<32x128xf32>, vector<10x128xf32> -> vector<10x128xf32>
    %c0_173 = arith.constant 0 : index
    %c0_174 = arith.constant 0 : index
    %c0_175 = arith.constant 0 : index
    %312 = vector.load %arg14[%c0_173, %c0_174, %c0_175] : memref<2x1x128xf32, #tpu.memory_space<vmem>>, vector<1x1x128xf32>
    %313 = vector.shape_cast %312 : vector<1x1x128xf32> to vector<1x128xf32>
    %314 = vector.broadcast %313 : vector<1x128xf32> to vector<10x128xf32>
    %315 = arith.addf %311, %314 : vector<10x128xf32>
    %cst_176 = arith.constant 5.000000e-01 : f32
    %316 = vector.broadcast %cst_176 : f32 to vector<10x128xf32>
    %317 = arith.mulf %316, %315 : vector<10x128xf32>
    %cst_177 = arith.constant 4.471500e-02 : f32
    %318 = vector.broadcast %cst_177 : f32 to vector<10x128xf32>
    %319 = arith.mulf %318, %315 : vector<10x128xf32>
    %320 = arith.mulf %319, %315 : vector<10x128xf32>
    %321 = arith.mulf %320, %315 : vector<10x128xf32>
    %322 = arith.addf %315, %321 : vector<10x128xf32>
    %cst_178 = arith.constant 0.797884583 : f32
    %323 = vector.broadcast %cst_178 : f32 to vector<10x128xf32>
    %324 = arith.mulf %323, %322 : vector<10x128xf32>
    %325 = math.tanh %324 : vector<10x128xf32>
    %cst_179 = arith.constant 1.000000e+00 : f32
    %326 = vector.broadcast %cst_179 : f32 to vector<10x128xf32>
    %327 = arith.addf %326, %325 : vector<10x128xf32>
    %328 = arith.mulf %317, %327 : vector<10x128xf32>
    %c0_180 = arith.constant 0 : index
    %c0_181 = arith.constant 0 : index
    %c0_182 = arith.constant 0 : index
    %329 = vector.load %arg15[%c0_180, %c0_181, %c0_182] : memref<2x128x32xf32, #tpu.memory_space<vmem>>, vector<1x128x32xf32>
    %330 = vector.shape_cast %329 : vector<1x128x32xf32> to vector<128x32xf32>
    %cst_183 = arith.constant dense<0.000000e+00> : vector<10x32xf32>
    %331 = tpu.matmul %328, %330, %cst_183 {dimension_numbers = #tpu.dot_dimension_numbers<[1], [0], [0], [1], [0, 0, 1, 1], [], []>} : vector<10x128xf32>, vector<128x32xf32>, vector<10x32xf32> -> vector<10x32xf32>
    %c0_184 = arith.constant 0 : index
    %c0_185 = arith.constant 0 : index
    %c0_186 = arith.constant 0 : index
    %332 = vector.load %arg16[%c0_184, %c0_185, %c0_186] : memref<2x1x32xf32, #tpu.memory_space<vmem>>, vector<1x1x32xf32>
    %333 = vector.shape_cast %332 : vector<1x1x32xf32> to vector<1x32xf32>
    %334 = vector.broadcast %333 : vector<1x32xf32> to vector<10x32xf32>
    %335 = arith.addf %331, %334 : vector<10x32xf32>
    %336 = arith.addf %284, %335 : vector<10x32xf32>
    %c1_187 = arith.constant 1 : index
    %c0_188 = arith.constant 0 : index
    %c0_189 = arith.constant 0 : index
    %337 = vector.load %arg5[%c1_187, %c0_188, %c0_189] : memref<2x1x32xf32, #tpu.memory_space<vmem>>, vector<1x1x32xf32>
    %338 = vector.shape_cast %337 : vector<1x1x32xf32> to vector<1x32xf32>
    %c1_190 = arith.constant 1 : index
    %c0_191 = arith.constant 0 : index
    %c0_192 = arith.constant 0 : index
    %339 = vector.load %arg6[%c1_190, %c0_191, %c0_192] : memref<2x1x32xf32, #tpu.memory_space<vmem>>, vector<1x1x32xf32>
    %340 = vector.shape_cast %339 : vector<1x1x32xf32> to vector<1x32xf32>
    %cst_193 = arith.constant dense<0.000000e+00> : vector<10xf32>
    %341 = vector.multi_reduction <add>, %336, %cst_193 [1] : vector<10x32xf32> to vector<10xf32>
    %342 = vector.shape_cast %341 : vector<10xf32> to vector<10x1xf32>
    %cst_194 = arith.constant 3.200000e+01 : f32
    %343 = vector.broadcast %cst_194 : f32 to vector<10x1xf32>
    %344 = arith.divf %342, %343 : vector<10x1xf32>
    %345 = vector.broadcast %344 : vector<10x1xf32> to vector<10x32xf32>
    %346 = arith.subf %336, %345 : vector<10x32xf32>
    %347 = arith.mulf %346, %346 : vector<10x32xf32>
    %cst_195 = arith.constant dense<0.000000e+00> : vector<10xf32>
    %348 = vector.multi_reduction <add>, %347, %cst_195 [1] : vector<10x32xf32> to vector<10xf32>
    %349 = vector.shape_cast %348 : vector<10xf32> to vector<10x1xf32>
    %cst_196 = arith.constant 3.200000e+01 : f32
    %350 = vector.broadcast %cst_196 : f32 to vector<10x1xf32>
    %351 = arith.divf %349, %350 : vector<10x1xf32>
    %cst_197 = arith.constant 9.99999974E-6 : f32
    %352 = vector.broadcast %cst_197 : f32 to vector<10x1xf32>
    %353 = arith.addf %351, %352 : vector<10x1xf32>
    %354 = math.rsqrt %353 : vector<10x1xf32>
    %355 = vector.broadcast %354 : vector<10x1xf32> to vector<10x32xf32>
    %356 = arith.mulf %346, %355 : vector<10x32xf32>
    %357 = vector.broadcast %338 : vector<1x32xf32> to vector<10x32xf32>
    %358 = arith.mulf %356, %357 : vector<10x32xf32>
    %359 = vector.broadcast %340 : vector<1x32xf32> to vector<10x32xf32>
    %360 = arith.addf %358, %359 : vector<10x32xf32>
    %c12 = arith.constant 12 : index
    %c0_198 = arith.constant 0 : index
    %c0_199 = arith.constant 0 : index
    %361 = vector.load %arg7[%c12, %c0_198, %c0_199] : memref<24x32x8xf32, #tpu.memory_space<vmem>>, vector<1x32x8xf32>
    %362 = vector.shape_cast %361 : vector<1x32x8xf32> to vector<32x8xf32>
    %c12_200 = arith.constant 12 : index
    %c0_201 = arith.constant 0 : index
    %c0_202 = arith.constant 0 : index
    %363 = vector.load %arg8[%c12_200, %c0_201, %c0_202] : memref<24x1x8xf32, #tpu.memory_space<vmem>>, vector<1x1x8xf32>
    %364 = vector.shape_cast %363 : vector<1x1x8xf32> to vector<1x8xf32>
    %c16 = arith.constant 16 : index
    %c0_203 = arith.constant 0 : index
    %c0_204 = arith.constant 0 : index
    %365 = vector.load %arg7[%c16, %c0_203, %c0_204] : memref<24x32x8xf32, #tpu.memory_space<vmem>>, vector<1x32x8xf32>
    %366 = vector.shape_cast %365 : vector<1x32x8xf32> to vector<32x8xf32>
    %c16_205 = arith.constant 16 : index
    %c0_206 = arith.constant 0 : index
    %c0_207 = arith.constant 0 : index
    %367 = vector.load %arg8[%c16_205, %c0_206, %c0_207] : memref<24x1x8xf32, #tpu.memory_space<vmem>>, vector<1x1x8xf32>
    %368 = vector.shape_cast %367 : vector<1x1x8xf32> to vector<1x8xf32>
    %c20 = arith.constant 20 : index
    %c0_208 = arith.constant 0 : index
    %c0_209 = arith.constant 0 : index
    %369 = vector.load %arg7[%c20, %c0_208, %c0_209] : memref<24x32x8xf32, #tpu.memory_space<vmem>>, vector<1x32x8xf32>
    %370 = vector.shape_cast %369 : vector<1x32x8xf32> to vector<32x8xf32>
    %c20_210 = arith.constant 20 : index
    %c0_211 = arith.constant 0 : index
    %c0_212 = arith.constant 0 : index
    %371 = vector.load %arg8[%c20_210, %c0_211, %c0_212] : memref<24x1x8xf32, #tpu.memory_space<vmem>>, vector<1x1x8xf32>
    %372 = vector.shape_cast %371 : vector<1x1x8xf32> to vector<1x8xf32>
    %cst_213 = arith.constant dense<0.000000e+00> : vector<10x8xf32>
    %373 = tpu.matmul %360, %362, %cst_213 {dimension_numbers = #tpu.dot_dimension_numbers<[1], [0], [0], [1], [0, 0, 1, 1], [], []>} : vector<10x32xf32>, vector<32x8xf32>, vector<10x8xf32> -> vector<10x8xf32>
    %374 = vector.broadcast %364 : vector<1x8xf32> to vector<10x8xf32>
    %375 = arith.addf %373, %374 : vector<10x8xf32>
    %cst_214 = arith.constant dense<0.000000e+00> : vector<10x8xf32>
    %376 = tpu.matmul %360, %366, %cst_214 {dimension_numbers = #tpu.dot_dimension_numbers<[1], [0], [0], [1], [0, 0, 1, 1], [], []>} : vector<10x32xf32>, vector<32x8xf32>, vector<10x8xf32> -> vector<10x8xf32>
    %377 = vector.broadcast %368 : vector<1x8xf32> to vector<10x8xf32>
    %378 = arith.addf %376, %377 : vector<10x8xf32>
    %cst_215 = arith.constant dense<0.000000e+00> : vector<10x8xf32>
    %379 = tpu.matmul %360, %370, %cst_215 {dimension_numbers = #tpu.dot_dimension_numbers<[1], [0], [0], [1], [0, 0, 1, 1], [], []>} : vector<10x32xf32>, vector<32x8xf32>, vector<10x8xf32> -> vector<10x8xf32>
    %380 = vector.broadcast %372 : vector<1x8xf32> to vector<10x8xf32>
    %381 = arith.addf %379, %380 : vector<10x8xf32>
    %c4_216 = arith.constant 4 : index
    %c0_217 = arith.constant 0 : index
    %c0_218 = arith.constant 0 : index
    %382 = vector.load %arg9[%c4_216, %c0_217, %c0_218] : memref<8x8x32xf32, #tpu.memory_space<vmem>>, vector<1x8x32xf32>
    %383 = vector.shape_cast %382 : vector<1x8x32xf32> to vector<8x32xf32>
    %384 = vector.extract_strided_slice %375 {offsets = [0, 0], sizes = [5, 8], strides = [1, 1]} : vector<10x8xf32> to vector<5x8xf32>
    %385 = vector.extract_strided_slice %378 {offsets = [0, 0], sizes = [5, 8], strides = [1, 1]} : vector<10x8xf32> to vector<5x8xf32>
    %386 = vector.extract_strided_slice %381 {offsets = [0, 0], sizes = [5, 8], strides = [1, 1]} : vector<10x8xf32> to vector<5x8xf32>
    %cst_219 = arith.constant dense<0.000000e+00> : vector<5x5xf32>
    %387 = tpu.matmul %384, %385, %cst_219 {dimension_numbers = #tpu.dot_dimension_numbers<[1], [1], [0], [0], [0, 0, 1, 0], [], []>} : vector<5x8xf32>, vector<5x8xf32>, vector<5x5xf32> -> vector<5x5xf32>
    %cst_220 = arith.constant 0.353553385 : f32
    %388 = vector.broadcast %cst_220 : f32 to vector<5x5xf32>
    %389 = arith.mulf %387, %388 : vector<5x5xf32>
    %cst_221 = arith.constant dense<0xFF800000> : vector<5xf32>
    %390 = vector.multi_reduction <maximumf>, %389, %cst_221 [1] : vector<5x5xf32> to vector<5xf32>
    %391 = vector.shape_cast %390 : vector<5xf32> to vector<5x1xf32>
    %392 = vector.broadcast %391 : vector<5x1xf32> to vector<5x5xf32>
    %393 = arith.subf %389, %392 : vector<5x5xf32>
    %394 = math.exp %393 : vector<5x5xf32>
    %cst_222 = arith.constant dense<0.000000e+00> : vector<5xf32>
    %395 = vector.multi_reduction <add>, %394, %cst_222 [1] : vector<5x5xf32> to vector<5xf32>
    %396 = vector.shape_cast %395 : vector<5xf32> to vector<5x1xf32>
    %397 = tpu.reciprocal %396 {approx = true} : vector<5x1xf32> -> vector<5x1xf32>
    %398 = vector.broadcast %397 : vector<5x1xf32> to vector<5x5xf32>
    %399 = arith.mulf %394, %398 : vector<5x5xf32>
    %cst_223 = arith.constant dense<0.000000e+00> : vector<5x8xf32>
    %400 = tpu.matmul %399, %386, %cst_223 {dimension_numbers = #tpu.dot_dimension_numbers<[1], [0], [0], [1], [0, 0, 1, 1], [], []>} : vector<5x5xf32>, vector<5x8xf32>, vector<5x8xf32> -> vector<5x8xf32>
    %cst_224 = arith.constant dense<0.000000e+00> : vector<5x32xf32>
    %401 = tpu.matmul %400, %383, %cst_224 {dimension_numbers = #tpu.dot_dimension_numbers<[1], [0], [0], [1], [0, 0, 1, 1], [], []>} : vector<5x8xf32>, vector<8x32xf32>, vector<5x32xf32> -> vector<5x32xf32>
    %402 = vector.extract_strided_slice %375 {offsets = [5, 0], sizes = [5, 8], strides = [1, 1]} : vector<10x8xf32> to vector<5x8xf32>
    %403 = vector.extract_strided_slice %378 {offsets = [5, 0], sizes = [5, 8], strides = [1, 1]} : vector<10x8xf32> to vector<5x8xf32>
    %404 = vector.extract_strided_slice %381 {offsets = [5, 0], sizes = [5, 8], strides = [1, 1]} : vector<10x8xf32> to vector<5x8xf32>
    %cst_225 = arith.constant dense<0.000000e+00> : vector<5x5xf32>
    %405 = tpu.matmul %402, %403, %cst_225 {dimension_numbers = #tpu.dot_dimension_numbers<[1], [1], [0], [0], [0, 0, 1, 0], [], []>} : vector<5x8xf32>, vector<5x8xf32>, vector<5x5xf32> -> vector<5x5xf32>
    %cst_226 = arith.constant 0.353553385 : f32
    %406 = vector.broadcast %cst_226 : f32 to vector<5x5xf32>
    %407 = arith.mulf %405, %406 : vector<5x5xf32>
    %cst_227 = arith.constant dense<0xFF800000> : vector<5xf32>
    %408 = vector.multi_reduction <maximumf>, %407, %cst_227 [1] : vector<5x5xf32> to vector<5xf32>
    %409 = vector.shape_cast %408 : vector<5xf32> to vector<5x1xf32>
    %410 = vector.broadcast %409 : vector<5x1xf32> to vector<5x5xf32>
    %411 = arith.subf %407, %410 : vector<5x5xf32>
    %412 = math.exp %411 : vector<5x5xf32>
    %cst_228 = arith.constant dense<0.000000e+00> : vector<5xf32>
    %413 = vector.multi_reduction <add>, %412, %cst_228 [1] : vector<5x5xf32> to vector<5xf32>
    %414 = vector.shape_cast %413 : vector<5xf32> to vector<5x1xf32>
    %415 = tpu.reciprocal %414 {approx = true} : vector<5x1xf32> -> vector<5x1xf32>
    %416 = vector.broadcast %415 : vector<5x1xf32> to vector<5x5xf32>
    %417 = arith.mulf %412, %416 : vector<5x5xf32>
    %cst_229 = arith.constant dense<0.000000e+00> : vector<5x8xf32>
    %418 = tpu.matmul %417, %404, %cst_229 {dimension_numbers = #tpu.dot_dimension_numbers<[1], [0], [0], [1], [0, 0, 1, 1], [], []>} : vector<5x5xf32>, vector<5x8xf32>, vector<5x8xf32> -> vector<5x8xf32>
    %cst_230 = arith.constant dense<0.000000e+00> : vector<5x32xf32>
    %419 = tpu.matmul %418, %383, %cst_230 {dimension_numbers = #tpu.dot_dimension_numbers<[1], [0], [0], [1], [0, 0, 1, 1], [], []>} : vector<5x8xf32>, vector<8x32xf32>, vector<5x32xf32> -> vector<5x32xf32>
    %c13 = arith.constant 13 : index
    %c0_231 = arith.constant 0 : index
    %c0_232 = arith.constant 0 : index
    %420 = vector.load %arg7[%c13, %c0_231, %c0_232] : memref<24x32x8xf32, #tpu.memory_space<vmem>>, vector<1x32x8xf32>
    %421 = vector.shape_cast %420 : vector<1x32x8xf32> to vector<32x8xf32>
    %c13_233 = arith.constant 13 : index
    %c0_234 = arith.constant 0 : index
    %c0_235 = arith.constant 0 : index
    %422 = vector.load %arg8[%c13_233, %c0_234, %c0_235] : memref<24x1x8xf32, #tpu.memory_space<vmem>>, vector<1x1x8xf32>
    %423 = vector.shape_cast %422 : vector<1x1x8xf32> to vector<1x8xf32>
    %c17 = arith.constant 17 : index
    %c0_236 = arith.constant 0 : index
    %c0_237 = arith.constant 0 : index
    %424 = vector.load %arg7[%c17, %c0_236, %c0_237] : memref<24x32x8xf32, #tpu.memory_space<vmem>>, vector<1x32x8xf32>
    %425 = vector.shape_cast %424 : vector<1x32x8xf32> to vector<32x8xf32>
    %c17_238 = arith.constant 17 : index
    %c0_239 = arith.constant 0 : index
    %c0_240 = arith.constant 0 : index
    %426 = vector.load %arg8[%c17_238, %c0_239, %c0_240] : memref<24x1x8xf32, #tpu.memory_space<vmem>>, vector<1x1x8xf32>
    %427 = vector.shape_cast %426 : vector<1x1x8xf32> to vector<1x8xf32>
    %c21 = arith.constant 21 : index
    %c0_241 = arith.constant 0 : index
    %c0_242 = arith.constant 0 : index
    %428 = vector.load %arg7[%c21, %c0_241, %c0_242] : memref<24x32x8xf32, #tpu.memory_space<vmem>>, vector<1x32x8xf32>
    %429 = vector.shape_cast %428 : vector<1x32x8xf32> to vector<32x8xf32>
    %c21_243 = arith.constant 21 : index
    %c0_244 = arith.constant 0 : index
    %c0_245 = arith.constant 0 : index
    %430 = vector.load %arg8[%c21_243, %c0_244, %c0_245] : memref<24x1x8xf32, #tpu.memory_space<vmem>>, vector<1x1x8xf32>
    %431 = vector.shape_cast %430 : vector<1x1x8xf32> to vector<1x8xf32>
    %cst_246 = arith.constant dense<0.000000e+00> : vector<10x8xf32>
    %432 = tpu.matmul %360, %421, %cst_246 {dimension_numbers = #tpu.dot_dimension_numbers<[1], [0], [0], [1], [0, 0, 1, 1], [], []>} : vector<10x32xf32>, vector<32x8xf32>, vector<10x8xf32> -> vector<10x8xf32>
    %433 = vector.broadcast %423 : vector<1x8xf32> to vector<10x8xf32>
    %434 = arith.addf %432, %433 : vector<10x8xf32>
    %cst_247 = arith.constant dense<0.000000e+00> : vector<10x8xf32>
    %435 = tpu.matmul %360, %425, %cst_247 {dimension_numbers = #tpu.dot_dimension_numbers<[1], [0], [0], [1], [0, 0, 1, 1], [], []>} : vector<10x32xf32>, vector<32x8xf32>, vector<10x8xf32> -> vector<10x8xf32>
    %436 = vector.broadcast %427 : vector<1x8xf32> to vector<10x8xf32>
    %437 = arith.addf %435, %436 : vector<10x8xf32>
    %cst_248 = arith.constant dense<0.000000e+00> : vector<10x8xf32>
    %438 = tpu.matmul %360, %429, %cst_248 {dimension_numbers = #tpu.dot_dimension_numbers<[1], [0], [0], [1], [0, 0, 1, 1], [], []>} : vector<10x32xf32>, vector<32x8xf32>, vector<10x8xf32> -> vector<10x8xf32>
    %439 = vector.broadcast %431 : vector<1x8xf32> to vector<10x8xf32>
    %440 = arith.addf %438, %439 : vector<10x8xf32>
    %c5_249 = arith.constant 5 : index
    %c0_250 = arith.constant 0 : index
    %c0_251 = arith.constant 0 : index
    %441 = vector.load %arg9[%c5_249, %c0_250, %c0_251] : memref<8x8x32xf32, #tpu.memory_space<vmem>>, vector<1x8x32xf32>
    %442 = vector.shape_cast %441 : vector<1x8x32xf32> to vector<8x32xf32>
    %443 = vector.extract_strided_slice %434 {offsets = [0, 0], sizes = [5, 8], strides = [1, 1]} : vector<10x8xf32> to vector<5x8xf32>
    %444 = vector.extract_strided_slice %437 {offsets = [0, 0], sizes = [5, 8], strides = [1, 1]} : vector<10x8xf32> to vector<5x8xf32>
    %445 = vector.extract_strided_slice %440 {offsets = [0, 0], sizes = [5, 8], strides = [1, 1]} : vector<10x8xf32> to vector<5x8xf32>
    %cst_252 = arith.constant dense<0.000000e+00> : vector<5x5xf32>
    %446 = tpu.matmul %443, %444, %cst_252 {dimension_numbers = #tpu.dot_dimension_numbers<[1], [1], [0], [0], [0, 0, 1, 0], [], []>} : vector<5x8xf32>, vector<5x8xf32>, vector<5x5xf32> -> vector<5x5xf32>
    %cst_253 = arith.constant 0.353553385 : f32
    %447 = vector.broadcast %cst_253 : f32 to vector<5x5xf32>
    %448 = arith.mulf %446, %447 : vector<5x5xf32>
    %cst_254 = arith.constant dense<0xFF800000> : vector<5xf32>
    %449 = vector.multi_reduction <maximumf>, %448, %cst_254 [1] : vector<5x5xf32> to vector<5xf32>
    %450 = vector.shape_cast %449 : vector<5xf32> to vector<5x1xf32>
    %451 = vector.broadcast %450 : vector<5x1xf32> to vector<5x5xf32>
    %452 = arith.subf %448, %451 : vector<5x5xf32>
    %453 = math.exp %452 : vector<5x5xf32>
    %cst_255 = arith.constant dense<0.000000e+00> : vector<5xf32>
    %454 = vector.multi_reduction <add>, %453, %cst_255 [1] : vector<5x5xf32> to vector<5xf32>
    %455 = vector.shape_cast %454 : vector<5xf32> to vector<5x1xf32>
    %456 = tpu.reciprocal %455 {approx = true} : vector<5x1xf32> -> vector<5x1xf32>
    %457 = vector.broadcast %456 : vector<5x1xf32> to vector<5x5xf32>
    %458 = arith.mulf %453, %457 : vector<5x5xf32>
    %cst_256 = arith.constant dense<0.000000e+00> : vector<5x8xf32>
    %459 = tpu.matmul %458, %445, %cst_256 {dimension_numbers = #tpu.dot_dimension_numbers<[1], [0], [0], [1], [0, 0, 1, 1], [], []>} : vector<5x5xf32>, vector<5x8xf32>, vector<5x8xf32> -> vector<5x8xf32>
    %cst_257 = arith.constant dense<0.000000e+00> : vector<5x32xf32>
    %460 = tpu.matmul %459, %442, %cst_257 {dimension_numbers = #tpu.dot_dimension_numbers<[1], [0], [0], [1], [0, 0, 1, 1], [], []>} : vector<5x8xf32>, vector<8x32xf32>, vector<5x32xf32> -> vector<5x32xf32>
    %461 = arith.addf %401, %460 : vector<5x32xf32>
    %462 = vector.extract_strided_slice %434 {offsets = [5, 0], sizes = [5, 8], strides = [1, 1]} : vector<10x8xf32> to vector<5x8xf32>
    %463 = vector.extract_strided_slice %437 {offsets = [5, 0], sizes = [5, 8], strides = [1, 1]} : vector<10x8xf32> to vector<5x8xf32>
    %464 = vector.extract_strided_slice %440 {offsets = [5, 0], sizes = [5, 8], strides = [1, 1]} : vector<10x8xf32> to vector<5x8xf32>
    %cst_258 = arith.constant dense<0.000000e+00> : vector<5x5xf32>
    %465 = tpu.matmul %462, %463, %cst_258 {dimension_numbers = #tpu.dot_dimension_numbers<[1], [1], [0], [0], [0, 0, 1, 0], [], []>} : vector<5x8xf32>, vector<5x8xf32>, vector<5x5xf32> -> vector<5x5xf32>
    %cst_259 = arith.constant 0.353553385 : f32
    %466 = vector.broadcast %cst_259 : f32 to vector<5x5xf32>
    %467 = arith.mulf %465, %466 : vector<5x5xf32>
    %cst_260 = arith.constant dense<0xFF800000> : vector<5xf32>
    %468 = vector.multi_reduction <maximumf>, %467, %cst_260 [1] : vector<5x5xf32> to vector<5xf32>
    %469 = vector.shape_cast %468 : vector<5xf32> to vector<5x1xf32>
    %470 = vector.broadcast %469 : vector<5x1xf32> to vector<5x5xf32>
    %471 = arith.subf %467, %470 : vector<5x5xf32>
    %472 = math.exp %471 : vector<5x5xf32>
    %cst_261 = arith.constant dense<0.000000e+00> : vector<5xf32>
    %473 = vector.multi_reduction <add>, %472, %cst_261 [1] : vector<5x5xf32> to vector<5xf32>
    %474 = vector.shape_cast %473 : vector<5xf32> to vector<5x1xf32>
    %475 = tpu.reciprocal %474 {approx = true} : vector<5x1xf32> -> vector<5x1xf32>
    %476 = vector.broadcast %475 : vector<5x1xf32> to vector<5x5xf32>
    %477 = arith.mulf %472, %476 : vector<5x5xf32>
    %cst_262 = arith.constant dense<0.000000e+00> : vector<5x8xf32>
    %478 = tpu.matmul %477, %464, %cst_262 {dimension_numbers = #tpu.dot_dimension_numbers<[1], [0], [0], [1], [0, 0, 1, 1], [], []>} : vector<5x5xf32>, vector<5x8xf32>, vector<5x8xf32> -> vector<5x8xf32>
    %cst_263 = arith.constant dense<0.000000e+00> : vector<5x32xf32>
    %479 = tpu.matmul %478, %442, %cst_263 {dimension_numbers = #tpu.dot_dimension_numbers<[1], [0], [0], [1], [0, 0, 1, 1], [], []>} : vector<5x8xf32>, vector<8x32xf32>, vector<5x32xf32> -> vector<5x32xf32>
    %480 = arith.addf %419, %479 : vector<5x32xf32>
    %c14 = arith.constant 14 : index
    %c0_264 = arith.constant 0 : index
    %c0_265 = arith.constant 0 : index
    %481 = vector.load %arg7[%c14, %c0_264, %c0_265] : memref<24x32x8xf32, #tpu.memory_space<vmem>>, vector<1x32x8xf32>
    %482 = vector.shape_cast %481 : vector<1x32x8xf32> to vector<32x8xf32>
    %c14_266 = arith.constant 14 : index
    %c0_267 = arith.constant 0 : index
    %c0_268 = arith.constant 0 : index
    %483 = vector.load %arg8[%c14_266, %c0_267, %c0_268] : memref<24x1x8xf32, #tpu.memory_space<vmem>>, vector<1x1x8xf32>
    %484 = vector.shape_cast %483 : vector<1x1x8xf32> to vector<1x8xf32>
    %c18 = arith.constant 18 : index
    %c0_269 = arith.constant 0 : index
    %c0_270 = arith.constant 0 : index
    %485 = vector.load %arg7[%c18, %c0_269, %c0_270] : memref<24x32x8xf32, #tpu.memory_space<vmem>>, vector<1x32x8xf32>
    %486 = vector.shape_cast %485 : vector<1x32x8xf32> to vector<32x8xf32>
    %c18_271 = arith.constant 18 : index
    %c0_272 = arith.constant 0 : index
    %c0_273 = arith.constant 0 : index
    %487 = vector.load %arg8[%c18_271, %c0_272, %c0_273] : memref<24x1x8xf32, #tpu.memory_space<vmem>>, vector<1x1x8xf32>
    %488 = vector.shape_cast %487 : vector<1x1x8xf32> to vector<1x8xf32>
    %c22 = arith.constant 22 : index
    %c0_274 = arith.constant 0 : index
    %c0_275 = arith.constant 0 : index
    %489 = vector.load %arg7[%c22, %c0_274, %c0_275] : memref<24x32x8xf32, #tpu.memory_space<vmem>>, vector<1x32x8xf32>
    %490 = vector.shape_cast %489 : vector<1x32x8xf32> to vector<32x8xf32>
    %c22_276 = arith.constant 22 : index
    %c0_277 = arith.constant 0 : index
    %c0_278 = arith.constant 0 : index
    %491 = vector.load %arg8[%c22_276, %c0_277, %c0_278] : memref<24x1x8xf32, #tpu.memory_space<vmem>>, vector<1x1x8xf32>
    %492 = vector.shape_cast %491 : vector<1x1x8xf32> to vector<1x8xf32>
    %cst_279 = arith.constant dense<0.000000e+00> : vector<10x8xf32>
    %493 = tpu.matmul %360, %482, %cst_279 {dimension_numbers = #tpu.dot_dimension_numbers<[1], [0], [0], [1], [0, 0, 1, 1], [], []>} : vector<10x32xf32>, vector<32x8xf32>, vector<10x8xf32> -> vector<10x8xf32>
    %494 = vector.broadcast %484 : vector<1x8xf32> to vector<10x8xf32>
    %495 = arith.addf %493, %494 : vector<10x8xf32>
    %cst_280 = arith.constant dense<0.000000e+00> : vector<10x8xf32>
    %496 = tpu.matmul %360, %486, %cst_280 {dimension_numbers = #tpu.dot_dimension_numbers<[1], [0], [0], [1], [0, 0, 1, 1], [], []>} : vector<10x32xf32>, vector<32x8xf32>, vector<10x8xf32> -> vector<10x8xf32>
    %497 = vector.broadcast %488 : vector<1x8xf32> to vector<10x8xf32>
    %498 = arith.addf %496, %497 : vector<10x8xf32>
    %cst_281 = arith.constant dense<0.000000e+00> : vector<10x8xf32>
    %499 = tpu.matmul %360, %490, %cst_281 {dimension_numbers = #tpu.dot_dimension_numbers<[1], [0], [0], [1], [0, 0, 1, 1], [], []>} : vector<10x32xf32>, vector<32x8xf32>, vector<10x8xf32> -> vector<10x8xf32>
    %500 = vector.broadcast %492 : vector<1x8xf32> to vector<10x8xf32>
    %501 = arith.addf %499, %500 : vector<10x8xf32>
    %c6_282 = arith.constant 6 : index
    %c0_283 = arith.constant 0 : index
    %c0_284 = arith.constant 0 : index
    %502 = vector.load %arg9[%c6_282, %c0_283, %c0_284] : memref<8x8x32xf32, #tpu.memory_space<vmem>>, vector<1x8x32xf32>
    %503 = vector.shape_cast %502 : vector<1x8x32xf32> to vector<8x32xf32>
    %504 = vector.extract_strided_slice %495 {offsets = [0, 0], sizes = [5, 8], strides = [1, 1]} : vector<10x8xf32> to vector<5x8xf32>
    %505 = vector.extract_strided_slice %498 {offsets = [0, 0], sizes = [5, 8], strides = [1, 1]} : vector<10x8xf32> to vector<5x8xf32>
    %506 = vector.extract_strided_slice %501 {offsets = [0, 0], sizes = [5, 8], strides = [1, 1]} : vector<10x8xf32> to vector<5x8xf32>
    %cst_285 = arith.constant dense<0.000000e+00> : vector<5x5xf32>
    %507 = tpu.matmul %504, %505, %cst_285 {dimension_numbers = #tpu.dot_dimension_numbers<[1], [1], [0], [0], [0, 0, 1, 0], [], []>} : vector<5x8xf32>, vector<5x8xf32>, vector<5x5xf32> -> vector<5x5xf32>
    %cst_286 = arith.constant 0.353553385 : f32
    %508 = vector.broadcast %cst_286 : f32 to vector<5x5xf32>
    %509 = arith.mulf %507, %508 : vector<5x5xf32>
    %cst_287 = arith.constant dense<0xFF800000> : vector<5xf32>
    %510 = vector.multi_reduction <maximumf>, %509, %cst_287 [1] : vector<5x5xf32> to vector<5xf32>
    %511 = vector.shape_cast %510 : vector<5xf32> to vector<5x1xf32>
    %512 = vector.broadcast %511 : vector<5x1xf32> to vector<5x5xf32>
    %513 = arith.subf %509, %512 : vector<5x5xf32>
    %514 = math.exp %513 : vector<5x5xf32>
    %cst_288 = arith.constant dense<0.000000e+00> : vector<5xf32>
    %515 = vector.multi_reduction <add>, %514, %cst_288 [1] : vector<5x5xf32> to vector<5xf32>
    %516 = vector.shape_cast %515 : vector<5xf32> to vector<5x1xf32>
    %517 = tpu.reciprocal %516 {approx = true} : vector<5x1xf32> -> vector<5x1xf32>
    %518 = vector.broadcast %517 : vector<5x1xf32> to vector<5x5xf32>
    %519 = arith.mulf %514, %518 : vector<5x5xf32>
    %cst_289 = arith.constant dense<0.000000e+00> : vector<5x8xf32>
    %520 = tpu.matmul %519, %506, %cst_289 {dimension_numbers = #tpu.dot_dimension_numbers<[1], [0], [0], [1], [0, 0, 1, 1], [], []>} : vector<5x5xf32>, vector<5x8xf32>, vector<5x8xf32> -> vector<5x8xf32>
    %cst_290 = arith.constant dense<0.000000e+00> : vector<5x32xf32>
    %521 = tpu.matmul %520, %503, %cst_290 {dimension_numbers = #tpu.dot_dimension_numbers<[1], [0], [0], [1], [0, 0, 1, 1], [], []>} : vector<5x8xf32>, vector<8x32xf32>, vector<5x32xf32> -> vector<5x32xf32>
    %522 = arith.addf %461, %521 : vector<5x32xf32>
    %523 = vector.extract_strided_slice %495 {offsets = [5, 0], sizes = [5, 8], strides = [1, 1]} : vector<10x8xf32> to vector<5x8xf32>
    %524 = vector.extract_strided_slice %498 {offsets = [5, 0], sizes = [5, 8], strides = [1, 1]} : vector<10x8xf32> to vector<5x8xf32>
    %525 = vector.extract_strided_slice %501 {offsets = [5, 0], sizes = [5, 8], strides = [1, 1]} : vector<10x8xf32> to vector<5x8xf32>
    %cst_291 = arith.constant dense<0.000000e+00> : vector<5x5xf32>
    %526 = tpu.matmul %523, %524, %cst_291 {dimension_numbers = #tpu.dot_dimension_numbers<[1], [1], [0], [0], [0, 0, 1, 0], [], []>} : vector<5x8xf32>, vector<5x8xf32>, vector<5x5xf32> -> vector<5x5xf32>
    %cst_292 = arith.constant 0.353553385 : f32
    %527 = vector.broadcast %cst_292 : f32 to vector<5x5xf32>
    %528 = arith.mulf %526, %527 : vector<5x5xf32>
    %cst_293 = arith.constant dense<0xFF800000> : vector<5xf32>
    %529 = vector.multi_reduction <maximumf>, %528, %cst_293 [1] : vector<5x5xf32> to vector<5xf32>
    %530 = vector.shape_cast %529 : vector<5xf32> to vector<5x1xf32>
    %531 = vector.broadcast %530 : vector<5x1xf32> to vector<5x5xf32>
    %532 = arith.subf %528, %531 : vector<5x5xf32>
    %533 = math.exp %532 : vector<5x5xf32>
    %cst_294 = arith.constant dense<0.000000e+00> : vector<5xf32>
    %534 = vector.multi_reduction <add>, %533, %cst_294 [1] : vector<5x5xf32> to vector<5xf32>
    %535 = vector.shape_cast %534 : vector<5xf32> to vector<5x1xf32>
    %536 = tpu.reciprocal %535 {approx = true} : vector<5x1xf32> -> vector<5x1xf32>
    %537 = vector.broadcast %536 : vector<5x1xf32> to vector<5x5xf32>
    %538 = arith.mulf %533, %537 : vector<5x5xf32>
    %cst_295 = arith.constant dense<0.000000e+00> : vector<5x8xf32>
    %539 = tpu.matmul %538, %525, %cst_295 {dimension_numbers = #tpu.dot_dimension_numbers<[1], [0], [0], [1], [0, 0, 1, 1], [], []>} : vector<5x5xf32>, vector<5x8xf32>, vector<5x8xf32> -> vector<5x8xf32>
    %cst_296 = arith.constant dense<0.000000e+00> : vector<5x32xf32>
    %540 = tpu.matmul %539, %503, %cst_296 {dimension_numbers = #tpu.dot_dimension_numbers<[1], [0], [0], [1], [0, 0, 1, 1], [], []>} : vector<5x8xf32>, vector<8x32xf32>, vector<5x32xf32> -> vector<5x32xf32>
    %541 = arith.addf %480, %540 : vector<5x32xf32>
    %c15 = arith.constant 15 : index
    %c0_297 = arith.constant 0 : index
    %c0_298 = arith.constant 0 : index
    %542 = vector.load %arg7[%c15, %c0_297, %c0_298] : memref<24x32x8xf32, #tpu.memory_space<vmem>>, vector<1x32x8xf32>
    %543 = vector.shape_cast %542 : vector<1x32x8xf32> to vector<32x8xf32>
    %c15_299 = arith.constant 15 : index
    %c0_300 = arith.constant 0 : index
    %c0_301 = arith.constant 0 : index
    %544 = vector.load %arg8[%c15_299, %c0_300, %c0_301] : memref<24x1x8xf32, #tpu.memory_space<vmem>>, vector<1x1x8xf32>
    %545 = vector.shape_cast %544 : vector<1x1x8xf32> to vector<1x8xf32>
    %c19 = arith.constant 19 : index
    %c0_302 = arith.constant 0 : index
    %c0_303 = arith.constant 0 : index
    %546 = vector.load %arg7[%c19, %c0_302, %c0_303] : memref<24x32x8xf32, #tpu.memory_space<vmem>>, vector<1x32x8xf32>
    %547 = vector.shape_cast %546 : vector<1x32x8xf32> to vector<32x8xf32>
    %c19_304 = arith.constant 19 : index
    %c0_305 = arith.constant 0 : index
    %c0_306 = arith.constant 0 : index
    %548 = vector.load %arg8[%c19_304, %c0_305, %c0_306] : memref<24x1x8xf32, #tpu.memory_space<vmem>>, vector<1x1x8xf32>
    %549 = vector.shape_cast %548 : vector<1x1x8xf32> to vector<1x8xf32>
    %c23 = arith.constant 23 : index
    %c0_307 = arith.constant 0 : index
    %c0_308 = arith.constant 0 : index
    %550 = vector.load %arg7[%c23, %c0_307, %c0_308] : memref<24x32x8xf32, #tpu.memory_space<vmem>>, vector<1x32x8xf32>
    %551 = vector.shape_cast %550 : vector<1x32x8xf32> to vector<32x8xf32>
    %c23_309 = arith.constant 23 : index
    %c0_310 = arith.constant 0 : index
    %c0_311 = arith.constant 0 : index
    %552 = vector.load %arg8[%c23_309, %c0_310, %c0_311] : memref<24x1x8xf32, #tpu.memory_space<vmem>>, vector<1x1x8xf32>
    %553 = vector.shape_cast %552 : vector<1x1x8xf32> to vector<1x8xf32>
    %cst_312 = arith.constant dense<0.000000e+00> : vector<10x8xf32>
    %554 = tpu.matmul %360, %543, %cst_312 {dimension_numbers = #tpu.dot_dimension_numbers<[1], [0], [0], [1], [0, 0, 1, 1], [], []>} : vector<10x32xf32>, vector<32x8xf32>, vector<10x8xf32> -> vector<10x8xf32>
    %555 = vector.broadcast %545 : vector<1x8xf32> to vector<10x8xf32>
    %556 = arith.addf %554, %555 : vector<10x8xf32>
    %cst_313 = arith.constant dense<0.000000e+00> : vector<10x8xf32>
    %557 = tpu.matmul %360, %547, %cst_313 {dimension_numbers = #tpu.dot_dimension_numbers<[1], [0], [0], [1], [0, 0, 1, 1], [], []>} : vector<10x32xf32>, vector<32x8xf32>, vector<10x8xf32> -> vector<10x8xf32>
    %558 = vector.broadcast %549 : vector<1x8xf32> to vector<10x8xf32>
    %559 = arith.addf %557, %558 : vector<10x8xf32>
    %cst_314 = arith.constant dense<0.000000e+00> : vector<10x8xf32>
    %560 = tpu.matmul %360, %551, %cst_314 {dimension_numbers = #tpu.dot_dimension_numbers<[1], [0], [0], [1], [0, 0, 1, 1], [], []>} : vector<10x32xf32>, vector<32x8xf32>, vector<10x8xf32> -> vector<10x8xf32>
    %561 = vector.broadcast %553 : vector<1x8xf32> to vector<10x8xf32>
    %562 = arith.addf %560, %561 : vector<10x8xf32>
    %c7_315 = arith.constant 7 : index
    %c0_316 = arith.constant 0 : index
    %c0_317 = arith.constant 0 : index
    %563 = vector.load %arg9[%c7_315, %c0_316, %c0_317] : memref<8x8x32xf32, #tpu.memory_space<vmem>>, vector<1x8x32xf32>
    %564 = vector.shape_cast %563 : vector<1x8x32xf32> to vector<8x32xf32>
    %565 = vector.extract_strided_slice %556 {offsets = [0, 0], sizes = [5, 8], strides = [1, 1]} : vector<10x8xf32> to vector<5x8xf32>
    %566 = vector.extract_strided_slice %559 {offsets = [0, 0], sizes = [5, 8], strides = [1, 1]} : vector<10x8xf32> to vector<5x8xf32>
    %567 = vector.extract_strided_slice %562 {offsets = [0, 0], sizes = [5, 8], strides = [1, 1]} : vector<10x8xf32> to vector<5x8xf32>
    %cst_318 = arith.constant dense<0.000000e+00> : vector<5x5xf32>
    %568 = tpu.matmul %565, %566, %cst_318 {dimension_numbers = #tpu.dot_dimension_numbers<[1], [1], [0], [0], [0, 0, 1, 0], [], []>} : vector<5x8xf32>, vector<5x8xf32>, vector<5x5xf32> -> vector<5x5xf32>
    %cst_319 = arith.constant 0.353553385 : f32
    %569 = vector.broadcast %cst_319 : f32 to vector<5x5xf32>
    %570 = arith.mulf %568, %569 : vector<5x5xf32>
    %cst_320 = arith.constant dense<0xFF800000> : vector<5xf32>
    %571 = vector.multi_reduction <maximumf>, %570, %cst_320 [1] : vector<5x5xf32> to vector<5xf32>
    %572 = vector.shape_cast %571 : vector<5xf32> to vector<5x1xf32>
    %573 = vector.broadcast %572 : vector<5x1xf32> to vector<5x5xf32>
    %574 = arith.subf %570, %573 : vector<5x5xf32>
    %575 = math.exp %574 : vector<5x5xf32>
    %cst_321 = arith.constant dense<0.000000e+00> : vector<5xf32>
    %576 = vector.multi_reduction <add>, %575, %cst_321 [1] : vector<5x5xf32> to vector<5xf32>
    %577 = vector.shape_cast %576 : vector<5xf32> to vector<5x1xf32>
    %578 = tpu.reciprocal %577 {approx = true} : vector<5x1xf32> -> vector<5x1xf32>
    %579 = vector.broadcast %578 : vector<5x1xf32> to vector<5x5xf32>
    %580 = arith.mulf %575, %579 : vector<5x5xf32>
    %cst_322 = arith.constant dense<0.000000e+00> : vector<5x8xf32>
    %581 = tpu.matmul %580, %567, %cst_322 {dimension_numbers = #tpu.dot_dimension_numbers<[1], [0], [0], [1], [0, 0, 1, 1], [], []>} : vector<5x5xf32>, vector<5x8xf32>, vector<5x8xf32> -> vector<5x8xf32>
    %cst_323 = arith.constant dense<0.000000e+00> : vector<5x32xf32>
    %582 = tpu.matmul %581, %564, %cst_323 {dimension_numbers = #tpu.dot_dimension_numbers<[1], [0], [0], [1], [0, 0, 1, 1], [], []>} : vector<5x8xf32>, vector<8x32xf32>, vector<5x32xf32> -> vector<5x32xf32>
    %583 = arith.addf %522, %582 : vector<5x32xf32>
    %584 = vector.extract_strided_slice %556 {offsets = [5, 0], sizes = [5, 8], strides = [1, 1]} : vector<10x8xf32> to vector<5x8xf32>
    %585 = vector.extract_strided_slice %559 {offsets = [5, 0], sizes = [5, 8], strides = [1, 1]} : vector<10x8xf32> to vector<5x8xf32>
    %586 = vector.extract_strided_slice %562 {offsets = [5, 0], sizes = [5, 8], strides = [1, 1]} : vector<10x8xf32> to vector<5x8xf32>
    %cst_324 = arith.constant dense<0.000000e+00> : vector<5x5xf32>
    %587 = tpu.matmul %584, %585, %cst_324 {dimension_numbers = #tpu.dot_dimension_numbers<[1], [1], [0], [0], [0, 0, 1, 0], [], []>} : vector<5x8xf32>, vector<5x8xf32>, vector<5x5xf32> -> vector<5x5xf32>
    %cst_325 = arith.constant 0.353553385 : f32
    %588 = vector.broadcast %cst_325 : f32 to vector<5x5xf32>
    %589 = arith.mulf %587, %588 : vector<5x5xf32>
    %cst_326 = arith.constant dense<0xFF800000> : vector<5xf32>
    %590 = vector.multi_reduction <maximumf>, %589, %cst_326 [1] : vector<5x5xf32> to vector<5xf32>
    %591 = vector.shape_cast %590 : vector<5xf32> to vector<5x1xf32>
    %592 = vector.broadcast %591 : vector<5x1xf32> to vector<5x5xf32>
    %593 = arith.subf %589, %592 : vector<5x5xf32>
    %594 = math.exp %593 : vector<5x5xf32>
    %cst_327 = arith.constant dense<0.000000e+00> : vector<5xf32>
    %595 = vector.multi_reduction <add>, %594, %cst_327 [1] : vector<5x5xf32> to vector<5xf32>
    %596 = vector.shape_cast %595 : vector<5xf32> to vector<5x1xf32>
    %597 = tpu.reciprocal %596 {approx = true} : vector<5x1xf32> -> vector<5x1xf32>
    %598 = vector.broadcast %597 : vector<5x1xf32> to vector<5x5xf32>
    %599 = arith.mulf %594, %598 : vector<5x5xf32>
    %cst_328 = arith.constant dense<0.000000e+00> : vector<5x8xf32>
    %600 = tpu.matmul %599, %586, %cst_328 {dimension_numbers = #tpu.dot_dimension_numbers<[1], [0], [0], [1], [0, 0, 1, 1], [], []>} : vector<5x5xf32>, vector<5x8xf32>, vector<5x8xf32> -> vector<5x8xf32>
    %cst_329 = arith.constant dense<0.000000e+00> : vector<5x32xf32>
    %601 = tpu.matmul %600, %564, %cst_329 {dimension_numbers = #tpu.dot_dimension_numbers<[1], [0], [0], [1], [0, 0, 1, 1], [], []>} : vector<5x8xf32>, vector<8x32xf32>, vector<5x32xf32> -> vector<5x32xf32>
    %602 = arith.addf %541, %601 : vector<5x32xf32>
    %603 = tpu.concatenate %583, %602 in 0 : vector<5x32xf32>, vector<5x32xf32> -> vector<10x32xf32>
    %604 = arith.addf %336, %603 : vector<10x32xf32>
    %c1_330 = arith.constant 1 : index
    %c0_331 = arith.constant 0 : index
    %c0_332 = arith.constant 0 : index
    %605 = vector.load %arg10[%c1_330, %c0_331, %c0_332] : memref<2x1x32xf32, #tpu.memory_space<vmem>>, vector<1x1x32xf32>
    %606 = vector.shape_cast %605 : vector<1x1x32xf32> to vector<1x32xf32>
    %607 = vector.broadcast %606 : vector<1x32xf32> to vector<10x32xf32>
    %608 = arith.addf %604, %607 : vector<10x32xf32>
    %c1_333 = arith.constant 1 : index
    %c0_334 = arith.constant 0 : index
    %c0_335 = arith.constant 0 : index
    %609 = vector.load %arg11[%c1_333, %c0_334, %c0_335] : memref<2x1x32xf32, #tpu.memory_space<vmem>>, vector<1x1x32xf32>
    %610 = vector.shape_cast %609 : vector<1x1x32xf32> to vector<1x32xf32>
    %c1_336 = arith.constant 1 : index
    %c0_337 = arith.constant 0 : index
    %c0_338 = arith.constant 0 : index
    %611 = vector.load %arg12[%c1_336, %c0_337, %c0_338] : memref<2x1x32xf32, #tpu.memory_space<vmem>>, vector<1x1x32xf32>
    %612 = vector.shape_cast %611 : vector<1x1x32xf32> to vector<1x32xf32>
    %cst_339 = arith.constant dense<0.000000e+00> : vector<10xf32>
    %613 = vector.multi_reduction <add>, %608, %cst_339 [1] : vector<10x32xf32> to vector<10xf32>
    %614 = vector.shape_cast %613 : vector<10xf32> to vector<10x1xf32>
    %cst_340 = arith.constant 3.200000e+01 : f32
    %615 = vector.broadcast %cst_340 : f32 to vector<10x1xf32>
    %616 = arith.divf %614, %615 : vector<10x1xf32>
    %617 = vector.broadcast %616 : vector<10x1xf32> to vector<10x32xf32>
    %618 = arith.subf %608, %617 : vector<10x32xf32>
    %619 = arith.mulf %618, %618 : vector<10x32xf32>
    %cst_341 = arith.constant dense<0.000000e+00> : vector<10xf32>
    %620 = vector.multi_reduction <add>, %619, %cst_341 [1] : vector<10x32xf32> to vector<10xf32>
    %621 = vector.shape_cast %620 : vector<10xf32> to vector<10x1xf32>
    %cst_342 = arith.constant 3.200000e+01 : f32
    %622 = vector.broadcast %cst_342 : f32 to vector<10x1xf32>
    %623 = arith.divf %621, %622 : vector<10x1xf32>
    %cst_343 = arith.constant 9.99999974E-6 : f32
    %624 = vector.broadcast %cst_343 : f32 to vector<10x1xf32>
    %625 = arith.addf %623, %624 : vector<10x1xf32>
    %626 = math.rsqrt %625 : vector<10x1xf32>
    %627 = vector.broadcast %626 : vector<10x1xf32> to vector<10x32xf32>
    %628 = arith.mulf %618, %627 : vector<10x32xf32>
    %629 = vector.broadcast %610 : vector<1x32xf32> to vector<10x32xf32>
    %630 = arith.mulf %628, %629 : vector<10x32xf32>
    %631 = vector.broadcast %612 : vector<1x32xf32> to vector<10x32xf32>
    %632 = arith.addf %630, %631 : vector<10x32xf32>
    %c1_344 = arith.constant 1 : index
    %c0_345 = arith.constant 0 : index
    %c0_346 = arith.constant 0 : index
    %633 = vector.load %arg13[%c1_344, %c0_345, %c0_346] : memref<2x32x128xf32, #tpu.memory_space<vmem>>, vector<1x32x128xf32>
    %634 = vector.shape_cast %633 : vector<1x32x128xf32> to vector<32x128xf32>
    %cst_347 = arith.constant dense<0.000000e+00> : vector<10x128xf32>
    %635 = tpu.matmul %632, %634, %cst_347 {dimension_numbers = #tpu.dot_dimension_numbers<[1], [0], [0], [1], [0, 0, 1, 1], [], []>} : vector<10x32xf32>, vector<32x128xf32>, vector<10x128xf32> -> vector<10x128xf32>
    %c1_348 = arith.constant 1 : index
    %c0_349 = arith.constant 0 : index
    %c0_350 = arith.constant 0 : index
    %636 = vector.load %arg14[%c1_348, %c0_349, %c0_350] : memref<2x1x128xf32, #tpu.memory_space<vmem>>, vector<1x1x128xf32>
    %637 = vector.shape_cast %636 : vector<1x1x128xf32> to vector<1x128xf32>
    %638 = vector.broadcast %637 : vector<1x128xf32> to vector<10x128xf32>
    %639 = arith.addf %635, %638 : vector<10x128xf32>
    %cst_351 = arith.constant 5.000000e-01 : f32
    %640 = vector.broadcast %cst_351 : f32 to vector<10x128xf32>
    %641 = arith.mulf %640, %639 : vector<10x128xf32>
    %cst_352 = arith.constant 4.471500e-02 : f32
    %642 = vector.broadcast %cst_352 : f32 to vector<10x128xf32>
    %643 = arith.mulf %642, %639 : vector<10x128xf32>
    %644 = arith.mulf %643, %639 : vector<10x128xf32>
    %645 = arith.mulf %644, %639 : vector<10x128xf32>
    %646 = arith.addf %639, %645 : vector<10x128xf32>
    %cst_353 = arith.constant 0.797884583 : f32
    %647 = vector.broadcast %cst_353 : f32 to vector<10x128xf32>
    %648 = arith.mulf %647, %646 : vector<10x128xf32>
    %649 = math.tanh %648 : vector<10x128xf32>
    %cst_354 = arith.constant 1.000000e+00 : f32
    %650 = vector.broadcast %cst_354 : f32 to vector<10x128xf32>
    %651 = arith.addf %650, %649 : vector<10x128xf32>
    %652 = arith.mulf %641, %651 : vector<10x128xf32>
    %c1_355 = arith.constant 1 : index
    %c0_356 = arith.constant 0 : index
    %c0_357 = arith.constant 0 : index
    %653 = vector.load %arg15[%c1_355, %c0_356, %c0_357] : memref<2x128x32xf32, #tpu.memory_space<vmem>>, vector<1x128x32xf32>
    %654 = vector.shape_cast %653 : vector<1x128x32xf32> to vector<128x32xf32>
    %cst_358 = arith.constant dense<0.000000e+00> : vector<10x32xf32>
    %655 = tpu.matmul %652, %654, %cst_358 {dimension_numbers = #tpu.dot_dimension_numbers<[1], [0], [0], [1], [0, 0, 1, 1], [], []>} : vector<10x128xf32>, vector<128x32xf32>, vector<10x32xf32> -> vector<10x32xf32>
    %c1_359 = arith.constant 1 : index
    %c0_360 = arith.constant 0 : index
    %c0_361 = arith.constant 0 : index
    %656 = vector.load %arg16[%c1_359, %c0_360, %c0_361] : memref<2x1x32xf32, #tpu.memory_space<vmem>>, vector<1x1x32xf32>
    %657 = vector.shape_cast %656 : vector<1x1x32xf32> to vector<1x32xf32>
    %658 = vector.broadcast %657 : vector<1x32xf32> to vector<10x32xf32>
    %659 = arith.addf %655, %658 : vector<10x32xf32>
    %660 = arith.addf %608, %659 : vector<10x32xf32>
    %c0_362 = arith.constant 0 : index
    %c0_363 = arith.constant 0 : index
    %661 = vector.load %arg17[%c0_362, %c0_363] : memref<1x32xf32, #tpu.memory_space<vmem>>, vector<1x32xf32>
    %c0_364 = arith.constant 0 : index
    %c0_365 = arith.constant 0 : index
    %662 = vector.load %arg18[%c0_364, %c0_365] : memref<1x32xf32, #tpu.memory_space<vmem>>, vector<1x32xf32>
    %cst_366 = arith.constant dense<0.000000e+00> : vector<10xf32>
    %663 = vector.multi_reduction <add>, %660, %cst_366 [1] : vector<10x32xf32> to vector<10xf32>
    %664 = vector.shape_cast %663 : vector<10xf32> to vector<10x1xf32>
    %cst_367 = arith.constant 3.200000e+01 : f32
    %665 = vector.broadcast %cst_367 : f32 to vector<10x1xf32>
    %666 = arith.divf %664, %665 : vector<10x1xf32>
    %667 = vector.broadcast %666 : vector<10x1xf32> to vector<10x32xf32>
    %668 = arith.subf %660, %667 : vector<10x32xf32>
    %669 = arith.mulf %668, %668 : vector<10x32xf32>
    %cst_368 = arith.constant dense<0.000000e+00> : vector<10xf32>
    %670 = vector.multi_reduction <add>, %669, %cst_368 [1] : vector<10x32xf32> to vector<10xf32>
    %671 = vector.shape_cast %670 : vector<10xf32> to vector<10x1xf32>
    %cst_369 = arith.constant 3.200000e+01 : f32
    %672 = vector.broadcast %cst_369 : f32 to vector<10x1xf32>
    %673 = arith.divf %671, %672 : vector<10x1xf32>
    %cst_370 = arith.constant 9.99999974E-6 : f32
    %674 = vector.broadcast %cst_370 : f32 to vector<10x1xf32>
    %675 = arith.addf %673, %674 : vector<10x1xf32>
    %676 = math.rsqrt %675 : vector<10x1xf32>
    %677 = vector.broadcast %676 : vector<10x1xf32> to vector<10x32xf32>
    %678 = arith.mulf %668, %677 : vector<10x32xf32>
    %679 = vector.broadcast %661 : vector<1x32xf32> to vector<10x32xf32>
    %680 = arith.mulf %678, %679 : vector<10x32xf32>
    %681 = vector.broadcast %662 : vector<1x32xf32> to vector<10x32xf32>
    %682 = arith.addf %680, %681 : vector<10x32xf32>
    %c0_371 = arith.constant 0 : index
    %c0_372 = arith.constant 0 : index
    %683 = vector.load %arg19[%c0_371, %c0_372] : memref<32x16xf32, #tpu.memory_space<vmem>>, vector<32x16xf32>
    %cst_373 = arith.constant dense<0.000000e+00> : vector<10x16xf32>
    %684 = tpu.matmul %682, %683, %cst_373 {dimension_numbers = #tpu.dot_dimension_numbers<[1], [0], [0], [1], [0, 0, 1, 1], [], []>} : vector<10x32xf32>, vector<32x16xf32>, vector<10x16xf32> -> vector<10x16xf32>
    %c0_374 = arith.constant 0 : index
    %c0_375 = arith.constant 0 : index
    %685 = vector.load %arg20[%c0_374, %c0_375] : memref<1x16xf32, #tpu.memory_space<vmem>>, vector<1x16xf32>
    %686 = vector.broadcast %685 : vector<1x16xf32> to vector<10x16xf32>
    %687 = arith.addf %684, %686 : vector<10x16xf32>
    %c0_376 = arith.constant 0 : index
    %c0_377 = arith.constant 0 : index
    %688 = vector.load %arg21[%c0_376, %c0_377] : memref<10x16xf32, #tpu.memory_space<vmem>>, vector<10x16xf32>
    tpu.vector_store %arg21[%c0_376, %c0_377], %687 {strides = array<i32>} : memref<10x16xf32, #tpu.memory_space<vmem>>, vector<10x16xf32>,
    return
  }
}

module attributes {stable_mosaic.version = 11 : i64} {
  func.func @_decoder_kernel(%arg0: memref<34x16xf32, #tpu.memory_space<vmem>>, %arg1: memref<2x1x16xf32, #tpu.memory_space<vmem>>, %arg2: memref<2x1x16xf32, #tpu.memory_space<vmem>>, %arg3: memref<12x16x8xf32, #tpu.memory_space<vmem>>, %arg4: memref<12x1x8xf32, #tpu.memory_space<vmem>>, %arg5: memref<4x8x16xf32, #tpu.memory_space<vmem>>, %arg6: memref<2x1x16xf32, #tpu.memory_space<vmem>>, %arg7: memref<2x1x16xf32, #tpu.memory_space<vmem>>, %arg8: memref<2x1x16xf32, #tpu.memory_space<vmem>>, %arg9: memref<2x16x64xf32, #tpu.memory_space<vmem>>, %arg10: memref<2x1x64xf32, #tpu.memory_space<vmem>>, %arg11: memref<2x64x16xf32, #tpu.memory_space<vmem>>, %arg12: memref<2x1x16xf32, #tpu.memory_space<vmem>>, %arg13: memref<1x16xf32, #tpu.memory_space<vmem>>, %arg14: memref<1x16xf32, #tpu.memory_space<vmem>>, %arg15: memref<16x48xf32, #tpu.memory_space<vmem>>, %arg16: memref<1x48xf32, #tpu.memory_space<vmem>>, %arg17: memref<34x48xf32, #tpu.memory_space<vmem>>, %arg18: memref<34x1xf32, #tpu.memory_space<vmem>>, %arg19: memref<34x48xf32, #tpu.memory_space<vmem>>, %arg20: memref<1x1xf32, #tpu.memory_space<vmem>>) attributes {dimension_semantics = [], scalar_prefetch = 0 : i64, scratch_operands = 0 : i64, tpu.core_type = #tpu.core_type<tc>} {
    %c0 = arith.constant 0 : index
    %c0_0 = arith.constant 0 : index
    %0 = vector.load %arg0[%c0, %c0_0] : memref<34x16xf32, #tpu.memory_space<vmem>>, vector<34x16xf32>
    %c0_1 = arith.constant 0 : index
    %c0_2 = arith.constant 0 : index
    %c0_3 = arith.constant 0 : index
    %1 = vector.load %arg1[%c0_1, %c0_2, %c0_3] : memref<2x1x16xf32, #tpu.memory_space<vmem>>, vector<1x1x16xf32>
    %2 = vector.shape_cast %1 : vector<1x1x16xf32> to vector<1x16xf32>
    %c0_4 = arith.constant 0 : index
    %c0_5 = arith.constant 0 : index
    %c0_6 = arith.constant 0 : index
    %3 = vector.load %arg2[%c0_4, %c0_5, %c0_6] : memref<2x1x16xf32, #tpu.memory_space<vmem>>, vector<1x1x16xf32>
    %4 = vector.shape_cast %3 : vector<1x1x16xf32> to vector<1x16xf32>
    %cst = arith.constant dense<0.000000e+00> : vector<34xf32>
    %5 = vector.multi_reduction <add>, %0, %cst [1] : vector<34x16xf32> to vector<34xf32>
    %6 = vector.shape_cast %5 : vector<34xf32> to vector<34x1xf32>
    %cst_7 = arith.constant 1.600000e+01 : f32
    %7 = vector.broadcast %cst_7 : f32 to vector<34x1xf32>
    %8 = arith.divf %6, %7 : vector<34x1xf32>
    %9 = vector.broadcast %8 : vector<34x1xf32> to vector<34x16xf32>
    %10 = arith.subf %0, %9 : vector<34x16xf32>
    %11 = arith.mulf %10, %10 : vector<34x16xf32>
    %cst_8 = arith.constant dense<0.000000e+00> : vector<34xf32>
    %12 = vector.multi_reduction <add>, %11, %cst_8 [1] : vector<34x16xf32> to vector<34xf32>
    %13 = vector.shape_cast %12 : vector<34xf32> to vector<34x1xf32>
    %cst_9 = arith.constant 1.600000e+01 : f32
    %14 = vector.broadcast %cst_9 : f32 to vector<34x1xf32>
    %15 = arith.divf %13, %14 : vector<34x1xf32>
    %cst_10 = arith.constant 9.99999974E-6 : f32
    %16 = vector.broadcast %cst_10 : f32 to vector<34x1xf32>
    %17 = arith.addf %15, %16 : vector<34x1xf32>
    %18 = math.rsqrt %17 : vector<34x1xf32>
    %19 = vector.broadcast %18 : vector<34x1xf32> to vector<34x16xf32>
    %20 = arith.mulf %10, %19 : vector<34x16xf32>
    %21 = vector.broadcast %2 : vector<1x16xf32> to vector<34x16xf32>
    %22 = arith.mulf %20, %21 : vector<34x16xf32>
    %23 = vector.broadcast %4 : vector<1x16xf32> to vector<34x16xf32>
    %24 = arith.addf %22, %23 : vector<34x16xf32>
    %c0_11 = arith.constant 0 : index
    %c0_12 = arith.constant 0 : index
    %c0_13 = arith.constant 0 : index
    %25 = vector.load %arg3[%c0_11, %c0_12, %c0_13] : memref<12x16x8xf32, #tpu.memory_space<vmem>>, vector<1x16x8xf32>
    %26 = vector.shape_cast %25 : vector<1x16x8xf32> to vector<16x8xf32>
    %c0_14 = arith.constant 0 : index
    %c0_15 = arith.constant 0 : index
    %c0_16 = arith.constant 0 : index
    %27 = vector.load %arg4[%c0_14, %c0_15, %c0_16] : memref<12x1x8xf32, #tpu.memory_space<vmem>>, vector<1x1x8xf32>
    %28 = vector.shape_cast %27 : vector<1x1x8xf32> to vector<1x8xf32>
    %c2 = arith.constant 2 : index
    %c0_17 = arith.constant 0 : index
    %c0_18 = arith.constant 0 : index
    %29 = vector.load %arg3[%c2, %c0_17, %c0_18] : memref<12x16x8xf32, #tpu.memory_space<vmem>>, vector<1x16x8xf32>
    %30 = vector.shape_cast %29 : vector<1x16x8xf32> to vector<16x8xf32>
    %c2_19 = arith.constant 2 : index
    %c0_20 = arith.constant 0 : index
    %c0_21 = arith.constant 0 : index
    %31 = vector.load %arg4[%c2_19, %c0_20, %c0_21] : memref<12x1x8xf32, #tpu.memory_space<vmem>>, vector<1x1x8xf32>
    %32 = vector.shape_cast %31 : vector<1x1x8xf32> to vector<1x8xf32>
    %c4 = arith.constant 4 : index
    %c0_22 = arith.constant 0 : index
    %c0_23 = arith.constant 0 : index
    %33 = vector.load %arg3[%c4, %c0_22, %c0_23] : memref<12x16x8xf32, #tpu.memory_space<vmem>>, vector<1x16x8xf32>
    %34 = vector.shape_cast %33 : vector<1x16x8xf32> to vector<16x8xf32>
    %c4_24 = arith.constant 4 : index
    %c0_25 = arith.constant 0 : index
    %c0_26 = arith.constant 0 : index
    %35 = vector.load %arg4[%c4_24, %c0_25, %c0_26] : memref<12x1x8xf32, #tpu.memory_space<vmem>>, vector<1x1x8xf32>
    %36 = vector.shape_cast %35 : vector<1x1x8xf32> to vector<1x8xf32>
    %cst_27 = arith.constant dense<0.000000e+00> : vector<34x8xf32>
    %37 = tpu.matmul %24, %26, %cst_27 {dimension_numbers = #tpu.dot_dimension_numbers<[1], [0], [0], [1], [0, 0, 1, 1], [], []>} : vector<34x16xf32>, vector<16x8xf32>, vector<34x8xf32> -> vector<34x8xf32>
    %38 = vector.broadcast %28 : vector<1x8xf32> to vector<34x8xf32>
    %39 = arith.addf %37, %38 : vector<34x8xf32>
    %cst_28 = arith.constant dense<0.000000e+00> : vector<34x8xf32>
    %40 = tpu.matmul %24, %30, %cst_28 {dimension_numbers = #tpu.dot_dimension_numbers<[1], [0], [0], [1], [0, 0, 1, 1], [], []>} : vector<34x16xf32>, vector<16x8xf32>, vector<34x8xf32> -> vector<34x8xf32>
    %41 = vector.broadcast %32 : vector<1x8xf32> to vector<34x8xf32>
    %42 = arith.addf %40, %41 : vector<34x8xf32>
    %cst_29 = arith.constant dense<0.000000e+00> : vector<34x8xf32>
    %43 = tpu.matmul %24, %34, %cst_29 {dimension_numbers = #tpu.dot_dimension_numbers<[1], [0], [0], [1], [0, 0, 1, 1], [], []>} : vector<34x16xf32>, vector<16x8xf32>, vector<34x8xf32> -> vector<34x8xf32>
    %44 = vector.broadcast %36 : vector<1x8xf32> to vector<34x8xf32>
    %45 = arith.addf %43, %44 : vector<34x8xf32>
    %c0_30 = arith.constant 0 : index
    %c0_31 = arith.constant 0 : index
    %c0_32 = arith.constant 0 : index
    %46 = vector.load %arg5[%c0_30, %c0_31, %c0_32] : memref<4x8x16xf32, #tpu.memory_space<vmem>>, vector<1x8x16xf32>
    %47 = vector.shape_cast %46 : vector<1x8x16xf32> to vector<8x16xf32>
    %48 = vector.extract_strided_slice %39 {offsets = [0, 0], sizes = [17, 8], strides = [1, 1]} : vector<34x8xf32> to vector<17x8xf32>
    %49 = vector.extract_strided_slice %42 {offsets = [0, 0], sizes = [17, 8], strides = [1, 1]} : vector<34x8xf32> to vector<17x8xf32>
    %50 = vector.extract_strided_slice %45 {offsets = [0, 0], sizes = [17, 8], strides = [1, 1]} : vector<34x8xf32> to vector<17x8xf32>
    %cst_33 = arith.constant dense<0.000000e+00> : vector<17x17xf32>
    %51 = tpu.matmul %48, %49, %cst_33 {dimension_numbers = #tpu.dot_dimension_numbers<[1], [1], [0], [0], [0, 0, 1, 0], [], []>} : vector<17x8xf32>, vector<17x8xf32>, vector<17x17xf32> -> vector<17x17xf32>
    %cst_34 = arith.constant 0.353553385 : f32
    %52 = vector.broadcast %cst_34 : f32 to vector<17x17xf32>
    %53 = arith.mulf %51, %52 : vector<17x17xf32>
    %cst_35 = arith.constant dense<0xFF800000> : vector<17xf32>
    %54 = vector.multi_reduction <maximumf>, %53, %cst_35 [1] : vector<17x17xf32> to vector<17xf32>
    %55 = vector.shape_cast %54 : vector<17xf32> to vector<17x1xf32>
    %56 = vector.broadcast %55 : vector<17x1xf32> to vector<17x17xf32>
    %57 = arith.subf %53, %56 : vector<17x17xf32>
    %58 = math.exp %57 : vector<17x17xf32>
    %cst_36 = arith.constant dense<0.000000e+00> : vector<17xf32>
    %59 = vector.multi_reduction <add>, %58, %cst_36 [1] : vector<17x17xf32> to vector<17xf32>
    %60 = vector.shape_cast %59 : vector<17xf32> to vector<17x1xf32>
    %61 = tpu.reciprocal %60 {approx = true} : vector<17x1xf32> -> vector<17x1xf32>
    %62 = vector.broadcast %61 : vector<17x1xf32> to vector<17x17xf32>
    %63 = arith.mulf %58, %62 : vector<17x17xf32>
    %cst_37 = arith.constant dense<0.000000e+00> : vector<17x8xf32>
    %64 = tpu.matmul %63, %50, %cst_37 {dimension_numbers = #tpu.dot_dimension_numbers<[1], [0], [0], [1], [0, 0, 1, 1], [], []>} : vector<17x17xf32>, vector<17x8xf32>, vector<17x8xf32> -> vector<17x8xf32>
    %cst_38 = arith.constant dense<0.000000e+00> : vector<17x16xf32>
    %65 = tpu.matmul %64, %47, %cst_38 {dimension_numbers = #tpu.dot_dimension_numbers<[1], [0], [0], [1], [0, 0, 1, 1], [], []>} : vector<17x8xf32>, vector<8x16xf32>, vector<17x16xf32> -> vector<17x16xf32>
    %66 = vector.extract_strided_slice %39 {offsets = [17, 0], sizes = [17, 8], strides = [1, 1]} : vector<34x8xf32> to vector<17x8xf32>
    %67 = vector.extract_strided_slice %42 {offsets = [17, 0], sizes = [17, 8], strides = [1, 1]} : vector<34x8xf32> to vector<17x8xf32>
    %68 = vector.extract_strided_slice %45 {offsets = [17, 0], sizes = [17, 8], strides = [1, 1]} : vector<34x8xf32> to vector<17x8xf32>
    %cst_39 = arith.constant dense<0.000000e+00> : vector<17x17xf32>
    %69 = tpu.matmul %66, %67, %cst_39 {dimension_numbers = #tpu.dot_dimension_numbers<[1], [1], [0], [0], [0, 0, 1, 0], [], []>} : vector<17x8xf32>, vector<17x8xf32>, vector<17x17xf32> -> vector<17x17xf32>
    %cst_40 = arith.constant 0.353553385 : f32
    %70 = vector.broadcast %cst_40 : f32 to vector<17x17xf32>
    %71 = arith.mulf %69, %70 : vector<17x17xf32>
    %cst_41 = arith.constant dense<0xFF800000> : vector<17xf32>
    %72 = vector.multi_reduction <maximumf>, %71, %cst_41 [1] : vector<17x17xf32> to vector<17xf32>
    %73 = vector.shape_cast %72 : vector<17xf32> to vector<17x1xf32>
    %74 = vector.broadcast %73 : vector<17x1xf32> to vector<17x17xf32>
    %75 = arith.subf %71, %74 : vector<17x17xf32>
    %76 = math.exp %75 : vector<17x17xf32>
    %cst_42 = arith.constant dense<0.000000e+00> : vector<17xf32>
    %77 = vector.multi_reduction <add>, %76, %cst_42 [1] : vector<17x17xf32> to vector<17xf32>
    %78 = vector.shape_cast %77 : vector<17xf32> to vector<17x1xf32>
    %79 = tpu.reciprocal %78 {approx = true} : vector<17x1xf32> -> vector<17x1xf32>
    %80 = vector.broadcast %79 : vector<17x1xf32> to vector<17x17xf32>
    %81 = arith.mulf %76, %80 : vector<17x17xf32>
    %cst_43 = arith.constant dense<0.000000e+00> : vector<17x8xf32>
    %82 = tpu.matmul %81, %68, %cst_43 {dimension_numbers = #tpu.dot_dimension_numbers<[1], [0], [0], [1], [0, 0, 1, 1], [], []>} : vector<17x17xf32>, vector<17x8xf32>, vector<17x8xf32> -> vector<17x8xf32>
    %cst_44 = arith.constant dense<0.000000e+00> : vector<17x16xf32>
    %83 = tpu.matmul %82, %47, %cst_44 {dimension_numbers = #tpu.dot_dimension_numbers<[1], [0], [0], [1], [0, 0, 1, 1], [], []>} : vector<17x8xf32>, vector<8x16xf32>, vector<17x16xf32> -> vector<17x16xf32>
    %c1 = arith.constant 1 : index
    %c0_45 = arith.constant 0 : index
    %c0_46 = arith.constant 0 : index
    %84 = vector.load %arg3[%c1, %c0_45, %c0_46] : memref<12x16x8xf32, #tpu.memory_space<vmem>>, vector<1x16x8xf32>
    %85 = vector.shape_cast %84 : vector<1x16x8xf32> to vector<16x8xf32>
    %c1_47 = arith.constant 1 : index
    %c0_48 = arith.constant 0 : index
    %c0_49 = arith.constant 0 : index
    %86 = vector.load %arg4[%c1_47, %c0_48, %c0_49] : memref<12x1x8xf32, #tpu.memory_space<vmem>>, vector<1x1x8xf32>
    %87 = vector.shape_cast %86 : vector<1x1x8xf32> to vector<1x8xf32>
    %c3 = arith.constant 3 : index
    %c0_50 = arith.constant 0 : index
    %c0_51 = arith.constant 0 : index
    %88 = vector.load %arg3[%c3, %c0_50, %c0_51] : memref<12x16x8xf32, #tpu.memory_space<vmem>>, vector<1x16x8xf32>
    %89 = vector.shape_cast %88 : vector<1x16x8xf32> to vector<16x8xf32>
    %c3_52 = arith.constant 3 : index
    %c0_53 = arith.constant 0 : index
    %c0_54 = arith.constant 0 : index
    %90 = vector.load %arg4[%c3_52, %c0_53, %c0_54] : memref<12x1x8xf32, #tpu.memory_space<vmem>>, vector<1x1x8xf32>
    %91 = vector.shape_cast %90 : vector<1x1x8xf32> to vector<1x8xf32>
    %c5 = arith.constant 5 : index
    %c0_55 = arith.constant 0 : index
    %c0_56 = arith.constant 0 : index
    %92 = vector.load %arg3[%c5, %c0_55, %c0_56] : memref<12x16x8xf32, #tpu.memory_space<vmem>>, vector<1x16x8xf32>
    %93 = vector.shape_cast %92 : vector<1x16x8xf32> to vector<16x8xf32>
    %c5_57 = arith.constant 5 : index
    %c0_58 = arith.constant 0 : index
    %c0_59 = arith.constant 0 : index
    %94 = vector.load %arg4[%c5_57, %c0_58, %c0_59] : memref<12x1x8xf32, #tpu.memory_space<vmem>>, vector<1x1x8xf32>
    %95 = vector.shape_cast %94 : vector<1x1x8xf32> to vector<1x8xf32>
    %cst_60 = arith.constant dense<0.000000e+00> : vector<34x8xf32>
    %96 = tpu.matmul %24, %85, %cst_60 {dimension_numbers = #tpu.dot_dimension_numbers<[1], [0], [0], [1], [0, 0, 1, 1], [], []>} : vector<34x16xf32>, vector<16x8xf32>, vector<34x8xf32> -> vector<34x8xf32>
    %97 = vector.broadcast %87 : vector<1x8xf32> to vector<34x8xf32>
    %98 = arith.addf %96, %97 : vector<34x8xf32>
    %cst_61 = arith.constant dense<0.000000e+00> : vector<34x8xf32>
    %99 = tpu.matmul %24, %89, %cst_61 {dimension_numbers = #tpu.dot_dimension_numbers<[1], [0], [0], [1], [0, 0, 1, 1], [], []>} : vector<34x16xf32>, vector<16x8xf32>, vector<34x8xf32> -> vector<34x8xf32>
    %100 = vector.broadcast %91 : vector<1x8xf32> to vector<34x8xf32>
    %101 = arith.addf %99, %100 : vector<34x8xf32>
    %cst_62 = arith.constant dense<0.000000e+00> : vector<34x8xf32>
    %102 = tpu.matmul %24, %93, %cst_62 {dimension_numbers = #tpu.dot_dimension_numbers<[1], [0], [0], [1], [0, 0, 1, 1], [], []>} : vector<34x16xf32>, vector<16x8xf32>, vector<34x8xf32> -> vector<34x8xf32>
    %103 = vector.broadcast %95 : vector<1x8xf32> to vector<34x8xf32>
    %104 = arith.addf %102, %103 : vector<34x8xf32>
    %c1_63 = arith.constant 1 : index
    %c0_64 = arith.constant 0 : index
    %c0_65 = arith.constant 0 : index
    %105 = vector.load %arg5[%c1_63, %c0_64, %c0_65] : memref<4x8x16xf32, #tpu.memory_space<vmem>>, vector<1x8x16xf32>
    %106 = vector.shape_cast %105 : vector<1x8x16xf32> to vector<8x16xf32>
    %107 = vector.extract_strided_slice %98 {offsets = [0, 0], sizes = [17, 8], strides = [1, 1]} : vector<34x8xf32> to vector<17x8xf32>
    %108 = vector.extract_strided_slice %101 {offsets = [0, 0], sizes = [17, 8], strides = [1, 1]} : vector<34x8xf32> to vector<17x8xf32>
    %109 = vector.extract_strided_slice %104 {offsets = [0, 0], sizes = [17, 8], strides = [1, 1]} : vector<34x8xf32> to vector<17x8xf32>
    %cst_66 = arith.constant dense<0.000000e+00> : vector<17x17xf32>
    %110 = tpu.matmul %107, %108, %cst_66 {dimension_numbers = #tpu.dot_dimension_numbers<[1], [1], [0], [0], [0, 0, 1, 0], [], []>} : vector<17x8xf32>, vector<17x8xf32>, vector<17x17xf32> -> vector<17x17xf32>
    %cst_67 = arith.constant 0.353553385 : f32
    %111 = vector.broadcast %cst_67 : f32 to vector<17x17xf32>
    %112 = arith.mulf %110, %111 : vector<17x17xf32>
    %cst_68 = arith.constant dense<0xFF800000> : vector<17xf32>
    %113 = vector.multi_reduction <maximumf>, %112, %cst_68 [1] : vector<17x17xf32> to vector<17xf32>
    %114 = vector.shape_cast %113 : vector<17xf32> to vector<17x1xf32>
    %115 = vector.broadcast %114 : vector<17x1xf32> to vector<17x17xf32>
    %116 = arith.subf %112, %115 : vector<17x17xf32>
    %117 = math.exp %116 : vector<17x17xf32>
    %cst_69 = arith.constant dense<0.000000e+00> : vector<17xf32>
    %118 = vector.multi_reduction <add>, %117, %cst_69 [1] : vector<17x17xf32> to vector<17xf32>
    %119 = vector.shape_cast %118 : vector<17xf32> to vector<17x1xf32>
    %120 = tpu.reciprocal %119 {approx = true} : vector<17x1xf32> -> vector<17x1xf32>
    %121 = vector.broadcast %120 : vector<17x1xf32> to vector<17x17xf32>
    %122 = arith.mulf %117, %121 : vector<17x17xf32>
    %cst_70 = arith.constant dense<0.000000e+00> : vector<17x8xf32>
    %123 = tpu.matmul %122, %109, %cst_70 {dimension_numbers = #tpu.dot_dimension_numbers<[1], [0], [0], [1], [0, 0, 1, 1], [], []>} : vector<17x17xf32>, vector<17x8xf32>, vector<17x8xf32> -> vector<17x8xf32>
    %cst_71 = arith.constant dense<0.000000e+00> : vector<17x16xf32>
    %124 = tpu.matmul %123, %106, %cst_71 {dimension_numbers = #tpu.dot_dimension_numbers<[1], [0], [0], [1], [0, 0, 1, 1], [], []>} : vector<17x8xf32>, vector<8x16xf32>, vector<17x16xf32> -> vector<17x16xf32>
    %125 = arith.addf %65, %124 : vector<17x16xf32>
    %126 = vector.extract_strided_slice %98 {offsets = [17, 0], sizes = [17, 8], strides = [1, 1]} : vector<34x8xf32> to vector<17x8xf32>
    %127 = vector.extract_strided_slice %101 {offsets = [17, 0], sizes = [17, 8], strides = [1, 1]} : vector<34x8xf32> to vector<17x8xf32>
    %128 = vector.extract_strided_slice %104 {offsets = [17, 0], sizes = [17, 8], strides = [1, 1]} : vector<34x8xf32> to vector<17x8xf32>
    %cst_72 = arith.constant dense<0.000000e+00> : vector<17x17xf32>
    %129 = tpu.matmul %126, %127, %cst_72 {dimension_numbers = #tpu.dot_dimension_numbers<[1], [1], [0], [0], [0, 0, 1, 0], [], []>} : vector<17x8xf32>, vector<17x8xf32>, vector<17x17xf32> -> vector<17x17xf32>
    %cst_73 = arith.constant 0.353553385 : f32
    %130 = vector.broadcast %cst_73 : f32 to vector<17x17xf32>
    %131 = arith.mulf %129, %130 : vector<17x17xf32>
    %cst_74 = arith.constant dense<0xFF800000> : vector<17xf32>
    %132 = vector.multi_reduction <maximumf>, %131, %cst_74 [1] : vector<17x17xf32> to vector<17xf32>
    %133 = vector.shape_cast %132 : vector<17xf32> to vector<17x1xf32>
    %134 = vector.broadcast %133 : vector<17x1xf32> to vector<17x17xf32>
    %135 = arith.subf %131, %134 : vector<17x17xf32>
    %136 = math.exp %135 : vector<17x17xf32>
    %cst_75 = arith.constant dense<0.000000e+00> : vector<17xf32>
    %137 = vector.multi_reduction <add>, %136, %cst_75 [1] : vector<17x17xf32> to vector<17xf32>
    %138 = vector.shape_cast %137 : vector<17xf32> to vector<17x1xf32>
    %139 = tpu.reciprocal %138 {approx = true} : vector<17x1xf32> -> vector<17x1xf32>
    %140 = vector.broadcast %139 : vector<17x1xf32> to vector<17x17xf32>
    %141 = arith.mulf %136, %140 : vector<17x17xf32>
    %cst_76 = arith.constant dense<0.000000e+00> : vector<17x8xf32>
    %142 = tpu.matmul %141, %128, %cst_76 {dimension_numbers = #tpu.dot_dimension_numbers<[1], [0], [0], [1], [0, 0, 1, 1], [], []>} : vector<17x17xf32>, vector<17x8xf32>, vector<17x8xf32> -> vector<17x8xf32>
    %cst_77 = arith.constant dense<0.000000e+00> : vector<17x16xf32>
    %143 = tpu.matmul %142, %106, %cst_77 {dimension_numbers = #tpu.dot_dimension_numbers<[1], [0], [0], [1], [0, 0, 1, 1], [], []>} : vector<17x8xf32>, vector<8x16xf32>, vector<17x16xf32> -> vector<17x16xf32>
    %144 = arith.addf %83, %143 : vector<17x16xf32>
    %145 = tpu.concatenate %125, %144 in 0 : vector<17x16xf32>, vector<17x16xf32> -> vector<34x16xf32>
    %146 = arith.addf %0, %145 : vector<34x16xf32>
    %c0_78 = arith.constant 0 : index
    %c0_79 = arith.constant 0 : index
    %c0_80 = arith.constant 0 : index
    %147 = vector.load %arg6[%c0_78, %c0_79, %c0_80] : memref<2x1x16xf32, #tpu.memory_space<vmem>>, vector<1x1x16xf32>
    %148 = vector.shape_cast %147 : vector<1x1x16xf32> to vector<1x16xf32>
    %149 = vector.broadcast %148 : vector<1x16xf32> to vector<34x16xf32>
    %150 = arith.addf %146, %149 : vector<34x16xf32>
    %c0_81 = arith.constant 0 : index
    %c0_82 = arith.constant 0 : index
    %c0_83 = arith.constant 0 : index
    %151 = vector.load %arg7[%c0_81, %c0_82, %c0_83] : memref<2x1x16xf32, #tpu.memory_space<vmem>>, vector<1x1x16xf32>
    %152 = vector.shape_cast %151 : vector<1x1x16xf32> to vector<1x16xf32>
    %c0_84 = arith.constant 0 : index
    %c0_85 = arith.constant 0 : index
    %c0_86 = arith.constant 0 : index
    %153 = vector.load %arg8[%c0_84, %c0_85, %c0_86] : memref<2x1x16xf32, #tpu.memory_space<vmem>>, vector<1x1x16xf32>
    %154 = vector.shape_cast %153 : vector<1x1x16xf32> to vector<1x16xf32>
    %cst_87 = arith.constant dense<0.000000e+00> : vector<34xf32>
    %155 = vector.multi_reduction <add>, %150, %cst_87 [1] : vector<34x16xf32> to vector<34xf32>
    %156 = vector.shape_cast %155 : vector<34xf32> to vector<34x1xf32>
    %cst_88 = arith.constant 1.600000e+01 : f32
    %157 = vector.broadcast %cst_88 : f32 to vector<34x1xf32>
    %158 = arith.divf %156, %157 : vector<34x1xf32>
    %159 = vector.broadcast %158 : vector<34x1xf32> to vector<34x16xf32>
    %160 = arith.subf %150, %159 : vector<34x16xf32>
    %161 = arith.mulf %160, %160 : vector<34x16xf32>
    %cst_89 = arith.constant dense<0.000000e+00> : vector<34xf32>
    %162 = vector.multi_reduction <add>, %161, %cst_89 [1] : vector<34x16xf32> to vector<34xf32>
    %163 = vector.shape_cast %162 : vector<34xf32> to vector<34x1xf32>
    %cst_90 = arith.constant 1.600000e+01 : f32
    %164 = vector.broadcast %cst_90 : f32 to vector<34x1xf32>
    %165 = arith.divf %163, %164 : vector<34x1xf32>
    %cst_91 = arith.constant 9.99999974E-6 : f32
    %166 = vector.broadcast %cst_91 : f32 to vector<34x1xf32>
    %167 = arith.addf %165, %166 : vector<34x1xf32>
    %168 = math.rsqrt %167 : vector<34x1xf32>
    %169 = vector.broadcast %168 : vector<34x1xf32> to vector<34x16xf32>
    %170 = arith.mulf %160, %169 : vector<34x16xf32>
    %171 = vector.broadcast %152 : vector<1x16xf32> to vector<34x16xf32>
    %172 = arith.mulf %170, %171 : vector<34x16xf32>
    %173 = vector.broadcast %154 : vector<1x16xf32> to vector<34x16xf32>
    %174 = arith.addf %172, %173 : vector<34x16xf32>
    %c0_92 = arith.constant 0 : index
    %c0_93 = arith.constant 0 : index
    %c0_94 = arith.constant 0 : index
    %175 = vector.load %arg9[%c0_92, %c0_93, %c0_94] : memref<2x16x64xf32, #tpu.memory_space<vmem>>, vector<1x16x64xf32>
    %176 = vector.shape_cast %175 : vector<1x16x64xf32> to vector<16x64xf32>
    %cst_95 = arith.constant dense<0.000000e+00> : vector<34x64xf32>
    %177 = tpu.matmul %174, %176, %cst_95 {dimension_numbers = #tpu.dot_dimension_numbers<[1], [0], [0], [1], [0, 0, 1, 1], [], []>} : vector<34x16xf32>, vector<16x64xf32>, vector<34x64xf32> -> vector<34x64xf32>
    %c0_96 = arith.constant 0 : index
    %c0_97 = arith.constant 0 : index
    %c0_98 = arith.constant 0 : index
    %178 = vector.load %arg10[%c0_96, %c0_97, %c0_98] : memref<2x1x64xf32, #tpu.memory_space<vmem>>, vector<1x1x64xf32>
    %179 = vector.shape_cast %178 : vector<1x1x64xf32> to vector<1x64xf32>
    %180 = vector.broadcast %179 : vector<1x64xf32> to vector<34x64xf32>
    %181 = arith.addf %177, %180 : vector<34x64xf32>
    %cst_99 = arith.constant 5.000000e-01 : f32
    %182 = vector.broadcast %cst_99 : f32 to vector<34x64xf32>
    %183 = arith.mulf %182, %181 : vector<34x64xf32>
    %cst_100 = arith.constant 4.471500e-02 : f32
    %184 = vector.broadcast %cst_100 : f32 to vector<34x64xf32>
    %185 = arith.mulf %184, %181 : vector<34x64xf32>
    %186 = arith.mulf %185, %181 : vector<34x64xf32>
    %187 = arith.mulf %186, %181 : vector<34x64xf32>
    %188 = arith.addf %181, %187 : vector<34x64xf32>
    %cst_101 = arith.constant 0.797884583 : f32
    %189 = vector.broadcast %cst_101 : f32 to vector<34x64xf32>
    %190 = arith.mulf %189, %188 : vector<34x64xf32>
    %191 = math.tanh %190 : vector<34x64xf32>
    %cst_102 = arith.constant 1.000000e+00 : f32
    %192 = vector.broadcast %cst_102 : f32 to vector<34x64xf32>
    %193 = arith.addf %192, %191 : vector<34x64xf32>
    %194 = arith.mulf %183, %193 : vector<34x64xf32>
    %c0_103 = arith.constant 0 : index
    %c0_104 = arith.constant 0 : index
    %c0_105 = arith.constant 0 : index
    %195 = vector.load %arg11[%c0_103, %c0_104, %c0_105] : memref<2x64x16xf32, #tpu.memory_space<vmem>>, vector<1x64x16xf32>
    %196 = vector.shape_cast %195 : vector<1x64x16xf32> to vector<64x16xf32>
    %cst_106 = arith.constant dense<0.000000e+00> : vector<34x16xf32>
    %197 = tpu.matmul %194, %196, %cst_106 {dimension_numbers = #tpu.dot_dimension_numbers<[1], [0], [0], [1], [0, 0, 1, 1], [], []>} : vector<34x64xf32>, vector<64x16xf32>, vector<34x16xf32> -> vector<34x16xf32>
    %c0_107 = arith.constant 0 : index
    %c0_108 = arith.constant 0 : index
    %c0_109 = arith.constant 0 : index
    %198 = vector.load %arg12[%c0_107, %c0_108, %c0_109] : memref<2x1x16xf32, #tpu.memory_space<vmem>>, vector<1x1x16xf32>
    %199 = vector.shape_cast %198 : vector<1x1x16xf32> to vector<1x16xf32>
    %200 = vector.broadcast %199 : vector<1x16xf32> to vector<34x16xf32>
    %201 = arith.addf %197, %200 : vector<34x16xf32>
    %202 = arith.addf %150, %201 : vector<34x16xf32>
    %c1_110 = arith.constant 1 : index
    %c0_111 = arith.constant 0 : index
    %c0_112 = arith.constant 0 : index
    %203 = vector.load %arg1[%c1_110, %c0_111, %c0_112] : memref<2x1x16xf32, #tpu.memory_space<vmem>>, vector<1x1x16xf32>
    %204 = vector.shape_cast %203 : vector<1x1x16xf32> to vector<1x16xf32>
    %c1_113 = arith.constant 1 : index
    %c0_114 = arith.constant 0 : index
    %c0_115 = arith.constant 0 : index
    %205 = vector.load %arg2[%c1_113, %c0_114, %c0_115] : memref<2x1x16xf32, #tpu.memory_space<vmem>>, vector<1x1x16xf32>
    %206 = vector.shape_cast %205 : vector<1x1x16xf32> to vector<1x16xf32>
    %cst_116 = arith.constant dense<0.000000e+00> : vector<34xf32>
    %207 = vector.multi_reduction <add>, %202, %cst_116 [1] : vector<34x16xf32> to vector<34xf32>
    %208 = vector.shape_cast %207 : vector<34xf32> to vector<34x1xf32>
    %cst_117 = arith.constant 1.600000e+01 : f32
    %209 = vector.broadcast %cst_117 : f32 to vector<34x1xf32>
    %210 = arith.divf %208, %209 : vector<34x1xf32>
    %211 = vector.broadcast %210 : vector<34x1xf32> to vector<34x16xf32>
    %212 = arith.subf %202, %211 : vector<34x16xf32>
    %213 = arith.mulf %212, %212 : vector<34x16xf32>
    %cst_118 = arith.constant dense<0.000000e+00> : vector<34xf32>
    %214 = vector.multi_reduction <add>, %213, %cst_118 [1] : vector<34x16xf32> to vector<34xf32>
    %215 = vector.shape_cast %214 : vector<34xf32> to vector<34x1xf32>
    %cst_119 = arith.constant 1.600000e+01 : f32
    %216 = vector.broadcast %cst_119 : f32 to vector<34x1xf32>
    %217 = arith.divf %215, %216 : vector<34x1xf32>
    %cst_120 = arith.constant 9.99999974E-6 : f32
    %218 = vector.broadcast %cst_120 : f32 to vector<34x1xf32>
    %219 = arith.addf %217, %218 : vector<34x1xf32>
    %220 = math.rsqrt %219 : vector<34x1xf32>
    %221 = vector.broadcast %220 : vector<34x1xf32> to vector<34x16xf32>
    %222 = arith.mulf %212, %221 : vector<34x16xf32>
    %223 = vector.broadcast %204 : vector<1x16xf32> to vector<34x16xf32>
    %224 = arith.mulf %222, %223 : vector<34x16xf32>
    %225 = vector.broadcast %206 : vector<1x16xf32> to vector<34x16xf32>
    %226 = arith.addf %224, %225 : vector<34x16xf32>
    %c6 = arith.constant 6 : index
    %c0_121 = arith.constant 0 : index
    %c0_122 = arith.constant 0 : index
    %227 = vector.load %arg3[%c6, %c0_121, %c0_122] : memref<12x16x8xf32, #tpu.memory_space<vmem>>, vector<1x16x8xf32>
    %228 = vector.shape_cast %227 : vector<1x16x8xf32> to vector<16x8xf32>
    %c6_123 = arith.constant 6 : index
    %c0_124 = arith.constant 0 : index
    %c0_125 = arith.constant 0 : index
    %229 = vector.load %arg4[%c6_123, %c0_124, %c0_125] : memref<12x1x8xf32, #tpu.memory_space<vmem>>, vector<1x1x8xf32>
    %230 = vector.shape_cast %229 : vector<1x1x8xf32> to vector<1x8xf32>
    %c8 = arith.constant 8 : index
    %c0_126 = arith.constant 0 : index
    %c0_127 = arith.constant 0 : index
    %231 = vector.load %arg3[%c8, %c0_126, %c0_127] : memref<12x16x8xf32, #tpu.memory_space<vmem>>, vector<1x16x8xf32>
    %232 = vector.shape_cast %231 : vector<1x16x8xf32> to vector<16x8xf32>
    %c8_128 = arith.constant 8 : index
    %c0_129 = arith.constant 0 : index
    %c0_130 = arith.constant 0 : index
    %233 = vector.load %arg4[%c8_128, %c0_129, %c0_130] : memref<12x1x8xf32, #tpu.memory_space<vmem>>, vector<1x1x8xf32>
    %234 = vector.shape_cast %233 : vector<1x1x8xf32> to vector<1x8xf32>
    %c10 = arith.constant 10 : index
    %c0_131 = arith.constant 0 : index
    %c0_132 = arith.constant 0 : index
    %235 = vector.load %arg3[%c10, %c0_131, %c0_132] : memref<12x16x8xf32, #tpu.memory_space<vmem>>, vector<1x16x8xf32>
    %236 = vector.shape_cast %235 : vector<1x16x8xf32> to vector<16x8xf32>
    %c10_133 = arith.constant 10 : index
    %c0_134 = arith.constant 0 : index
    %c0_135 = arith.constant 0 : index
    %237 = vector.load %arg4[%c10_133, %c0_134, %c0_135] : memref<12x1x8xf32, #tpu.memory_space<vmem>>, vector<1x1x8xf32>
    %238 = vector.shape_cast %237 : vector<1x1x8xf32> to vector<1x8xf32>
    %cst_136 = arith.constant dense<0.000000e+00> : vector<34x8xf32>
    %239 = tpu.matmul %226, %228, %cst_136 {dimension_numbers = #tpu.dot_dimension_numbers<[1], [0], [0], [1], [0, 0, 1, 1], [], []>} : vector<34x16xf32>, vector<16x8xf32>, vector<34x8xf32> -> vector<34x8xf32>
    %240 = vector.broadcast %230 : vector<1x8xf32> to vector<34x8xf32>
    %241 = arith.addf %239, %240 : vector<34x8xf32>
    %cst_137 = arith.constant dense<0.000000e+00> : vector<34x8xf32>
    %242 = tpu.matmul %226, %232, %cst_137 {dimension_numbers = #tpu.dot_dimension_numbers<[1], [0], [0], [1], [0, 0, 1, 1], [], []>} : vector<34x16xf32>, vector<16x8xf32>, vector<34x8xf32> -> vector<34x8xf32>
    %243 = vector.broadcast %234 : vector<1x8xf32> to vector<34x8xf32>
    %244 = arith.addf %242, %243 : vector<34x8xf32>
    %cst_138 = arith.constant dense<0.000000e+00> : vector<34x8xf32>
    %245 = tpu.matmul %226, %236, %cst_138 {dimension_numbers = #tpu.dot_dimension_numbers<[1], [0], [0], [1], [0, 0, 1, 1], [], []>} : vector<34x16xf32>, vector<16x8xf32>, vector<34x8xf32> -> vector<34x8xf32>
    %246 = vector.broadcast %238 : vector<1x8xf32> to vector<34x8xf32>
    %247 = arith.addf %245, %246 : vector<34x8xf32>
    %c2_139 = arith.constant 2 : index
    %c0_140 = arith.constant 0 : index
    %c0_141 = arith.constant 0 : index
    %248 = vector.load %arg5[%c2_139, %c0_140, %c0_141] : memref<4x8x16xf32, #tpu.memory_space<vmem>>, vector<1x8x16xf32>
    %249 = vector.shape_cast %248 : vector<1x8x16xf32> to vector<8x16xf32>
    %250 = vector.extract_strided_slice %241 {offsets = [0, 0], sizes = [17, 8], strides = [1, 1]} : vector<34x8xf32> to vector<17x8xf32>
    %251 = vector.extract_strided_slice %244 {offsets = [0, 0], sizes = [17, 8], strides = [1, 1]} : vector<34x8xf32> to vector<17x8xf32>
    %252 = vector.extract_strided_slice %247 {offsets = [0, 0], sizes = [17, 8], strides = [1, 1]} : vector<34x8xf32> to vector<17x8xf32>
    %cst_142 = arith.constant dense<0.000000e+00> : vector<17x17xf32>
    %253 = tpu.matmul %250, %251, %cst_142 {dimension_numbers = #tpu.dot_dimension_numbers<[1], [1], [0], [0], [0, 0, 1, 0], [], []>} : vector<17x8xf32>, vector<17x8xf32>, vector<17x17xf32> -> vector<17x17xf32>
    %cst_143 = arith.constant 0.353553385 : f32
    %254 = vector.broadcast %cst_143 : f32 to vector<17x17xf32>
    %255 = arith.mulf %253, %254 : vector<17x17xf32>
    %cst_144 = arith.constant dense<0xFF800000> : vector<17xf32>
    %256 = vector.multi_reduction <maximumf>, %255, %cst_144 [1] : vector<17x17xf32> to vector<17xf32>
    %257 = vector.shape_cast %256 : vector<17xf32> to vector<17x1xf32>
    %258 = vector.broadcast %257 : vector<17x1xf32> to vector<17x17xf32>
    %259 = arith.subf %255, %258 : vector<17x17xf32>
    %260 = math.exp %259 : vector<17x17xf32>
    %cst_145 = arith.constant dense<0.000000e+00> : vector<17xf32>
    %261 = vector.multi_reduction <add>, %260, %cst_145 [1] : vector<17x17xf32> to vector<17xf32>
    %262 = vector.shape_cast %261 : vector<17xf32> to vector<17x1xf32>
    %263 = tpu.reciprocal %262 {approx = true} : vector<17x1xf32> -> vector<17x1xf32>
    %264 = vector.broadcast %263 : vector<17x1xf32> to vector<17x17xf32>
    %265 = arith.mulf %260, %264 : vector<17x17xf32>
    %cst_146 = arith.constant dense<0.000000e+00> : vector<17x8xf32>
    %266 = tpu.matmul %265, %252, %cst_146 {dimension_numbers = #tpu.dot_dimension_numbers<[1], [0], [0], [1], [0, 0, 1, 1], [], []>} : vector<17x17xf32>, vector<17x8xf32>, vector<17x8xf32> -> vector<17x8xf32>
    %cst_147 = arith.constant dense<0.000000e+00> : vector<17x16xf32>
    %267 = tpu.matmul %266, %249, %cst_147 {dimension_numbers = #tpu.dot_dimension_numbers<[1], [0], [0], [1], [0, 0, 1, 1], [], []>} : vector<17x8xf32>, vector<8x16xf32>, vector<17x16xf32> -> vector<17x16xf32>
    %268 = vector.extract_strided_slice %241 {offsets = [17, 0], sizes = [17, 8], strides = [1, 1]} : vector<34x8xf32> to vector<17x8xf32>
    %269 = vector.extract_strided_slice %244 {offsets = [17, 0], sizes = [17, 8], strides = [1, 1]} : vector<34x8xf32> to vector<17x8xf32>
    %270 = vector.extract_strided_slice %247 {offsets = [17, 0], sizes = [17, 8], strides = [1, 1]} : vector<34x8xf32> to vector<17x8xf32>
    %cst_148 = arith.constant dense<0.000000e+00> : vector<17x17xf32>
    %271 = tpu.matmul %268, %269, %cst_148 {dimension_numbers = #tpu.dot_dimension_numbers<[1], [1], [0], [0], [0, 0, 1, 0], [], []>} : vector<17x8xf32>, vector<17x8xf32>, vector<17x17xf32> -> vector<17x17xf32>
    %cst_149 = arith.constant 0.353553385 : f32
    %272 = vector.broadcast %cst_149 : f32 to vector<17x17xf32>
    %273 = arith.mulf %271, %272 : vector<17x17xf32>
    %cst_150 = arith.constant dense<0xFF800000> : vector<17xf32>
    %274 = vector.multi_reduction <maximumf>, %273, %cst_150 [1] : vector<17x17xf32> to vector<17xf32>
    %275 = vector.shape_cast %274 : vector<17xf32> to vector<17x1xf32>
    %276 = vector.broadcast %275 : vector<17x1xf32> to vector<17x17xf32>
    %277 = arith.subf %273, %276 : vector<17x17xf32>
    %278 = math.exp %277 : vector<17x17xf32>
    %cst_151 = arith.constant dense<0.000000e+00> : vector<17xf32>
    %279 = vector.multi_reduction <add>, %278, %cst_151 [1] : vector<17x17xf32> to vector<17xf32>
    %280 = vector.shape_cast %279 : vector<17xf32> to vector<17x1xf32>
    %281 = tpu.reciprocal %280 {approx = true} : vector<17x1xf32> -> vector<17x1xf32>
    %282 = vector.broadcast %281 : vector<17x1xf32> to vector<17x17xf32>
    %283 = arith.mulf %278, %282 : vector<17x17xf32>
    %cst_152 = arith.constant dense<0.000000e+00> : vector<17x8xf32>
    %284 = tpu.matmul %283, %270, %cst_152 {dimension_numbers = #tpu.dot_dimension_numbers<[1], [0], [0], [1], [0, 0, 1, 1], [], []>} : vector<17x17xf32>, vector<17x8xf32>, vector<17x8xf32> -> vector<17x8xf32>
    %cst_153 = arith.constant dense<0.000000e+00> : vector<17x16xf32>
    %285 = tpu.matmul %284, %249, %cst_153 {dimension_numbers = #tpu.dot_dimension_numbers<[1], [0], [0], [1], [0, 0, 1, 1], [], []>} : vector<17x8xf32>, vector<8x16xf32>, vector<17x16xf32> -> vector<17x16xf32>
    %c7 = arith.constant 7 : index
    %c0_154 = arith.constant 0 : index
    %c0_155 = arith.constant 0 : index
    %286 = vector.load %arg3[%c7, %c0_154, %c0_155] : memref<12x16x8xf32, #tpu.memory_space<vmem>>, vector<1x16x8xf32>
    %287 = vector.shape_cast %286 : vector<1x16x8xf32> to vector<16x8xf32>
    %c7_156 = arith.constant 7 : index
    %c0_157 = arith.constant 0 : index
    %c0_158 = arith.constant 0 : index
    %288 = vector.load %arg4[%c7_156, %c0_157, %c0_158] : memref<12x1x8xf32, #tpu.memory_space<vmem>>, vector<1x1x8xf32>
    %289 = vector.shape_cast %288 : vector<1x1x8xf32> to vector<1x8xf32>
    %c9 = arith.constant 9 : index
    %c0_159 = arith.constant 0 : index
    %c0_160 = arith.constant 0 : index
    %290 = vector.load %arg3[%c9, %c0_159, %c0_160] : memref<12x16x8xf32, #tpu.memory_space<vmem>>, vector<1x16x8xf32>
    %291 = vector.shape_cast %290 : vector<1x16x8xf32> to vector<16x8xf32>
    %c9_161 = arith.constant 9 : index
    %c0_162 = arith.constant 0 : index
    %c0_163 = arith.constant 0 : index
    %292 = vector.load %arg4[%c9_161, %c0_162, %c0_163] : memref<12x1x8xf32, #tpu.memory_space<vmem>>, vector<1x1x8xf32>
    %293 = vector.shape_cast %292 : vector<1x1x8xf32> to vector<1x8xf32>
    %c11 = arith.constant 11 : index
    %c0_164 = arith.constant 0 : index
    %c0_165 = arith.constant 0 : index
    %294 = vector.load %arg3[%c11, %c0_164, %c0_165] : memref<12x16x8xf32, #tpu.memory_space<vmem>>, vector<1x16x8xf32>
    %295 = vector.shape_cast %294 : vector<1x16x8xf32> to vector<16x8xf32>
    %c11_166 = arith.constant 11 : index
    %c0_167 = arith.constant 0 : index
    %c0_168 = arith.constant 0 : index
    %296 = vector.load %arg4[%c11_166, %c0_167, %c0_168] : memref<12x1x8xf32, #tpu.memory_space<vmem>>, vector<1x1x8xf32>
    %297 = vector.shape_cast %296 : vector<1x1x8xf32> to vector<1x8xf32>
    %cst_169 = arith.constant dense<0.000000e+00> : vector<34x8xf32>
    %298 = tpu.matmul %226, %287, %cst_169 {dimension_numbers = #tpu.dot_dimension_numbers<[1], [0], [0], [1], [0, 0, 1, 1], [], []>} : vector<34x16xf32>, vector<16x8xf32>, vector<34x8xf32> -> vector<34x8xf32>
    %299 = vector.broadcast %289 : vector<1x8xf32> to vector<34x8xf32>
    %300 = arith.addf %298, %299 : vector<34x8xf32>
    %cst_170 = arith.constant dense<0.000000e+00> : vector<34x8xf32>
    %301 = tpu.matmul %226, %291, %cst_170 {dimension_numbers = #tpu.dot_dimension_numbers<[1], [0], [0], [1], [0, 0, 1, 1], [], []>} : vector<34x16xf32>, vector<16x8xf32>, vector<34x8xf32> -> vector<34x8xf32>
    %302 = vector.broadcast %293 : vector<1x8xf32> to vector<34x8xf32>
    %303 = arith.addf %301, %302 : vector<34x8xf32>
    %cst_171 = arith.constant dense<0.000000e+00> : vector<34x8xf32>
    %304 = tpu.matmul %226, %295, %cst_171 {dimension_numbers = #tpu.dot_dimension_numbers<[1], [0], [0], [1], [0, 0, 1, 1], [], []>} : vector<34x16xf32>, vector<16x8xf32>, vector<34x8xf32> -> vector<34x8xf32>
    %305 = vector.broadcast %297 : vector<1x8xf32> to vector<34x8xf32>
    %306 = arith.addf %304, %305 : vector<34x8xf32>
    %c3_172 = arith.constant 3 : index
    %c0_173 = arith.constant 0 : index
    %c0_174 = arith.constant 0 : index
    %307 = vector.load %arg5[%c3_172, %c0_173, %c0_174] : memref<4x8x16xf32, #tpu.memory_space<vmem>>, vector<1x8x16xf32>
    %308 = vector.shape_cast %307 : vector<1x8x16xf32> to vector<8x16xf32>
    %309 = vector.extract_strided_slice %300 {offsets = [0, 0], sizes = [17, 8], strides = [1, 1]} : vector<34x8xf32> to vector<17x8xf32>
    %310 = vector.extract_strided_slice %303 {offsets = [0, 0], sizes = [17, 8], strides = [1, 1]} : vector<34x8xf32> to vector<17x8xf32>
    %311 = vector.extract_strided_slice %306 {offsets = [0, 0], sizes = [17, 8], strides = [1, 1]} : vector<34x8xf32> to vector<17x8xf32>
    %cst_175 = arith.constant dense<0.000000e+00> : vector<17x17xf32>
    %312 = tpu.matmul %309, %310, %cst_175 {dimension_numbers = #tpu.dot_dimension_numbers<[1], [1], [0], [0], [0, 0, 1, 0], [], []>} : vector<17x8xf32>, vector<17x8xf32>, vector<17x17xf32> -> vector<17x17xf32>
    %cst_176 = arith.constant 0.353553385 : f32
    %313 = vector.broadcast %cst_176 : f32 to vector<17x17xf32>
    %314 = arith.mulf %312, %313 : vector<17x17xf32>
    %cst_177 = arith.constant dense<0xFF800000> : vector<17xf32>
    %315 = vector.multi_reduction <maximumf>, %314, %cst_177 [1] : vector<17x17xf32> to vector<17xf32>
    %316 = vector.shape_cast %315 : vector<17xf32> to vector<17x1xf32>
    %317 = vector.broadcast %316 : vector<17x1xf32> to vector<17x17xf32>
    %318 = arith.subf %314, %317 : vector<17x17xf32>
    %319 = math.exp %318 : vector<17x17xf32>
    %cst_178 = arith.constant dense<0.000000e+00> : vector<17xf32>
    %320 = vector.multi_reduction <add>, %319, %cst_178 [1] : vector<17x17xf32> to vector<17xf32>
    %321 = vector.shape_cast %320 : vector<17xf32> to vector<17x1xf32>
    %322 = tpu.reciprocal %321 {approx = true} : vector<17x1xf32> -> vector<17x1xf32>
    %323 = vector.broadcast %322 : vector<17x1xf32> to vector<17x17xf32>
    %324 = arith.mulf %319, %323 : vector<17x17xf32>
    %cst_179 = arith.constant dense<0.000000e+00> : vector<17x8xf32>
    %325 = tpu.matmul %324, %311, %cst_179 {dimension_numbers = #tpu.dot_dimension_numbers<[1], [0], [0], [1], [0, 0, 1, 1], [], []>} : vector<17x17xf32>, vector<17x8xf32>, vector<17x8xf32> -> vector<17x8xf32>
    %cst_180 = arith.constant dense<0.000000e+00> : vector<17x16xf32>
    %326 = tpu.matmul %325, %308, %cst_180 {dimension_numbers = #tpu.dot_dimension_numbers<[1], [0], [0], [1], [0, 0, 1, 1], [], []>} : vector<17x8xf32>, vector<8x16xf32>, vector<17x16xf32> -> vector<17x16xf32>
    %327 = arith.addf %267, %326 : vector<17x16xf32>
    %328 = vector.extract_strided_slice %300 {offsets = [17, 0], sizes = [17, 8], strides = [1, 1]} : vector<34x8xf32> to vector<17x8xf32>
    %329 = vector.extract_strided_slice %303 {offsets = [17, 0], sizes = [17, 8], strides = [1, 1]} : vector<34x8xf32> to vector<17x8xf32>
    %330 = vector.extract_strided_slice %306 {offsets = [17, 0], sizes = [17, 8], strides = [1, 1]} : vector<34x8xf32> to vector<17x8xf32>
    %cst_181 = arith.constant dense<0.000000e+00> : vector<17x17xf32>
    %331 = tpu.matmul %328, %329, %cst_181 {dimension_numbers = #tpu.dot_dimension_numbers<[1], [1], [0], [0], [0, 0, 1, 0], [], []>} : vector<17x8xf32>, vector<17x8xf32>, vector<17x17xf32> -> vector<17x17xf32>
    %cst_182 = arith.constant 0.353553385 : f32
    %332 = vector.broadcast %cst_182 : f32 to vector<17x17xf32>
    %333 = arith.mulf %331, %332 : vector<17x17xf32>
    %cst_183 = arith.constant dense<0xFF800000> : vector<17xf32>
    %334 = vector.multi_reduction <maximumf>, %333, %cst_183 [1] : vector<17x17xf32> to vector<17xf32>
    %335 = vector.shape_cast %334 : vector<17xf32> to vector<17x1xf32>
    %336 = vector.broadcast %335 : vector<17x1xf32> to vector<17x17xf32>
    %337 = arith.subf %333, %336 : vector<17x17xf32>
    %338 = math.exp %337 : vector<17x17xf32>
    %cst_184 = arith.constant dense<0.000000e+00> : vector<17xf32>
    %339 = vector.multi_reduction <add>, %338, %cst_184 [1] : vector<17x17xf32> to vector<17xf32>
    %340 = vector.shape_cast %339 : vector<17xf32> to vector<17x1xf32>
    %341 = tpu.reciprocal %340 {approx = true} : vector<17x1xf32> -> vector<17x1xf32>
    %342 = vector.broadcast %341 : vector<17x1xf32> to vector<17x17xf32>
    %343 = arith.mulf %338, %342 : vector<17x17xf32>
    %cst_185 = arith.constant dense<0.000000e+00> : vector<17x8xf32>
    %344 = tpu.matmul %343, %330, %cst_185 {dimension_numbers = #tpu.dot_dimension_numbers<[1], [0], [0], [1], [0, 0, 1, 1], [], []>} : vector<17x17xf32>, vector<17x8xf32>, vector<17x8xf32> -> vector<17x8xf32>
    %cst_186 = arith.constant dense<0.000000e+00> : vector<17x16xf32>
    %345 = tpu.matmul %344, %308, %cst_186 {dimension_numbers = #tpu.dot_dimension_numbers<[1], [0], [0], [1], [0, 0, 1, 1], [], []>} : vector<17x8xf32>, vector<8x16xf32>, vector<17x16xf32> -> vector<17x16xf32>
    %346 = arith.addf %285, %345 : vector<17x16xf32>
    %347 = tpu.concatenate %327, %346 in 0 : vector<17x16xf32>, vector<17x16xf32> -> vector<34x16xf32>
    %348 = arith.addf %202, %347 : vector<34x16xf32>
    %c1_187 = arith.constant 1 : index
    %c0_188 = arith.constant 0 : index
    %c0_189 = arith.constant 0 : index
    %349 = vector.load %arg6[%c1_187, %c0_188, %c0_189] : memref<2x1x16xf32, #tpu.memory_space<vmem>>, vector<1x1x16xf32>
    %350 = vector.shape_cast %349 : vector<1x1x16xf32> to vector<1x16xf32>
    %351 = vector.broadcast %350 : vector<1x16xf32> to vector<34x16xf32>
    %352 = arith.addf %348, %351 : vector<34x16xf32>
    %c1_190 = arith.constant 1 : index
    %c0_191 = arith.constant 0 : index
    %c0_192 = arith.constant 0 : index
    %353 = vector.load %arg7[%c1_190, %c0_191, %c0_192] : memref<2x1x16xf32, #tpu.memory_space<vmem>>, vector<1x1x16xf32>
    %354 = vector.shape_cast %353 : vector<1x1x16xf32> to vector<1x16xf32>
    %c1_193 = arith.constant 1 : index
    %c0_194 = arith.constant 0 : index
    %c0_195 = arith.constant 0 : index
    %355 = vector.load %arg8[%c1_193, %c0_194, %c0_195] : memref<2x1x16xf32, #tpu.memory_space<vmem>>, vector<1x1x16xf32>
    %356 = vector.shape_cast %355 : vector<1x1x16xf32> to vector<1x16xf32>
    %cst_196 = arith.constant dense<0.000000e+00> : vector<34xf32>
    %357 = vector.multi_reduction <add>, %352, %cst_196 [1] : vector<34x16xf32> to vector<34xf32>
    %358 = vector.shape_cast %357 : vector<34xf32> to vector<34x1xf32>
    %cst_197 = arith.constant 1.600000e+01 : f32
    %359 = vector.broadcast %cst_197 : f32 to vector<34x1xf32>
    %360 = arith.divf %358, %359 : vector<34x1xf32>
    %361 = vector.broadcast %360 : vector<34x1xf32> to vector<34x16xf32>
    %362 = arith.subf %352, %361 : vector<34x16xf32>
    %363 = arith.mulf %362, %362 : vector<34x16xf32>
    %cst_198 = arith.constant dense<0.000000e+00> : vector<34xf32>
    %364 = vector.multi_reduction <add>, %363, %cst_198 [1] : vector<34x16xf32> to vector<34xf32>
    %365 = vector.shape_cast %364 : vector<34xf32> to vector<34x1xf32>
    %cst_199 = arith.constant 1.600000e+01 : f32
    %366 = vector.broadcast %cst_199 : f32 to vector<34x1xf32>
    %367 = arith.divf %365, %366 : vector<34x1xf32>
    %cst_200 = arith.constant 9.99999974E-6 : f32
    %368 = vector.broadcast %cst_200 : f32 to vector<34x1xf32>
    %369 = arith.addf %367, %368 : vector<34x1xf32>
    %370 = math.rsqrt %369 : vector<34x1xf32>
    %371 = vector.broadcast %370 : vector<34x1xf32> to vector<34x16xf32>
    %372 = arith.mulf %362, %371 : vector<34x16xf32>
    %373 = vector.broadcast %354 : vector<1x16xf32> to vector<34x16xf32>
    %374 = arith.mulf %372, %373 : vector<34x16xf32>
    %375 = vector.broadcast %356 : vector<1x16xf32> to vector<34x16xf32>
    %376 = arith.addf %374, %375 : vector<34x16xf32>
    %c1_201 = arith.constant 1 : index
    %c0_202 = arith.constant 0 : index
    %c0_203 = arith.constant 0 : index
    %377 = vector.load %arg9[%c1_201, %c0_202, %c0_203] : memref<2x16x64xf32, #tpu.memory_space<vmem>>, vector<1x16x64xf32>
    %378 = vector.shape_cast %377 : vector<1x16x64xf32> to vector<16x64xf32>
    %cst_204 = arith.constant dense<0.000000e+00> : vector<34x64xf32>
    %379 = tpu.matmul %376, %378, %cst_204 {dimension_numbers = #tpu.dot_dimension_numbers<[1], [0], [0], [1], [0, 0, 1, 1], [], []>} : vector<34x16xf32>, vector<16x64xf32>, vector<34x64xf32> -> vector<34x64xf32>
    %c1_205 = arith.constant 1 : index
    %c0_206 = arith.constant 0 : index
    %c0_207 = arith.constant 0 : index
    %380 = vector.load %arg10[%c1_205, %c0_206, %c0_207] : memref<2x1x64xf32, #tpu.memory_space<vmem>>, vector<1x1x64xf32>
    %381 = vector.shape_cast %380 : vector<1x1x64xf32> to vector<1x64xf32>
    %382 = vector.broadcast %381 : vector<1x64xf32> to vector<34x64xf32>
    %383 = arith.addf %379, %382 : vector<34x64xf32>
    %cst_208 = arith.constant 5.000000e-01 : f32
    %384 = vector.broadcast %cst_208 : f32 to vector<34x64xf32>
    %385 = arith.mulf %384, %383 : vector<34x64xf32>
    %cst_209 = arith.constant 4.471500e-02 : f32
    %386 = vector.broadcast %cst_209 : f32 to vector<34x64xf32>
    %387 = arith.mulf %386, %383 : vector<34x64xf32>
    %388 = arith.mulf %387, %383 : vector<34x64xf32>
    %389 = arith.mulf %388, %383 : vector<34x64xf32>
    %390 = arith.addf %383, %389 : vector<34x64xf32>
    %cst_210 = arith.constant 0.797884583 : f32
    %391 = vector.broadcast %cst_210 : f32 to vector<34x64xf32>
    %392 = arith.mulf %391, %390 : vector<34x64xf32>
    %393 = math.tanh %392 : vector<34x64xf32>
    %cst_211 = arith.constant 1.000000e+00 : f32
    %394 = vector.broadcast %cst_211 : f32 to vector<34x64xf32>
    %395 = arith.addf %394, %393 : vector<34x64xf32>
    %396 = arith.mulf %385, %395 : vector<34x64xf32>
    %c1_212 = arith.constant 1 : index
    %c0_213 = arith.constant 0 : index
    %c0_214 = arith.constant 0 : index
    %397 = vector.load %arg11[%c1_212, %c0_213, %c0_214] : memref<2x64x16xf32, #tpu.memory_space<vmem>>, vector<1x64x16xf32>
    %398 = vector.shape_cast %397 : vector<1x64x16xf32> to vector<64x16xf32>
    %cst_215 = arith.constant dense<0.000000e+00> : vector<34x16xf32>
    %399 = tpu.matmul %396, %398, %cst_215 {dimension_numbers = #tpu.dot_dimension_numbers<[1], [0], [0], [1], [0, 0, 1, 1], [], []>} : vector<34x64xf32>, vector<64x16xf32>, vector<34x16xf32> -> vector<34x16xf32>
    %c1_216 = arith.constant 1 : index
    %c0_217 = arith.constant 0 : index
    %c0_218 = arith.constant 0 : index
    %400 = vector.load %arg12[%c1_216, %c0_217, %c0_218] : memref<2x1x16xf32, #tpu.memory_space<vmem>>, vector<1x1x16xf32>
    %401 = vector.shape_cast %400 : vector<1x1x16xf32> to vector<1x16xf32>
    %402 = vector.broadcast %401 : vector<1x16xf32> to vector<34x16xf32>
    %403 = arith.addf %399, %402 : vector<34x16xf32>
    %404 = arith.addf %352, %403 : vector<34x16xf32>
    %c0_219 = arith.constant 0 : index
    %c0_220 = arith.constant 0 : index
    %405 = vector.load %arg13[%c0_219, %c0_220] : memref<1x16xf32, #tpu.memory_space<vmem>>, vector<1x16xf32>
    %c0_221 = arith.constant 0 : index
    %c0_222 = arith.constant 0 : index
    %406 = vector.load %arg14[%c0_221, %c0_222] : memref<1x16xf32, #tpu.memory_space<vmem>>, vector<1x16xf32>
    %cst_223 = arith.constant dense<0.000000e+00> : vector<34xf32>
    %407 = vector.multi_reduction <add>, %404, %cst_223 [1] : vector<34x16xf32> to vector<34xf32>
    %408 = vector.shape_cast %407 : vector<34xf32> to vector<34x1xf32>
    %cst_224 = arith.constant 1.600000e+01 : f32
    %409 = vector.broadcast %cst_224 : f32 to vector<34x1xf32>
    %410 = arith.divf %408, %409 : vector<34x1xf32>
    %411 = vector.broadcast %410 : vector<34x1xf32> to vector<34x16xf32>
    %412 = arith.subf %404, %411 : vector<34x16xf32>
    %413 = arith.mulf %412, %412 : vector<34x16xf32>
    %cst_225 = arith.constant dense<0.000000e+00> : vector<34xf32>
    %414 = vector.multi_reduction <add>, %413, %cst_225 [1] : vector<34x16xf32> to vector<34xf32>
    %415 = vector.shape_cast %414 : vector<34xf32> to vector<34x1xf32>
    %cst_226 = arith.constant 1.600000e+01 : f32
    %416 = vector.broadcast %cst_226 : f32 to vector<34x1xf32>
    %417 = arith.divf %415, %416 : vector<34x1xf32>
    %cst_227 = arith.constant 9.99999974E-6 : f32
    %418 = vector.broadcast %cst_227 : f32 to vector<34x1xf32>
    %419 = arith.addf %417, %418 : vector<34x1xf32>
    %420 = math.rsqrt %419 : vector<34x1xf32>
    %421 = vector.broadcast %420 : vector<34x1xf32> to vector<34x16xf32>
    %422 = arith.mulf %412, %421 : vector<34x16xf32>
    %423 = vector.broadcast %405 : vector<1x16xf32> to vector<34x16xf32>
    %424 = arith.mulf %422, %423 : vector<34x16xf32>
    %425 = vector.broadcast %406 : vector<1x16xf32> to vector<34x16xf32>
    %426 = arith.addf %424, %425 : vector<34x16xf32>
    %c0_228 = arith.constant 0 : index
    %c0_229 = arith.constant 0 : index
    %427 = vector.load %arg15[%c0_228, %c0_229] : memref<16x48xf32, #tpu.memory_space<vmem>>, vector<16x48xf32>
    %cst_230 = arith.constant dense<0.000000e+00> : vector<34x48xf32>
    %428 = tpu.matmul %426, %427, %cst_230 {dimension_numbers = #tpu.dot_dimension_numbers<[1], [0], [0], [1], [0, 0, 1, 1], [], []>} : vector<34x16xf32>, vector<16x48xf32>, vector<34x48xf32> -> vector<34x48xf32>
    %c0_231 = arith.constant 0 : index
    %c0_232 = arith.constant 0 : index
    %429 = vector.load %arg16[%c0_231, %c0_232] : memref<1x48xf32, #tpu.memory_space<vmem>>, vector<1x48xf32>
    %430 = vector.broadcast %429 : vector<1x48xf32> to vector<34x48xf32>
    %431 = arith.addf %428, %430 : vector<34x48xf32>
    %c0_233 = arith.constant 0 : index
    %c0_234 = arith.constant 0 : index
    %432 = vector.load %arg19[%c0_233, %c0_234] : memref<34x48xf32, #tpu.memory_space<vmem>>, vector<34x48xf32>
    tpu.vector_store %arg19[%c0_233, %c0_234], %431 {strides = array<i32>} : memref<34x48xf32, #tpu.memory_space<vmem>>, vector<34x48xf32>,
    %c0_235 = arith.constant 0 : index
    %c0_236 = arith.constant 0 : index
    %433 = vector.load %arg17[%c0_235, %c0_236] : memref<34x48xf32, #tpu.memory_space<vmem>>, vector<34x48xf32>
    %434 = arith.subf %431, %433 : vector<34x48xf32>
    %435 = arith.mulf %434, %434 : vector<34x48xf32>
    %cst_237 = arith.constant dense<0.000000e+00> : vector<34xf32>
    %436 = vector.multi_reduction <add>, %435, %cst_237 [1] : vector<34x48xf32> to vector<34xf32>
    %437 = vector.shape_cast %436 : vector<34xf32> to vector<34x1xf32>
    %cst_238 = arith.constant 4.800000e+01 : f32
    %438 = vector.broadcast %cst_238 : f32 to vector<34x1xf32>
    %439 = arith.divf %437, %438 : vector<34x1xf32>
    %c0_239 = arith.constant 0 : index
    %c0_240 = arith.constant 0 : index
    %440 = vector.load %arg18[%c0_239, %c0_240] : memref<34x1xf32, #tpu.memory_space<vmem>>, vector<34x1xf32>
    %441 = arith.mulf %439, %440 : vector<34x1xf32>
    %442 = vector.shape_cast %441 : vector<34x1xf32> to vector<1x34x1xf32>
    %cst_241 = arith.constant dense<0.000000e+00> : vector<1xf32>
    %443 = vector.multi_reduction <add>, %442, %cst_241 [1, 2] : vector<1x34x1xf32> to vector<1xf32>
    %444 = vector.shape_cast %443 : vector<1xf32> to vector<1x1x1xf32>
    %445 = vector.extract %444[0, 0, 0] : f32 from vector<1x1x1xf32>
    %446 = vector.broadcast %445 : f32 to vector<1x1xf32>
    %447 = vector.shape_cast %440 : vector<34x1xf32> to vector<1x34x1xf32>
    %cst_242 = arith.constant dense<0.000000e+00> : vector<1xf32>
    %448 = vector.multi_reduction <add>, %447, %cst_242 [1, 2] : vector<1x34x1xf32> to vector<1xf32>
    %449 = vector.shape_cast %448 : vector<1xf32> to vector<1x1x1xf32>
    %450 = vector.extract %449[0, 0, 0] : f32 from vector<1x1x1xf32>
    %451 = vector.broadcast %450 : f32 to vector<1x1xf32>
    %cst_243 = arith.constant 1.000000e+00 : f32
    %452 = vector.broadcast %cst_243 : f32 to vector<1x1xf32>
    %453 = arith.maximumf %451, %452 : vector<1x1xf32>
    %454 = arith.divf %446, %453 : vector<1x1xf32>
    %c0_244 = arith.constant 0 : index
    %c0_245 = arith.constant 0 : index
    %455 = vector.load %arg20[%c0_244, %c0_245] : memref<1x1xf32, #tpu.memory_space<vmem>>, vector<1x1xf32>
    tpu.vector_store %arg20[%c0_244, %c0_245], %454 {strides = array<i32>} : memref<1x1xf32, #tpu.memory_space<vmem>>, vector<1x1xf32>,
    return
  }
}

</mosaic_0001>

<llo_original>
// kernel: mae_forward.2
$region0: #{mae_forward.2}
  #allocation0 [shape = 'u32[]', space=smem, size = 0x4, offset = 0x4, fixed_abs, tag = 'smem constant byte address 0x4 - core index']
  #allocation1 [shape = 'u32[72,128]{1,0:T(1,128)}', space=vmem, size = 0x9000, scoped, tag = 'internal scratch']
  %s0 = inlined_call_operand.vmem [shape: f32[8,48], index: 0, kind: input, shape index: {}]
  %s1 = inlined_call_operand.vmem [shape: f32[8,32], index: 1, kind: input, shape index: {}]
  %s2 = inlined_call_operand.vmem [shape: f32[1,32], index: 2, kind: input, shape index: {}]
  %s3 = inlined_call_operand.vmem [shape: f32[48,32], index: 3, kind: input, shape index: {}]
  %s4 = inlined_call_operand.vmem [shape: f32[1,32], index: 4, kind: input, shape index: {}]
  %s5 = inlined_call_operand.vmem [shape: f32[2,1,32], index: 5, kind: input, shape index: {}]
  %s6 = inlined_call_operand.vmem [shape: f32[2,1,32], index: 6, kind: input, shape index: {}]
  %s7 = inlined_call_operand.vmem [shape: f32[24,32,8], index: 7, kind: input, shape index: {}]
  %s8 = inlined_call_operand.vmem [shape: f32[24,1,8], index: 8, kind: input, shape index: {}]
  %s9 = inlined_call_operand.vmem [shape: f32[8,8,32], index: 9, kind: input, shape index: {}]
  %s10 = inlined_call_operand.vmem [shape: f32[2,1,32], index: 10, kind: input, shape index: {}]
  %s11 = inlined_call_operand.vmem [shape: f32[2,1,32], index: 11, kind: input, shape index: {}]
  %s12 = inlined_call_operand.vmem [shape: f32[2,1,32], index: 12, kind: input, shape index: {}]
  %s13 = inlined_call_operand.vmem [shape: f32[2,32,128], index: 13, kind: input, shape index: {}]
  %s14 = inlined_call_operand.vmem [shape: f32[2,1,128], index: 14, kind: input, shape index: {}]
  %s15 = inlined_call_operand.vmem [shape: f32[2,128,32], index: 15, kind: input, shape index: {}]
  %s16 = inlined_call_operand.vmem [shape: f32[2,1,32], index: 16, kind: input, shape index: {}]
  %s17 = inlined_call_operand.vmem [shape: f32[1,32], index: 17, kind: input, shape index: {}]
  %s18 = inlined_call_operand.vmem [shape: f32[1,32], index: 18, kind: input, shape index: {}]
  %s19 = inlined_call_operand.vmem [shape: f32[32,16], index: 19, kind: input, shape index: {}]
  %s20 = inlined_call_operand.vmem [shape: f32[1,16], index: 20, kind: input, shape index: {}]
  %s21 = inlined_call_operand.vmem [shape: f32[10,16], index: 21, kind: output, shape index: {}]
  %s22 = sld [smem:[#allocation0]]
  $region94: #{mae_forward.2} parent=0
    _
  %s24 = ssub.s32 1, %s22
  %s25 = scalar_select 0, %s24, %s22
  // Predicated region
  $region2: #{mae_forward.2} parent=0 // pred_check
    _
  $region3: #{mae_forward.2} parent=0 // pred_check_branch
    %27 = sbr.rel (0) target = $region5
  $region4: #{mae_forward.2} parent=0 // pred_region
    _
  $region5: #{mae_forward.2} parent=0 // pred_fallthru
    _
  // Predicated region
  $region6: #{mae_forward.2} parent=0 // pred_check
    _
  $region7: #{mae_forward.2} parent=0 // pred_check_branch
    %29 = sbr.rel (0) target = $region9
  $region8: #{mae_forward.2} parent=0 // pred_region
    _
  $region9: #{mae_forward.2} parent=0 // pred_fallthru
    _
  // Predicated region
  $region10: #{mae_forward.2} parent=0 // pred_check
    _
  $region11: #{mae_forward.2} parent=0 // pred_check_branch
    %31 = sbr.rel (0) target = $region13
  $region12: #{mae_forward.2} parent=0 // pred_region
    _
  $region13: #{mae_forward.2} parent=0 // pred_fallthru
    _
  // Predicated region
  $region14: #{mae_forward.2} parent=0 // pred_check
    _
  $region15: #{mae_forward.2} parent=0 // pred_check_branch
    %33 = sbr.rel (0) target = $region17
  $region16: #{mae_forward.2} parent=0 // pred_region
    _
  $region17: #{mae_forward.2} parent=0 // pred_fallthru
    _
  // Predicated region
  $region18: #{mae_forward.2} parent=0 // pred_check
    _
  $region19: #{mae_forward.2} parent=0 // pred_check_branch
    %35 = sbr.rel (0) target = $region21
  $region20: #{mae_forward.2} parent=0 // pred_region
    _
  $region21: #{mae_forward.2} parent=0 // pred_fallthru
    _
  // Predicated region
  $region22: #{mae_forward.2} parent=0 // pred_check
    _
  $region23: #{mae_forward.2} parent=0 // pred_check_branch
    %37 = sbr.rel (0) target = $region25
  $region24: #{mae_forward.2} parent=0 // pred_region
    _
  $region25: #{mae_forward.2} parent=0 // pred_fallthru
    _
  // Predicated region
  $region26: #{mae_forward.2} parent=0 // pred_check
    _
  $region27: #{mae_forward.2} parent=0 // pred_check_branch
    %39 = sbr.rel (0) target = $region29
  $region28: #{mae_forward.2} parent=0 // pred_region
    _
  $region29: #{mae_forward.2} parent=0 // pred_fallthru
    _
  // Predicated region
  $region30: #{mae_forward.2} parent=0 // pred_check
    _
  $region31: #{mae_forward.2} parent=0 // pred_check_branch
    %41 = sbr.rel (0) target = $region33
  $region32: #{mae_forward.2} parent=0 // pred_region
    _
  $region33: #{mae_forward.2} parent=0 // pred_fallthru
    _
  // Predicated region
  $region34: #{mae_forward.2} parent=0 // pred_check
    _
  $region35: #{mae_forward.2} parent=0 // pred_check_branch
    %43 = sbr.rel (0) target = $region37
  $region36: #{mae_forward.2} parent=0 // pred_region
    _
  $region37: #{mae_forward.2} parent=0 // pred_fallthru
    _
  // Predicated region
  $region38: #{mae_forward.2} parent=0 // pred_check
    _
  $region39: #{mae_forward.2} parent=0 // pred_check_branch
    %45 = sbr.rel (0) target = $region41
  $region40: #{mae_forward.2} parent=0 // pred_region
    _
  $region41: #{mae_forward.2} parent=0 // pred_fallthru
    _
  // Predicated region
  $region42: #{mae_forward.2} parent=0 // pred_check
    _
  $region43: #{mae_forward.2} parent=0 // pred_check_branch
    %47 = sbr.rel (0) target = $region45
  $region44: #{mae_forward.2} parent=0 // pred_region
    _
  $region45: #{mae_forward.2} parent=0 // pred_fallthru
    _
  // Predicated region
  $region46: #{mae_forward.2} parent=0 // pred_check
    _
  $region47: #{mae_forward.2} parent=0 // pred_check_branch
    %49 = sbr.rel (0) target = $region49
  $region48: #{mae_forward.2} parent=0 // pred_region
    _
  $region49: #{mae_forward.2} parent=0 // pred_fallthru
    _
  // Predicated region
  $region50: #{mae_forward.2} parent=0 // pred_check
    _
  $region51: #{mae_forward.2} parent=0 // pred_check_branch
    %51 = sbr.rel (0) target = $region53
  $region52: #{mae_forward.2} parent=0 // pred_region
    _
  $region53: #{mae_forward.2} parent=0 // pred_fallthru
    _
  // Predicated region
  $region54: #{mae_forward.2} parent=0 // pred_check
    _
  $region55: #{mae_forward.2} parent=0 // pred_check_branch
    %53 = sbr.rel (0) target = $region57
  $region56: #{mae_forward.2} parent=0 // pred_region
    _
  $region57: #{mae_forward.2} parent=0 // pred_fallthru
    _
  // Predicated region
  $region58: #{mae_forward.2} parent=0 // pred_check
    _
  $region59: #{mae_forward.2} parent=0 // pred_check_branch
    %55 = sbr.rel (0) target = $region61
  $region60: #{mae_forward.2} parent=0 // pred_region
    _
  $region61: #{mae_forward.2} parent=0 // pred_fallthru
    _
  // Predicated region
  $region62: #{mae_forward.2} parent=0 // pred_check
    _
  $region63: #{mae_forward.2} parent=0 // pred_check_branch
    %57 = sbr.rel (0) target = $region65
  $region64: #{mae_forward.2} parent=0 // pred_region
    _
  $region65: #{mae_forward.2} parent=0 // pred_fallthru
    _
  // Predicated region
  $region66: #{mae_forward.2} parent=0 // pred_check
    _
  $region67: #{mae_forward.2} parent=0 // pred_check_branch
    %59 = sbr.rel (0) target = $region69
  $region68: #{mae_forward.2} parent=0 // pred_region
    _
  $region69: #{mae_forward.2} parent=0 // pred_fallthru
    _
  // Predicated region
  $region70: #{mae_forward.2} parent=0 // pred_check
    _
  $region71: #{mae_forward.2} parent=0 // pred_check_branch
    %61 = sbr.rel (0) target = $region73
  $region72: #{mae_forward.2} parent=0 // pred_region
    _
  $region73: #{mae_forward.2} parent=0 // pred_fallthru
    _
  // Predicated region
  $region74: #{mae_forward.2} parent=0 // pred_check
    _
  $region75: #{mae_forward.2} parent=0 // pred_check_branch
    %63 = sbr.rel (0) target = $region77
  $region76: #{mae_forward.2} parent=0 // pred_region
    _
  $region77: #{mae_forward.2} parent=0 // pred_fallthru
    _
  // Predicated region
  $region78: #{mae_forward.2} parent=0 // pred_check
    _
  $region79: #{mae_forward.2} parent=0 // pred_check_branch
    %65 = sbr.rel (0) target = $region81
  $region80: #{mae_forward.2} parent=0 // pred_region
    _
  $region81: #{mae_forward.2} parent=0 // pred_fallthru
    _
  // Predicated region
  $region82: #{mae_forward.2} parent=0 // pred_check
    _
  $region83: #{mae_forward.2} parent=0 // pred_check_branch
    %67 = sbr.rel (0) target = $region85
  $region84: #{mae_forward.2} parent=0 // pred_region
    _
  $region85: #{mae_forward.2} parent=0 // pred_fallthru
    _
  %v68 = vld [vmem:[%s0] sm:$0xff]
  %v69 = vld [vmem:[%s3] sm:$0xff]
  %v70 = vld [vmem:[%s3 + $0x8] sm:$0xff]
  %v71 = vld [vmem:[%s3 + $0x10] sm:$0xff]
  %v72 = vld [vmem:[%s3 + $0x18] sm:$0xff]
  %v73 = vld [vmem:[%s3 + $0x20] sm:$0xff]
  %v74 = vld [vmem:[%s3 + $0x28] sm:$0xff]
  %v75 = vld [vmem:[%s4] sm:$0x1]
  %v77 = vperm.slane %v75, 0
  %vm79 = vcmask 392192
  %v81 = vsel %vm79, %v68, 0
  %83 = vmatpush.msra.mxu0 0.0
  %84 = vmatpush.msra.mxu0 0.0
  %85 = vmatpush.msra.mxu0 0.0
  %86 = vmatpush.msra.mxu0 0.0
  %87 = vmatpush.msra.mxu0 0.0
  %88 = vmatpush.msra.mxu0 0.0
  %89 = vmatpush.msra.mxu0 0.0
  %90 = vmatpush.msra.mxu0 0.0
  %91 = vmatpush.msra.mxu0 0.0
  %92 = vmatpush.msra.mxu0 0.0
  %93 = vmatpush.msra.mxu0 %v74
  %94 = vmatpush.msra.mxu0 %v73
  %95 = vmatpush.msra.mxu0 %v72
  %96 = vmatpush.msra.mxu0 %v71
  %97 = vmatpush.msra.mxu0 %v70
  %98 = vmatpush.msra.mxu0 %v69
  %99 = vmatmul.f32.gmra.mxu0 %v81
  %v100 = vpop.f32.mrf.mxu0
  %v101 = vadd.f32 %v77, %v100
  %102 = vdwg.mxu0
  %v103 = vld [vmem:[%s1] sm:$0xff]
  %v104 = vadd.f32 %v101, %v103
  %v105 = vld [vmem:[%s2] sm:$0x1]
  %v107 = vrot.slane %v104, 7
  %v110 = vperm.slane %v105, 0
  %v112 = vrot.slane %v104, 6
  %vm114 = vcmask 1040384
  %v115 = vsel %vm114, %v105, %v107
  %vm116 = vcmask 1044480
  %v117 = vsel %vm116, %v115, %v110
  %vm118 = vcmask 1045504
  %v119 = vsel %vm118, %v117, %v112
  %v120 = vld [vmem:[%s5] sm:$0x1]
  %v121 = vld [vmem:[%s6] sm:$0x1]
  %vm122 = vcmask 261120
  %v123 = vsel %vm122, %v119, 0.0
  %124 = vadd.xlane.f32.xlu0 %v123
  %v125 = vpop.xlane.xlu0 %124
  %vm126 = vcmask 254976
  %v127 = vsel %vm126, %v112, 0.0
  %128 = vadd.xlane.f32.xlu0 %v127
  %v129 = vpop.xlane.xlu0 %128
  %v130 = vrcp.pop 32.0
  %v131 = vmul.f32 32.0, %v130
  %v132 = vsub.f32 1.0, %v131
  %v133 = vmul.f32 %v130, %v132
  %v134 = vadd.f32 %v130, %v133
  %vm135 = vweird.f32 %v130
  %v136 = vsel %vm135, %v130, %v134
  %v137 = vmul.f32 %v125, %v136
  %v138 = vmul.f32 %v129, %v136
  %v139 = vsub.f32 %v119, %v137
  %v140 = vsub.f32 %v112, %v138
  %v141 = vmul.f32 %v139, %v139
  %v142 = vmul.f32 %v140, %v140
  %v143 = vsel %vm122, %v141, 0.0
  %144 = vadd.xlane.f32.xlu0 %v143
  %v145 = vpop.xlane.xlu0 %144
  %v146 = vsel %vm126, %v142, 0.0
  %147 = vadd.xlane.f32.xlu0 %v146
  %v148 = vpop.xlane.xlu0 %147
  %v149 = vmul.f32 %v145, %v136
  %v150 = vmul.f32 %v148, %v136
  %v151 = vadd.f32 %v149, 1e-05
  %v152 = vadd.f32 %v150, 1e-05
  %v153 = vrsqrt.pop %v151
  %v154 = vmul.f32 %v153, %v151
  %v155 = vmul.f32 %v154, %v153
  %v156 = vmul.f32 0.5, %v155
  %v157 = vsub.f32 1.5, %v156
  %v158 = vmul.f32 %v153, %v157
  %vm159 = vweird.f32 %v151
  %vm160 = vweird.f32 %v153
  %vm161 = vmor %vm159, %vm160
  %v162 = vsel %vm161, %v153, %v158
  %v163 = vrsqrt.pop %v152
  %v164 = vmul.f32 %v163, %v152
  %v165 = vmul.f32 %v164, %v163
  %v166 = vmul.f32 0.5, %v165
  %v167 = vsub.f32 1.5, %v166
  %v168 = vmul.f32 %v163, %v167
  %vm169 = vweird.f32 %v152
  %vm170 = vweird.f32 %v163
  %vm171 = vmor %vm169, %vm170
  %v172 = vsel %vm171, %v163, %v168
  %v173 = vmul.f32 %v139, %v162
  %v174 = vmul.f32 %v140, %v172
  %v176 = vperm.slane %v120, 0
  %v178 = vmul.f32 %v173, %v176
  %v179 = vmul.f32 %v174, %v176
  %v181 = vperm.slane %v121, 0
  %v183 = vadd.f32 %v178, %v181
  %v184 = vadd.f32 %v179, %v181
  %v185 = vld [vmem:[%s7] sm:$0xff]
  %v186 = vld [vmem:[%s7 + $0x8] sm:$0xff]
  %v187 = vld [vmem:[%s7 + $0x10] sm:$0xff]
  %v188 = vld [vmem:[%s7 + $0x18] sm:$0xff]
  %v189 = vld [vmem:[%s8] sm:$0x1]
  %s190 = scalar_lea.vmem %s7, 128
  %v191 = vld [vmem:[%s190] sm:$0xff]
  %v192 = vld [vmem:[%s190 + $0x8] sm:$0xff]
  %v193 = vld [vmem:[%s190 + $0x10] sm:$0xff]
  %v194 = vld [vmem:[%s190 + $0x18] sm:$0xff]
  %s195 = scalar_lea.vmem %s8, 4
  %v196 = vld [vmem:[%s195] sm:$0x1]
  %s197 = scalar_lea.vmem %s7, 256
  %v198 = vld [vmem:[%s197] sm:$0xff]
  %v199 = vld [vmem:[%s197 + $0x8] sm:$0xff]
  %v200 = vld [vmem:[%s197 + $0x10] sm:$0xff]
  %v201 = vld [vmem:[%s197 + $0x18] sm:$0xff]
  %s202 = scalar_lea.vmem %s8, 8
  %v203 = vld [vmem:[%s202] sm:$0x1]
  %v205 = vperm.slane %v189, 0
  %v208 = vsel %vm122, %v183, 0
  %v211 = vsel %vm122, %v184, 0
  %213 = vmatpush.msra.mxu0 0.0
  %214 = vmatpush.msra.mxu0 0.0
  %215 = vmatpush.msra.mxu0 0.0
  %216 = vmatpush.msra.mxu0 0.0
  %217 = vmatpush.msra.mxu0 0.0
  %218 = vmatpush.msra.mxu0 0.0
  %219 = vmatpush.msra.mxu0 0.0
  %220 = vmatpush.msra.mxu0 0.0
  %221 = vmatpush.msra.mxu0 0.0
  %222 = vmatpush.msra.mxu0 0.0
  %223 = vmatpush.msra.mxu0 0.0
  %224 = vmatpush.msra.mxu0 0.0
  %225 = vmatpush.msra.mxu0 %v188
  %226 = vmatpush.msra.mxu0 %v187
  %227 = vmatpush.msra.mxu0 %v186
  %228 = vmatpush.msra.mxu0 %v185
  %229 = vmatmul.f32.gmra.mxu0 %v208
  %v230 = vpop.f32.mrf.mxu0
  %v231 = vadd.f32 %v205, %v230
  %232 = vmatmul.f32.gmra.mxu0 %v211
  %v233 = vpop.f32.mrf.mxu0
  %v234 = vadd.f32 %v205, %v233
  %235 = vdwg.mxu0
  %v237 = vperm.slane %v196, 0
  %239 = vmatpush.msra.mxu0 0.0
  %240 = vmatpush.msra.mxu0 0.0
  %241 = vmatpush.msra.mxu0 0.0
  %242 = vmatpush.msra.mxu0 0.0
  %243 = vmatpush.msra.mxu0 0.0
  %244 = vmatpush.msra.mxu0 0.0
  %245 = vmatpush.msra.mxu0 0.0
  %246 = vmatpush.msra.mxu0 0.0
  %247 = vmatpush.msra.mxu0 0.0
  %248 = vmatpush.msra.mxu0 0.0
  %249 = vmatpush.msra.mxu0 0.0
  %250 = vmatpush.msra.mxu0 0.0
  %251 = vmatpush.msra.mxu0 %v194
  %252 = vmatpush.msra.mxu0 %v193
  %253 = vmatpush.msra.mxu0 %v192
  %254 = vmatpush.msra.mxu0 %v191
  %255 = vmatmul.f32.gmra.mxu0 %v208
  %v256 = vpop.f32.mrf.mxu0
  %v257 = vadd.f32 %v237, %v256
  %258 = vmatmul.f32.gmra.mxu0 %v211
  %v259 = vpop.f32.mrf.mxu0
  %v260 = vadd.f32 %v237, %v259
  %261 = vdwg.mxu0
  %v263 = vperm.slane %v203, 0
  %265 = vmatpush.msra.mxu0 0.0
  %266 = vmatpush.msra.mxu0 0.0
  %267 = vmatpush.msra.mxu0 0.0
  %268 = vmatpush.msra.mxu0 0.0
  %269 = vmatpush.msra.mxu0 0.0
  %270 = vmatpush.msra.mxu0 0.0
  %271 = vmatpush.msra.mxu0 0.0
  %272 = vmatpush.msra.mxu0 0.0
  %273 = vmatpush.msra.mxu0 0.0
  %274 = vmatpush.msra.mxu0 0.0
  %275 = vmatpush.msra.mxu0 0.0
  %276 = vmatpush.msra.mxu0 0.0
  %277 = vmatpush.msra.mxu0 %v201
  %278 = vmatpush.msra.mxu0 %v200
  %279 = vmatpush.msra.mxu0 %v199
  %280 = vmatpush.msra.mxu0 %v198
  %281 = vmatmul.f32.gmra.mxu0 %v208
  %v282 = vpop.f32.mrf.mxu0
  %v283 = vadd.f32 %v263, %v282
  %284 = vmatmul.f32.gmra.mxu0 %v211
  %v285 = vpop.f32.mrf.mxu0
  %v286 = vadd.f32 %v263, %v285
  %287 = vdwg.mxu0
  %v288 = vld [vmem:[%s9] sm:$0xff]
  %vm289 = vcmask 64512
  %v291 = vsel %vm289, %v231, 0
  %v294 = vsel %vm289, %v257, 0
  %296 = vmatpush.xpose.msra.mxu0 0.0
  %297 = vmatpush.xpose.msra.mxu0 0.0
  %298 = vmatpush.xpose.msra.mxu0 0.0
  %299 = vmatpush.xpose.msra.mxu0 0.0
  %300 = vmatpush.xpose.msra.mxu0 0.0
  %301 = vmatpush.xpose.msra.mxu0 0.0
  %302 = vmatpush.xpose.msra.mxu0 0.0
  %303 = vmatpush.xpose.msra.mxu0 0.0
  %304 = vmatpush.xpose.msra.mxu0 0.0
  %305 = vmatpush.xpose.msra.mxu0 0.0
  %306 = vmatpush.xpose.msra.mxu0 0.0
  %307 = vmatpush.xpose.msra.mxu0 0.0
  %308 = vmatpush.xpose.msra.mxu0 0.0
  %309 = vmatpush.xpose.msra.mxu0 0.0
  %310 = vmatpush.xpose.msra.mxu0 0.0
  %311 = vmatpush.xpose.msra.mxu0 %v294
  %312 = vmatmul.f32.gmra.mxu0 %v291
  %v313 = vpop.f32.mrf.mxu0
  %v314 = vadd.f32 0.0, %v313
  %315 = vdwg.mxu0
  %v316 = vmul.f32 %v314, 0.35355338
  %vm317 = vcmask 36864
  %v318 = vsel %vm317, %v316, -inf
  %319 = vmax.xlane.f32.xlu0 %v318
  %v320 = vpop.xlane.xlu0 %319
  %v321 = vsub.f32 %v316, %v320
  %v322 = vmul.f32 %v321, 1.442695
  %v323 = vpow.pop %v322
  %v324 = vsel %vm317, %v323, 0.0
  %325 = vadd.xlane.f32.xlu0 %v324
  %v326 = vpop.xlane.xlu0 %325
  %v327 = vrcp.pop %v326
  %v328 = vmul.f32 %v323, %v327
  %vm329 = vcmask 39936
  %v331 = vsel %vm329, %v328, 0
  %v334 = vsel %vm116, %v283, 0
  %336 = vmatpush.msra.mxu0 0.0
  %337 = vmatpush.msra.mxu0 0.0
  %338 = vmatpush.msra.mxu0 0.0
  %339 = vmatpush.msra.mxu0 0.0
  %340 = vmatpush.msra.mxu0 0.0
  %341 = vmatpush.msra.mxu0 0.0
  %342 = vmatpush.msra.mxu0 0.0
  %343 = vmatpush.msra.mxu0 0.0
  %344 = vmatpush.msra.mxu0 0.0
  %345 = vmatpush.msra.mxu0 0.0
  %346 = vmatpush.msra.mxu0 0.0
  %347 = vmatpush.msra.mxu0 0.0
  %348 = vmatpush.msra.mxu0 0.0
  %349 = vmatpush.msra.mxu0 0.0
  %350 = vmatpush.msra.mxu0 0.0
  %351 = vmatpush.msra.mxu0 %v334
  %352 = vmatmul.f32.gmra.mxu0 %v331
  %v353 = vpop.f32.mrf.mxu0
  %v354 = vadd.f32 0.0, %v353
  %355 = vdwg.mxu0
  %vm357 = vcmask 1042432
  %v358 = vrot.slane %v231, 5
  %v359 = vrot.slane %v234, 5
  %v360 = vsel %vm357, %v358, %v359
  %v362 = vrot.slane %v257, 5
  %v363 = vrot.slane %v260, 5
  %v364 = vsel %vm357, %v362, %v363
  %v365 = vsel %vm289, %v360, 0
  %v367 = vsel %vm289, %v364, 0
  %369 = vmatpush.xpose.msra.mxu0 0.0
  %370 = vmatpush.xpose.msra.mxu0 0.0
  %371 = vmatpush.xpose.msra.mxu0 0.0
  %372 = vmatpush.xpose.msra.mxu0 0.0
  %373 = vmatpush.xpose.msra.mxu0 0.0
  %374 = vmatpush.xpose.msra.mxu0 0.0
  %375 = vmatpush.xpose.msra.mxu0 0.0
  %376 = vmatpush.xpose.msra.mxu0 0.0
  %377 = vmatpush.xpose.msra.mxu0 0.0
  %378 = vmatpush.xpose.msra.mxu0 0.0
  %379 = vmatpush.xpose.msra.mxu0 0.0
  %380 = vmatpush.xpose.msra.mxu0 0.0
  %381 = vmatpush.xpose.msra.mxu0 0.0
  %382 = vmatpush.xpose.msra.mxu0 0.0
  %383 = vmatpush.xpose.msra.mxu0 0.0
  %384 = vmatpush.xpose.msra.mxu0 %v367
  %385 = vmatmul.f32.gmra.mxu0 %v365
  %v386 = vpop.f32.mrf.mxu0
  %v387 = vadd.f32 0.0, %v386
  %388 = vdwg.mxu0
  %v389 = vmul.f32 %v387, 0.35355338
  %v390 = vsel %vm317, %v389, -inf
  %391 = vmax.xlane.f32.xlu0 %v390
  %v392 = vpop.xlane.xlu0 %391
  %v393 = vsub.f32 %v389, %v392
  %v394 = vmul.f32 %v393, 1.442695
  %v395 = vpow.pop %v394
  %v396 = vsel %vm317, %v395, 0.0
  %397 = vadd.xlane.f32.xlu0 %v396
  %v398 = vpop.xlane.xlu0 %397
  %v399 = vrcp.pop %v398
  %v400 = vmul.f32 %v395, %v399
  %v402 = vrot.slane %v283, 5
  %v403 = vrot.slane %v286, 5
  %v404 = vsel %vm357, %v402, %v403
  %v406 = vsel %vm329, %v400, 0
  %v408 = vsel %vm116, %v404, 0
  %410 = vmatpush.msra.mxu0 0.0
  %411 = vmatpush.msra.mxu0 0.0
  %412 = vmatpush.msra.mxu0 0.0
  %413 = vmatpush.msra.mxu0 0.0
  %414 = vmatpush.msra.mxu0 0.0
  %415 = vmatpush.msra.mxu0 0.0
  %416 = vmatpush.msra.mxu0 0.0
  %417 = vmatpush.msra.mxu0 0.0
  %418 = vmatpush.msra.mxu0 0.0
  %419 = vmatpush.msra.mxu0 0.0
  %420 = vmatpush.msra.mxu0 0.0
  %421 = vmatpush.msra.mxu0 0.0
  %422 = vmatpush.msra.mxu0 0.0
  %423 = vmatpush.msra.mxu0 0.0
  %424 = vmatpush.msra.mxu0 0.0
  %425 = vmatpush.msra.mxu0 %v408
  %426 = vmatmul.f32.gmra.mxu0 %v406
  %v427 = vpop.f32.mrf.mxu0
  %v428 = vadd.f32 0.0, %v427
  %429 = vdwg.mxu0
  %s430 = scalar_lea.vmem %s7, 32
  %v431 = vld [vmem:[%s430] sm:$0xff]
  %v432 = vld [vmem:[%s430 + $0x8] sm:$0xff]
  %v433 = vld [vmem:[%s430 + $0x10] sm:$0xff]
  %v434 = vld [vmem:[%s430 + $0x18] sm:$0xff]
  %s435 = scalar_lea.vmem %s8, 1
  %v436 = vld [vmem:[%s435] sm:$0x1]
  %s437 = scalar_lea.vmem %s7, 160
  %v438 = vld [vmem:[%s437] sm:$0xff]
  %v439 = vld [vmem:[%s437 + $0x8] sm:$0xff]
  %v440 = vld [vmem:[%s437 + $0x10] sm:$0xff]
  %v441 = vld [vmem:[%s437 + $0x18] sm:$0xff]
  %s442 = scalar_lea.vmem %s8, 5
  %v443 = vld [vmem:[%s442] sm:$0x1]
  %s444 = scalar_lea.vmem %s7, 288
  %v445 = vld [vmem:[%s444] sm:$0xff]
  %v446 = vld [vmem:[%s444 + $0x8] sm:$0xff]
  %v447 = vld [vmem:[%s444 + $0x10] sm:$0xff]
  %v448 = vld [vmem:[%s444 + $0x18] sm:$0xff]
  %s449 = scalar_lea.vmem %s8, 9
  %v450 = vld [vmem:[%s449] sm:$0x1]
  %v452 = vperm.slane %v436, 0
  %454 = vmatpush.msra.mxu0 0.0
  %455 = vmatpush.msra.mxu0 0.0
  %456 = vmatpush.msra.mxu0 0.0
  %457 = vmatpush.msra.mxu0 0.0
  %458 = vmatpush.msra.mxu0 0.0
  %459 = vmatpush.msra.mxu0 0.0
  %460 = vmatpush.msra.mxu0 0.0
  %461 = vmatpush.msra.mxu0 0.0
  %462 = vmatpush.msra.mxu0 0.0
  %463 = vmatpush.msra.mxu0 0.0
  %464 = vmatpush.msra.mxu0 0.0
  %465 = vmatpush.msra.mxu0 0.0
  %466 = vmatpush.msra.mxu0 %v434
  %467 = vmatpush.msra.mxu0 %v433
  %468 = vmatpush.msra.mxu0 %v432
  %469 = vmatpush.msra.mxu0 %v431
  %470 = vmatmul.f32.gmra.mxu0 %v208
  %v471 = vpop.f32.mrf.mxu0
  %v472 = vadd.f32 %v452, %v471
  %473 = vmatmul.f32.gmra.mxu0 %v211
  %v474 = vpop.f32.mrf.mxu0
  %v475 = vadd.f32 %v452, %v474
  %476 = vdwg.mxu0
  %v478 = vperm.slane %v443, 0
  %480 = vmatpush.msra.mxu0 0.0
  %481 = vmatpush.msra.mxu0 0.0
  %482 = vmatpush.msra.mxu0 0.0
  %483 = vmatpush.msra.mxu0 0.0
  %484 = vmatpush.msra.mxu0 0.0
  %485 = vmatpush.msra.mxu0 0.0
  %486 = vmatpush.msra.mxu0 0.0
  %487 = vmatpush.msra.mxu0 0.0
  %488 = vmatpush.msra.mxu0 0.0
  %489 = vmatpush.msra.mxu0 0.0
  %490 = vmatpush.msra.mxu0 0.0
  %491 = vmatpush.msra.mxu0 0.0
  %492 = vmatpush.msra.mxu0 %v441
  %493 = vmatpush.msra.mxu0 %v440
  %494 = vmatpush.msra.mxu0 %v439
  %495 = vmatpush.msra.mxu0 %v438
  %496 = vmatmul.f32.gmra.mxu0 %v208
  %v497 = vpop.f32.mrf.mxu0
  %v498 = vadd.f32 %v478, %v497
  %499 = vmatmul.f32.gmra.mxu0 %v211
  %v500 = vpop.f32.mrf.mxu0
  %v501 = vadd.f32 %v478, %v500
  %502 = vdwg.mxu0
  %v504 = vperm.slane %v450, 0
  %506 = vmatpush.msra.mxu0 0.0
  %507 = vmatpush.msra.mxu0 0.0
  %508 = vmatpush.msra.mxu0 0.0
  %509 = vmatpush.msra.mxu0 0.0
  %510 = vmatpush.msra.mxu0 0.0
  %511 = vmatpush.msra.mxu0 0.0
  %512 = vmatpush.msra.mxu0 0.0
  %513 = vmatpush.msra.mxu0 0.0
  %514 = vmatpush.msra.mxu0 0.0
  %515 = vmatpush.msra.mxu0 0.0
  %516 = vmatpush.msra.mxu0 0.0
  %517 = vmatpush.msra.mxu0 0.0
  %518 = vmatpush.msra.mxu0 %v448
  %519 = vmatpush.msra.mxu0 %v447
  %520 = vmatpush.msra.mxu0 %v446
  %521 = vmatpush.msra.mxu0 %v445
  %522 = vmatmul.f32.gmra.mxu0 %v208
  %v523 = vpop.f32.mrf.mxu0
  %v524 = vadd.f32 %v504, %v523
  %525 = vmatmul.f32.gmra.mxu0 %v211
  %v526 = vpop.f32.mrf.mxu0
  %v527 = vadd.f32 %v504, %v526
  %528 = vdwg.mxu0
  %s529 = scalar_lea.vmem %s9, 8
  %v530 = vld [vmem:[%s529] sm:$0xff]
  %v532 = vsel %vm289, %v472, 0
  %v535 = vsel %vm289, %v498, 0
  %537 = vmatpush.xpose.msra.mxu0 0.0
  %538 = vmatpush.xpose.msra.mxu0 0.0
  %539 = vmatpush.xpose.msra.mxu0 0.0
  %540 = vmatpush.xpose.msra.mxu0 0.0
  %541 = vmatpush.xpose.msra.mxu0 0.0
  %542 = vmatpush.xpose.msra.mxu0 0.0
  %543 = vmatpush.xpose.msra.mxu0 0.0
  %544 = vmatpush.xpose.msra.mxu0 0.0
  %545 = vmatpush.xpose.msra.mxu0 0.0
  %546 = vmatpush.xpose.msra.mxu0 0.0
  %547 = vmatpush.xpose.msra.mxu0 0.0
  %548 = vmatpush.xpose.msra.mxu0 0.0
  %549 = vmatpush.xpose.msra.mxu0 0.0
  %550 = vmatpush.xpose.msra.mxu0 0.0
  %551 = vmatpush.xpose.msra.mxu0 0.0
  %552 = vmatpush.xpose.msra.mxu0 %v535
  %553 = vmatmul.f32.gmra.mxu0 %v532
  %v554 = vpop.f32.mrf.mxu0
  %v555 = vadd.f32 0.0, %v554
  %556 = vdwg.mxu0
  %v557 = vmul.f32 %v555, 0.35355338
  %v558 = vsel %vm317, %v557, -inf
  %559 = vmax.xlane.f32.xlu0 %v558
  %v560 = vpop.xlane.xlu0 %559
  %v561 = vsub.f32 %v557, %v560
  %v562 = vmul.f32 %v561, 1.442695
  %v563 = vpow.pop %v562
  %v564 = vsel %vm317, %v563, 0.0
  %565 = vadd.xlane.f32.xlu0 %v564
  %v566 = vpop.xlane.xlu0 %565
  %v567 = vrcp.pop %v566
  %v568 = vmul.f32 %v563, %v567
  %v570 = vsel %vm329, %v568, 0
  %v573 = vsel %vm116, %v524, 0
  %575 = vmatpush.msra.mxu0 0.0
  %576 = vmatpush.msra.mxu0 0.0
  %577 = vmatpush.msra.mxu0 0.0
  %578 = vmatpush.msra.mxu0 0.0
  %579 = vmatpush.msra.mxu0 0.0
  %580 = vmatpush.msra.mxu0 0.0
  %581 = vmatpush.msra.mxu0 0.0
  %582 = vmatpush.msra.mxu0 0.0
  %583 = vmatpush.msra.mxu0 0.0
  %584 = vmatpush.msra.mxu0 0.0
  %585 = vmatpush.msra.mxu0 0.0
  %586 = vmatpush.msra.mxu0 0.0
  %587 = vmatpush.msra.mxu0 0.0
  %588 = vmatpush.msra.mxu0 0.0
  %589 = vmatpush.msra.mxu0 0.0
  %590 = vmatpush.msra.mxu0 %v573
  %591 = vmatmul.f32.gmra.mxu0 %v570
  %v592 = vpop.f32.mrf.mxu0
  %v593 = vadd.f32 0.0, %v592
  %594 = vdwg.mxu0
  %v596 = vsel %vm289, %v593, 0
  %598 = vmatpush.msra.mxu0 0.0
  %599 = vmatpush.msra.mxu0 0.0
  %600 = vmatpush.msra.mxu0 0.0
  %601 = vmatpush.msra.mxu0 0.0
  %602 = vmatpush.msra.mxu0 0.0
  %603 = vmatpush.msra.mxu0 0.0
  %604 = vmatpush.msra.mxu0 0.0
  %605 = vmatpush.msra.mxu0 0.0
  %606 = vmatpush.msra.mxu0 0.0
  %607 = vmatpush.msra.mxu0 0.0
  %608 = vmatpush.msra.mxu0 0.0
  %609 = vmatpush.msra.mxu0 0.0
  %610 = vmatpush.msra.mxu0 0.0
  %611 = vmatpush.msra.mxu0 0.0
  %612 = vmatpush.msra.mxu0 0.0
  %613 = vmatpush.msra.mxu0 %v530
  %614 = vmatmul.f32.gmra.mxu0 %v596
  %v615 = vpop.f32.mrf.mxu0
  %v616 = vadd.f32 0.0, %v615
  %617 = vdwg.mxu0
  %v619 = vsel %vm289, %v354, 0
  %621 = vmatpush.msra.mxu0 0.0
  %622 = vmatpush.msra.mxu0 0.0
  %623 = vmatpush.msra.mxu0 0.0
  %624 = vmatpush.msra.mxu0 0.0
  %625 = vmatpush.msra.mxu0 0.0
  %626 = vmatpush.msra.mxu0 0.0
  %627 = vmatpush.msra.mxu0 0.0
  %628 = vmatpush.msra.mxu0 0.0
  %629 = vmatpush.msra.mxu0 0.0
  %630 = vmatpush.msra.mxu0 0.0
  %631 = vmatpush.msra.mxu0 0.0
  %632 = vmatpush.msra.mxu0 0.0
  %633 = vmatpush.msra.mxu0 0.0
  %634 = vmatpush.msra.mxu0 0.0
  %635 = vmatpush.msra.mxu0 0.0
  %636 = vmatpush.msra.mxu0 %v288
  %637 = vmatmul.f32.gmra.mxu0 %v619
  %v638 = vpop.f32.mrf.mxu0
  %v639 = vadd.f32 %v616, %v638
  %640 = vdwg.mxu0
  %v642 = vrot.slane %v472, 5
  %v643 = vrot.slane %v475, 5
  %v644 = vsel %vm357, %v642, %v643
  %v646 = vrot.slane %v498, 5
  %v647 = vrot.slane %v501, 5
  %v648 = vsel %vm357, %v646, %v647
  %v649 = vsel %vm289, %v644, 0
  %v651 = vsel %vm289, %v648, 0
  %653 = vmatpush.xpose.msra.mxu0 0.0
  %654 = vmatpush.xpose.msra.mxu0 0.0
  %655 = vmatpush.xpose.msra.mxu0 0.0
  %656 = vmatpush.xpose.msra.mxu0 0.0
  %657 = vmatpush.xpose.msra.mxu0 0.0
  %658 = vmatpush.xpose.msra.mxu0 0.0
  %659 = vmatpush.xpose.msra.mxu0 0.0
  %660 = vmatpush.xpose.msra.mxu0 0.0
  %661 = vmatpush.xpose.msra.mxu0 0.0
  %662 = vmatpush.xpose.msra.mxu0 0.0
  %663 = vmatpush.xpose.msra.mxu0 0.0
  %664 = vmatpush.xpose.msra.mxu0 0.0
  %665 = vmatpush.xpose.msra.mxu0 0.0
  %666 = vmatpush.xpose.msra.mxu0 0.0
  %667 = vmatpush.xpose.msra.mxu0 0.0
  %668 = vmatpush.xpose.msra.mxu0 %v651
  %669 = vmatmul.f32.gmra.mxu0 %v649
  %v670 = vpop.f32.mrf.mxu0
  %v671 = vadd.f32 0.0, %v670
  %672 = vdwg.mxu0
  %v673 = vmul.f32 %v671, 0.35355338
  %v674 = vsel %vm317, %v673, -inf
  %675 = vmax.xlane.f32.xlu0 %v674
  %v676 = vpop.xlane.xlu0 %675
  %v677 = vsub.f32 %v673, %v676
  %v678 = vmul.f32 %v677, 1.442695
  %v679 = vpow.pop %v678
  %v680 = vsel %vm317, %v679, 0.0
  %681 = vadd.xlane.f32.xlu0 %v680
  %v682 = vpop.xlane.xlu0 %681
  %v683 = vrcp.pop %v682
  %v684 = vmul.f32 %v679, %v683
  %v686 = vrot.slane %v524, 5
  %v687 = vrot.slane %v527, 5
  %v688 = vsel %vm357, %v686, %v687
  %v690 = vsel %vm329, %v684, 0
  %v692 = vsel %vm116, %v688, 0
  %694 = vmatpush.msra.mxu0 0.0
  %695 = vmatpush.msra.mxu0 0.0
  %696 = vmatpush.msra.mxu0 0.0
  %697 = vmatpush.msra.mxu0 0.0
  %698 = vmatpush.msra.mxu0 0.0
  %699 = vmatpush.msra.mxu0 0.0
  %700 = vmatpush.msra.mxu0 0.0
  %701 = vmatpush.msra.mxu0 0.0
  %702 = vmatpush.msra.mxu0 0.0
  %703 = vmatpush.msra.mxu0 0.0
  %704 = vmatpush.msra.mxu0 0.0
  %705 = vmatpush.msra.mxu0 0.0
  %706 = vmatpush.msra.mxu0 0.0
  %707 = vmatpush.msra.mxu0 0.0
  %708 = vmatpush.msra.mxu0 0.0
  %709 = vmatpush.msra.mxu0 %v692
  %710 = vmatmul.f32.gmra.mxu0 %v690
  %v711 = vpop.f32.mrf.mxu0
  %v712 = vadd.f32 0.0, %v711
  %713 = vdwg.mxu0
  %v715 = vsel %vm289, %v712, 0
  %717 = vmatpush.msra.mxu0 0.0
  %718 = vmatpush.msra.mxu0 0.0
  %719 = vmatpush.msra.mxu0 0.0
  %720 = vmatpush.msra.mxu0 0.0
  %721 = vmatpush.msra.mxu0 0.0
  %722 = vmatpush.msra.mxu0 0.0
  %723 = vmatpush.msra.mxu0 0.0
  %724 = vmatpush.msra.mxu0 0.0
  %725 = vmatpush.msra.mxu0 0.0
  %726 = vmatpush.msra.mxu0 0.0
  %727 = vmatpush.msra.mxu0 0.0
  %728 = vmatpush.msra.mxu0 0.0
  %729 = vmatpush.msra.mxu0 0.0
  %730 = vmatpush.msra.mxu0 0.0
  %731 = vmatpush.msra.mxu0 0.0
  %732 = vmatpush.msra.mxu0 %v530
  %733 = vmatmul.f32.gmra.mxu0 %v715
  %v734 = vpop.f32.mrf.mxu0
  %v735 = vadd.f32 0.0, %v734
  %736 = vdwg.mxu0
  %v738 = vsel %vm289, %v428, 0
  %740 = vmatpush.msra.mxu0 0.0
  %741 = vmatpush.msra.mxu0 0.0
  %742 = vmatpush.msra.mxu0 0.0
  %743 = vmatpush.msra.mxu0 0.0
  %744 = vmatpush.msra.mxu0 0.0
  %745 = vmatpush.msra.mxu0 0.0
  %746 = vmatpush.msra.mxu0 0.0
  %747 = vmatpush.msra.mxu0 0.0
  %748 = vmatpush.msra.mxu0 0.0
  %749 = vmatpush.msra.mxu0 0.0
  %750 = vmatpush.msra.mxu0 0.0
  %751 = vmatpush.msra.mxu0 0.0
  %752 = vmatpush.msra.mxu0 0.0
  %753 = vmatpush.msra.mxu0 0.0
  %754 = vmatpush.msra.mxu0 0.0
  %755 = vmatpush.msra.mxu0 %v288
  %756 = vmatmul.f32.gmra.mxu0 %v738
  %v757 = vpop.f32.mrf.mxu0
  %v758 = vadd.f32 %v735, %v757
  %759 = vdwg.mxu0
  %s760 = scalar_lea.vmem %s7, 64
  %v761 = vld [vmem:[%s760] sm:$0xff]
  %v762 = vld [vmem:[%s760 + $0x8] sm:$0xff]
  %v763 = vld [vmem:[%s760 + $0x10] sm:$0xff]
  %v764 = vld [vmem:[%s760 + $0x18] sm:$0xff]
  %s765 = scalar_lea.vmem %s8, 2
  %v766 = vld [vmem:[%s765] sm:$0x1]
  %s767 = scalar_lea.vmem %s7, 192
  %v768 = vld [vmem:[%s767] sm:$0xff]
  %v769 = vld [vmem:[%s767 + $0x8] sm:$0xff]
  %v770 = vld [vmem:[%s767 + $0x10] sm:$0xff]
  %v771 = vld [vmem:[%s767 + $0x18] sm:$0xff]
  %s772 = scalar_lea.vmem %s8, 6
  %v773 = vld [vmem:[%s772] sm:$0x1]
  %s774 = scalar_lea.vmem %s7, 320
  %v775 = vld [vmem:[%s774] sm:$0xff]
  %v776 = vld [vmem:[%s774 + $0x8] sm:$0xff]
  %v777 = vld [vmem:[%s774 + $0x10] sm:$0xff]
  %v778 = vld [vmem:[%s774 + $0x18] sm:$0xff]
  %s779 = scalar_lea.vmem %s8, 10
  %v780 = vld [vmem:[%s779] sm:$0x1]
  %v782 = vperm.slane %v766, 0
  %784 = vmatpush.msra.mxu0 0.0
  %785 = vmatpush.msra.mxu0 0.0
  %786 = vmatpush.msra.mxu0 0.0
  %787 = vmatpush.msra.mxu0 0.0
  %788 = vmatpush.msra.mxu0 0.0
  %789 = vmatpush.msra.mxu0 0.0
  %790 = vmatpush.msra.mxu0 0.0
  %791 = vmatpush.msra.mxu0 0.0
  %792 = vmatpush.msra.mxu0 0.0
  %793 = vmatpush.msra.mxu0 0.0
  %794 = vmatpush.msra.mxu0 0.0
  %795 = vmatpush.msra.mxu0 0.0
  %796 = vmatpush.msra.mxu0 %v764
  %797 = vmatpush.msra.mxu0 %v763
  %798 = vmatpush.msra.mxu0 %v762
  %799 = vmatpush.msra.mxu0 %v761
  %800 = vmatmul.f32.gmra.mxu0 %v208
  %v801 = vpop.f32.mrf.mxu0
  %v802 = vadd.f32 %v782, %v801
  %803 = vmatmul.f32.gmra.mxu0 %v211
  %v804 = vpop.f32.mrf.mxu0
  %v805 = vadd.f32 %v782, %v804
  %806 = vdwg.mxu0
  %v808 = vperm.slane %v773, 0
  %810 = vmatpush.msra.mxu0 0.0
  %811 = vmatpush.msra.mxu0 0.0
  %812 = vmatpush.msra.mxu0 0.0
  %813 = vmatpush.msra.mxu0 0.0
  %814 = vmatpush.msra.mxu0 0.0
  %815 = vmatpush.msra.mxu0 0.0
  %816 = vmatpush.msra.mxu0 0.0
  %817 = vmatpush.msra.mxu0 0.0
  %818 = vmatpush.msra.mxu0 0.0
  %819 = vmatpush.msra.mxu0 0.0
  %820 = vmatpush.msra.mxu0 0.0
  %821 = vmatpush.msra.mxu0 0.0
  %822 = vmatpush.msra.mxu0 %v771
  %823 = vmatpush.msra.mxu0 %v770
  %824 = vmatpush.msra.mxu0 %v769
  %825 = vmatpush.msra.mxu0 %v768
  %826 = vmatmul.f32.gmra.mxu0 %v208
  %v827 = vpop.f32.mrf.mxu0
  %v828 = vadd.f32 %v808, %v827
  %829 = vmatmul.f32.gmra.mxu0 %v211
  %v830 = vpop.f32.mrf.mxu0
  %v831 = vadd.f32 %v808, %v830
  %832 = vdwg.mxu0
  %v834 = vperm.slane %v780, 0
  %836 = vmatpush.msra.mxu0 0.0
  %837 = vmatpush.msra.mxu0 0.0
  %838 = vmatpush.msra.mxu0 0.0
  %839 = vmatpush.msra.mxu0 0.0
  %840 = vmatpush.msra.mxu0 0.0
  %841 = vmatpush.msra.mxu0 0.0
  %842 = vmatpush.msra.mxu0 0.0
  %843 = vmatpush.msra.mxu0 0.0
  %844 = vmatpush.msra.mxu0 0.0
  %845 = vmatpush.msra.mxu0 0.0
  %846 = vmatpush.msra.mxu0 0.0
  %847 = vmatpush.msra.mxu0 0.0
  %848 = vmatpush.msra.mxu0 %v778
  %849 = vmatpush.msra.mxu0 %v777
  %850 = vmatpush.msra.mxu0 %v776
  %851 = vmatpush.msra.mxu0 %v775
  %852 = vmatmul.f32.gmra.mxu0 %v208
  %v853 = vpop.f32.mrf.mxu0
  %v854 = vadd.f32 %v834, %v853
  %855 = vmatmul.f32.gmra.mxu0 %v211
  %v856 = vpop.f32.mrf.mxu0
  %v857 = vadd.f32 %v834, %v856
  %858 = vdwg.mxu0
  %s859 = scalar_lea.vmem %s9, 16
  %v860 = vld [vmem:[%s859] sm:$0xff]
  %v862 = vsel %vm289, %v802, 0
  %v865 = vsel %vm289, %v828, 0
  %867 = vmatpush.xpose.msra.mxu0 0.0
  %868 = vmatpush.xpose.msra.mxu0 0.0
  %869 = vmatpush.xpose.msra.mxu0 0.0
  %870 = vmatpush.xpose.msra.mxu0 0.0
  %871 = vmatpush.xpose.msra.mxu0 0.0
  %872 = vmatpush.xpose.msra.mxu0 0.0
  %873 = vmatpush.xpose.msra.mxu0 0.0
  %874 = vmatpush.xpose.msra.mxu0 0.0
  %875 = vmatpush.xpose.msra.mxu0 0.0
  %876 = vmatpush.xpose.msra.mxu0 0.0
  %877 = vmatpush.xpose.msra.mxu0 0.0
  %878 = vmatpush.xpose.msra.mxu0 0.0
  %879 = vmatpush.xpose.msra.mxu0 0.0
  %880 = vmatpush.xpose.msra.mxu0 0.0
  %881 = vmatpush.xpose.msra.mxu0 0.0
  %882 = vmatpush.xpose.msra.mxu0 %v865
  %883 = vmatmul.f32.gmra.mxu0 %v862
  %v884 = vpop.f32.mrf.mxu0
  %v885 = vadd.f32 0.0, %v884
  %886 = vdwg.mxu0
  %v887 = vmul.f32 %v885, 0.35355338
  %v888 = vsel %vm317, %v887, -inf
  %889 = vmax.xlane.f32.xlu0 %v888
  %v890 = vpop.xlane.xlu0 %889
  %v891 = vsub.f32 %v887, %v890
  %v892 = vmul.f32 %v891, 1.442695
  %v893 = vpow.pop %v892
  %v894 = vsel %vm317, %v893, 0.0
  %895 = vadd.xlane.f32.xlu0 %v894
  %v896 = vpop.xlane.xlu0 %895
  %v897 = vrcp.pop %v896
  %v898 = vmul.f32 %v893, %v897
  %v900 = vsel %vm329, %v898, 0
  %v903 = vsel %vm116, %v854, 0
  %905 = vmatpush.msra.mxu0 0.0
  %906 = vmatpush.msra.mxu0 0.0
  %907 = vmatpush.msra.mxu0 0.0
  %908 = vmatpush.msra.mxu0 0.0
  %909 = vmatpush.msra.mxu0 0.0
  %910 = vmatpush.msra.mxu0 0.0
  %911 = vmatpush.msra.mxu0 0.0
  %912 = vmatpush.msra.mxu0 0.0
  %913 = vmatpush.msra.mxu0 0.0
  %914 = vmatpush.msra.mxu0 0.0
  %915 = vmatpush.msra.mxu0 0.0
  %916 = vmatpush.msra.mxu0 0.0
  %917 = vmatpush.msra.mxu0 0.0
  %918 = vmatpush.msra.mxu0 0.0
  %919 = vmatpush.msra.mxu0 0.0
  %920 = vmatpush.msra.mxu0 %v903
  %921 = vmatmul.f32.gmra.mxu0 %v900
  %v922 = vpop.f32.mrf.mxu0
  %v923 = vadd.f32 0.0, %v922
  %924 = vdwg.mxu0
  %v926 = vsel %vm289, %v923, 0
  %928 = vmatpush.msra.mxu0 0.0
  %929 = vmatpush.msra.mxu0 0.0
  %930 = vmatpush.msra.mxu0 0.0
  %931 = vmatpush.msra.mxu0 0.0
  %932 = vmatpush.msra.mxu0 0.0
  %933 = vmatpush.msra.mxu0 0.0
  %934 = vmatpush.msra.mxu0 0.0
  %935 = vmatpush.msra.mxu0 0.0
  %936 = vmatpush.msra.mxu0 0.0
  %937 = vmatpush.msra.mxu0 0.0
  %938 = vmatpush.msra.mxu0 0.0
  %939 = vmatpush.msra.mxu0 0.0
  %940 = vmatpush.msra.mxu0 0.0
  %941 = vmatpush.msra.mxu0 0.0
  %942 = vmatpush.msra.mxu0 0.0
  %943 = vmatpush.msra.mxu0 %v860
  %944 = vmatmul.f32.gmra.mxu0 %v926
  %v945 = vpop.f32.mrf.mxu0
  %v946 = vadd.f32 0.0, %v945
  %947 = vdwg.mxu0
  %v948 = vadd.f32 %v639, %v946
  %v950 = vrot.slane %v802, 5
  %v951 = vrot.slane %v805, 5
  %v952 = vsel %vm357, %v950, %v951
  %v954 = vrot.slane %v828, 5
  %v955 = vrot.slane %v831, 5
  %v956 = vsel %vm357, %v954, %v955
  %v957 = vsel %vm289, %v952, 0
  %v959 = vsel %vm289, %v956, 0
  %961 = vmatpush.xpose.msra.mxu0 0.0
  %962 = vmatpush.xpose.msra.mxu0 0.0
  %963 = vmatpush.xpose.msra.mxu0 0.0
  %964 = vmatpush.xpose.msra.mxu0 0.0
  %965 = vmatpush.xpose.msra.mxu0 0.0
  %966 = vmatpush.xpose.msra.mxu0 0.0
  %967 = vmatpush.xpose.msra.mxu0 0.0
  %968 = vmatpush.xpose.msra.mxu0 0.0
  %969 = vmatpush.xpose.msra.mxu0 0.0
  %970 = vmatpush.xpose.msra.mxu0 0.0
  %971 = vmatpush.xpose.msra.mxu0 0.0
  %972 = vmatpush.xpose.msra.mxu0 0.0
  %973 = vmatpush.xpose.msra.mxu0 0.0
  %974 = vmatpush.xpose.msra.mxu0 0.0
  %975 = vmatpush.xpose.msra.mxu0 0.0
  %976 = vmatpush.xpose.msra.mxu0 %v959
  %977 = vmatmul.f32.gmra.mxu0 %v957
  %v978 = vpop.f32.mrf.mxu0
  %v979 = vadd.f32 0.0, %v978
  %980 = vdwg.mxu0
  %v981 = vmul.f32 %v979, 0.35355338
  %v982 = vsel %vm317, %v981, -inf
  %983 = vmax.xlane.f32.xlu0 %v982
  %v984 = vpop.xlane.xlu0 %983
  %v985 = vsub.f32 %v981, %v984
  %v986 = vmul.f32 %v985, 1.442695
  %v987 = vpow.pop %v986
  %v988 = vsel %vm317, %v987, 0.0
  %989 = vadd.xlane.f32.xlu0 %v988
  %v990 = vpop.xlane.xlu0 %989
  %v991 = vrcp.pop %v990
  %v992 = vmul.f32 %v987, %v991
  %v994 = vrot.slane %v854, 5
  %v995 = vrot.slane %v857, 5
  %v996 = vsel %vm357, %v994, %v995
  %v998 = vsel %vm329, %v992, 0
  %v1000 = vsel %vm116, %v996, 0
  %1002 = vmatpush.msra.mxu0 0.0
  %1003 = vmatpush.msra.mxu0 0.0
  %1004 = vmatpush.msra.mxu0 0.0
  %1005 = vmatpush.msra.mxu0 0.0
  %1006 = vmatpush.msra.mxu0 0.0
  %1007 = vmatpush.msra.mxu0 0.0
  %1008 = vmatpush.msra.mxu0 0.0
  %1009 = vmatpush.msra.mxu0 0.0
  %1010 = vmatpush.msra.mxu0 0.0
  %1011 = vmatpush.msra.mxu0 0.0
  %1012 = vmatpush.msra.mxu0 0.0
  %1013 = vmatpush.msra.mxu0 0.0
  %1014 = vmatpush.msra.mxu0 0.0
  %1015 = vmatpush.msra.mxu0 0.0
  %1016 = vmatpush.msra.mxu0 0.0
  %1017 = vmatpush.msra.mxu0 %v1000
  %1018 = vmatmul.f32.gmra.mxu0 %v998
  %v1019 = vpop.f32.mrf.mxu0
  %v1020 = vadd.f32 0.0, %v1019
  %1021 = vdwg.mxu0
  %v1023 = vsel %vm289, %v1020, 0
  %1025 = vmatpush.msra.mxu0 0.0
  %1026 = vmatpush.msra.mxu0 0.0
  %1027 = vmatpush.msra.mxu0 0.0
  %1028 = vmatpush.msra.mxu0 0.0
  %1029 = vmatpush.msra.mxu0 0.0
  %1030 = vmatpush.msra.mxu0 0.0
  %1031 = vmatpush.msra.mxu0 0.0
  %1032 = vmatpush.msra.mxu0 0.0
  %1033 = vmatpush.msra.mxu0 0.0
  %1034 = vmatpush.msra.mxu0 0.0
  %1035 = vmatpush.msra.mxu0 0.0
  %1036 = vmatpush.msra.mxu0 0.0
  %1037 = vmatpush.msra.mxu0 0.0
  %1038 = vmatpush.msra.mxu0 0.0
  %1039 = vmatpush.msra.mxu0 0.0
  %1040 = vmatpush.msra.mxu0 %v860
  %1041 = vmatmul.f32.gmra.mxu0 %v1023
  %v1042 = vpop.f32.mrf.mxu0
  %v1043 = vadd.f32 0.0, %v1042
  %1044 = vdwg.mxu0
  %v1045 = vadd.f32 %v758, %v1043
  %s1046 = scalar_lea.vmem %s7, 96
  %v1047 = vld [vmem:[%s1046] sm:$0xff]
  %v1048 = vld [vmem:[%s1046 + $0x8] sm:$0xff]
  %v1049 = vld [vmem:[%s1046 + $0x10] sm:$0xff]
  %v1050 = vld [vmem:[%s1046 + $0x18] sm:$0xff]
  %s1051 = scalar_lea.vmem %s8, 3
  %v1052 = vld [vmem:[%s1051] sm:$0x1]
  %s1053 = scalar_lea.vmem %s7, 224
  %v1054 = vld [vmem:[%s1053] sm:$0xff]
  %v1055 = vld [vmem:[%s1053 + $0x8] sm:$0xff]
  %v1056 = vld [vmem:[%s1053 + $0x10] sm:$0xff]
  %v1057 = vld [vmem:[%s1053 + $0x18] sm:$0xff]
  %s1058 = scalar_lea.vmem %s8, 7
  %v1059 = vld [vmem:[%s1058] sm:$0x1]
  %s1060 = scalar_lea.vmem %s7, 352
  %v1061 = vld [vmem:[%s1060] sm:$0xff]
  %v1062 = vld [vmem:[%s1060 + $0x8] sm:$0xff]
  %v1063 = vld [vmem:[%s1060 + $0x10] sm:$0xff]
  %v1064 = vld [vmem:[%s1060 + $0x18] sm:$0xff]
  %s1065 = scalar_lea.vmem %s8, 11
  %v1066 = vld [vmem:[%s1065] sm:$0x1]
  %v1068 = vperm.slane %v1052, 0
  %1070 = vmatpush.msra.mxu0 0.0
  %1071 = vmatpush.msra.mxu0 0.0
  %1072 = vmatpush.msra.mxu0 0.0
  %1073 = vmatpush.msra.mxu0 0.0
  %1074 = vmatpush.msra.mxu0 0.0
  %1075 = vmatpush.msra.mxu0 0.0
  %1076 = vmatpush.msra.mxu0 0.0
  %1077 = vmatpush.msra.mxu0 0.0
  %1078 = vmatpush.msra.mxu0 0.0
  %1079 = vmatpush.msra.mxu0 0.0
  %1080 = vmatpush.msra.mxu0 0.0
  %1081 = vmatpush.msra.mxu0 0.0
  %1082 = vmatpush.msra.mxu0 %v1050
  %1083 = vmatpush.msra.mxu0 %v1049
  %1084 = vmatpush.msra.mxu0 %v1048
  %1085 = vmatpush.msra.mxu0 %v1047
  %1086 = vmatmul.f32.gmra.mxu0 %v208
  %v1087 = vpop.f32.mrf.mxu0
  %v1088 = vadd.f32 %v1068, %v1087
  %1089 = vmatmul.f32.gmra.mxu0 %v211
  %v1090 = vpop.f32.mrf.mxu0
  %v1091 = vadd.f32 %v1068, %v1090
  %1092 = vdwg.mxu0
  %v1094 = vperm.slane %v1059, 0
  %1096 = vmatpush.msra.mxu0 0.0
  %1097 = vmatpush.msra.mxu0 0.0
  %1098 = vmatpush.msra.mxu0 0.0
  %1099 = vmatpush.msra.mxu0 0.0
  %1100 = vmatpush.msra.mxu0 0.0
  %1101 = vmatpush.msra.mxu0 0.0
  %1102 = vmatpush.msra.mxu0 0.0
  %1103 = vmatpush.msra.mxu0 0.0
  %1104 = vmatpush.msra.mxu0 0.0
  %1105 = vmatpush.msra.mxu0 0.0
  %1106 = vmatpush.msra.mxu0 0.0
  %1107 = vmatpush.msra.mxu0 0.0
  %1108 = vmatpush.msra.mxu0 %v1057
  %1109 = vmatpush.msra.mxu0 %v1056
  %1110 = vmatpush.msra.mxu0 %v1055
  %1111 = vmatpush.msra.mxu0 %v1054
  %1112 = vmatmul.f32.gmra.mxu0 %v208
  %v1113 = vpop.f32.mrf.mxu0
  %v1114 = vadd.f32 %v1094, %v1113
  %1115 = vmatmul.f32.gmra.mxu0 %v211
  %v1116 = vpop.f32.mrf.mxu0
  %v1117 = vadd.f32 %v1094, %v1116
  %1118 = vdwg.mxu0
  %v1120 = vperm.slane %v1066, 0
  %1122 = vmatpush.msra.mxu0 0.0
  %1123 = vmatpush.msra.mxu0 0.0
  %1124 = vmatpush.msra.mxu0 0.0
  %1125 = vmatpush.msra.mxu0 0.0
  %1126 = vmatpush.msra.mxu0 0.0
  %1127 = vmatpush.msra.mxu0 0.0
  %1128 = vmatpush.msra.mxu0 0.0
  %1129 = vmatpush.msra.mxu0 0.0
  %1130 = vmatpush.msra.mxu0 0.0
  %1131 = vmatpush.msra.mxu0 0.0
  %1132 = vmatpush.msra.mxu0 0.0
  %1133 = vmatpush.msra.mxu0 0.0
  %1134 = vmatpush.msra.mxu0 %v1064
  %1135 = vmatpush.msra.mxu0 %v1063
  %1136 = vmatpush.msra.mxu0 %v1062
  %1137 = vmatpush.msra.mxu0 %v1061
  %1138 = vmatmul.f32.gmra.mxu0 %v208
  %v1139 = vpop.f32.mrf.mxu0
  %v1140 = vadd.f32 %v1120, %v1139
  %1141 = vmatmul.f32.gmra.mxu0 %v211
  %v1142 = vpop.f32.mrf.mxu0
  %v1143 = vadd.f32 %v1120, %v1142
  %1144 = vdwg.mxu0
  %s1145 = scalar_lea.vmem %s9, 24
  %v1146 = vld [vmem:[%s1145] sm:$0xff]
  %v1148 = vsel %vm289, %v1088, 0
  %v1151 = vsel %vm289, %v1114, 0
  %1153 = vmatpush.xpose.msra.mxu0 0.0
  %1154 = vmatpush.xpose.msra.mxu0 0.0
  %1155 = vmatpush.xpose.msra.mxu0 0.0
  %1156 = vmatpush.xpose.msra.mxu0 0.0
  %1157 = vmatpush.xpose.msra.mxu0 0.0
  %1158 = vmatpush.xpose.msra.mxu0 0.0
  %1159 = vmatpush.xpose.msra.mxu0 0.0
  %1160 = vmatpush.xpose.msra.mxu0 0.0
  %1161 = vmatpush.xpose.msra.mxu0 0.0
  %1162 = vmatpush.xpose.msra.mxu0 0.0
  %1163 = vmatpush.xpose.msra.mxu0 0.0
  %1164 = vmatpush.xpose.msra.mxu0 0.0
  %1165 = vmatpush.xpose.msra.mxu0 0.0
  %1166 = vmatpush.xpose.msra.mxu0 0.0
  %1167 = vmatpush.xpose.msra.mxu0 0.0
  %1168 = vmatpush.xpose.msra.mxu0 %v1151
  %1169 = vmatmul.f32.gmra.mxu0 %v1148
  %v1170 = vpop.f32.mrf.mxu0
  %v1171 = vadd.f32 0.0, %v1170
  %1172 = vdwg.mxu0
  %v1173 = vmul.f32 %v1171, 0.35355338
  %v1174 = vsel %vm317, %v1173, -inf
  %1175 = vmax.xlane.f32.xlu0 %v1174
  %v1176 = vpop.xlane.xlu0 %1175
  %v1177 = vsub.f32 %v1173, %v1176
  %v1178 = vmul.f32 %v1177, 1.442695
  %v1179 = vpow.pop %v1178
  %v1180 = vsel %vm317, %v1179, 0.0
  %1181 = vadd.xlane.f32.xlu0 %v1180
  %v1182 = vpop.xlane.xlu0 %1181
  %v1183 = vrcp.pop %v1182
  %v1184 = vmul.f32 %v1179, %v1183
  %v1186 = vsel %vm329, %v1184, 0
  %v1189 = vsel %vm116, %v1140, 0
  %1191 = vmatpush.msra.mxu0 0.0
  %1192 = vmatpush.msra.mxu0 0.0
  %1193 = vmatpush.msra.mxu0 0.0
  %1194 = vmatpush.msra.mxu0 0.0
  %1195 = vmatpush.msra.mxu0 0.0
  %1196 = vmatpush.msra.mxu0 0.0
  %1197 = vmatpush.msra.mxu0 0.0
  %1198 = vmatpush.msra.mxu0 0.0
  %1199 = vmatpush.msra.mxu0 0.0
  %1200 = vmatpush.msra.mxu0 0.0
  %1201 = vmatpush.msra.mxu0 0.0
  %1202 = vmatpush.msra.mxu0 0.0
  %1203 = vmatpush.msra.mxu0 0.0
  %1204 = vmatpush.msra.mxu0 0.0
  %1205 = vmatpush.msra.mxu0 0.0
  %1206 = vmatpush.msra.mxu0 %v1189
  %1207 = vmatmul.f32.gmra.mxu0 %v1186
  %v1208 = vpop.f32.mrf.mxu0
  %v1209 = vadd.f32 0.0, %v1208
  %1210 = vdwg.mxu0
  %v1212 = vsel %vm289, %v1209, 0
  %1214 = vmatpush.msra.mxu0 0.0
  %1215 = vmatpush.msra.mxu0 0.0
  %1216 = vmatpush.msra.mxu0 0.0
  %1217 = vmatpush.msra.mxu0 0.0
  %1218 = vmatpush.msra.mxu0 0.0
  %1219 = vmatpush.msra.mxu0 0.0
  %1220 = vmatpush.msra.mxu0 0.0
  %1221 = vmatpush.msra.mxu0 0.0
  %1222 = vmatpush.msra.mxu0 0.0
  %1223 = vmatpush.msra.mxu0 0.0
  %1224 = vmatpush.msra.mxu0 0.0
  %1225 = vmatpush.msra.mxu0 0.0
  %1226 = vmatpush.msra.mxu0 0.0
  %1227 = vmatpush.msra.mxu0 0.0
  %1228 = vmatpush.msra.mxu0 0.0
  %1229 = vmatpush.msra.mxu0 %v1146
  %1230 = vmatmul.f32.gmra.mxu0 %v1212
  %v1231 = vpop.f32.mrf.mxu0
  %v1232 = vadd.f32 0.0, %v1231
  %1233 = vdwg.mxu0
  %v1234 = vadd.f32 %v948, %v1232
  %v1236 = vrot.slane %v1088, 5
  %v1237 = vrot.slane %v1091, 5
  %v1238 = vsel %vm357, %v1236, %v1237
  %v1240 = vrot.slane %v1114, 5
  %v1241 = vrot.slane %v1117, 5
  %v1242 = vsel %vm357, %v1240, %v1241
  %v1243 = vsel %vm289, %v1238, 0
  %v1245 = vsel %vm289, %v1242, 0
  %1247 = vmatpush.xpose.msra.mxu0 0.0
  %1248 = vmatpush.xpose.msra.mxu0 0.0
  %1249 = vmatpush.xpose.msra.mxu0 0.0
  %1250 = vmatpush.xpose.msra.mxu0 0.0
  %1251 = vmatpush.xpose.msra.mxu0 0.0
  %1252 = vmatpush.xpose.msra.mxu0 0.0
  %1253 = vmatpush.xpose.msra.mxu0 0.0
  %1254 = vmatpush.xpose.msra.mxu0 0.0
  %1255 = vmatpush.xpose.msra.mxu0 0.0
  %1256 = vmatpush.xpose.msra.mxu0 0.0
  %1257 = vmatpush.xpose.msra.mxu0 0.0
  %1258 = vmatpush.xpose.msra.mxu0 0.0
  %1259 = vmatpush.xpose.msra.mxu0 0.0
  %1260 = vmatpush.xpose.msra.mxu0 0.0
  %1261 = vmatpush.xpose.msra.mxu0 0.0
  %1262 = vmatpush.xpose.msra.mxu0 %v1245
  %1263 = vmatmul.f32.gmra.mxu0 %v1243
  %v1264 = vpop.f32.mrf.mxu0
  %v1265 = vadd.f32 0.0, %v1264
  %1266 = vdwg.mxu0
  %v1267 = vmul.f32 %v1265, 0.35355338
  %v1268 = vsel %vm317, %v1267, -inf
  %1269 = vmax.xlane.f32.xlu0 %v1268
  %v1270 = vpop.xlane.xlu0 %1269
  %v1271 = vsub.f32 %v1267, %v1270
  %v1272 = vmul.f32 %v1271, 1.442695
  %v1273 = vpow.pop %v1272
  %v1274 = vsel %vm317, %v1273, 0.0
  %1275 = vadd.xlane.f32.xlu0 %v1274
  %v1276 = vpop.xlane.xlu0 %1275
  %v1277 = vrcp.pop %v1276
  %v1278 = vmul.f32 %v1273, %v1277
  %v1280 = vrot.slane %v1140, 5
  %v1281 = vrot.slane %v1143, 5
  %v1282 = vsel %vm357, %v1280, %v1281
  %v1284 = vsel %vm329, %v1278, 0
  %v1286 = vsel %vm116, %v1282, 0
  %1288 = vmatpush.msra.mxu0 0.0
  %1289 = vmatpush.msra.mxu0 0.0
  %1290 = vmatpush.msra.mxu0 0.0
  %1291 = vmatpush.msra.mxu0 0.0
  %1292 = vmatpush.msra.mxu0 0.0
  %1293 = vmatpush.msra.mxu0 0.0
  %1294 = vmatpush.msra.mxu0 0.0
  %1295 = vmatpush.msra.mxu0 0.0
  %1296 = vmatpush.msra.mxu0 0.0
  %1297 = vmatpush.msra.mxu0 0.0
  %1298 = vmatpush.msra.mxu0 0.0
  %1299 = vmatpush.msra.mxu0 0.0
  %1300 = vmatpush.msra.mxu0 0.0
  %1301 = vmatpush.msra.mxu0 0.0
  %1302 = vmatpush.msra.mxu0 0.0
  %1303 = vmatpush.msra.mxu0 %v1286
  %1304 = vmatmul.f32.gmra.mxu0 %v1284
  %v1305 = vpop.f32.mrf.mxu0
  %v1306 = vadd.f32 0.0, %v1305
  %1307 = vdwg.mxu0
  %v1309 = vsel %vm289, %v1306, 0
  %1311 = vmatpush.msra.mxu0 0.0
  %1312 = vmatpush.msra.mxu0 0.0
  %1313 = vmatpush.msra.mxu0 0.0
  %1314 = vmatpush.msra.mxu0 0.0
  %1315 = vmatpush.msra.mxu0 0.0
  %1316 = vmatpush.msra.mxu0 0.0
  %1317 = vmatpush.msra.mxu0 0.0
  %1318 = vmatpush.msra.mxu0 0.0
  %1319 = vmatpush.msra.mxu0 0.0
  %1320 = vmatpush.msra.mxu0 0.0
  %1321 = vmatpush.msra.mxu0 0.0
  %1322 = vmatpush.msra.mxu0 0.0
  %1323 = vmatpush.msra.mxu0 0.0
  %1324 = vmatpush.msra.mxu0 0.0
  %1325 = vmatpush.msra.mxu0 0.0
  %1326 = vmatpush.msra.mxu0 %v1146
  %1327 = vmatmul.f32.gmra.mxu0 %v1309
  %v1328 = vpop.f32.mrf.mxu0
  %v1329 = vadd.f32 0.0, %v1328
  %1330 = vdwg.mxu0
  %v1331 = vadd.f32 %v1045, %v1329
  %v1333 = vrot.slane %v1331, 3
  %v1335 = vsel %vm116, %v1234, %v1333
  %v1336 = vadd.f32 %v119, %v1335
  %v1337 = vadd.f32 %v112, %v1333
  %v1338 = vld [vmem:[%s10] sm:$0x1]
  %v1340 = vperm.slane %v1338, 0
  %v1342 = vadd.f32 %v1336, %v1340
  %v1343 = vadd.f32 %v1337, %v1340
  %v1344 = vld [vmem:[%s11] sm:$0x1]
  %v1345 = vld [vmem:[%s12] sm:$0x1]
  %v1346 = vsel %vm122, %v1342, 0.0
  %1347 = vadd.xlane.f32.xlu0 %v1346
  %v1348 = vpop.xlane.xlu0 %1347
  %v1349 = vsel %vm126, %v1343, 0.0
  %1350 = vadd.xlane.f32.xlu0 %v1349
  %v1351 = vpop.xlane.xlu0 %1350
  %v1352 = vmul.f32 %v1348, %v136
  %v1353 = vmul.f32 %v1351, %v136
  %v1354 = vsub.f32 %v1342, %v1352
  %v1355 = vsub.f32 %v1343, %v1353
  %v1356 = vmul.f32 %v1354, %v1354
  %v1357 = vmul.f32 %v1355, %v1355
  %v1358 = vsel %vm122, %v1356, 0.0
  %1359 = vadd.xlane.f32.xlu0 %v1358
  %v1360 = vpop.xlane.xlu0 %1359
  %v1361 = vsel %vm126, %v1357, 0.0
  %1362 = vadd.xlane.f32.xlu0 %v1361
  %v1363 = vpop.xlane.xlu0 %1362
  %v1364 = vmul.f32 %v1360, %v136
  %v1365 = vmul.f32 %v1363, %v136
  %v1366 = vadd.f32 %v1364, 1e-05
  %v1367 = vadd.f32 %v1365, 1e-05
  %v1368 = vrsqrt.pop %v1366
  %v1369 = vmul.f32 %v1368, %v1366
  %v1370 = vmul.f32 %v1369, %v1368
  %v1371 = vmul.f32 0.5, %v1370
  %v1372 = vsub.f32 1.5, %v1371
  %v1373 = vmul.f32 %v1368, %v1372
  %vm1374 = vweird.f32 %v1366
  %vm1375 = vweird.f32 %v1368
  %vm1376 = vmor %vm1374, %vm1375
  %v1377 = vsel %vm1376, %v1368, %v1373
  %v1378 = vrsqrt.pop %v1367
  %v1379 = vmul.f32 %v1378, %v1367
  %v1380 = vmul.f32 %v1379, %v1378
  %v1381 = vmul.f32 0.5, %v1380
  %v1382 = vsub.f32 1.5, %v1381
  %v1383 = vmul.f32 %v1378, %v1382
  %vm1384 = vweird.f32 %v1367
  %vm1385 = vweird.f32 %v1378
  %vm1386 = vmor %vm1384, %vm1385
  %v1387 = vsel %vm1386, %v1378, %v1383
  %v1388 = vmul.f32 %v1354, %v1377
  %v1389 = vmul.f32 %v1355, %v1387
  %v1391 = vperm.slane %v1344, 0
  %v1393 = vmul.f32 %v1388, %v1391
  %v1394 = vmul.f32 %v1389, %v1391
  %v1396 = vperm.slane %v1345, 0
  %v1398 = vadd.f32 %v1393, %v1396
  %v1399 = vadd.f32 %v1394, %v1396
  %v1400 = vld [vmem:[%s13] sm:$0xff]
  %v1401 = vld [vmem:[%s13 + $0x8] sm:$0xff]
  %v1402 = vld [vmem:[%s13 + $0x10] sm:$0xff]
  %v1403 = vld [vmem:[%s13 + $0x18] sm:$0xff]
  %v1404 = vld [vmem:[%s14] sm:$0x1]
  %v1406 = vperm.slane %v1404, 0
  %v1409 = vsel %vm122, %v1398, 0
  %v1412 = vsel %vm122, %v1399, 0
  %1414 = vmatpush.msra.mxu0 0.0
  %1415 = vmatpush.msra.mxu0 0.0
  %1416 = vmatpush.msra.mxu0 0.0
  %1417 = vmatpush.msra.mxu0 0.0
  %1418 = vmatpush.msra.mxu0 0.0
  %1419 = vmatpush.msra.mxu0 0.0
  %1420 = vmatpush.msra.mxu0 0.0
  %1421 = vmatpush.msra.mxu0 0.0
  %1422 = vmatpush.msra.mxu0 0.0
  %1423 = vmatpush.msra.mxu0 0.0
  %1424 = vmatpush.msra.mxu0 0.0
  %1425 = vmatpush.msra.mxu0 0.0
  %1426 = vmatpush.msra.mxu0 %v1403
  %1427 = vmatpush.msra.mxu0 %v1402
  %1428 = vmatpush.msra.mxu0 %v1401
  %1429 = vmatpush.msra.mxu0 %v1400
  %1430 = vmatmul.f32.gmra.mxu0 %v1409
  %v1431 = vpop.f32.mrf.mxu0
  %v1432 = vadd.f32 %v1406, %v1431
  %1433 = vmatmul.f32.gmra.mxu0 %v1412
  %v1434 = vpop.f32.mrf.mxu0
  %v1435 = vadd.f32 %v1406, %v1434
  %1436 = vdwg.mxu0
  %v1437 = vmul.f32 %v1432, 0.5
  %v1438 = vmul.f32 %v1435, 0.5
  %v1439 = vmul.f32 %v1432, 0.044715
  %v1440 = vmul.f32 %v1435, 0.044715
  %v1441 = vmul.f32 %v1439, %v1432
  %v1442 = vmul.f32 %v1440, %v1435
  %v1443 = vmul.f32 %v1441, %v1432
  %v1444 = vmul.f32 %v1442, %v1435
  %v1445 = vadd.f32 %v1432, %v1443
  %v1446 = vadd.f32 %v1435, %v1444
  %v1447 = vmul.f32 %v1445, 0.7978846
  %v1448 = vmul.f32 %v1446, 0.7978846
  %v1449 = vtanh.pop %v1447
  %v1450 = vtanh.pop %v1448
  %v1451 = vadd.f32 %v1449, 1.0
  %v1452 = vadd.f32 %v1450, 1.0
  %v1453 = vmul.f32 %v1437, %v1451
  %v1454 = vmul.f32 %v1438, %v1452
  %v1455 = vld [vmem:[%s15] sm:$0xff]
  %v1456 = vld [vmem:[%s15 + $0x8] sm:$0xff]
  %v1457 = vld [vmem:[%s15 + $0x10] sm:$0xff]
  %v1458 = vld [vmem:[%s15 + $0x18] sm:$0xff]
  %v1459 = vld [vmem:[%s15 + $0x20] sm:$0xff]
  %v1460 = vld [vmem:[%s15 + $0x28] sm:$0xff]
  %v1461 = vld [vmem:[%s15 + $0x30] sm:$0xff]
  %v1462 = vld [vmem:[%s15 + $0x38] sm:$0xff]
  %v1463 = vld [vmem:[%s15 + $0x40] sm:$0xff]
  %v1464 = vld [vmem:[%s15 + $0x48] sm:$0xff]
  %v1465 = vld [vmem:[%s15 + $0x50] sm:$0xff]
  %v1466 = vld [vmem:[%s15 + $0x58] sm:$0xff]
  %v1467 = vld [vmem:[%s15 + $0x60] sm:$0xff]
  %v1468 = vld [vmem:[%s15 + $0x68] sm:$0xff]
  %v1469 = vld [vmem:[%s15 + $0x70] sm:$0xff]
  %v1470 = vld [vmem:[%s15 + $0x78] sm:$0xff]
  %v1471 = vld [vmem:[%s16] sm:$0x1]
  %v1473 = vperm.slane %v1471, 0
  %1475 = vmatpush.msra.mxu0 %v1470
  %1476 = vmatpush.msra.mxu0 %v1469
  %1477 = vmatpush.msra.mxu0 %v1468
  %1478 = vmatpush.msra.mxu0 %v1467
  %1479 = vmatpush.msra.mxu0 %v1466
  %1480 = vmatpush.msra.mxu0 %v1465
  %1481 = vmatpush.msra.mxu0 %v1464
  %1482 = vmatpush.msra.mxu0 %v1463
  %1483 = vmatpush.msra.mxu0 %v1462
  %1484 = vmatpush.msra.mxu0 %v1461
  %1485 = vmatpush.msra.mxu0 %v1460
  %1486 = vmatpush.msra.mxu0 %v1459
  %1487 = vmatpush.msra.mxu0 %v1458
  %1488 = vmatpush.msra.mxu0 %v1457
  %1489 = vmatpush.msra.mxu0 %v1456
  %1490 = vmatpush.msra.mxu0 %v1455
  %1491 = vmatmul.f32.gmra.mxu0 %v1453
  %v1492 = vpop.f32.mrf.mxu0
  %v1493 = vadd.f32 %v1473, %v1492
  %1494 = vmatmul.f32.gmra.mxu0 %v1454
  %v1495 = vpop.f32.mrf.mxu0
  %v1496 = vadd.f32 %v1473, %v1495
  %1497 = vdwg.mxu0
  %v1498 = vadd.f32 %v1342, %v1493
  %v1499 = vadd.f32 %v1343, %v1496
  %s1500 = scalar_lea.vmem %s5, 1
  %v1501 = vld [vmem:[%s1500] sm:$0x1]
  %s1502 = scalar_lea.vmem %s6, 1
  %v1503 = vld [vmem:[%s1502] sm:$0x1]
  %v1504 = vsel %vm122, %v1498, 0.0
  %1505 = vadd.xlane.f32.xlu0 %v1504
  %v1506 = vpop.xlane.xlu0 %1505
  %v1507 = vsel %vm126, %v1499, 0.0
  %1508 = vadd.xlane.f32.xlu0 %v1507
  %v1509 = vpop.xlane.xlu0 %1508
  %v1510 = vmul.f32 %v1506, %v136
  %v1511 = vmul.f32 %v1509, %v136
  %v1512 = vsub.f32 %v1498, %v1510
  %v1513 = vsub.f32 %v1499, %v1511
  %v1514 = vmul.f32 %v1512, %v1512
  %v1515 = vmul.f32 %v1513, %v1513
  %v1516 = vsel %vm122, %v1514, 0.0
  %1517 = vadd.xlane.f32.xlu0 %v1516
  %v1518 = vpop.xlane.xlu0 %1517
  %v1519 = vsel %vm126, %v1515, 0.0
  %1520 = vadd.xlane.f32.xlu0 %v1519
  %v1521 = vpop.xlane.xlu0 %1520
  %v1522 = vmul.f32 %v1518, %v136
  %v1523 = vmul.f32 %v1521, %v136
  %v1524 = vadd.f32 %v1522, 1e-05
  %v1525 = vadd.f32 %v1523, 1e-05
  %v1526 = vrsqrt.pop %v1524
  %v1527 = vmul.f32 %v1526, %v1524
  %v1528 = vmul.f32 %v1527, %v1526
  %v1529 = vmul.f32 0.5, %v1528
  %v1530 = vsub.f32 1.5, %v1529
  %v1531 = vmul.f32 %v1526, %v1530
  %vm1532 = vweird.f32 %v1524
  %vm1533 = vweird.f32 %v1526
  %vm1534 = vmor %vm1532, %vm1533
  %v1535 = vsel %vm1534, %v1526, %v1531
  %v1536 = vrsqrt.pop %v1525
  %v1537 = vmul.f32 %v1536, %v1525
  %v1538 = vmul.f32 %v1537, %v1536
  %v1539 = vmul.f32 0.5, %v1538
  %v1540 = vsub.f32 1.5, %v1539
  %v1541 = vmul.f32 %v1536, %v1540
  %vm1542 = vweird.f32 %v1525
  %vm1543 = vweird.f32 %v1536
  %vm1544 = vmor %vm1542, %vm1543
  %v1545 = vsel %vm1544, %v1536, %v1541
  %v1546 = vmul.f32 %v1512, %v1535
  %v1547 = vmul.f32 %v1513, %v1545
  %v1549 = vperm.slane %v1501, 0
  %v1551 = vmul.f32 %v1546, %v1549
  %v1552 = vmul.f32 %v1547, %v1549
  %v1554 = vperm.slane %v1503, 0
  %v1556 = vadd.f32 %v1551, %v1554
  %v1557 = vadd.f32 %v1552, %v1554
  %s1558 = scalar_lea.vmem %s7, 384
  %v1559 = vld [vmem:[%s1558] sm:$0xff]
  %v1560 = vld [vmem:[%s1558 + $0x8] sm:$0xff]
  %v1561 = vld [vmem:[%s1558 + $0x10] sm:$0xff]
  %v1562 = vld [vmem:[%s1558 + $0x18] sm:$0xff]
  %s1563 = scalar_lea.vmem %s8, 12
  %v1564 = vld [vmem:[%s1563] sm:$0x1]
  %s1565 = scalar_lea.vmem %s7, 512
  %v1566 = vld [vmem:[%s1565] sm:$0xff]
  %v1567 = vld [vmem:[%s1565 + $0x8] sm:$0xff]
  %v1568 = vld [vmem:[%s1565 + $0x10] sm:$0xff]
  %v1569 = vld [vmem:[%s1565 + $0x18] sm:$0xff]
  %s1570 = scalar_lea.vmem %s8, 16
  %v1571 = vld [vmem:[%s1570] sm:$0x1]
  %s1572 = scalar_lea.vmem %s7, 640
  %v1573 = vld [vmem:[%s1572] sm:$0xff]
  %v1574 = vld [vmem:[%s1572 + $0x8] sm:$0xff]
  %v1575 = vld [vmem:[%s1572 + $0x10] sm:$0xff]
  %v1576 = vld [vmem:[%s1572 + $0x18] sm:$0xff]
  %s1577 = scalar_lea.vmem %s8, 20
  %v1578 = vld [vmem:[%s1577] sm:$0x1]
  %v1580 = vperm.slane %v1564, 0
  %v1583 = vsel %vm122, %v1556, 0
  %v1586 = vsel %vm122, %v1557, 0
  %1588 = vmatpush.msra.mxu0 0.0
  %1589 = vmatpush.msra.mxu0 0.0
  %1590 = vmatpush.msra.mxu0 0.0
  %1591 = vmatpush.msra.mxu0 0.0
  %1592 = vmatpush.msra.mxu0 0.0
  %1593 = vmatpush.msra.mxu0 0.0
  %1594 = vmatpush.msra.mxu0 0.0
  %1595 = vmatpush.msra.mxu0 0.0
  %1596 = vmatpush.msra.mxu0 0.0
  %1597 = vmatpush.msra.mxu0 0.0
  %1598 = vmatpush.msra.mxu0 0.0
  %1599 = vmatpush.msra.mxu0 0.0
  %1600 = vmatpush.msra.mxu0 %v1562
  %1601 = vmatpush.msra.mxu0 %v1561
  %1602 = vmatpush.msra.mxu0 %v1560
  %1603 = vmatpush.msra.mxu0 %v1559
  %1604 = vmatmul.f32.gmra.mxu0 %v1583
  %v1605 = vpop.f32.mrf.mxu0
  %v1606 = vadd.f32 %v1580, %v1605
  %1607 = vmatmul.f32.gmra.mxu0 %v1586
  %v1608 = vpop.f32.mrf.mxu0
  %v1609 = vadd.f32 %v1580, %v1608
  %1610 = vdwg.mxu0
  %v1612 = vperm.slane %v1571, 0
  %1614 = vmatpush.msra.mxu0 0.0
  %1615 = vmatpush.msra.mxu0 0.0
  %1616 = vmatpush.msra.mxu0 0.0
  %1617 = vmatpush.msra.mxu0 0.0
  %1618 = vmatpush.msra.mxu0 0.0
  %1619 = vmatpush.msra.mxu0 0.0
  %1620 = vmatpush.msra.mxu0 0.0
  %1621 = vmatpush.msra.mxu0 0.0
  %1622 = vmatpush.msra.mxu0 0.0
  %1623 = vmatpush.msra.mxu0 0.0
  %1624 = vmatpush.msra.mxu0 0.0
  %1625 = vmatpush.msra.mxu0 0.0
  %1626 = vmatpush.msra.mxu0 %v1569
  %1627 = vmatpush.msra.mxu0 %v1568
  %1628 = vmatpush.msra.mxu0 %v1567
  %1629 = vmatpush.msra.mxu0 %v1566
  %1630 = vmatmul.f32.gmra.mxu0 %v1583
  %v1631 = vpop.f32.mrf.mxu0
  %v1632 = vadd.f32 %v1612, %v1631
  %1633 = vmatmul.f32.gmra.mxu0 %v1586
  %v1634 = vpop.f32.mrf.mxu0
  %v1635 = vadd.f32 %v1612, %v1634
  %1636 = vdwg.mxu0
  %v1638 = vperm.slane %v1578, 0
  %1640 = vmatpush.msra.mxu0 0.0
  %1641 = vmatpush.msra.mxu0 0.0
  %1642 = vmatpush.msra.mxu0 0.0
  %1643 = vmatpush.msra.mxu0 0.0
  %1644 = vmatpush.msra.mxu0 0.0
  %1645 = vmatpush.msra.mxu0 0.0
  %1646 = vmatpush.msra.mxu0 0.0
  %1647 = vmatpush.msra.mxu0 0.0
  %1648 = vmatpush.msra.mxu0 0.0
  %1649 = vmatpush.msra.mxu0 0.0
  %1650 = vmatpush.msra.mxu0 0.0
  %1651 = vmatpush.msra.mxu0 0.0
  %1652 = vmatpush.msra.mxu0 %v1576
  %1653 = vmatpush.msra.mxu0 %v1575
  %1654 = vmatpush.msra.mxu0 %v1574
  %1655 = vmatpush.msra.mxu0 %v1573
  %1656 = vmatmul.f32.gmra.mxu0 %v1583
  %v1657 = vpop.f32.mrf.mxu0
  %v1658 = vadd.f32 %v1638, %v1657
  %1659 = vmatmul.f32.gmra.mxu0 %v1586
  %v1660 = vpop.f32.mrf.mxu0
  %v1661 = vadd.f32 %v1638, %v1660
  %1662 = vdwg.mxu0
  %s1663 = scalar_lea.vmem %s9, 32
  %v1664 = vld [vmem:[%s1663] sm:$0xff]
  %v1666 = vsel %vm289, %v1606, 0
  %v1669 = vsel %vm289, %v1632, 0
  %1671 = vmatpush.xpose.msra.mxu0 0.0
  %1672 = vmatpush.xpose.msra.mxu0 0.0
  %1673 = vmatpush.xpose.msra.mxu0 0.0
  %1674 = vmatpush.xpose.msra.mxu0 0.0
  %1675 = vmatpush.xpose.msra.mxu0 0.0
  %1676 = vmatpush.xpose.msra.mxu0 0.0
  %1677 = vmatpush.xpose.msra.mxu0 0.0
  %1678 = vmatpush.xpose.msra.mxu0 0.0
  %1679 = vmatpush.xpose.msra.mxu0 0.0
  %1680 = vmatpush.xpose.msra.mxu0 0.0
  %1681 = vmatpush.xpose.msra.mxu0 0.0
  %1682 = vmatpush.xpose.msra.mxu0 0.0
  %1683 = vmatpush.xpose.msra.mxu0 0.0
  %1684 = vmatpush.xpose.msra.mxu0 0.0
  %1685 = vmatpush.xpose.msra.mxu0 0.0
  %1686 = vmatpush.xpose.msra.mxu0 %v1669
  %1687 = vmatmul.f32.gmra.mxu0 %v1666
  %v1688 = vpop.f32.mrf.mxu0
  %v1689 = vadd.f32 0.0, %v1688
  %1690 = vdwg.mxu0
  %v1691 = vmul.f32 %v1689, 0.35355338
  %v1692 = vsel %vm317, %v1691, -inf
  %1693 = vmax.xlane.f32.xlu0 %v1692
  %v1694 = vpop.xlane.xlu0 %1693
  %v1695 = vsub.f32 %v1691, %v1694
  %v1696 = vmul.f32 %v1695, 1.442695
  %v1697 = vpow.pop %v1696
  %v1698 = vsel %vm317, %v1697, 0.0
  %1699 = vadd.xlane.f32.xlu0 %v1698
  %v1700 = vpop.xlane.xlu0 %1699
  %v1701 = vrcp.pop %v1700
  %v1702 = vmul.f32 %v1697, %v1701
  %v1704 = vsel %vm329, %v1702, 0
  %v1707 = vsel %vm116, %v1658, 0
  %1709 = vmatpush.msra.mxu0 0.0
  %1710 = vmatpush.msra.mxu0 0.0
  %1711 = vmatpush.msra.mxu0 0.0
  %1712 = vmatpush.msra.mxu0 0.0
  %1713 = vmatpush.msra.mxu0 0.0
  %1714 = vmatpush.msra.mxu0 0.0
  %1715 = vmatpush.msra.mxu0 0.0
  %1716 = vmatpush.msra.mxu0 0.0
  %1717 = vmatpush.msra.mxu0 0.0
  %1718 = vmatpush.msra.mxu0 0.0
  %1719 = vmatpush.msra.mxu0 0.0
  %1720 = vmatpush.msra.mxu0 0.0
  %1721 = vmatpush.msra.mxu0 0.0
  %1722 = vmatpush.msra.mxu0 0.0
  %1723 = vmatpush.msra.mxu0 0.0
  %1724 = vmatpush.msra.mxu0 %v1707
  %1725 = vmatmul.f32.gmra.mxu0 %v1704
  %v1726 = vpop.f32.mrf.mxu0
  %v1727 = vadd.f32 0.0, %v1726
  %1728 = vdwg.mxu0
  %v1730 = vrot.slane %v1606, 5
  %v1731 = vrot.slane %v1609, 5
  %v1732 = vsel %vm357, %v1730, %v1731
  %v1734 = vrot.slane %v1632, 5
  %v1735 = vrot.slane %v1635, 5
  %v1736 = vsel %vm357, %v1734, %v1735
  %v1737 = vsel %vm289, %v1732, 0
  %v1739 = vsel %vm289, %v1736, 0
  %1741 = vmatpush.xpose.msra.mxu0 0.0
  %1742 = vmatpush.xpose.msra.mxu0 0.0
  %1743 = vmatpush.xpose.msra.mxu0 0.0
  %1744 = vmatpush.xpose.msra.mxu0 0.0
  %1745 = vmatpush.xpose.msra.mxu0 0.0
  %1746 = vmatpush.xpose.msra.mxu0 0.0
  %1747 = vmatpush.xpose.msra.mxu0 0.0
  %1748 = vmatpush.xpose.msra.mxu0 0.0
  %1749 = vmatpush.xpose.msra.mxu0 0.0
  %1750 = vmatpush.xpose.msra.mxu0 0.0
  %1751 = vmatpush.xpose.msra.mxu0 0.0
  %1752 = vmatpush.xpose.msra.mxu0 0.0
  %1753 = vmatpush.xpose.msra.mxu0 0.0
  %1754 = vmatpush.xpose.msra.mxu0 0.0
  %1755 = vmatpush.xpose.msra.mxu0 0.0
  %1756 = vmatpush.xpose.msra.mxu0 %v1739
  %1757 = vmatmul.f32.gmra.mxu0 %v1737
  %v1758 = vpop.f32.mrf.mxu0
  %v1759 = vadd.f32 0.0, %v1758
  %1760 = vdwg.mxu0
  %v1761 = vmul.f32 %v1759, 0.35355338
  %v1762 = vsel %vm317, %v1761, -inf
  %1763 = vmax.xlane.f32.xlu0 %v1762
  %v1764 = vpop.xlane.xlu0 %1763
  %v1765 = vsub.f32 %v1761, %v1764
  %v1766 = vmul.f32 %v1765, 1.442695
  %v1767 = vpow.pop %v1766
  %v1768 = vsel %vm317, %v1767, 0.0
  %1769 = vadd.xlane.f32.xlu0 %v1768
  %v1770 = vpop.xlane.xlu0 %1769
  %v1771 = vrcp.pop %v1770
  %v1772 = vmul.f32 %v1767, %v1771
  %v1774 = vrot.slane %v1658, 5
  %v1775 = vrot.slane %v1661, 5
  %v1776 = vsel %vm357, %v1774, %v1775
  %v1778 = vsel %vm329, %v1772, 0
  %v1780 = vsel %vm116, %v1776, 0
  %1782 = vmatpush.msra.mxu0 0.0
  %1783 = vmatpush.msra.mxu0 0.0
  %1784 = vmatpush.msra.mxu0 0.0
  %1785 = vmatpush.msra.mxu0 0.0
  %1786 = vmatpush.msra.mxu0 0.0
  %1787 = vmatpush.msra.mxu0 0.0
  %1788 = vmatpush.msra.mxu0 0.0
  %1789 = vmatpush.msra.mxu0 0.0
  %1790 = vmatpush.msra.mxu0 0.0
  %1791 = vmatpush.msra.mxu0 0.0
  %1792 = vmatpush.msra.mxu0 0.0
  %1793 = vmatpush.msra.mxu0 0.0
  %1794 = vmatpush.msra.mxu0 0.0
  %1795 = vmatpush.msra.mxu0 0.0
  %1796 = vmatpush.msra.mxu0 0.0
  %1797 = vmatpush.msra.mxu0 %v1780
  %1798 = vmatmul.f32.gmra.mxu0 %v1778
  %v1799 = vpop.f32.mrf.mxu0
  %v1800 = vadd.f32 0.0, %v1799
  %1801 = vdwg.mxu0
  %s1802 = scalar_lea.vmem %s7, 416
  %v1803 = vld [vmem:[%s1802] sm:$0xff]
  %v1804 = vld [vmem:[%s1802 + $0x8] sm:$0xff]
  %v1805 = vld [vmem:[%s1802 + $0x10] sm:$0xff]
  %v1806 = vld [vmem:[%s1802 + $0x18] sm:$0xff]
  %s1807 = scalar_lea.vmem %s8, 13
  %v1808 = vld [vmem:[%s1807] sm:$0x1]
  %s1809 = scalar_lea.vmem %s7, 544
  %v1810 = vld [vmem:[%s1809] sm:$0xff]
  %v1811 = vld [vmem:[%s1809 + $0x8] sm:$0xff]
  %v1812 = vld [vmem:[%s1809 + $0x10] sm:$0xff]
  %v1813 = vld [vmem:[%s1809 + $0x18] sm:$0xff]
  %s1814 = scalar_lea.vmem %s8, 17
  %v1815 = vld [vmem:[%s1814] sm:$0x1]
  %s1816 = scalar_lea.vmem %s7, 672
  %v1817 = vld [vmem:[%s1816] sm:$0xff]
  %v1818 = vld [vmem:[%s1816 + $0x8] sm:$0xff]
  %v1819 = vld [vmem:[%s1816 + $0x10] sm:$0xff]
  %v1820 = vld [vmem:[%s1816 + $0x18] sm:$0xff]
  %s1821 = scalar_lea.vmem %s8, 21
  %v1822 = vld [vmem:[%s1821] sm:$0x1]
  %v1824 = vperm.slane %v1808, 0
  %1826 = vmatpush.msra.mxu0 0.0
  %1827 = vmatpush.msra.mxu0 0.0
  %1828 = vmatpush.msra.mxu0 0.0
  %1829 = vmatpush.msra.mxu0 0.0
  %1830 = vmatpush.msra.mxu0 0.0
  %1831 = vmatpush.msra.mxu0 0.0
  %1832 = vmatpush.msra.mxu0 0.0
  %1833 = vmatpush.msra.mxu0 0.0
  %1834 = vmatpush.msra.mxu0 0.0
  %1835 = vmatpush.msra.mxu0 0.0
  %1836 = vmatpush.msra.mxu0 0.0
  %1837 = vmatpush.msra.mxu0 0.0
  %1838 = vmatpush.msra.mxu0 %v1806
  %1839 = vmatpush.msra.mxu0 %v1805
  %1840 = vmatpush.msra.mxu0 %v1804
  %1841 = vmatpush.msra.mxu0 %v1803
  %1842 = vmatmul.f32.gmra.mxu0 %v1583
  %v1843 = vpop.f32.mrf.mxu0
  %v1844 = vadd.f32 %v1824, %v1843
  %1845 = vmatmul.f32.gmra.mxu0 %v1586
  %v1846 = vpop.f32.mrf.mxu0
  %v1847 = vadd.f32 %v1824, %v1846
  %1848 = vdwg.mxu0
  %v1850 = vperm.slane %v1815, 0
  %1852 = vmatpush.msra.mxu0 0.0
  %1853 = vmatpush.msra.mxu0 0.0
  %1854 = vmatpush.msra.mxu0 0.0
  %1855 = vmatpush.msra.mxu0 0.0
  %1856 = vmatpush.msra.mxu0 0.0
  %1857 = vmatpush.msra.mxu0 0.0
  %1858 = vmatpush.msra.mxu0 0.0
  %1859 = vmatpush.msra.mxu0 0.0
  %1860 = vmatpush.msra.mxu0 0.0
  %1861 = vmatpush.msra.mxu0 0.0
  %1862 = vmatpush.msra.mxu0 0.0
  %1863 = vmatpush.msra.mxu0 0.0
  %1864 = vmatpush.msra.mxu0 %v1813
  %1865 = vmatpush.msra.mxu0 %v1812
  %1866 = vmatpush.msra.mxu0 %v1811
  %1867 = vmatpush.msra.mxu0 %v1810
  %1868 = vmatmul.f32.gmra.mxu0 %v1583
  %v1869 = vpop.f32.mrf.mxu0
  %v1870 = vadd.f32 %v1850, %v1869
  %1871 = vmatmul.f32.gmra.mxu0 %v1586
  %v1872 = vpop.f32.mrf.mxu0
  %v1873 = vadd.f32 %v1850, %v1872
  %1874 = vdwg.mxu0
  %v1876 = vperm.slane %v1822, 0
  %1878 = vmatpush.msra.mxu0 0.0
  %1879 = vmatpush.msra.mxu0 0.0
  %1880 = vmatpush.msra.mxu0 0.0
  %1881 = vmatpush.msra.mxu0 0.0
  %1882 = vmatpush.msra.mxu0 0.0
  %1883 = vmatpush.msra.mxu0 0.0
  %1884 = vmatpush.msra.mxu0 0.0
  %1885 = vmatpush.msra.mxu0 0.0
  %1886 = vmatpush.msra.mxu0 0.0
  %1887 = vmatpush.msra.mxu0 0.0
  %1888 = vmatpush.msra.mxu0 0.0
  %1889 = vmatpush.msra.mxu0 0.0
  %1890 = vmatpush.msra.mxu0 %v1820
  %1891 = vmatpush.msra.mxu0 %v1819
  %1892 = vmatpush.msra.mxu0 %v1818
  %1893 = vmatpush.msra.mxu0 %v1817
  %1894 = vmatmul.f32.gmra.mxu0 %v1583
  %v1895 = vpop.f32.mrf.mxu0
  %v1896 = vadd.f32 %v1876, %v1895
  %1897 = vmatmul.f32.gmra.mxu0 %v1586
  %v1898 = vpop.f32.mrf.mxu0
  %v1899 = vadd.f32 %v1876, %v1898
  %1900 = vdwg.mxu0
  %s1901 = scalar_lea.vmem %s9, 40
  %v1902 = vld [vmem:[%s1901] sm:$0xff]
  %v1904 = vsel %vm289, %v1844, 0
  %v1907 = vsel %vm289, %v1870, 0
  %1909 = vmatpush.xpose.msra.mxu0 0.0
  %1910 = vmatpush.xpose.msra.mxu0 0.0
  %1911 = vmatpush.xpose.msra.mxu0 0.0
  %1912 = vmatpush.xpose.msra.mxu0 0.0
  %1913 = vmatpush.xpose.msra.mxu0 0.0
  %1914 = vmatpush.xpose.msra.mxu0 0.0
  %1915 = vmatpush.xpose.msra.mxu0 0.0
  %1916 = vmatpush.xpose.msra.mxu0 0.0
  %1917 = vmatpush.xpose.msra.mxu0 0.0
  %1918 = vmatpush.xpose.msra.mxu0 0.0
  %1919 = vmatpush.xpose.msra.mxu0 0.0
  %1920 = vmatpush.xpose.msra.mxu0 0.0
  %1921 = vmatpush.xpose.msra.mxu0 0.0
  %1922 = vmatpush.xpose.msra.mxu0 0.0
  %1923 = vmatpush.xpose.msra.mxu0 0.0
  %1924 = vmatpush.xpose.msra.mxu0 %v1907
  %1925 = vmatmul.f32.gmra.mxu0 %v1904
  %v1926 = vpop.f32.mrf.mxu0
  %v1927 = vadd.f32 0.0, %v1926
  %1928 = vdwg.mxu0
  %v1929 = vmul.f32 %v1927, 0.35355338
  %v1930 = vsel %vm317, %v1929, -inf
  %1931 = vmax.xlane.f32.xlu0 %v1930
  %v1932 = vpop.xlane.xlu0 %1931
  %v1933 = vsub.f32 %v1929, %v1932
  %v1934 = vmul.f32 %v1933, 1.442695
  %v1935 = vpow.pop %v1934
  %v1936 = vsel %vm317, %v1935, 0.0
  %1937 = vadd.xlane.f32.xlu0 %v1936
  %v1938 = vpop.xlane.xlu0 %1937
  %v1939 = vrcp.pop %v1938
  %v1940 = vmul.f32 %v1935, %v1939
  %v1942 = vsel %vm329, %v1940, 0
  %v1945 = vsel %vm116, %v1896, 0
  %1947 = vmatpush.msra.mxu0 0.0
  %1948 = vmatpush.msra.mxu0 0.0
  %1949 = vmatpush.msra.mxu0 0.0
  %1950 = vmatpush.msra.mxu0 0.0
  %1951 = vmatpush.msra.mxu0 0.0
  %1952 = vmatpush.msra.mxu0 0.0
  %1953 = vmatpush.msra.mxu0 0.0
  %1954 = vmatpush.msra.mxu0 0.0
  %1955 = vmatpush.msra.mxu0 0.0
  %1956 = vmatpush.msra.mxu0 0.0
  %1957 = vmatpush.msra.mxu0 0.0
  %1958 = vmatpush.msra.mxu0 0.0
  %1959 = vmatpush.msra.mxu0 0.0
  %1960 = vmatpush.msra.mxu0 0.0
  %1961 = vmatpush.msra.mxu0 0.0
  %1962 = vmatpush.msra.mxu0 %v1945
  %1963 = vmatmul.f32.gmra.mxu0 %v1942
  %v1964 = vpop.f32.mrf.mxu0
  %v1965 = vadd.f32 0.0, %v1964
  %1966 = vdwg.mxu0
  %v1968 = vsel %vm289, %v1965, 0
  %1970 = vmatpush.msra.mxu0 0.0
  %1971 = vmatpush.msra.mxu0 0.0
  %1972 = vmatpush.msra.mxu0 0.0
  %1973 = vmatpush.msra.mxu0 0.0
  %1974 = vmatpush.msra.mxu0 0.0
  %1975 = vmatpush.msra.mxu0 0.0
  %1976 = vmatpush.msra.mxu0 0.0
  %1977 = vmatpush.msra.mxu0 0.0
  %1978 = vmatpush.msra.mxu0 0.0
  %1979 = vmatpush.msra.mxu0 0.0
  %1980 = vmatpush.msra.mxu0 0.0
  %1981 = vmatpush.msra.mxu0 0.0
  %1982 = vmatpush.msra.mxu0 0.0
  %1983 = vmatpush.msra.mxu0 0.0
  %1984 = vmatpush.msra.mxu0 0.0
  %1985 = vmatpush.msra.mxu0 %v1902
  %1986 = vmatmul.f32.gmra.mxu0 %v1968
  %v1987 = vpop.f32.mrf.mxu0
  %v1988 = vadd.f32 0.0, %v1987
  %1989 = vdwg.mxu0
  %v1991 = vsel %vm289, %v1727, 0
  %1993 = vmatpush.msra.mxu0 0.0
  %1994 = vmatpush.msra.mxu0 0.0
  %1995 = vmatpush.msra.mxu0 0.0
  %1996 = vmatpush.msra.mxu0 0.0
  %1997 = vmatpush.msra.mxu0 0.0
  %1998 = vmatpush.msra.mxu0 0.0
  %1999 = vmatpush.msra.mxu0 0.0
  %2000 = vmatpush.msra.mxu0 0.0
  %2001 = vmatpush.msra.mxu0 0.0
  %2002 = vmatpush.msra.mxu0 0.0
  %2003 = vmatpush.msra.mxu0 0.0
  %2004 = vmatpush.msra.mxu0 0.0
  %2005 = vmatpush.msra.mxu0 0.0
  %2006 = vmatpush.msra.mxu0 0.0
  %2007 = vmatpush.msra.mxu0 0.0
  %2008 = vmatpush.msra.mxu0 %v1664
  %2009 = vmatmul.f32.gmra.mxu0 %v1991
  %v2010 = vpop.f32.mrf.mxu0
  %v2011 = vadd.f32 %v1988, %v2010
  %2012 = vdwg.mxu0
  %v2014 = vrot.slane %v1844, 5
  %v2015 = vrot.slane %v1847, 5
  %v2016 = vsel %vm357, %v2014, %v2015
  %v2018 = vrot.slane %v1870, 5
  %v2019 = vrot.slane %v1873, 5
  %v2020 = vsel %vm357, %v2018, %v2019
  %v2021 = vsel %vm289, %v2016, 0
  %v2023 = vsel %vm289, %v2020, 0
  %2025 = vmatpush.xpose.msra.mxu0 0.0
  %2026 = vmatpush.xpose.msra.mxu0 0.0
  %2027 = vmatpush.xpose.msra.mxu0 0.0
  %2028 = vmatpush.xpose.msra.mxu0 0.0
  %2029 = vmatpush.xpose.msra.mxu0 0.0
  %2030 = vmatpush.xpose.msra.mxu0 0.0
  %2031 = vmatpush.xpose.msra.mxu0 0.0
  %2032 = vmatpush.xpose.msra.mxu0 0.0
  %2033 = vmatpush.xpose.msra.mxu0 0.0
  %2034 = vmatpush.xpose.msra.mxu0 0.0
  %2035 = vmatpush.xpose.msra.mxu0 0.0
  %2036 = vmatpush.xpose.msra.mxu0 0.0
  %2037 = vmatpush.xpose.msra.mxu0 0.0
  %2038 = vmatpush.xpose.msra.mxu0 0.0
  %2039 = vmatpush.xpose.msra.mxu0 0.0
  %2040 = vmatpush.xpose.msra.mxu0 %v2023
  %2041 = vmatmul.f32.gmra.mxu0 %v2021
  %v2042 = vpop.f32.mrf.mxu0
  %v2043 = vadd.f32 0.0, %v2042
  %2044 = vdwg.mxu0
  %v2045 = vmul.f32 %v2043, 0.35355338
  %v2046 = vsel %vm317, %v2045, -inf
  %2047 = vmax.xlane.f32.xlu0 %v2046
  %v2048 = vpop.xlane.xlu0 %2047
  %v2049 = vsub.f32 %v2045, %v2048
  %v2050 = vmul.f32 %v2049, 1.442695
  %v2051 = vpow.pop %v2050
  %v2052 = vsel %vm317, %v2051, 0.0
  %2053 = vadd.xlane.f32.xlu0 %v2052
  %v2054 = vpop.xlane.xlu0 %2053
  %v2055 = vrcp.pop %v2054
  %v2056 = vmul.f32 %v2051, %v2055
  %v2058 = vrot.slane %v1896, 5
  %v2059 = vrot.slane %v1899, 5
  %v2060 = vsel %vm357, %v2058, %v2059
  %v2062 = vsel %vm329, %v2056, 0
  %v2064 = vsel %vm116, %v2060, 0
  %2066 = vmatpush.msra.mxu0 0.0
  %2067 = vmatpush.msra.mxu0 0.0
  %2068 = vmatpush.msra.mxu0 0.0
  %2069 = vmatpush.msra.mxu0 0.0
  %2070 = vmatpush.msra.mxu0 0.0
  %2071 = vmatpush.msra.mxu0 0.0
  %2072 = vmatpush.msra.mxu0 0.0
  %2073 = vmatpush.msra.mxu0 0.0
  %2074 = vmatpush.msra.mxu0 0.0
  %2075 = vmatpush.msra.mxu0 0.0
  %2076 = vmatpush.msra.mxu0 0.0
  %2077 = vmatpush.msra.mxu0 0.0
  %2078 = vmatpush.msra.mxu0 0.0
  %2079 = vmatpush.msra.mxu0 0.0
  %2080 = vmatpush.msra.mxu0 0.0
  %2081 = vmatpush.msra.mxu0 %v2064
  %2082 = vmatmul.f32.gmra.mxu0 %v2062
  %v2083 = vpop.f32.mrf.mxu0
  %v2084 = vadd.f32 0.0, %v2083
  %2085 = vdwg.mxu0
  %v2087 = vsel %vm289, %v2084, 0
  %2089 = vmatpush.msra.mxu0 0.0
  %2090 = vmatpush.msra.mxu0 0.0
  %2091 = vmatpush.msra.mxu0 0.0
  %2092 = vmatpush.msra.mxu0 0.0
  %2093 = vmatpush.msra.mxu0 0.0
  %2094 = vmatpush.msra.mxu0 0.0
  %2095 = vmatpush.msra.mxu0 0.0
  %2096 = vmatpush.msra.mxu0 0.0
  %2097 = vmatpush.msra.mxu0 0.0
  %2098 = vmatpush.msra.mxu0 0.0
  %2099 = vmatpush.msra.mxu0 0.0
  %2100 = vmatpush.msra.mxu0 0.0
  %2101 = vmatpush.msra.mxu0 0.0
  %2102 = vmatpush.msra.mxu0 0.0
  %2103 = vmatpush.msra.mxu0 0.0
  %2104 = vmatpush.msra.mxu0 %v1902
  %2105 = vmatmul.f32.gmra.mxu0 %v2087
  %v2106 = vpop.f32.mrf.mxu0
  %v2107 = vadd.f32 0.0, %v2106
  %2108 = vdwg.mxu0
  %v2110 = vsel %vm289, %v1800, 0
  %2112 = vmatpush.msra.mxu0 0.0
  %2113 = vmatpush.msra.mxu0 0.0
  %2114 = vmatpush.msra.mxu0 0.0
  %2115 = vmatpush.msra.mxu0 0.0
  %2116 = vmatpush.msra.mxu0 0.0
  %2117 = vmatpush.msra.mxu0 0.0
  %2118 = vmatpush.msra.mxu0 0.0
  %2119 = vmatpush.msra.mxu0 0.0
  %2120 = vmatpush.msra.mxu0 0.0
  %2121 = vmatpush.msra.mxu0 0.0
  %2122 = vmatpush.msra.mxu0 0.0
  %2123 = vmatpush.msra.mxu0 0.0
  %2124 = vmatpush.msra.mxu0 0.0
  %2125 = vmatpush.msra.mxu0 0.0
  %2126 = vmatpush.msra.mxu0 0.0
  %2127 = vmatpush.msra.mxu0 %v1664
  %2128 = vmatmul.f32.gmra.mxu0 %v2110
  %v2129 = vpop.f32.mrf.mxu0
  %v2130 = vadd.f32 %v2107, %v2129
  %2131 = vdwg.mxu0
  %s2132 = scalar_lea.vmem %s7, 448
  %v2133 = vld [vmem:[%s2132] sm:$0xff]
  %v2134 = vld [vmem:[%s2132 + $0x8] sm:$0xff]
  %v2135 = vld [vmem:[%s2132 + $0x10] sm:$0xff]
  %v2136 = vld [vmem:[%s2132 + $0x18] sm:$0xff]
  %s2137 = scalar_lea.vmem %s8, 14
  %v2138 = vld [vmem:[%s2137] sm:$0x1]
  %s2139 = scalar_lea.vmem %s7, 576
  %v2140 = vld [vmem:[%s2139] sm:$0xff]
  %v2141 = vld [vmem:[%s2139 + $0x8] sm:$0xff]
  %v2142 = vld [vmem:[%s2139 + $0x10] sm:$0xff]
  %v2143 = vld [vmem:[%s2139 + $0x18] sm:$0xff]
  %s2144 = scalar_lea.vmem %s8, 18
  %v2145 = vld [vmem:[%s2144] sm:$0x1]
  %s2146 = scalar_lea.vmem %s7, 704
  %v2147 = vld [vmem:[%s2146] sm:$0xff]
  %v2148 = vld [vmem:[%s2146 + $0x8] sm:$0xff]
  %v2149 = vld [vmem:[%s2146 + $0x10] sm:$0xff]
  %v2150 = vld [vmem:[%s2146 + $0x18] sm:$0xff]
  %s2151 = scalar_lea.vmem %s8, 22
  %v2152 = vld [vmem:[%s2151] sm:$0x1]
  %v2154 = vperm.slane %v2138, 0
  %2156 = vmatpush.msra.mxu0 0.0
  %2157 = vmatpush.msra.mxu0 0.0
  %2158 = vmatpush.msra.mxu0 0.0
  %2159 = vmatpush.msra.mxu0 0.0
  %2160 = vmatpush.msra.mxu0 0.0
  %2161 = vmatpush.msra.mxu0 0.0
  %2162 = vmatpush.msra.mxu0 0.0
  %2163 = vmatpush.msra.mxu0 0.0
  %2164 = vmatpush.msra.mxu0 0.0
  %2165 = vmatpush.msra.mxu0 0.0
  %2166 = vmatpush.msra.mxu0 0.0
  %2167 = vmatpush.msra.mxu0 0.0
  %2168 = vmatpush.msra.mxu0 %v2136
  %2169 = vmatpush.msra.mxu0 %v2135
  %2170 = vmatpush.msra.mxu0 %v2134
  %2171 = vmatpush.msra.mxu0 %v2133
  %2172 = vmatmul.f32.gmra.mxu0 %v1583
  %v2173 = vpop.f32.mrf.mxu0
  %v2174 = vadd.f32 %v2154, %v2173
  %2175 = vmatmul.f32.gmra.mxu0 %v1586
  %v2176 = vpop.f32.mrf.mxu0
  %v2177 = vadd.f32 %v2154, %v2176
  %2178 = vdwg.mxu0
  %v2180 = vperm.slane %v2145, 0
  %2182 = vmatpush.msra.mxu0 0.0
  %2183 = vmatpush.msra.mxu0 0.0
  %2184 = vmatpush.msra.mxu0 0.0
  %2185 = vmatpush.msra.mxu0 0.0
  %2186 = vmatpush.msra.mxu0 0.0
  %2187 = vmatpush.msra.mxu0 0.0
  %2188 = vmatpush.msra.mxu0 0.0
  %2189 = vmatpush.msra.mxu0 0.0
  %2190 = vmatpush.msra.mxu0 0.0
  %2191 = vmatpush.msra.mxu0 0.0
  %2192 = vmatpush.msra.mxu0 0.0
  %2193 = vmatpush.msra.mxu0 0.0
  %2194 = vmatpush.msra.mxu0 %v2143
  %2195 = vmatpush.msra.mxu0 %v2142
  %2196 = vmatpush.msra.mxu0 %v2141
  %2197 = vmatpush.msra.mxu0 %v2140
  %2198 = vmatmul.f32.gmra.mxu0 %v1583
  %v2199 = vpop.f32.mrf.mxu0
  %v2200 = vadd.f32 %v2180, %v2199
  %2201 = vmatmul.f32.gmra.mxu0 %v1586
  %v2202 = vpop.f32.mrf.mxu0
  %v2203 = vadd.f32 %v2180, %v2202
  %2204 = vdwg.mxu0
  %v2206 = vperm.slane %v2152, 0
  %2208 = vmatpush.msra.mxu0 0.0
  %2209 = vmatpush.msra.mxu0 0.0
  %2210 = vmatpush.msra.mxu0 0.0
  %2211 = vmatpush.msra.mxu0 0.0
  %2212 = vmatpush.msra.mxu0 0.0
  %2213 = vmatpush.msra.mxu0 0.0
  %2214 = vmatpush.msra.mxu0 0.0
  %2215 = vmatpush.msra.mxu0 0.0
  %2216 = vmatpush.msra.mxu0 0.0
  %2217 = vmatpush.msra.mxu0 0.0
  %2218 = vmatpush.msra.mxu0 0.0
  %2219 = vmatpush.msra.mxu0 0.0
  %2220 = vmatpush.msra.mxu0 %v2150
  %2221 = vmatpush.msra.mxu0 %v2149
  %2222 = vmatpush.msra.mxu0 %v2148
  %2223 = vmatpush.msra.mxu0 %v2147
  %2224 = vmatmul.f32.gmra.mxu0 %v1583
  %v2225 = vpop.f32.mrf.mxu0
  %v2226 = vadd.f32 %v2206, %v2225
  %2227 = vmatmul.f32.gmra.mxu0 %v1586
  %v2228 = vpop.f32.mrf.mxu0
  %v2229 = vadd.f32 %v2206, %v2228
  %2230 = vdwg.mxu0
  %s2231 = scalar_lea.vmem %s9, 48
  %v2232 = vld [vmem:[%s2231] sm:$0xff]
  %v2234 = vsel %vm289, %v2174, 0
  %v2237 = vsel %vm289, %v2200, 0
  %2239 = vmatpush.xpose.msra.mxu0 0.0
  %2240 = vmatpush.xpose.msra.mxu0 0.0
  %2241 = vmatpush.xpose.msra.mxu0 0.0
  %2242 = vmatpush.xpose.msra.mxu0 0.0
  %2243 = vmatpush.xpose.msra.mxu0 0.0
  %2244 = vmatpush.xpose.msra.mxu0 0.0
  %2245 = vmatpush.xpose.msra.mxu0 0.0
  %2246 = vmatpush.xpose.msra.mxu0 0.0
  %2247 = vmatpush.xpose.msra.mxu0 0.0
  %2248 = vmatpush.xpose.msra.mxu0 0.0
  %2249 = vmatpush.xpose.msra.mxu0 0.0
  %2250 = vmatpush.xpose.msra.mxu0 0.0
  %2251 = vmatpush.xpose.msra.mxu0 0.0
  %2252 = vmatpush.xpose.msra.mxu0 0.0
  %2253 = vmatpush.xpose.msra.mxu0 0.0
  %2254 = vmatpush.xpose.msra.mxu0 %v2237
  %2255 = vmatmul.f32.gmra.mxu0 %v2234
  %v2256 = vpop.f32.mrf.mxu0
  %v2257 = vadd.f32 0.0, %v2256
  %2258 = vdwg.mxu0
  %v2259 = vmul.f32 %v2257, 0.35355338
  %v2260 = vsel %vm317, %v2259, -inf
  %2261 = vmax.xlane.f32.xlu0 %v2260
  %v2262 = vpop.xlane.xlu0 %2261
  %v2263 = vsub.f32 %v2259, %v2262
  %v2264 = vmul.f32 %v2263, 1.442695
  %v2265 = vpow.pop %v2264
  %v2266 = vsel %vm317, %v2265, 0.0
  %2267 = vadd.xlane.f32.xlu0 %v2266
  %v2268 = vpop.xlane.xlu0 %2267
  %v2269 = vrcp.pop %v2268
  %v2270 = vmul.f32 %v2265, %v2269
  %v2272 = vsel %vm329, %v2270, 0
  %v2275 = vsel %vm116, %v2226, 0
  %2277 = vmatpush.msra.mxu0 0.0
  %2278 = vmatpush.msra.mxu0 0.0
  %2279 = vmatpush.msra.mxu0 0.0
  %2280 = vmatpush.msra.mxu0 0.0
  %2281 = vmatpush.msra.mxu0 0.0
  %2282 = vmatpush.msra.mxu0 0.0
  %2283 = vmatpush.msra.mxu0 0.0
  %2284 = vmatpush.msra.mxu0 0.0
  %2285 = vmatpush.msra.mxu0 0.0
  %2286 = vmatpush.msra.mxu0 0.0
  %2287 = vmatpush.msra.mxu0 0.0
  %2288 = vmatpush.msra.mxu0 0.0
  %2289 = vmatpush.msra.mxu0 0.0
  %2290 = vmatpush.msra.mxu0 0.0
  %2291 = vmatpush.msra.mxu0 0.0
  %2292 = vmatpush.msra.mxu0 %v2275
  %2293 = vmatmul.f32.gmra.mxu0 %v2272
  %v2294 = vpop.f32.mrf.mxu0
  %v2295 = vadd.f32 0.0, %v2294
  %2296 = vdwg.mxu0
  %v2298 = vsel %vm289, %v2295, 0
  %2300 = vmatpush.msra.mxu0 0.0
  %2301 = vmatpush.msra.mxu0 0.0
  %2302 = vmatpush.msra.mxu0 0.0
  %2303 = vmatpush.msra.mxu0 0.0
  %2304 = vmatpush.msra.mxu0 0.0
  %2305 = vmatpush.msra.mxu0 0.0
  %2306 = vmatpush.msra.mxu0 0.0
  %2307 = vmatpush.msra.mxu0 0.0
  %2308 = vmatpush.msra.mxu0 0.0
  %2309 = vmatpush.msra.mxu0 0.0
  %2310 = vmatpush.msra.mxu0 0.0
  %2311 = vmatpush.msra.mxu0 0.0
  %2312 = vmatpush.msra.mxu0 0.0
  %2313 = vmatpush.msra.mxu0 0.0
  %2314 = vmatpush.msra.mxu0 0.0
  %2315 = vmatpush.msra.mxu0 %v2232
  %2316 = vmatmul.f32.gmra.mxu0 %v2298
  %v2317 = vpop.f32.mrf.mxu0
  %v2318 = vadd.f32 0.0, %v2317
  %2319 = vdwg.mxu0
  %v2320 = vadd.f32 %v2011, %v2318
  %v2322 = vrot.slane %v2174, 5
  %v2323 = vrot.slane %v2177, 5
  %v2324 = vsel %vm357, %v2322, %v2323
  %v2326 = vrot.slane %v2200, 5
  %v2327 = vrot.slane %v2203, 5
  %v2328 = vsel %vm357, %v2326, %v2327
  %v2329 = vsel %vm289, %v2324, 0
  %v2331 = vsel %vm289, %v2328, 0
  %2333 = vmatpush.xpose.msra.mxu0 0.0
  %2334 = vmatpush.xpose.msra.mxu0 0.0
  %2335 = vmatpush.xpose.msra.mxu0 0.0
  %2336 = vmatpush.xpose.msra.mxu0 0.0
  %2337 = vmatpush.xpose.msra.mxu0 0.0
  %2338 = vmatpush.xpose.msra.mxu0 0.0
  %2339 = vmatpush.xpose.msra.mxu0 0.0
  %2340 = vmatpush.xpose.msra.mxu0 0.0
  %2341 = vmatpush.xpose.msra.mxu0 0.0
  %2342 = vmatpush.xpose.msra.mxu0 0.0
  %2343 = vmatpush.xpose.msra.mxu0 0.0
  %2344 = vmatpush.xpose.msra.mxu0 0.0
  %2345 = vmatpush.xpose.msra.mxu0 0.0
  %2346 = vmatpush.xpose.msra.mxu0 0.0
  %2347 = vmatpush.xpose.msra.mxu0 0.0
  %2348 = vmatpush.xpose.msra.mxu0 %v2331
  %2349 = vmatmul.f32.gmra.mxu0 %v2329
  %v2350 = vpop.f32.mrf.mxu0
  %v2351 = vadd.f32 0.0, %v2350
  %2352 = vdwg.mxu0
  %v2353 = vmul.f32 %v2351, 0.35355338
  %v2354 = vsel %vm317, %v2353, -inf
  %2355 = vmax.xlane.f32.xlu0 %v2354
  %v2356 = vpop.xlane.xlu0 %2355
  %v2357 = vsub.f32 %v2353, %v2356
  %v2358 = vmul.f32 %v2357, 1.442695
  %v2359 = vpow.pop %v2358
  %v2360 = vsel %vm317, %v2359, 0.0
  %2361 = vadd.xlane.f32.xlu0 %v2360
  %v2362 = vpop.xlane.xlu0 %2361
  %v2363 = vrcp.pop %v2362
  %v2364 = vmul.f32 %v2359, %v2363
  %v2366 = vrot.slane %v2226, 5
  %v2367 = vrot.slane %v2229, 5
  %v2368 = vsel %vm357, %v2366, %v2367
  %v2370 = vsel %vm329, %v2364, 0
  %v2372 = vsel %vm116, %v2368, 0
  %2374 = vmatpush.msra.mxu0 0.0
  %2375 = vmatpush.msra.mxu0 0.0
  %2376 = vmatpush.msra.mxu0 0.0
  %2377 = vmatpush.msra.mxu0 0.0
  %2378 = vmatpush.msra.mxu0 0.0
  %2379 = vmatpush.msra.mxu0 0.0
  %2380 = vmatpush.msra.mxu0 0.0
  %2381 = vmatpush.msra.mxu0 0.0
  %2382 = vmatpush.msra.mxu0 0.0
  %2383 = vmatpush.msra.mxu0 0.0
  %2384 = vmatpush.msra.mxu0 0.0
  %2385 = vmatpush.msra.mxu0 0.0
  %2386 = vmatpush.msra.mxu0 0.0
  %2387 = vmatpush.msra.mxu0 0.0
  %2388 = vmatpush.msra.mxu0 0.0
  %2389 = vmatpush.msra.mxu0 %v2372
  %2390 = vmatmul.f32.gmra.mxu0 %v2370
  %v2391 = vpop.f32.mrf.mxu0
  %v2392 = vadd.f32 0.0, %v2391
  %2393 = vdwg.mxu0
  %v2395 = vsel %vm289, %v2392, 0
  %2397 = vmatpush.msra.mxu0 0.0
  %2398 = vmatpush.msra.mxu0 0.0
  %2399 = vmatpush.msra.mxu0 0.0
  %2400 = vmatpush.msra.mxu0 0.0
  %2401 = vmatpush.msra.mxu0 0.0
  %2402 = vmatpush.msra.mxu0 0.0
  %2403 = vmatpush.msra.mxu0 0.0
  %2404 = vmatpush.msra.mxu0 0.0
  %2405 = vmatpush.msra.mxu0 0.0
  %2406 = vmatpush.msra.mxu0 0.0
  %2407 = vmatpush.msra.mxu0 0.0
  %2408 = vmatpush.msra.mxu0 0.0
  %2409 = vmatpush.msra.mxu0 0.0
  %2410 = vmatpush.msra.mxu0 0.0
  %2411 = vmatpush.msra.mxu0 0.0
  %2412 = vmatpush.msra.mxu0 %v2232
  %2413 = vmatmul.f32.gmra.mxu0 %v2395
  %v2414 = vpop.f32.mrf.mxu0
  %v2415 = vadd.f32 0.0, %v2414
  %2416 = vdwg.mxu0
  %v2417 = vadd.f32 %v2130, %v2415
  %s2418 = scalar_lea.vmem %s7, 480
  %v2419 = vld [vmem:[%s2418] sm:$0xff]
  %v2420 = vld [vmem:[%s2418 + $0x8] sm:$0xff]
  %v2421 = vld [vmem:[%s2418 + $0x10] sm:$0xff]
  %v2422 = vld [vmem:[%s2418 + $0x18] sm:$0xff]
  %s2423 = scalar_lea.vmem %s8, 15
  %v2424 = vld [vmem:[%s2423] sm:$0x1]
  %s2425 = scalar_lea.vmem %s7, 608
  %v2426 = vld [vmem:[%s2425] sm:$0xff]
  %v2427 = vld [vmem:[%s2425 + $0x8] sm:$0xff]
  %v2428 = vld [vmem:[%s2425 + $0x10] sm:$0xff]
  %v2429 = vld [vmem:[%s2425 + $0x18] sm:$0xff]
  %s2430 = scalar_lea.vmem %s8, 19
  %v2431 = vld [vmem:[%s2430] sm:$0x1]
  %s2432 = scalar_lea.vmem %s7, 736
  %v2433 = vld [vmem:[%s2432] sm:$0xff]
  %v2434 = vld [vmem:[%s2432 + $0x8] sm:$0xff]
  %v2435 = vld [vmem:[%s2432 + $0x10] sm:$0xff]
  %v2436 = vld [vmem:[%s2432 + $0x18] sm:$0xff]
  %s2437 = scalar_lea.vmem %s8, 23
  %v2438 = vld [vmem:[%s2437] sm:$0x1]
  %v2440 = vperm.slane %v2424, 0
  %2442 = vmatpush.msra.mxu0 0.0
  %2443 = vmatpush.msra.mxu0 0.0
  %2444 = vmatpush.msra.mxu0 0.0
  %2445 = vmatpush.msra.mxu0 0.0
  %2446 = vmatpush.msra.mxu0 0.0
  %2447 = vmatpush.msra.mxu0 0.0
  %2448 = vmatpush.msra.mxu0 0.0
  %2449 = vmatpush.msra.mxu0 0.0
  %2450 = vmatpush.msra.mxu0 0.0
  %2451 = vmatpush.msra.mxu0 0.0
  %2452 = vmatpush.msra.mxu0 0.0
  %2453 = vmatpush.msra.mxu0 0.0
  %2454 = vmatpush.msra.mxu0 %v2422
  %2455 = vmatpush.msra.mxu0 %v2421
  %2456 = vmatpush.msra.mxu0 %v2420
  %2457 = vmatpush.msra.mxu0 %v2419
  %2458 = vmatmul.f32.gmra.mxu0 %v1583
  %v2459 = vpop.f32.mrf.mxu0
  %v2460 = vadd.f32 %v2440, %v2459
  %2461 = vmatmul.f32.gmra.mxu0 %v1586
  %v2462 = vpop.f32.mrf.mxu0
  %v2463 = vadd.f32 %v2440, %v2462
  %2464 = vdwg.mxu0
  %v2466 = vperm.slane %v2431, 0
  %2468 = vmatpush.msra.mxu0 0.0
  %2469 = vmatpush.msra.mxu0 0.0
  %2470 = vmatpush.msra.mxu0 0.0
  %2471 = vmatpush.msra.mxu0 0.0
  %2472 = vmatpush.msra.mxu0 0.0
  %2473 = vmatpush.msra.mxu0 0.0
  %2474 = vmatpush.msra.mxu0 0.0
  %2475 = vmatpush.msra.mxu0 0.0
  %2476 = vmatpush.msra.mxu0 0.0
  %2477 = vmatpush.msra.mxu0 0.0
  %2478 = vmatpush.msra.mxu0 0.0
  %2479 = vmatpush.msra.mxu0 0.0
  %2480 = vmatpush.msra.mxu0 %v2429
  %2481 = vmatpush.msra.mxu0 %v2428
  %2482 = vmatpush.msra.mxu0 %v2427
  %2483 = vmatpush.msra.mxu0 %v2426
  %2484 = vmatmul.f32.gmra.mxu0 %v1583
  %v2485 = vpop.f32.mrf.mxu0
  %v2486 = vadd.f32 %v2466, %v2485
  %2487 = vmatmul.f32.gmra.mxu0 %v1586
  %v2488 = vpop.f32.mrf.mxu0
  %v2489 = vadd.f32 %v2466, %v2488
  %2490 = vdwg.mxu0
  %v2492 = vperm.slane %v2438, 0
  %2494 = vmatpush.msra.mxu0 0.0
  %2495 = vmatpush.msra.mxu0 0.0
  %2496 = vmatpush.msra.mxu0 0.0
  %2497 = vmatpush.msra.mxu0 0.0
  %2498 = vmatpush.msra.mxu0 0.0
  %2499 = vmatpush.msra.mxu0 0.0
  %2500 = vmatpush.msra.mxu0 0.0
  %2501 = vmatpush.msra.mxu0 0.0
  %2502 = vmatpush.msra.mxu0 0.0
  %2503 = vmatpush.msra.mxu0 0.0
  %2504 = vmatpush.msra.mxu0 0.0
  %2505 = vmatpush.msra.mxu0 0.0
  %2506 = vmatpush.msra.mxu0 %v2436
  %2507 = vmatpush.msra.mxu0 %v2435
  %2508 = vmatpush.msra.mxu0 %v2434
  %2509 = vmatpush.msra.mxu0 %v2433
  %2510 = vmatmul.f32.gmra.mxu0 %v1583
  %v2511 = vpop.f32.mrf.mxu0
  %v2512 = vadd.f32 %v2492, %v2511
  %2513 = vmatmul.f32.gmra.mxu0 %v1586
  %v2514 = vpop.f32.mrf.mxu0
  %v2515 = vadd.f32 %v2492, %v2514
  %2516 = vdwg.mxu0
  %s2517 = scalar_lea.vmem %s9, 56
  %v2518 = vld [vmem:[%s2517] sm:$0xff]
  %v2520 = vsel %vm289, %v2460, 0
  %v2523 = vsel %vm289, %v2486, 0
  %2525 = vmatpush.xpose.msra.mxu0 0.0
  %2526 = vmatpush.xpose.msra.mxu0 0.0
  %2527 = vmatpush.xpose.msra.mxu0 0.0
  %2528 = vmatpush.xpose.msra.mxu0 0.0
  %2529 = vmatpush.xpose.msra.mxu0 0.0
  %2530 = vmatpush.xpose.msra.mxu0 0.0
  %2531 = vmatpush.xpose.msra.mxu0 0.0
  %2532 = vmatpush.xpose.msra.mxu0 0.0
  %2533 = vmatpush.xpose.msra.mxu0 0.0
  %2534 = vmatpush.xpose.msra.mxu0 0.0
  %2535 = vmatpush.xpose.msra.mxu0 0.0
  %2536 = vmatpush.xpose.msra.mxu0 0.0
  %2537 = vmatpush.xpose.msra.mxu0 0.0
  %2538 = vmatpush.xpose.msra.mxu0 0.0
  %2539 = vmatpush.xpose.msra.mxu0 0.0
  %2540 = vmatpush.xpose.msra.mxu0 %v2523
  %2541 = vmatmul.f32.gmra.mxu0 %v2520
  %v2542 = vpop.f32.mrf.mxu0
  %v2543 = vadd.f32 0.0, %v2542
  %2544 = vdwg.mxu0
  %v2545 = vmul.f32 %v2543, 0.35355338
  %v2546 = vsel %vm317, %v2545, -inf
  %2547 = vmax.xlane.f32.xlu0 %v2546
  %v2548 = vpop.xlane.xlu0 %2547
  %v2549 = vsub.f32 %v2545, %v2548
  %v2550 = vmul.f32 %v2549, 1.442695
  %v2551 = vpow.pop %v2550
  %v2552 = vsel %vm317, %v2551, 0.0
  %2553 = vadd.xlane.f32.xlu0 %v2552
  %v2554 = vpop.xlane.xlu0 %2553
  %v2555 = vrcp.pop %v2554
  %v2556 = vmul.f32 %v2551, %v2555
  %v2558 = vsel %vm329, %v2556, 0
  %v2561 = vsel %vm116, %v2512, 0
  %2563 = vmatpush.msra.mxu0 0.0
  %2564 = vmatpush.msra.mxu0 0.0
  %2565 = vmatpush.msra.mxu0 0.0
  %2566 = vmatpush.msra.mxu0 0.0
  %2567 = vmatpush.msra.mxu0 0.0
  %2568 = vmatpush.msra.mxu0 0.0
  %2569 = vmatpush.msra.mxu0 0.0
  %2570 = vmatpush.msra.mxu0 0.0
  %2571 = vmatpush.msra.mxu0 0.0
  %2572 = vmatpush.msra.mxu0 0.0
  %2573 = vmatpush.msra.mxu0 0.0
  %2574 = vmatpush.msra.mxu0 0.0
  %2575 = vmatpush.msra.mxu0 0.0
  %2576 = vmatpush.msra.mxu0 0.0
  %2577 = vmatpush.msra.mxu0 0.0
  %2578 = vmatpush.msra.mxu0 %v2561
  %2579 = vmatmul.f32.gmra.mxu0 %v2558
  %v2580 = vpop.f32.mrf.mxu0
  %v2581 = vadd.f32 0.0, %v2580
  %2582 = vdwg.mxu0
  %v2584 = vsel %vm289, %v2581, 0
  %2586 = vmatpush.msra.mxu0 0.0
  %2587 = vmatpush.msra.mxu0 0.0
  %2588 = vmatpush.msra.mxu0 0.0
  %2589 = vmatpush.msra.mxu0 0.0
  %2590 = vmatpush.msra.mxu0 0.0
  %2591 = vmatpush.msra.mxu0 0.0
  %2592 = vmatpush.msra.mxu0 0.0
  %2593 = vmatpush.msra.mxu0 0.0
  %2594 = vmatpush.msra.mxu0 0.0
  %2595 = vmatpush.msra.mxu0 0.0
  %2596 = vmatpush.msra.mxu0 0.0
  %2597 = vmatpush.msra.mxu0 0.0
  %2598 = vmatpush.msra.mxu0 0.0
  %2599 = vmatpush.msra.mxu0 0.0
  %2600 = vmatpush.msra.mxu0 0.0
  %2601 = vmatpush.msra.mxu0 %v2518
  %2602 = vmatmul.f32.gmra.mxu0 %v2584
  %v2603 = vpop.f32.mrf.mxu0
  %v2604 = vadd.f32 0.0, %v2603
  %2605 = vdwg.mxu0
  %v2606 = vadd.f32 %v2320, %v2604
  %v2608 = vrot.slane %v2460, 5
  %v2609 = vrot.slane %v2463, 5
  %v2610 = vsel %vm357, %v2608, %v2609
  %v2612 = vrot.slane %v2486, 5
  %v2613 = vrot.slane %v2489, 5
  %v2614 = vsel %vm357, %v2612, %v2613
  %v2615 = vsel %vm289, %v2610, 0
  %v2617 = vsel %vm289, %v2614, 0
  %2619 = vmatpush.xpose.msra.mxu0 0.0
  %2620 = vmatpush.xpose.msra.mxu0 0.0
  %2621 = vmatpush.xpose.msra.mxu0 0.0
  %2622 = vmatpush.xpose.msra.mxu0 0.0
  %2623 = vmatpush.xpose.msra.mxu0 0.0
  %2624 = vmatpush.xpose.msra.mxu0 0.0
  %2625 = vmatpush.xpose.msra.mxu0 0.0
  %2626 = vmatpush.xpose.msra.mxu0 0.0
  %2627 = vmatpush.xpose.msra.mxu0 0.0
  %2628 = vmatpush.xpose.msra.mxu0 0.0
  %2629 = vmatpush.xpose.msra.mxu0 0.0
  %2630 = vmatpush.xpose.msra.mxu0 0.0
  %2631 = vmatpush.xpose.msra.mxu0 0.0
  %2632 = vmatpush.xpose.msra.mxu0 0.0
  %2633 = vmatpush.xpose.msra.mxu0 0.0
  %2634 = vmatpush.xpose.msra.mxu0 %v2617
  %2635 = vmatmul.f32.gmra.mxu0 %v2615
  %v2636 = vpop.f32.mrf.mxu0
  %v2637 = vadd.f32 0.0, %v2636
  %2638 = vdwg.mxu0
  %v2639 = vmul.f32 %v2637, 0.35355338
  %v2640 = vsel %vm317, %v2639, -inf
  %2641 = vmax.xlane.f32.xlu0 %v2640
  %v2642 = vpop.xlane.xlu0 %2641
  %v2643 = vsub.f32 %v2639, %v2642
  %v2644 = vmul.f32 %v2643, 1.442695
  %v2645 = vpow.pop %v2644
  %v2646 = vsel %vm317, %v2645, 0.0
  %2647 = vadd.xlane.f32.xlu0 %v2646
  %v2648 = vpop.xlane.xlu0 %2647
  %v2649 = vrcp.pop %v2648
  %v2650 = vmul.f32 %v2645, %v2649
  %v2652 = vrot.slane %v2512, 5
  %v2653 = vrot.slane %v2515, 5
  %v2654 = vsel %vm357, %v2652, %v2653
  %v2656 = vsel %vm329, %v2650, 0
  %v2658 = vsel %vm116, %v2654, 0
  %2660 = vmatpush.msra.mxu0 0.0
  %2661 = vmatpush.msra.mxu0 0.0
  %2662 = vmatpush.msra.mxu0 0.0
  %2663 = vmatpush.msra.mxu0 0.0
  %2664 = vmatpush.msra.mxu0 0.0
  %2665 = vmatpush.msra.mxu0 0.0
  %2666 = vmatpush.msra.mxu0 0.0
  %2667 = vmatpush.msra.mxu0 0.0
  %2668 = vmatpush.msra.mxu0 0.0
  %2669 = vmatpush.msra.mxu0 0.0
  %2670 = vmatpush.msra.mxu0 0.0
  %2671 = vmatpush.msra.mxu0 0.0
  %2672 = vmatpush.msra.mxu0 0.0
  %2673 = vmatpush.msra.mxu0 0.0
  %2674 = vmatpush.msra.mxu0 0.0
  %2675 = vmatpush.msra.mxu0 %v2658
  %2676 = vmatmul.f32.gmra.mxu0 %v2656
  %v2677 = vpop.f32.mrf.mxu0
  %v2678 = vadd.f32 0.0, %v2677
  %2679 = vdwg.mxu0
  %v2681 = vsel %vm289, %v2678, 0
  %2683 = vmatpush.msra.mxu0 0.0
  %2684 = vmatpush.msra.mxu0 0.0
  %2685 = vmatpush.msra.mxu0 0.0
  %2686 = vmatpush.msra.mxu0 0.0
  %2687 = vmatpush.msra.mxu0 0.0
  %2688 = vmatpush.msra.mxu0 0.0
  %2689 = vmatpush.msra.mxu0 0.0
  %2690 = vmatpush.msra.mxu0 0.0
  %2691 = vmatpush.msra.mxu0 0.0
  %2692 = vmatpush.msra.mxu0 0.0
  %2693 = vmatpush.msra.mxu0 0.0
  %2694 = vmatpush.msra.mxu0 0.0
  %2695 = vmatpush.msra.mxu0 0.0
  %2696 = vmatpush.msra.mxu0 0.0
  %2697 = vmatpush.msra.mxu0 0.0
  %2698 = vmatpush.msra.mxu0 %v2518
  %2699 = vmatmul.f32.gmra.mxu0 %v2681
  %v2700 = vpop.f32.mrf.mxu0
  %v2701 = vadd.f32 0.0, %v2700
  %2702 = vdwg.mxu0
  %v2703 = vadd.f32 %v2417, %v2701
  %v2705 = vrot.slane %v2703, 3
  %v2707 = vsel %vm116, %v2606, %v2705
  %v2708 = vadd.f32 %v1498, %v2707
  %v2709 = vadd.f32 %v1499, %v2705
  %s2710 = scalar_lea.vmem %s10, 1
  %v2711 = vld [vmem:[%s2710] sm:$0x1]
  %v2713 = vperm.slane %v2711, 0
  %v2715 = vadd.f32 %v2708, %v2713
  %v2716 = vadd.f32 %v2709, %v2713
  %s2717 = scalar_lea.vmem %s11, 1
  %v2718 = vld [vmem:[%s2717] sm:$0x1]
  %s2719 = scalar_lea.vmem %s12, 1
  %v2720 = vld [vmem:[%s2719] sm:$0x1]
  %v2721 = vsel %vm122, %v2715, 0.0
  %2722 = vadd.xlane.f32.xlu0 %v2721
  %v2723 = vpop.xlane.xlu0 %2722
  %v2724 = vsel %vm126, %v2716, 0.0
  %2725 = vadd.xlane.f32.xlu0 %v2724
  %v2726 = vpop.xlane.xlu0 %2725
  %v2727 = vmul.f32 %v2723, %v136
  %v2728 = vmul.f32 %v2726, %v136
  %v2729 = vsub.f32 %v2715, %v2727
  %v2730 = vsub.f32 %v2716, %v2728
  %v2731 = vmul.f32 %v2729, %v2729
  %v2732 = vmul.f32 %v2730, %v2730
  %v2733 = vsel %vm122, %v2731, 0.0
  %2734 = vadd.xlane.f32.xlu0 %v2733
  %v2735 = vpop.xlane.xlu0 %2734
  %v2736 = vsel %vm126, %v2732, 0.0
  %2737 = vadd.xlane.f32.xlu0 %v2736
  %v2738 = vpop.xlane.xlu0 %2737
  %v2739 = vmul.f32 %v2735, %v136
  %v2740 = vmul.f32 %v2738, %v136
  %v2741 = vadd.f32 %v2739, 1e-05
  %v2742 = vadd.f32 %v2740, 1e-05
  %v2743 = vrsqrt.pop %v2741
  %v2744 = vmul.f32 %v2743, %v2741
  %v2745 = vmul.f32 %v2744, %v2743
  %v2746 = vmul.f32 0.5, %v2745
  %v2747 = vsub.f32 1.5, %v2746
  %v2748 = vmul.f32 %v2743, %v2747
  %vm2749 = vweird.f32 %v2741
  %vm2750 = vweird.f32 %v2743
  %vm2751 = vmor %vm2749, %vm2750
  %v2752 = vsel %vm2751, %v2743, %v2748
  %v2753 = vrsqrt.pop %v2742
  %v2754 = vmul.f32 %v2753, %v2742
  %v2755 = vmul.f32 %v2754, %v2753
  %v2756 = vmul.f32 0.5, %v2755
  %v2757 = vsub.f32 1.5, %v2756
  %v2758 = vmul.f32 %v2753, %v2757
  %vm2759 = vweird.f32 %v2742
  %vm2760 = vweird.f32 %v2753
  %vm2761 = vmor %vm2759, %vm2760
  %v2762 = vsel %vm2761, %v2753, %v2758
  %v2763 = vmul.f32 %v2729, %v2752
  %v2764 = vmul.f32 %v2730, %v2762
  %v2766 = vperm.slane %v2718, 0
  %v2768 = vmul.f32 %v2763, %v2766
  %v2769 = vmul.f32 %v2764, %v2766
  %v2771 = vperm.slane %v2720, 0
  %v2773 = vadd.f32 %v2768, %v2771
  %v2774 = vadd.f32 %v2769, %v2771
  %s2775 = scalar_lea.vmem %s13, 32
  %v2776 = vld [vmem:[%s2775] sm:$0xff]
  %v2777 = vld [vmem:[%s2775 + $0x8] sm:$0xff]
  %v2778 = vld [vmem:[%s2775 + $0x10] sm:$0xff]
  %v2779 = vld [vmem:[%s2775 + $0x18] sm:$0xff]
  %s2780 = scalar_lea.vmem %s14, 1
  %v2781 = vld [vmem:[%s2780] sm:$0x1]
  %v2783 = vperm.slane %v2781, 0
  %v2786 = vsel %vm122, %v2773, 0
  %v2789 = vsel %vm122, %v2774, 0
  %2791 = vmatpush.msra.mxu0 0.0
  %2792 = vmatpush.msra.mxu0 0.0
  %2793 = vmatpush.msra.mxu0 0.0
  %2794 = vmatpush.msra.mxu0 0.0
  %2795 = vmatpush.msra.mxu0 0.0
  %2796 = vmatpush.msra.mxu0 0.0
  %2797 = vmatpush.msra.mxu0 0.0
  %2798 = vmatpush.msra.mxu0 0.0
  %2799 = vmatpush.msra.mxu0 0.0
  %2800 = vmatpush.msra.mxu0 0.0
  %2801 = vmatpush.msra.mxu0 0.0
  %2802 = vmatpush.msra.mxu0 0.0
  %2803 = vmatpush.msra.mxu0 %v2779
  %2804 = vmatpush.msra.mxu0 %v2778
  %2805 = vmatpush.msra.mxu0 %v2777
  %2806 = vmatpush.msra.mxu0 %v2776
  %2807 = vmatmul.f32.gmra.mxu0 %v2786
  %v2808 = vpop.f32.mrf.mxu0
  %v2809 = vadd.f32 %v2783, %v2808
  %2810 = vmatmul.f32.gmra.mxu0 %v2789
  %v2811 = vpop.f32.mrf.mxu0
  %v2812 = vadd.f32 %v2783, %v2811
  %2813 = vdwg.mxu0
  %v2814 = vmul.f32 %v2809, 0.5
  %v2815 = vmul.f32 %v2812, 0.5
  %v2816 = vmul.f32 %v2809, 0.044715
  %v2817 = vmul.f32 %v2812, 0.044715
  %v2818 = vmul.f32 %v2816, %v2809
  %v2819 = vmul.f32 %v2817, %v2812
  %v2820 = vmul.f32 %v2818, %v2809
  %v2821 = vmul.f32 %v2819, %v2812
  %v2822 = vadd.f32 %v2809, %v2820
  %v2823 = vadd.f32 %v2812, %v2821
  %v2824 = vmul.f32 %v2822, 0.7978846
  %v2825 = vmul.f32 %v2823, 0.7978846
  %v2826 = vtanh.pop %v2824
  %v2827 = vtanh.pop %v2825
  %v2828 = vadd.f32 %v2826, 1.0
  %v2829 = vadd.f32 %v2827, 1.0
  %v2830 = vmul.f32 %v2814, %v2828
  %v2831 = vmul.f32 %v2815, %v2829
  %s2832 = scalar_lea.vmem %s15, 128
  %v2833 = vld [vmem:[%s2832] sm:$0xff]
  %v2834 = vld [vmem:[%s2832 + $0x8] sm:$0xff]
  %v2835 = vld [vmem:[%s2832 + $0x10] sm:$0xff]
  %v2836 = vld [vmem:[%s2832 + $0x18] sm:$0xff]
  %v2837 = vld [vmem:[%s2832 + $0x20] sm:$0xff]
  %v2838 = vld [vmem:[%s2832 + $0x28] sm:$0xff]
  %v2839 = vld [vmem:[%s2832 + $0x30] sm:$0xff]
  %v2840 = vld [vmem:[%s2832 + $0x38] sm:$0xff]
  %v2841 = vld [vmem:[%s2832 + $0x40] sm:$0xff]
  %v2842 = vld [vmem:[%s2832 + $0x48] sm:$0xff]
  %v2843 = vld [vmem:[%s2832 + $0x50] sm:$0xff]
  %v2844 = vld [vmem:[%s2832 + $0x58] sm:$0xff]
  %v2845 = vld [vmem:[%s2832 + $0x60] sm:$0xff]
  %v2846 = vld [vmem:[%s2832 + $0x68] sm:$0xff]
  %v2847 = vld [vmem:[%s2832 + $0x70] sm:$0xff]
  %v2848 = vld [vmem:[%s2832 + $0x78] sm:$0xff]
  %s2849 = scalar_lea.vmem %s16, 1
  %v2850 = vld [vmem:[%s2849] sm:$0x1]
  %v2852 = vperm.slane %v2850, 0
  %2854 = vmatpush.msra.mxu0 %v2848
  %2855 = vmatpush.msra.mxu0 %v2847
  %2856 = vmatpush.msra.mxu0 %v2846
  %2857 = vmatpush.msra.mxu0 %v2845
  %2858 = vmatpush.msra.mxu0 %v2844
  %2859 = vmatpush.msra.mxu0 %v2843
  %2860 = vmatpush.msra.mxu0 %v2842
  %2861 = vmatpush.msra.mxu0 %v2841
  %2862 = vmatpush.msra.mxu0 %v2840
  %2863 = vmatpush.msra.mxu0 %v2839
  %2864 = vmatpush.msra.mxu0 %v2838
  %2865 = vmatpush.msra.mxu0 %v2837
  %2866 = vmatpush.msra.mxu0 %v2836
  %2867 = vmatpush.msra.mxu0 %v2835
  %2868 = vmatpush.msra.mxu0 %v2834
  %2869 = vmatpush.msra.mxu0 %v2833
  %2870 = vmatmul.f32.gmra.mxu0 %v2830
  %v2871 = vpop.f32.mrf.mxu0
  %v2872 = vadd.f32 %v2852, %v2871
  %2873 = vmatmul.f32.gmra.mxu0 %v2831
  %v2874 = vpop.f32.mrf.mxu0
  %v2875 = vadd.f32 %v2852, %v2874
  %2876 = vdwg.mxu0
  %v2877 = vadd.f32 %v2715, %v2872
  %v2878 = vadd.f32 %v2716, %v2875
  %v2879 = vld [vmem:[%s17] sm:$0x1]
  %v2880 = vld [vmem:[%s18] sm:$0x1]
  %v2881 = vsel %vm122, %v2877, 0.0
  %2882 = vadd.xlane.f32.xlu0 %v2881
  %v2883 = vpop.xlane.xlu0 %2882
  %v2884 = vsel %vm126, %v2878, 0.0
  %2885 = vadd.xlane.f32.xlu0 %v2884
  %v2886 = vpop.xlane.xlu0 %2885
  %v2887 = vmul.f32 %v2883, %v136
  %v2888 = vmul.f32 %v2886, %v136
  %v2889 = vsub.f32 %v2877, %v2887
  %v2890 = vsub.f32 %v2878, %v2888
  %v2891 = vmul.f32 %v2889, %v2889
  %v2892 = vmul.f32 %v2890, %v2890
  %v2893 = vsel %vm122, %v2891, 0.0
  %2894 = vadd.xlane.f32.xlu0 %v2893
  %v2895 = vpop.xlane.xlu0 %2894
  %v2896 = vsel %vm126, %v2892, 0.0
  %2897 = vadd.xlane.f32.xlu0 %v2896
  %v2898 = vpop.xlane.xlu0 %2897
  %v2899 = vmul.f32 %v2895, %v136
  %v2900 = vmul.f32 %v2898, %v136
  %v2901 = vadd.f32 %v2899, 1e-05
  %v2902 = vadd.f32 %v2900, 1e-05
  %v2903 = vrsqrt.pop %v2901
  %v2904 = vmul.f32 %v2903, %v2901
  %v2905 = vmul.f32 %v2904, %v2903
  %v2906 = vmul.f32 0.5, %v2905
  %v2907 = vsub.f32 1.5, %v2906
  %v2908 = vmul.f32 %v2903, %v2907
  %vm2909 = vweird.f32 %v2901
  %vm2910 = vweird.f32 %v2903
  %vm2911 = vmor %vm2909, %vm2910
  %v2912 = vsel %vm2911, %v2903, %v2908
  %v2913 = vrsqrt.pop %v2902
  %v2914 = vmul.f32 %v2913, %v2902
  %v2915 = vmul.f32 %v2914, %v2913
  %v2916 = vmul.f32 0.5, %v2915
  %v2917 = vsub.f32 1.5, %v2916
  %v2918 = vmul.f32 %v2913, %v2917
  %vm2919 = vweird.f32 %v2902
  %vm2920 = vweird.f32 %v2913
  %vm2921 = vmor %vm2919, %vm2920
  %v2922 = vsel %vm2921, %v2913, %v2918
  %v2923 = vmul.f32 %v2889, %v2912
  %v2924 = vmul.f32 %v2890, %v2922
  %v2926 = vperm.slane %v2879, 0
  %v2928 = vmul.f32 %v2923, %v2926
  %v2929 = vmul.f32 %v2924, %v2926
  %v2931 = vperm.slane %v2880, 0
  %v2933 = vadd.f32 %v2928, %v2931
  %v2934 = vadd.f32 %v2929, %v2931
  %v2935 = vld [vmem:[%s19] sm:$0xff]
  %v2936 = vld [vmem:[%s19 + $0x8] sm:$0xff]
  %v2937 = vld [vmem:[%s19 + $0x10] sm:$0xff]
  %v2938 = vld [vmem:[%s19 + $0x18] sm:$0xff]
  %v2939 = vld [vmem:[%s20] sm:$0x1]
  %v2941 = vperm.slane %v2939, 0
  %v2944 = vsel %vm122, %v2933, 0
  %v2947 = vsel %vm122, %v2934, 0
  %2949 = vmatpush.msra.mxu0 0.0
  %2950 = vmatpush.msra.mxu0 0.0
  %2951 = vmatpush.msra.mxu0 0.0
  %2952 = vmatpush.msra.mxu0 0.0
  %2953 = vmatpush.msra.mxu0 0.0
  %2954 = vmatpush.msra.mxu0 0.0
  %2955 = vmatpush.msra.mxu0 0.0
  %2956 = vmatpush.msra.mxu0 0.0
  %2957 = vmatpush.msra.mxu0 0.0
  %2958 = vmatpush.msra.mxu0 0.0
  %2959 = vmatpush.msra.mxu0 0.0
  %2960 = vmatpush.msra.mxu0 0.0
  %2961 = vmatpush.msra.mxu0 %v2938
  %2962 = vmatpush.msra.mxu0 %v2937
  %2963 = vmatpush.msra.mxu0 %v2936
  %2964 = vmatpush.msra.mxu0 %v2935
  %2965 = vmatmul.f32.gmra.mxu0 %v2944
  %v2966 = vpop.f32.mrf.mxu0
  %v2967 = vadd.f32 %v2941, %v2966
  %2968 = vmatmul.f32.gmra.mxu0 %v2947
  %v2969 = vpop.f32.mrf.mxu0
  %v2970 = vadd.f32 %v2941, %v2969
  %2971 = vdwg.mxu0
  %vm2972 = vcmask 130048
  %2973 = vst.msk [vmem:[%s21] sm:$0xff] %vm2972, %v2967
  %vm2974 = vcmask 123904
  %2975 = vst.msk [vmem:[%s21 + $0x8] sm:$0x3] %vm2974, %v2970
  // Predicated region
  $region86: #{mae_forward.2} parent=0 // pred_check
    _
  $region87: #{mae_forward.2} parent=0 // pred_check_branch
    %2977 = sbr.rel (0) target = $region89
  $region88: #{mae_forward.2} parent=0 // pred_region
    _
  $region89: #{mae_forward.2} parent=0 // pred_fallthru
    _
  // Predicated region
  $region90: #{mae_forward.2} parent=0 // pred_check
    _
  $region91: #{mae_forward.2} parent=0 // pred_check_branch
    %2979 = sbr.rel (0) target = $region93
  $region92: #{mae_forward.2} parent=0 // pred_region
    _
  $region93: #{mae_forward.2} parent=0 // pred_fallthru
    _

// kernel: mae_forward.3
$region0: #{mae_forward.3}
  #allocation0 [shape = 'u32[]', space=smem, size = 0x4, offset = 0x4, fixed_abs, tag = 'smem constant byte address 0x4 - core index']
  #allocation1 [shape = 'u32[72,128]{1,0:T(1,128)}', space=vmem, size = 0x9000, scoped, tag = 'internal scratch']
  %s0 = inlined_call_operand.vmem [shape: f32[34,16], index: 0, kind: input, shape index: {}]
  %s1 = inlined_call_operand.vmem [shape: f32[2,1,16], index: 1, kind: input, shape index: {}]
  %s2 = inlined_call_operand.vmem [shape: f32[2,1,16], index: 2, kind: input, shape index: {}]
  %s3 = inlined_call_operand.vmem [shape: f32[12,16,8], index: 3, kind: input, shape index: {}]
  %s4 = inlined_call_operand.vmem [shape: f32[12,1,8], index: 4, kind: input, shape index: {}]
  %s5 = inlined_call_operand.vmem [shape: f32[4,8,16], index: 5, kind: input, shape index: {}]
  %s6 = inlined_call_operand.vmem [shape: f32[2,1,16], index: 6, kind: input, shape index: {}]
  %s7 = inlined_call_operand.vmem [shape: f32[2,1,16], index: 7, kind: input, shape index: {}]
  %s8 = inlined_call_operand.vmem [shape: f32[2,1,16], index: 8, kind: input, shape index: {}]
  %s9 = inlined_call_operand.vmem [shape: f32[2,16,64], index: 9, kind: input, shape index: {}]
  %s10 = inlined_call_operand.vmem [shape: f32[2,1,64], index: 10, kind: input, shape index: {}]
  %s11 = inlined_call_operand.vmem [shape: f32[2,64,16], index: 11, kind: input, shape index: {}]
  %s12 = inlined_call_operand.vmem [shape: f32[2,1,16], index: 12, kind: input, shape index: {}]
  %s13 = inlined_call_operand.vmem [shape: f32[1,16], index: 13, kind: input, shape index: {}]
  %s14 = inlined_call_operand.vmem [shape: f32[1,16], index: 14, kind: input, shape index: {}]
  %s15 = inlined_call_operand.vmem [shape: f32[16,48], index: 15, kind: input, shape index: {}]
  %s16 = inlined_call_operand.vmem [shape: f32[1,48], index: 16, kind: input, shape index: {}]
  %s17 = inlined_call_operand.vmem [shape: f32[34,48], index: 17, kind: input, shape index: {}]
  %s18 = inlined_call_operand.vmem [shape: f32[34,1], index: 18, kind: input, shape index: {}]
  %s19 = inlined_call_operand.vmem [shape: f32[34,48], index: 19, kind: output, shape index: {0}]
  %s20 = inlined_call_operand.hbm [shape: f32[1,1], index: 20, kind: output, shape index: {1}]
  %21 = xla_tuple %s19, %s20
  %s22 = sld [smem:[#allocation0]]
  $region94: #{mae_forward.3} parent=0
    _
  %s24 = ssub.s32 1, %s22
  %s25 = scalar_select 0, %s24, %s22
  $region1: #{mae_forward.3} parent=0
    #allocation2 [shape = 'u8[512]{0}', space=vmem, size = 0x400, scoped, tag = 'output window, operand 1, single buffered']
    #allocation3 [shape = 's32[1]{0}', space=sflag, size = 0x4, scoped, tag = 'scoped memory for mae_forward.3']
    %26 = vsyncpa [#allocation3], 0
    // Predicated region
    $region2: #{mae_forward.3} parent=1 // pred_check
      _
    $region3: #{mae_forward.3} parent=1 // pred_check_branch
      %28 = sbr.rel (0) target = $region5
    $region4: #{mae_forward.3} parent=1 // pred_region
      _
    $region5: #{mae_forward.3} parent=1 // pred_fallthru
      _
    // Predicated region
    $region6: #{mae_forward.3} parent=1 // pred_check
      _
    $region7: #{mae_forward.3} parent=1 // pred_check_branch
      %30 = sbr.rel (0) target = $region9
    $region8: #{mae_forward.3} parent=1 // pred_region
      _
    $region9: #{mae_forward.3} parent=1 // pred_fallthru
      _
    // Predicated region
    $region10: #{mae_forward.3} parent=1 // pred_check
      _
    $region11: #{mae_forward.3} parent=1 // pred_check_branch
      %32 = sbr.rel (0) target = $region13
    $region12: #{mae_forward.3} parent=1 // pred_region
      _
    $region13: #{mae_forward.3} parent=1 // pred_fallthru
      _
    // Predicated region
    $region14: #{mae_forward.3} parent=1 // pred_check
      _
    $region15: #{mae_forward.3} parent=1 // pred_check_branch
      %34 = sbr.rel (0) target = $region17
    $region16: #{mae_forward.3} parent=1 // pred_region
      _
    $region17: #{mae_forward.3} parent=1 // pred_fallthru
      _
    // Predicated region
    $region18: #{mae_forward.3} parent=1 // pred_check
      _
    $region19: #{mae_forward.3} parent=1 // pred_check_branch
      %36 = sbr.rel (0) target = $region21
    $region20: #{mae_forward.3} parent=1 // pred_region
      _
    $region21: #{mae_forward.3} parent=1 // pred_fallthru
      _
    // Predicated region
    $region22: #{mae_forward.3} parent=1 // pred_check
      _
    $region23: #{mae_forward.3} parent=1 // pred_check_branch
      %38 = sbr.rel (0) target = $region25
    $region24: #{mae_forward.3} parent=1 // pred_region
      _
    $region25: #{mae_forward.3} parent=1 // pred_fallthru
      _
    // Predicated region
    $region26: #{mae_forward.3} parent=1 // pred_check
      _
    $region27: #{mae_forward.3} parent=1 // pred_check_branch
      %40 = sbr.rel (0) target = $region29
    $region28: #{mae_forward.3} parent=1 // pred_region
      _
    $region29: #{mae_forward.3} parent=1 // pred_fallthru
      _
    // Predicated region
    $region30: #{mae_forward.3} parent=1 // pred_check
      _
    $region31: #{mae_forward.3} parent=1 // pred_check_branch
      %42 = sbr.rel (0) target = $region33
    $region32: #{mae_forward.3} parent=1 // pred_region
      _
    $region33: #{mae_forward.3} parent=1 // pred_fallthru
      _
    // Predicated region
    $region34: #{mae_forward.3} parent=1 // pred_check
      _
    $region35: #{mae_forward.3} parent=1 // pred_check_branch
      %44 = sbr.rel (0) target = $region37
    $region36: #{mae_forward.3} parent=1 // pred_region
      _
    $region37: #{mae_forward.3} parent=1 // pred_fallthru
      _
    // Predicated region
    $region38: #{mae_forward.3} parent=1 // pred_check
      _
    $region39: #{mae_forward.3} parent=1 // pred_check_branch
      %46 = sbr.rel (0) target = $region41
    $region40: #{mae_forward.3} parent=1 // pred_region
      _
    $region41: #{mae_forward.3} parent=1 // pred_fallthru
      _
    // Predicated region
    $region42: #{mae_forward.3} parent=1 // pred_check
      _
    $region43: #{mae_forward.3} parent=1 // pred_check_branch
      %48 = sbr.rel (0) target = $region45
    $region44: #{mae_forward.3} parent=1 // pred_region
      _
    $region45: #{mae_forward.3} parent=1 // pred_fallthru
      _
    // Predicated region
    $region46: #{mae_forward.3} parent=1 // pred_check
      _
    $region47: #{mae_forward.3} parent=1 // pred_check_branch
      %50 = sbr.rel (0) target = $region49
    $region48: #{mae_forward.3} parent=1 // pred_region
      _
    $region49: #{mae_forward.3} parent=1 // pred_fallthru
      _
    // Predicated region
    $region50: #{mae_forward.3} parent=1 // pred_check
      _
    $region51: #{mae_forward.3} parent=1 // pred_check_branch
      %52 = sbr.rel (0) target = $region53
    $region52: #{mae_forward.3} parent=1 // pred_region
      _
    $region53: #{mae_forward.3} parent=1 // pred_fallthru
      _
    // Predicated region
    $region54: #{mae_forward.3} parent=1 // pred_check
      _
    $region55: #{mae_forward.3} parent=1 // pred_check_branch
      %54 = sbr.rel (0) target = $region57
    $region56: #{mae_forward.3} parent=1 // pred_region
      _
    $region57: #{mae_forward.3} parent=1 // pred_fallthru
      _
    // Predicated region
    $region58: #{mae_forward.3} parent=1 // pred_check
      _
    $region59: #{mae_forward.3} parent=1 // pred_check_branch
      %56 = sbr.rel (0) target = $region61
    $region60: #{mae_forward.3} parent=1 // pred_region
      _
    $region61: #{mae_forward.3} parent=1 // pred_fallthru
      _
    // Predicated region
    $region62: #{mae_forward.3} parent=1 // pred_check
      _
    $region63: #{mae_forward.3} parent=1 // pred_check_branch
      %58 = sbr.rel (0) target = $region65
    $region64: #{mae_forward.3} parent=1 // pred_region
      _
    $region65: #{mae_forward.3} parent=1 // pred_fallthru
      _
    // Predicated region
    $region66: #{mae_forward.3} parent=1 // pred_check
      _
    $region67: #{mae_forward.3} parent=1 // pred_check_branch
      %60 = sbr.rel (0) target = $region69
    $region68: #{mae_forward.3} parent=1 // pred_region
      _
    $region69: #{mae_forward.3} parent=1 // pred_fallthru
      _
    // Predicated region
    $region70: #{mae_forward.3} parent=1 // pred_check
      _
    $region71: #{mae_forward.3} parent=1 // pred_check_branch
      %62 = sbr.rel (0) target = $region73
    $region72: #{mae_forward.3} parent=1 // pred_region
      _
    $region73: #{mae_forward.3} parent=1 // pred_fallthru
      _
    // Predicated region
    $region74: #{mae_forward.3} parent=1 // pred_check
      _
    $region75: #{mae_forward.3} parent=1 // pred_check_branch
      %64 = sbr.rel (0) target = $region77
    $region76: #{mae_forward.3} parent=1 // pred_region
      _
    $region77: #{mae_forward.3} parent=1 // pred_fallthru
      _
    %v65 = vld [vmem:[%s0] sm:$0xff]
    %v66 = vld [vmem:[%s0 + $0x8] sm:$0xff]
    %v67 = vld [vmem:[%s0 + $0x10] sm:$0xff]
    %v68 = vld [vmem:[%s0 + $0x18] sm:$0xff]
    %v69 = vld [vmem:[%s0 + $0x20] sm:$0x3]
    %v70 = vld [vmem:[%s1] sm:$0x1]
    %v71 = vld [vmem:[%s2] sm:$0x1]
    %vm72 = vcmask 130048
    %v73 = vsel %vm72, %v65, 0.0
    %74 = vadd.xlane.f32.xlu0 %v73
    %v75 = vpop.xlane.xlu0 %74
    %v76 = vsel %vm72, %v66, 0.0
    %77 = vadd.xlane.f32.xlu0 %v76
    %v78 = vpop.xlane.xlu0 %77
    %v79 = vsel %vm72, %v67, 0.0
    %80 = vadd.xlane.f32.xlu0 %v79
    %v81 = vpop.xlane.xlu0 %80
    %v82 = vsel %vm72, %v68, 0.0
    %83 = vadd.xlane.f32.xlu0 %v82
    %v84 = vpop.xlane.xlu0 %83
    %vm85 = vcmask 123904
    %v86 = vsel %vm85, %v69, 0.0
    %87 = vadd.xlane.f32.xlu0 %v86
    %v88 = vpop.xlane.xlu0 %87
    %v89 = vrcp.pop 16.0
    %v90 = vmul.f32 16.0, %v89
    %v91 = vsub.f32 1.0, %v90
    %v92 = vmul.f32 %v89, %v91
    %v93 = vadd.f32 %v89, %v92
    %vm94 = vweird.f32 %v89
    %v95 = vsel %vm94, %v89, %v93
    %v96 = vmul.f32 %v75, %v95
    %v97 = vmul.f32 %v78, %v95
    %v98 = vmul.f32 %v81, %v95
    %v99 = vmul.f32 %v84, %v95
    %v100 = vmul.f32 %v88, %v95
    %v101 = vsub.f32 %v65, %v96
    %v102 = vsub.f32 %v66, %v97
    %v103 = vsub.f32 %v67, %v98
    %v104 = vsub.f32 %v68, %v99
    %v105 = vsub.f32 %v69, %v100
    %v106 = vmul.f32 %v101, %v101
    %v107 = vmul.f32 %v102, %v102
    %v108 = vmul.f32 %v103, %v103
    %v109 = vmul.f32 %v104, %v104
    %v110 = vmul.f32 %v105, %v105
    %v111 = vsel %vm72, %v106, 0.0
    %112 = vadd.xlane.f32.xlu0 %v111
    %v113 = vpop.xlane.xlu0 %112
    %v114 = vsel %vm72, %v107, 0.0
    %115 = vadd.xlane.f32.xlu0 %v114
    %v116 = vpop.xlane.xlu0 %115
    %v117 = vsel %vm72, %v108, 0.0
    %118 = vadd.xlane.f32.xlu0 %v117
    %v119 = vpop.xlane.xlu0 %118
    %v120 = vsel %vm72, %v109, 0.0
    %121 = vadd.xlane.f32.xlu0 %v120
    %v122 = vpop.xlane.xlu0 %121
    %v123 = vsel %vm85, %v110, 0.0
    %124 = vadd.xlane.f32.xlu0 %v123
    %v125 = vpop.xlane.xlu0 %124
    %v126 = vmul.f32 %v113, %v95
    %v127 = vmul.f32 %v116, %v95
    %v128 = vmul.f32 %v119, %v95
    %v129 = vmul.f32 %v122, %v95
    %v130 = vmul.f32 %v125, %v95
    %v131 = vadd.f32 %v126, 1e-05
    %v132 = vadd.f32 %v127, 1e-05
    %v133 = vadd.f32 %v128, 1e-05
    %v134 = vadd.f32 %v129, 1e-05
    %v135 = vadd.f32 %v130, 1e-05
    %v136 = vrsqrt.pop %v131
    %v137 = vmul.f32 %v136, %v131
    %v138 = vmul.f32 %v137, %v136
    %v139 = vmul.f32 0.5, %v138
    %v140 = vsub.f32 1.5, %v139
    %v141 = vmul.f32 %v136, %v140
    %vm142 = vweird.f32 %v131
    %vm143 = vweird.f32 %v136
    %vm144 = vmor %vm142, %vm143
    %v145 = vsel %vm144, %v136, %v141
    %v146 = vrsqrt.pop %v132
    %v147 = vmul.f32 %v146, %v132
    %v148 = vmul.f32 %v147, %v146
    %v149 = vmul.f32 0.5, %v148
    %v150 = vsub.f32 1.5, %v149
    %v151 = vmul.f32 %v146, %v150
    %vm152 = vweird.f32 %v132
    %vm153 = vweird.f32 %v146
    %vm154 = vmor %vm152, %vm153
    %v155 = vsel %vm154, %v146, %v151
    %v156 = vrsqrt.pop %v133
    %v157 = vmul.f32 %v156, %v133
    %v158 = vmul.f32 %v157, %v156
    %v159 = vmul.f32 0.5, %v158
    %v160 = vsub.f32 1.5, %v159
    %v161 = vmul.f32 %v156, %v160
    %vm162 = vweird.f32 %v133
    %vm163 = vweird.f32 %v156
    %vm164 = vmor %vm162, %vm163
    %v165 = vsel %vm164, %v156, %v161
    %v166 = vrsqrt.pop %v134
    %v167 = vmul.f32 %v166, %v134
    %v168 = vmul.f32 %v167, %v166
    %v169 = vmul.f32 0.5, %v168
    %v170 = vsub.f32 1.5, %v169
    %v171 = vmul.f32 %v166, %v170
    %vm172 = vweird.f32 %v134
    %vm173 = vweird.f32 %v166
    %vm174 = vmor %vm172, %vm173
    %v175 = vsel %vm174, %v166, %v171
    %v176 = vrsqrt.pop %v135
    %v177 = vmul.f32 %v176, %v135
    %v178 = vmul.f32 %v177, %v176
    %v179 = vmul.f32 0.5, %v178
    %v180 = vsub.f32 1.5, %v179
    %v181 = vmul.f32 %v176, %v180
    %vm182 = vweird.f32 %v135
    %vm183 = vweird.f32 %v176
    %vm184 = vmor %vm182, %vm183
    %v185 = vsel %vm184, %v176, %v181
    %v186 = vmul.f32 %v101, %v145
    %v187 = vmul.f32 %v102, %v155
    %v188 = vmul.f32 %v103, %v165
    %v189 = vmul.f32 %v104, %v175
    %v190 = vmul.f32 %v105, %v185
    %v192 = vperm.slane %v70, 0
    %v194 = vmul.f32 %v186, %v192
    %v195 = vmul.f32 %v187, %v192
    %v196 = vmul.f32 %v188, %v192
    %v197 = vmul.f32 %v189, %v192
    %v198 = vmul.f32 %v190, %v192
    %v200 = vperm.slane %v71, 0
    %v202 = vadd.f32 %v194, %v200
    %v203 = vadd.f32 %v195, %v200
    %v204 = vadd.f32 %v196, %v200
    %v205 = vadd.f32 %v197, %v200
    %v206 = vadd.f32 %v198, %v200
    %v207 = vld [vmem:[%s3] sm:$0xff]
    %v208 = vld [vmem:[%s3 + $0x8] sm:$0xff]
    %v209 = vld [vmem:[%s4] sm:$0x1]
    %s210 = scalar_lea.vmem %s3, 32
    %v211 = vld [vmem:[%s210] sm:$0xff]
    %v212 = vld [vmem:[%s210 + $0x8] sm:$0xff]
    %s213 = scalar_lea.vmem %s4, 2
    %v214 = vld [vmem:[%s213] sm:$0x1]
    %s215 = scalar_lea.vmem %s3, 64
    %v216 = vld [vmem:[%s215] sm:$0xff]
    %v217 = vld [vmem:[%s215 + $0x8] sm:$0xff]
    %s218 = scalar_lea.vmem %s4, 4
    %v219 = vld [vmem:[%s218] sm:$0x1]
    %v221 = vperm.slane %v209, 0
    %v224 = vsel %vm72, %v202, 0
    %v227 = vsel %vm72, %v203, 0
    %v230 = vsel %vm72, %v204, 0
    %v233 = vsel %vm72, %v205, 0
    %v236 = vsel %vm72, %v206, 0
    %238 = vmatpush.msra.mxu0 0.0
    %239 = vmatpush.msra.mxu0 0.0
    %240 = vmatpush.msra.mxu0 0.0
    %241 = vmatpush.msra.mxu0 0.0
    %242 = vmatpush.msra.mxu0 0.0
    %243 = vmatpush.msra.mxu0 0.0
    %244 = vmatpush.msra.mxu0 0.0
    %245 = vmatpush.msra.mxu0 0.0
    %246 = vmatpush.msra.mxu0 0.0
    %247 = vmatpush.msra.mxu0 0.0
    %248 = vmatpush.msra.mxu0 0.0
    %249 = vmatpush.msra.mxu0 0.0
    %250 = vmatpush.msra.mxu0 0.0
    %251 = vmatpush.msra.mxu0 0.0
    %252 = vmatpush.msra.mxu0 %v208
    %253 = vmatpush.msra.mxu0 %v207
    %254 = vmatmul.f32.gmra.mxu0 %v224
    %v255 = vpop.f32.mrf.mxu0
    %v256 = vadd.f32 %v221, %v255
    %257 = vmatmul.f32.gmra.mxu0 %v227
    %v258 = vpop.f32.mrf.mxu0
    %v259 = vadd.f32 %v221, %v258
    %260 = vmatmul.f32.gmra.mxu0 %v230
    %v261 = vpop.f32.mrf.mxu0
    %v262 = vadd.f32 %v221, %v261
    %263 = vmatmul.f32.gmra.mxu0 %v233
    %v264 = vpop.f32.mrf.mxu0
    %v265 = vadd.f32 %v221, %v264
    %266 = vmatmul.f32.gmra.mxu0 %v236
    %v267 = vpop.f32.mrf.mxu0
    %v268 = vadd.f32 %v221, %v267
    %269 = vdwg.mxu0
    %v271 = vperm.slane %v214, 0
    %273 = vmatpush.msra.mxu0 0.0
    %274 = vmatpush.msra.mxu0 0.0
    %275 = vmatpush.msra.mxu0 0.0
    %276 = vmatpush.msra.mxu0 0.0
    %277 = vmatpush.msra.mxu0 0.0
    %278 = vmatpush.msra.mxu0 0.0
    %279 = vmatpush.msra.mxu0 0.0
    %280 = vmatpush.msra.mxu0 0.0
    %281 = vmatpush.msra.mxu0 0.0
    %282 = vmatpush.msra.mxu0 0.0
    %283 = vmatpush.msra.mxu0 0.0
    %284 = vmatpush.msra.mxu0 0.0
    %285 = vmatpush.msra.mxu0 0.0
    %286 = vmatpush.msra.mxu0 0.0
    %287 = vmatpush.msra.mxu0 %v212
    %288 = vmatpush.msra.mxu0 %v211
    %289 = vmatmul.f32.gmra.mxu0 %v224
    %v290 = vpop.f32.mrf.mxu0
    %v291 = vadd.f32 %v271, %v290
    %292 = vmatmul.f32.gmra.mxu0 %v227
    %v293 = vpop.f32.mrf.mxu0
    %v294 = vadd.f32 %v271, %v293
    %295 = vmatmul.f32.gmra.mxu0 %v230
    %v296 = vpop.f32.mrf.mxu0
    %v297 = vadd.f32 %v271, %v296
    %298 = vmatmul.f32.gmra.mxu0 %v233
    %v299 = vpop.f32.mrf.mxu0
    %v300 = vadd.f32 %v271, %v299
    %301 = vmatmul.f32.gmra.mxu0 %v236
    %v302 = vpop.f32.mrf.mxu0
    %v303 = vadd.f32 %v271, %v302
    %304 = vdwg.mxu0
    %v306 = vperm.slane %v219, 0
    %308 = vmatpush.msra.mxu0 0.0
    %309 = vmatpush.msra.mxu0 0.0
    %310 = vmatpush.msra.mxu0 0.0
    %311 = vmatpush.msra.mxu0 0.0
    %312 = vmatpush.msra.mxu0 0.0
    %313 = vmatpush.msra.mxu0 0.0
    %314 = vmatpush.msra.mxu0 0.0
    %315 = vmatpush.msra.mxu0 0.0
    %316 = vmatpush.msra.mxu0 0.0
    %317 = vmatpush.msra.mxu0 0.0
    %318 = vmatpush.msra.mxu0 0.0
    %319 = vmatpush.msra.mxu0 0.0
    %320 = vmatpush.msra.mxu0 0.0
    %321 = vmatpush.msra.mxu0 0.0
    %322 = vmatpush.msra.mxu0 %v217
    %323 = vmatpush.msra.mxu0 %v216
    %324 = vmatmul.f32.gmra.mxu0 %v224
    %v325 = vpop.f32.mrf.mxu0
    %v326 = vadd.f32 %v306, %v325
    %327 = vmatmul.f32.gmra.mxu0 %v227
    %v328 = vpop.f32.mrf.mxu0
    %v329 = vadd.f32 %v306, %v328
    %330 = vmatmul.f32.gmra.mxu0 %v230
    %v331 = vpop.f32.mrf.mxu0
    %v332 = vadd.f32 %v306, %v331
    %333 = vmatmul.f32.gmra.mxu0 %v233
    %v334 = vpop.f32.mrf.mxu0
    %v335 = vadd.f32 %v306, %v334
    %336 = vmatmul.f32.gmra.mxu0 %v236
    %v337 = vpop.f32.mrf.mxu0
    %v338 = vadd.f32 %v306, %v337
    %339 = vdwg.mxu0
    %v340 = vld [vmem:[%s5] sm:$0xff]
    %vm341 = vcmask 64512
    %v343 = vsel %vm341, %v256, 0
    %v346 = vsel %vm341, %v259, 0
    %v349 = vsel %vm341, %v262, 0
    %v352 = vsel %vm341, %v291, 0
    %v355 = vsel %vm341, %v294, 0
    %v358 = vsel %vm341, %v297, 0
    %360 = vmatpush.xpose.msra.mxu0 0.0
    %361 = vmatpush.xpose.msra.mxu0 0.0
    %362 = vmatpush.xpose.msra.mxu0 0.0
    %363 = vmatpush.xpose.msra.mxu0 0.0
    %364 = vmatpush.xpose.msra.mxu0 0.0
    %365 = vmatpush.xpose.msra.mxu0 0.0
    %366 = vmatpush.xpose.msra.mxu0 0.0
    %367 = vmatpush.xpose.msra.mxu0 0.0
    %368 = vmatpush.xpose.msra.mxu0 0.0
    %369 = vmatpush.xpose.msra.mxu0 0.0
    %370 = vmatpush.xpose.msra.mxu0 0.0
    %371 = vmatpush.xpose.msra.mxu0 0.0
    %372 = vmatpush.xpose.msra.mxu0 0.0
    %373 = vmatpush.xpose.msra.mxu0 %v358
    %374 = vmatpush.xpose.msra.mxu0 %v355
    %375 = vmatpush.xpose.msra.mxu0 %v352
    %376 = vmatmul.f32.gmra.mxu0 %v343
    %v377 = vpop.f32.mrf.mxu0
    %v378 = vadd.f32 0.0, %v377
    %379 = vmatmul.f32.gmra.mxu0 %v346
    %v380 = vpop.f32.mrf.mxu0
    %v381 = vadd.f32 0.0, %v380
    %382 = vmatmul.f32.gmra.mxu0 %v349
    %v383 = vpop.f32.mrf.mxu0
    %v384 = vadd.f32 0.0, %v383
    %385 = vdwg.mxu0
    %v386 = vmul.f32 %v378, 0.35355338
    %v387 = vmul.f32 %v381, 0.35355338
    %v388 = vmul.f32 %v384, 0.35355338
    %vm389 = vcmask 138240
    %v390 = vsel %vm389, %v386, -inf
    %391 = vmax.xlane.f32.xlu0 %v390
    %v392 = vpop.xlane.xlu0 %391
    %v393 = vsel %vm389, %v387, -inf
    %394 = vmax.xlane.f32.xlu0 %v393
    %v395 = vpop.xlane.xlu0 %394
    %vm396 = vcmask 131072
    %v397 = vsel %vm396, %v388, -inf
    %398 = vmax.xlane.f32.xlu0 %v397
    %v399 = vpop.xlane.xlu0 %398
    %v400 = vsub.f32 %v386, %v392
    %v401 = vsub.f32 %v387, %v395
    %v402 = vsub.f32 %v388, %v399
    %v403 = vmul.f32 %v400, 1.442695
    %v404 = vpow.pop %v403
    %v405 = vmul.f32 %v401, 1.442695
    %v406 = vpow.pop %v405
    %v407 = vmul.f32 %v402, 1.442695
    %v408 = vpow.pop %v407
    %v409 = vsel %vm389, %v404, 0.0
    %410 = vadd.xlane.f32.xlu0 %v409
    %v411 = vpop.xlane.xlu0 %410
    %v412 = vsel %vm389, %v406, 0.0
    %413 = vadd.xlane.f32.xlu0 %v412
    %v414 = vpop.xlane.xlu0 %413
    %v415 = vsel %vm396, %v408, 0.0
    %416 = vadd.xlane.f32.xlu0 %v415
    %v417 = vpop.xlane.xlu0 %416
    %v418 = vrcp.pop %v411
    %v419 = vrcp.pop %v414
    %v420 = vrcp.pop %v417
    %v421 = vmul.f32 %v404, %v418
    %v422 = vmul.f32 %v406, %v419
    %v423 = vmul.f32 %v408, %v420
    %v425 = vsel %vm389, %v421, 0
    %v428 = vsel %vm389, %v422, 0
    %v431 = vsel %vm389, %v423, 0
    %vm433 = vcmask 1040384
    %v435 = vsel %vm433, %v332, 0
    %437 = vmatpush.msra.mxu0 0.0
    %438 = vmatpush.msra.mxu0 0.0
    %439 = vmatpush.msra.mxu0 0.0
    %440 = vmatpush.msra.mxu0 0.0
    %441 = vmatpush.msra.mxu0 0.0
    %442 = vmatpush.msra.mxu0 0.0
    %443 = vmatpush.msra.mxu0 0.0
    %444 = vmatpush.msra.mxu0 0.0
    %445 = vmatpush.msra.mxu0 0.0
    %446 = vmatpush.msra.mxu0 0.0
    %447 = vmatpush.msra.mxu0 0.0
    %448 = vmatpush.msra.mxu0 0.0
    %449 = vmatpush.msra.mxu0 0.0
    %450 = vmatpush.msra.mxu0 %v435
    %451 = vmatpush.msra.mxu0 %v329
    %452 = vmatpush.msra.mxu0 %v326
    %453 = vmatmul.f32.gmra.mxu0 %v425
    %v454 = vpop.f32.mrf.mxu0
    %v455 = vadd.f32 0.0, %v454
    %456 = vmatmul.f32.gmra.mxu0 %v428
    %v457 = vpop.f32.mrf.mxu0
    %v458 = vadd.f32 0.0, %v457
    %459 = vmatmul.f32.gmra.mxu0 %v431
    %v460 = vpop.f32.mrf.mxu0
    %v461 = vadd.f32 0.0, %v460
    %462 = vdwg.mxu0
    %vm465 = vcmask 1046528
    %v466 = vrot.slane %v262, 1
    %v467 = vrot.slane %v265, 1
    %v468 = vsel %vm465, %v466, %v467
    %v469 = vrot.slane %v268, 1
    %v470 = vsel %vm465, %v467, %v469
    %v473 = vrot.slane %v297, 1
    %v474 = vrot.slane %v300, 1
    %v475 = vsel %vm465, %v473, %v474
    %v476 = vrot.slane %v303, 1
    %v477 = vsel %vm465, %v474, %v476
    %v478 = vsel %vm341, %v468, 0
    %v480 = vsel %vm341, %v470, 0
    %v482 = vsel %vm341, %v469, 0
    %v484 = vsel %vm341, %v475, 0
    %v486 = vsel %vm341, %v477, 0
    %v488 = vsel %vm341, %v476, 0
    %490 = vmatpush.xpose.msra.mxu0 0.0
    %491 = vmatpush.xpose.msra.mxu0 0.0
    %492 = vmatpush.xpose.msra.mxu0 0.0
    %493 = vmatpush.xpose.msra.mxu0 0.0
    %494 = vmatpush.xpose.msra.mxu0 0.0
    %495 = vmatpush.xpose.msra.mxu0 0.0
    %496 = vmatpush.xpose.msra.mxu0 0.0
    %497 = vmatpush.xpose.msra.mxu0 0.0
    %498 = vmatpush.xpose.msra.mxu0 0.0
    %499 = vmatpush.xpose.msra.mxu0 0.0
    %500 = vmatpush.xpose.msra.mxu0 0.0
    %501 = vmatpush.xpose.msra.mxu0 0.0
    %502 = vmatpush.xpose.msra.mxu0 0.0
    %503 = vmatpush.xpose.msra.mxu0 %v488
    %504 = vmatpush.xpose.msra.mxu0 %v486
    %505 = vmatpush.xpose.msra.mxu0 %v484
    %506 = vmatmul.f32.gmra.mxu0 %v478
    %v507 = vpop.f32.mrf.mxu0
    %v508 = vadd.f32 0.0, %v507
    %509 = vmatmul.f32.gmra.mxu0 %v480
    %v510 = vpop.f32.mrf.mxu0
    %v511 = vadd.f32 0.0, %v510
    %512 = vmatmul.f32.gmra.mxu0 %v482
    %v513 = vpop.f32.mrf.mxu0
    %v514 = vadd.f32 0.0, %v513
    %515 = vdwg.mxu0
    %v516 = vmul.f32 %v508, 0.35355338
    %v517 = vmul.f32 %v511, 0.35355338
    %v518 = vmul.f32 %v514, 0.35355338
    %v519 = vsel %vm389, %v516, -inf
    %520 = vmax.xlane.f32.xlu0 %v519
    %v521 = vpop.xlane.xlu0 %520
    %v522 = vsel %vm389, %v517, -inf
    %523 = vmax.xlane.f32.xlu0 %v522
    %v524 = vpop.xlane.xlu0 %523
    %v525 = vsel %vm396, %v518, -inf
    %526 = vmax.xlane.f32.xlu0 %v525
    %v527 = vpop.xlane.xlu0 %526
    %v528 = vsub.f32 %v516, %v521
    %v529 = vsub.f32 %v517, %v524
    %v530 = vsub.f32 %v518, %v527
    %v531 = vmul.f32 %v528, 1.442695
    %v532 = vpow.pop %v531
    %v533 = vmul.f32 %v529, 1.442695
    %v534 = vpow.pop %v533
    %v535 = vmul.f32 %v530, 1.442695
    %v536 = vpow.pop %v535
    %v537 = vsel %vm389, %v532, 0.0
    %538 = vadd.xlane.f32.xlu0 %v537
    %v539 = vpop.xlane.xlu0 %538
    %v540 = vsel %vm389, %v534, 0.0
    %541 = vadd.xlane.f32.xlu0 %v540
    %v542 = vpop.xlane.xlu0 %541
    %v543 = vsel %vm396, %v536, 0.0
    %544 = vadd.xlane.f32.xlu0 %v543
    %v545 = vpop.xlane.xlu0 %544
    %v546 = vrcp.pop %v539
    %v547 = vrcp.pop %v542
    %v548 = vrcp.pop %v545
    %v549 = vmul.f32 %v532, %v546
    %v550 = vmul.f32 %v534, %v547
    %v551 = vmul.f32 %v536, %v548
    %v554 = vrot.slane %v332, 1
    %v555 = vrot.slane %v335, 1
    %v556 = vsel %vm465, %v554, %v555
    %v557 = vrot.slane %v338, 1
    %v558 = vsel %vm465, %v555, %v557
    %v562 = vsel %vm389, %v549, 0
    %v565 = vsel %vm389, %v550, 0
    %v568 = vsel %vm389, %v551, 0
    %v570 = vsel %vm433, %v557, 0
    %572 = vmatpush.msra.mxu0 0.0
    %573 = vmatpush.msra.mxu0 0.0
    %574 = vmatpush.msra.mxu0 0.0
    %575 = vmatpush.msra.mxu0 0.0
    %576 = vmatpush.msra.mxu0 0.0
    %577 = vmatpush.msra.mxu0 0.0
    %578 = vmatpush.msra.mxu0 0.0
    %579 = vmatpush.msra.mxu0 0.0
    %580 = vmatpush.msra.mxu0 0.0
    %581 = vmatpush.msra.mxu0 0.0
    %582 = vmatpush.msra.mxu0 0.0
    %583 = vmatpush.msra.mxu0 0.0
    %584 = vmatpush.msra.mxu0 0.0
    %585 = vmatpush.msra.mxu0 %v570
    %586 = vmatpush.msra.mxu0 %v558
    %587 = vmatpush.msra.mxu0 %v556
    %588 = vmatmul.f32.gmra.mxu0 %v562
    %v589 = vpop.f32.mrf.mxu0
    %v590 = vadd.f32 0.0, %v589
    %591 = vmatmul.f32.gmra.mxu0 %v565
    %v592 = vpop.f32.mrf.mxu0
    %v593 = vadd.f32 0.0, %v592
    %594 = vmatmul.f32.gmra.mxu0 %v568
    %v595 = vpop.f32.mrf.mxu0
    %v596 = vadd.f32 0.0, %v595
    %597 = vdwg.mxu0
    %s598 = scalar_lea.vmem %s3, 16
    %v599 = vld [vmem:[%s598] sm:$0xff]
    %v600 = vld [vmem:[%s598 + $0x8] sm:$0xff]
    %s601 = scalar_lea.vmem %s4, 1
    %v602 = vld [vmem:[%s601] sm:$0x1]
    %s603 = scalar_lea.vmem %s3, 48
    %v604 = vld [vmem:[%s603] sm:$0xff]
    %v605 = vld [vmem:[%s603 + $0x8] sm:$0xff]
    %s606 = scalar_lea.vmem %s4, 3
    %v607 = vld [vmem:[%s606] sm:$0x1]
    %s608 = scalar_lea.vmem %s3, 80
    %v609 = vld [vmem:[%s608] sm:$0xff]
    %v610 = vld [vmem:[%s608 + $0x8] sm:$0xff]
    %s611 = scalar_lea.vmem %s4, 5
    %v612 = vld [vmem:[%s611] sm:$0x1]
    %v614 = vperm.slane %v602, 0
    %616 = vmatpush.msra.mxu0 0.0
    %617 = vmatpush.msra.mxu0 0.0
    %618 = vmatpush.msra.mxu0 0.0
    %619 = vmatpush.msra.mxu0 0.0
    %620 = vmatpush.msra.mxu0 0.0
    %621 = vmatpush.msra.mxu0 0.0
    %622 = vmatpush.msra.mxu0 0.0
    %623 = vmatpush.msra.mxu0 0.0
    %624 = vmatpush.msra.mxu0 0.0
    %625 = vmatpush.msra.mxu0 0.0
    %626 = vmatpush.msra.mxu0 0.0
    %627 = vmatpush.msra.mxu0 0.0
    %628 = vmatpush.msra.mxu0 0.0
    %629 = vmatpush.msra.mxu0 0.0
    %630 = vmatpush.msra.mxu0 %v600
    %631 = vmatpush.msra.mxu0 %v599
    %632 = vmatmul.f32.gmra.mxu0 %v224
    %v633 = vpop.f32.mrf.mxu0
    %v634 = vadd.f32 %v614, %v633
    %635 = vmatmul.f32.gmra.mxu0 %v227
    %v636 = vpop.f32.mrf.mxu0
    %v637 = vadd.f32 %v614, %v636
    %638 = vmatmul.f32.gmra.mxu0 %v230
    %v639 = vpop.f32.mrf.mxu0
    %v640 = vadd.f32 %v614, %v639
    %641 = vmatmul.f32.gmra.mxu0 %v233
    %v642 = vpop.f32.mrf.mxu0
    %v643 = vadd.f32 %v614, %v642
    %644 = vmatmul.f32.gmra.mxu0 %v236
    %v645 = vpop.f32.mrf.mxu0
    %v646 = vadd.f32 %v614, %v645
    %647 = vdwg.mxu0
    %v649 = vperm.slane %v607, 0
    %651 = vmatpush.msra.mxu0 0.0
    %652 = vmatpush.msra.mxu0 0.0
    %653 = vmatpush.msra.mxu0 0.0
    %654 = vmatpush.msra.mxu0 0.0
    %655 = vmatpush.msra.mxu0 0.0
    %656 = vmatpush.msra.mxu0 0.0
    %657 = vmatpush.msra.mxu0 0.0
    %658 = vmatpush.msra.mxu0 0.0
    %659 = vmatpush.msra.mxu0 0.0
    %660 = vmatpush.msra.mxu0 0.0
    %661 = vmatpush.msra.mxu0 0.0
    %662 = vmatpush.msra.mxu0 0.0
    %663 = vmatpush.msra.mxu0 0.0
    %664 = vmatpush.msra.mxu0 0.0
    %665 = vmatpush.msra.mxu0 %v605
    %666 = vmatpush.msra.mxu0 %v604
    %667 = vmatmul.f32.gmra.mxu0 %v224
    %v668 = vpop.f32.mrf.mxu0
    %v669 = vadd.f32 %v649, %v668
    %670 = vmatmul.f32.gmra.mxu0 %v227
    %v671 = vpop.f32.mrf.mxu0
    %v672 = vadd.f32 %v649, %v671
    %673 = vmatmul.f32.gmra.mxu0 %v230
    %v674 = vpop.f32.mrf.mxu0
    %v675 = vadd.f32 %v649, %v674
    %676 = vmatmul.f32.gmra.mxu0 %v233
    %v677 = vpop.f32.mrf.mxu0
    %v678 = vadd.f32 %v649, %v677
    %679 = vmatmul.f32.gmra.mxu0 %v236
    %v680 = vpop.f32.mrf.mxu0
    %v681 = vadd.f32 %v649, %v680
    %682 = vdwg.mxu0
    %v684 = vperm.slane %v612, 0
    %686 = vmatpush.msra.mxu0 0.0
    %687 = vmatpush.msra.mxu0 0.0
    %688 = vmatpush.msra.mxu0 0.0
    %689 = vmatpush.msra.mxu0 0.0
    %690 = vmatpush.msra.mxu0 0.0
    %691 = vmatpush.msra.mxu0 0.0
    %692 = vmatpush.msra.mxu0 0.0
    %693 = vmatpush.msra.mxu0 0.0
    %694 = vmatpush.msra.mxu0 0.0
    %695 = vmatpush.msra.mxu0 0.0
    %696 = vmatpush.msra.mxu0 0.0
    %697 = vmatpush.msra.mxu0 0.0
    %698 = vmatpush.msra.mxu0 0.0
    %699 = vmatpush.msra.mxu0 0.0
    %700 = vmatpush.msra.mxu0 %v610
    %701 = vmatpush.msra.mxu0 %v609
    %702 = vmatmul.f32.gmra.mxu0 %v224
    %v703 = vpop.f32.mrf.mxu0
    %v704 = vadd.f32 %v684, %v703
    %705 = vmatmul.f32.gmra.mxu0 %v227
    %v706 = vpop.f32.mrf.mxu0
    %v707 = vadd.f32 %v684, %v706
    %708 = vmatmul.f32.gmra.mxu0 %v230
    %v709 = vpop.f32.mrf.mxu0
    %v710 = vadd.f32 %v684, %v709
    %711 = vmatmul.f32.gmra.mxu0 %v233
    %v712 = vpop.f32.mrf.mxu0
    %v713 = vadd.f32 %v684, %v712
    %714 = vmatmul.f32.gmra.mxu0 %v236
    %v715 = vpop.f32.mrf.mxu0
    %v716 = vadd.f32 %v684, %v715
    %717 = vdwg.mxu0
    %s718 = scalar_lea.vmem %s5, 8
    %v719 = vld [vmem:[%s718] sm:$0xff]
    %v721 = vsel %vm341, %v634, 0
    %v724 = vsel %vm341, %v637, 0
    %v727 = vsel %vm341, %v640, 0
    %v730 = vsel %vm341, %v669, 0
    %v733 = vsel %vm341, %v672, 0
    %v736 = vsel %vm341, %v675, 0
    %738 = vmatpush.xpose.msra.mxu0 0.0
    %739 = vmatpush.xpose.msra.mxu0 0.0
    %740 = vmatpush.xpose.msra.mxu0 0.0
    %741 = vmatpush.xpose.msra.mxu0 0.0
    %742 = vmatpush.xpose.msra.mxu0 0.0
    %743 = vmatpush.xpose.msra.mxu0 0.0
    %744 = vmatpush.xpose.msra.mxu0 0.0
    %745 = vmatpush.xpose.msra.mxu0 0.0
    %746 = vmatpush.xpose.msra.mxu0 0.0
    %747 = vmatpush.xpose.msra.mxu0 0.0
    %748 = vmatpush.xpose.msra.mxu0 0.0
    %749 = vmatpush.xpose.msra.mxu0 0.0
    %750 = vmatpush.xpose.msra.mxu0 0.0
    %751 = vmatpush.xpose.msra.mxu0 %v736
    %752 = vmatpush.xpose.msra.mxu0 %v733
    %753 = vmatpush.xpose.msra.mxu0 %v730
    %754 = vmatmul.f32.gmra.mxu0 %v721
    %v755 = vpop.f32.mrf.mxu0
    %v756 = vadd.f32 0.0, %v755
    %757 = vmatmul.f32.gmra.mxu0 %v724
    %v758 = vpop.f32.mrf.mxu0
    %v759 = vadd.f32 0.0, %v758
    %760 = vmatmul.f32.gmra.mxu0 %v727
    %v761 = vpop.f32.mrf.mxu0
    %v762 = vadd.f32 0.0, %v761
    %763 = vdwg.mxu0
    %v764 = vmul.f32 %v756, 0.35355338
    %v765 = vmul.f32 %v759, 0.35355338
    %v766 = vmul.f32 %v762, 0.35355338
    %v767 = vsel %vm389, %v764, -inf
    %768 = vmax.xlane.f32.xlu0 %v767
    %v769 = vpop.xlane.xlu0 %768
    %v770 = vsel %vm389, %v765, -inf
    %771 = vmax.xlane.f32.xlu0 %v770
    %v772 = vpop.xlane.xlu0 %771
    %v773 = vsel %vm396, %v766, -inf
    %774 = vmax.xlane.f32.xlu0 %v773
    %v775 = vpop.xlane.xlu0 %774
    %v776 = vsub.f32 %v764, %v769
    %v777 = vsub.f32 %v765, %v772
    %v778 = vsub.f32 %v766, %v775
    %v779 = vmul.f32 %v776, 1.442695
    %v780 = vpow.pop %v779
    %v781 = vmul.f32 %v777, 1.442695
    %v782 = vpow.pop %v781
    %v783 = vmul.f32 %v778, 1.442695
    %v784 = vpow.pop %v783
    %v785 = vsel %vm389, %v780, 0.0
    %786 = vadd.xlane.f32.xlu0 %v785
    %v787 = vpop.xlane.xlu0 %786
    %v788 = vsel %vm389, %v782, 0.0
    %789 = vadd.xlane.f32.xlu0 %v788
    %v790 = vpop.xlane.xlu0 %789
    %v791 = vsel %vm396, %v784, 0.0
    %792 = vadd.xlane.f32.xlu0 %v791
    %v793 = vpop.xlane.xlu0 %792
    %v794 = vrcp.pop %v787
    %v795 = vrcp.pop %v790
    %v796 = vrcp.pop %v793
    %v797 = vmul.f32 %v780, %v794
    %v798 = vmul.f32 %v782, %v795
    %v799 = vmul.f32 %v784, %v796
    %v801 = vsel %vm389, %v797, 0
    %v804 = vsel %vm389, %v798, 0
    %v807 = vsel %vm389, %v799, 0
    %v810 = vsel %vm433, %v710, 0
    %812 = vmatpush.msra.mxu0 0.0
    %813 = vmatpush.msra.mxu0 0.0
    %814 = vmatpush.msra.mxu0 0.0
    %815 = vmatpush.msra.mxu0 0.0
    %816 = vmatpush.msra.mxu0 0.0
    %817 = vmatpush.msra.mxu0 0.0
    %818 = vmatpush.msra.mxu0 0.0
    %819 = vmatpush.msra.mxu0 0.0
    %820 = vmatpush.msra.mxu0 0.0
    %821 = vmatpush.msra.mxu0 0.0
    %822 = vmatpush.msra.mxu0 0.0
    %823 = vmatpush.msra.mxu0 0.0
    %824 = vmatpush.msra.mxu0 0.0
    %825 = vmatpush.msra.mxu0 %v810
    %826 = vmatpush.msra.mxu0 %v707
    %827 = vmatpush.msra.mxu0 %v704
    %828 = vmatmul.f32.gmra.mxu0 %v801
    %v829 = vpop.f32.mrf.mxu0
    %v830 = vadd.f32 0.0, %v829
    %831 = vmatmul.f32.gmra.mxu0 %v804
    %v832 = vpop.f32.mrf.mxu0
    %v833 = vadd.f32 0.0, %v832
    %834 = vmatmul.f32.gmra.mxu0 %v807
    %v835 = vpop.f32.mrf.mxu0
    %v836 = vadd.f32 0.0, %v835
    %837 = vdwg.mxu0
    %v839 = vsel %vm341, %v830, 0
    %v842 = vsel %vm341, %v833, 0
    %v845 = vsel %vm341, %v836, 0
    %847 = vmatpush.msra.mxu0 0.0
    %848 = vmatpush.msra.mxu0 0.0
    %849 = vmatpush.msra.mxu0 0.0
    %850 = vmatpush.msra.mxu0 0.0
    %851 = vmatpush.msra.mxu0 0.0
    %852 = vmatpush.msra.mxu0 0.0
    %853 = vmatpush.msra.mxu0 0.0
    %854 = vmatpush.msra.mxu0 0.0
    %855 = vmatpush.msra.mxu0 0.0
    %856 = vmatpush.msra.mxu0 0.0
    %857 = vmatpush.msra.mxu0 0.0
    %858 = vmatpush.msra.mxu0 0.0
    %859 = vmatpush.msra.mxu0 0.0
    %860 = vmatpush.msra.mxu0 0.0
    %861 = vmatpush.msra.mxu0 0.0
    %862 = vmatpush.msra.mxu0 %v719
    %863 = vmatmul.f32.gmra.mxu0 %v839
    %v864 = vpop.f32.mrf.mxu0
    %v865 = vadd.f32 0.0, %v864
    %866 = vmatmul.f32.gmra.mxu0 %v842
    %v867 = vpop.f32.mrf.mxu0
    %v868 = vadd.f32 0.0, %v867
    %869 = vmatmul.f32.gmra.mxu0 %v845
    %v870 = vpop.f32.mrf.mxu0
    %v871 = vadd.f32 0.0, %v870
    %872 = vdwg.mxu0
    %v874 = vsel %vm341, %v455, 0
    %v877 = vsel %vm341, %v458, 0
    %v880 = vsel %vm341, %v461, 0
    %882 = vmatpush.msra.mxu0 0.0
    %883 = vmatpush.msra.mxu0 0.0
    %884 = vmatpush.msra.mxu0 0.0
    %885 = vmatpush.msra.mxu0 0.0
    %886 = vmatpush.msra.mxu0 0.0
    %887 = vmatpush.msra.mxu0 0.0
    %888 = vmatpush.msra.mxu0 0.0
    %889 = vmatpush.msra.mxu0 0.0
    %890 = vmatpush.msra.mxu0 0.0
    %891 = vmatpush.msra.mxu0 0.0
    %892 = vmatpush.msra.mxu0 0.0
    %893 = vmatpush.msra.mxu0 0.0
    %894 = vmatpush.msra.mxu0 0.0
    %895 = vmatpush.msra.mxu0 0.0
    %896 = vmatpush.msra.mxu0 0.0
    %897 = vmatpush.msra.mxu0 %v340
    %898 = vmatmul.f32.gmra.mxu0 %v874
    %v899 = vpop.f32.mrf.mxu0
    %v900 = vadd.f32 %v865, %v899
    %901 = vmatmul.f32.gmra.mxu0 %v877
    %v902 = vpop.f32.mrf.mxu0
    %v903 = vadd.f32 %v868, %v902
    %904 = vmatmul.f32.gmra.mxu0 %v880
    %v905 = vpop.f32.mrf.mxu0
    %v906 = vadd.f32 %v871, %v905
    %907 = vdwg.mxu0
    %v910 = vrot.slane %v640, 1
    %v911 = vrot.slane %v643, 1
    %v912 = vsel %vm465, %v910, %v911
    %v913 = vrot.slane %v646, 1
    %v914 = vsel %vm465, %v911, %v913
    %v917 = vrot.slane %v675, 1
    %v918 = vrot.slane %v678, 1
    %v919 = vsel %vm465, %v917, %v918
    %v920 = vrot.slane %v681, 1
    %v921 = vsel %vm465, %v918, %v920
    %v922 = vsel %vm341, %v912, 0
    %v924 = vsel %vm341, %v914, 0
    %v926 = vsel %vm341, %v913, 0
    %v928 = vsel %vm341, %v919, 0
    %v930 = vsel %vm341, %v921, 0
    %v932 = vsel %vm341, %v920, 0
    %934 = vmatpush.xpose.msra.mxu0 0.0
    %935 = vmatpush.xpose.msra.mxu0 0.0
    %936 = vmatpush.xpose.msra.mxu0 0.0
    %937 = vmatpush.xpose.msra.mxu0 0.0
    %938 = vmatpush.xpose.msra.mxu0 0.0
    %939 = vmatpush.xpose.msra.mxu0 0.0
    %940 = vmatpush.xpose.msra.mxu0 0.0
    %941 = vmatpush.xpose.msra.mxu0 0.0
    %942 = vmatpush.xpose.msra.mxu0 0.0
    %943 = vmatpush.xpose.msra.mxu0 0.0
    %944 = vmatpush.xpose.msra.mxu0 0.0
    %945 = vmatpush.xpose.msra.mxu0 0.0
    %946 = vmatpush.xpose.msra.mxu0 0.0
    %947 = vmatpush.xpose.msra.mxu0 %v932
    %948 = vmatpush.xpose.msra.mxu0 %v930
    %949 = vmatpush.xpose.msra.mxu0 %v928
    %950 = vmatmul.f32.gmra.mxu0 %v922
    %v951 = vpop.f32.mrf.mxu0
    %v952 = vadd.f32 0.0, %v951
    %953 = vmatmul.f32.gmra.mxu0 %v924
    %v954 = vpop.f32.mrf.mxu0
    %v955 = vadd.f32 0.0, %v954
    %956 = vmatmul.f32.gmra.mxu0 %v926
    %v957 = vpop.f32.mrf.mxu0
    %v958 = vadd.f32 0.0, %v957
    %959 = vdwg.mxu0
    %v960 = vmul.f32 %v952, 0.35355338
    %v961 = vmul.f32 %v955, 0.35355338
    %v962 = vmul.f32 %v958, 0.35355338
    %v963 = vsel %vm389, %v960, -inf
    %964 = vmax.xlane.f32.xlu0 %v963
    %v965 = vpop.xlane.xlu0 %964
    %v966 = vsel %vm389, %v961, -inf
    %967 = vmax.xlane.f32.xlu0 %v966
    %v968 = vpop.xlane.xlu0 %967
    %v969 = vsel %vm396, %v962, -inf
    %970 = vmax.xlane.f32.xlu0 %v969
    %v971 = vpop.xlane.xlu0 %970
    %v972 = vsub.f32 %v960, %v965
    %v973 = vsub.f32 %v961, %v968
    %v974 = vsub.f32 %v962, %v971
    %v975 = vmul.f32 %v972, 1.442695
    %v976 = vpow.pop %v975
    %v977 = vmul.f32 %v973, 1.442695
    %v978 = vpow.pop %v977
    %v979 = vmul.f32 %v974, 1.442695
    %v980 = vpow.pop %v979
    %v981 = vsel %vm389, %v976, 0.0
    %982 = vadd.xlane.f32.xlu0 %v981
    %v983 = vpop.xlane.xlu0 %982
    %v984 = vsel %vm389, %v978, 0.0
    %985 = vadd.xlane.f32.xlu0 %v984
    %v986 = vpop.xlane.xlu0 %985
    %v987 = vsel %vm396, %v980, 0.0
    %988 = vadd.xlane.f32.xlu0 %v987
    %v989 = vpop.xlane.xlu0 %988
    %v990 = vrcp.pop %v983
    %v991 = vrcp.pop %v986
    %v992 = vrcp.pop %v989
    %v993 = vmul.f32 %v976, %v990
    %v994 = vmul.f32 %v978, %v991
    %v995 = vmul.f32 %v980, %v992
    %v998 = vrot.slane %v710, 1
    %v999 = vrot.slane %v713, 1
    %v1000 = vsel %vm465, %v998, %v999
    %v1001 = vrot.slane %v716, 1
    %v1002 = vsel %vm465, %v999, %v1001
    %v1006 = vsel %vm389, %v993, 0
    %v1009 = vsel %vm389, %v994, 0
    %v1012 = vsel %vm389, %v995, 0
    %v1014 = vsel %vm433, %v1001, 0
    %1016 = vmatpush.msra.mxu0 0.0
    %1017 = vmatpush.msra.mxu0 0.0
    %1018 = vmatpush.msra.mxu0 0.0
    %1019 = vmatpush.msra.mxu0 0.0
    %1020 = vmatpush.msra.mxu0 0.0
    %1021 = vmatpush.msra.mxu0 0.0
    %1022 = vmatpush.msra.mxu0 0.0
    %1023 = vmatpush.msra.mxu0 0.0
    %1024 = vmatpush.msra.mxu0 0.0
    %1025 = vmatpush.msra.mxu0 0.0
    %1026 = vmatpush.msra.mxu0 0.0
    %1027 = vmatpush.msra.mxu0 0.0
    %1028 = vmatpush.msra.mxu0 0.0
    %1029 = vmatpush.msra.mxu0 %v1014
    %1030 = vmatpush.msra.mxu0 %v1002
    %1031 = vmatpush.msra.mxu0 %v1000
    %1032 = vmatmul.f32.gmra.mxu0 %v1006
    %v1033 = vpop.f32.mrf.mxu0
    %v1034 = vadd.f32 0.0, %v1033
    %1035 = vmatmul.f32.gmra.mxu0 %v1009
    %v1036 = vpop.f32.mrf.mxu0
    %v1037 = vadd.f32 0.0, %v1036
    %1038 = vmatmul.f32.gmra.mxu0 %v1012
    %v1039 = vpop.f32.mrf.mxu0
    %v1040 = vadd.f32 0.0, %v1039
    %1041 = vdwg.mxu0
    %v1043 = vsel %vm341, %v1034, 0
    %v1046 = vsel %vm341, %v1037, 0
    %v1049 = vsel %vm341, %v1040, 0
    %1051 = vmatpush.msra.mxu0 0.0
    %1052 = vmatpush.msra.mxu0 0.0
    %1053 = vmatpush.msra.mxu0 0.0
    %1054 = vmatpush.msra.mxu0 0.0
    %1055 = vmatpush.msra.mxu0 0.0
    %1056 = vmatpush.msra.mxu0 0.0
    %1057 = vmatpush.msra.mxu0 0.0
    %1058 = vmatpush.msra.mxu0 0.0
    %1059 = vmatpush.msra.mxu0 0.0
    %1060 = vmatpush.msra.mxu0 0.0
    %1061 = vmatpush.msra.mxu0 0.0
    %1062 = vmatpush.msra.mxu0 0.0
    %1063 = vmatpush.msra.mxu0 0.0
    %1064 = vmatpush.msra.mxu0 0.0
    %1065 = vmatpush.msra.mxu0 0.0
    %1066 = vmatpush.msra.mxu0 %v719
    %1067 = vmatmul.f32.gmra.mxu0 %v1043
    %v1068 = vpop.f32.mrf.mxu0
    %v1069 = vadd.f32 0.0, %v1068
    %1070 = vmatmul.f32.gmra.mxu0 %v1046
    %v1071 = vpop.f32.mrf.mxu0
    %v1072 = vadd.f32 0.0, %v1071
    %1073 = vmatmul.f32.gmra.mxu0 %v1049
    %v1074 = vpop.f32.mrf.mxu0
    %v1075 = vadd.f32 0.0, %v1074
    %1076 = vdwg.mxu0
    %v1078 = vsel %vm341, %v590, 0
    %v1081 = vsel %vm341, %v593, 0
    %v1084 = vsel %vm341, %v596, 0
    %1086 = vmatpush.msra.mxu0 0.0
    %1087 = vmatpush.msra.mxu0 0.0
    %1088 = vmatpush.msra.mxu0 0.0
    %1089 = vmatpush.msra.mxu0 0.0
    %1090 = vmatpush.msra.mxu0 0.0
    %1091 = vmatpush.msra.mxu0 0.0
    %1092 = vmatpush.msra.mxu0 0.0
    %1093 = vmatpush.msra.mxu0 0.0
    %1094 = vmatpush.msra.mxu0 0.0
    %1095 = vmatpush.msra.mxu0 0.0
    %1096 = vmatpush.msra.mxu0 0.0
    %1097 = vmatpush.msra.mxu0 0.0
    %1098 = vmatpush.msra.mxu0 0.0
    %1099 = vmatpush.msra.mxu0 0.0
    %1100 = vmatpush.msra.mxu0 0.0
    %1101 = vmatpush.msra.mxu0 %v340
    %1102 = vmatmul.f32.gmra.mxu0 %v1078
    %v1103 = vpop.f32.mrf.mxu0
    %v1104 = vadd.f32 %v1069, %v1103
    %1105 = vmatmul.f32.gmra.mxu0 %v1081
    %v1106 = vpop.f32.mrf.mxu0
    %v1107 = vadd.f32 %v1072, %v1106
    %1108 = vmatmul.f32.gmra.mxu0 %v1084
    %v1109 = vpop.f32.mrf.mxu0
    %v1110 = vadd.f32 %v1075, %v1109
    %1111 = vdwg.mxu0
    %v1115 = vrot.slane %v1104, 7
    %v1116 = vrot.slane %v1107, 7
    %v1117 = vsel %vm433, %v1115, %v1116
    %v1118 = vrot.slane %v1110, 7
    %v1119 = vsel %vm433, %v1116, %v1118
    %v1123 = vsel %vm433, %v906, %v1115
    %v1124 = vadd.f32 %v65, %v900
    %v1125 = vadd.f32 %v66, %v903
    %v1126 = vadd.f32 %v67, %v1123
    %v1127 = vadd.f32 %v68, %v1117
    %v1128 = vadd.f32 %v69, %v1119
    %v1129 = vld [vmem:[%s6] sm:$0x1]
    %v1131 = vperm.slane %v1129, 0
    %v1133 = vadd.f32 %v1124, %v1131
    %v1134 = vadd.f32 %v1125, %v1131
    %v1135 = vadd.f32 %v1126, %v1131
    %v1136 = vadd.f32 %v1127, %v1131
    %v1137 = vadd.f32 %v1128, %v1131
    %v1138 = vld [vmem:[%s7] sm:$0x1]
    %v1139 = vld [vmem:[%s8] sm:$0x1]
    %v1140 = vsel %vm72, %v1133, 0.0
    %1141 = vadd.xlane.f32.xlu0 %v1140
    %v1142 = vpop.xlane.xlu0 %1141
    %v1143 = vsel %vm72, %v1134, 0.0
    %1144 = vadd.xlane.f32.xlu0 %v1143
    %v1145 = vpop.xlane.xlu0 %1144
    %v1146 = vsel %vm72, %v1135, 0.0
    %1147 = vadd.xlane.f32.xlu0 %v1146
    %v1148 = vpop.xlane.xlu0 %1147
    %v1149 = vsel %vm72, %v1136, 0.0
    %1150 = vadd.xlane.f32.xlu0 %v1149
    %v1151 = vpop.xlane.xlu0 %1150
    %v1152 = vsel %vm85, %v1137, 0.0
    %1153 = vadd.xlane.f32.xlu0 %v1152
    %v1154 = vpop.xlane.xlu0 %1153
    %v1155 = vmul.f32 %v1142, %v95
    %v1156 = vmul.f32 %v1145, %v95
    %v1157 = vmul.f32 %v1148, %v95
    %v1158 = vmul.f32 %v1151, %v95
    %v1159 = vmul.f32 %v1154, %v95
    %v1160 = vsub.f32 %v1133, %v1155
    %v1161 = vsub.f32 %v1134, %v1156
    %v1162 = vsub.f32 %v1135, %v1157
    %v1163 = vsub.f32 %v1136, %v1158
    %v1164 = vsub.f32 %v1137, %v1159
    %v1165 = vmul.f32 %v1160, %v1160
    %v1166 = vmul.f32 %v1161, %v1161
    %v1167 = vmul.f32 %v1162, %v1162
    %v1168 = vmul.f32 %v1163, %v1163
    %v1169 = vmul.f32 %v1164, %v1164
    %v1170 = vsel %vm72, %v1165, 0.0
    %1171 = vadd.xlane.f32.xlu0 %v1170
    %v1172 = vpop.xlane.xlu0 %1171
    %v1173 = vsel %vm72, %v1166, 0.0
    %1174 = vadd.xlane.f32.xlu0 %v1173
    %v1175 = vpop.xlane.xlu0 %1174
    %v1176 = vsel %vm72, %v1167, 0.0
    %1177 = vadd.xlane.f32.xlu0 %v1176
    %v1178 = vpop.xlane.xlu0 %1177
    %v1179 = vsel %vm72, %v1168, 0.0
    %1180 = vadd.xlane.f32.xlu0 %v1179
    %v1181 = vpop.xlane.xlu0 %1180
    %v1182 = vsel %vm85, %v1169, 0.0
    %1183 = vadd.xlane.f32.xlu0 %v1182
    %v1184 = vpop.xlane.xlu0 %1183
    %v1185 = vmul.f32 %v1172, %v95
    %v1186 = vmul.f32 %v1175, %v95
    %v1187 = vmul.f32 %v1178, %v95
    %v1188 = vmul.f32 %v1181, %v95
    %v1189 = vmul.f32 %v1184, %v95
    %v1190 = vadd.f32 %v1185, 1e-05
    %v1191 = vadd.f32 %v1186, 1e-05
    %v1192 = vadd.f32 %v1187, 1e-05
    %v1193 = vadd.f32 %v1188, 1e-05
    %v1194 = vadd.f32 %v1189, 1e-05
    %v1195 = vrsqrt.pop %v1190
    %v1196 = vmul.f32 %v1195, %v1190
    %v1197 = vmul.f32 %v1196, %v1195
    %v1198 = vmul.f32 0.5, %v1197
    %v1199 = vsub.f32 1.5, %v1198
    %v1200 = vmul.f32 %v1195, %v1199
    %vm1201 = vweird.f32 %v1190
    %vm1202 = vweird.f32 %v1195
    %vm1203 = vmor %vm1201, %vm1202
    %v1204 = vsel %vm1203, %v1195, %v1200
    %v1205 = vrsqrt.pop %v1191
    %v1206 = vmul.f32 %v1205, %v1191
    %v1207 = vmul.f32 %v1206, %v1205
    %v1208 = vmul.f32 0.5, %v1207
    %v1209 = vsub.f32 1.5, %v1208
    %v1210 = vmul.f32 %v1205, %v1209
    %vm1211 = vweird.f32 %v1191
    %vm1212 = vweird.f32 %v1205
    %vm1213 = vmor %vm1211, %vm1212
    %v1214 = vsel %vm1213, %v1205, %v1210
    %v1215 = vrsqrt.pop %v1192
    %v1216 = vmul.f32 %v1215, %v1192
    %v1217 = vmul.f32 %v1216, %v1215
    %v1218 = vmul.f32 0.5, %v1217
    %v1219 = vsub.f32 1.5, %v1218
    %v1220 = vmul.f32 %v1215, %v1219
    %vm1221 = vweird.f32 %v1192
    %vm1222 = vweird.f32 %v1215
    %vm1223 = vmor %vm1221, %vm1222
    %v1224 = vsel %vm1223, %v1215, %v1220
    %v1225 = vrsqrt.pop %v1193
    %v1226 = vmul.f32 %v1225, %v1193
    %v1227 = vmul.f32 %v1226, %v1225
    %v1228 = vmul.f32 0.5, %v1227
    %v1229 = vsub.f32 1.5, %v1228
    %v1230 = vmul.f32 %v1225, %v1229
    %vm1231 = vweird.f32 %v1193
    %vm1232 = vweird.f32 %v1225
    %vm1233 = vmor %vm1231, %vm1232
    %v1234 = vsel %vm1233, %v1225, %v1230
    %v1235 = vrsqrt.pop %v1194
    %v1236 = vmul.f32 %v1235, %v1194
    %v1237 = vmul.f32 %v1236, %v1235
    %v1238 = vmul.f32 0.5, %v1237
    %v1239 = vsub.f32 1.5, %v1238
    %v1240 = vmul.f32 %v1235, %v1239
    %vm1241 = vweird.f32 %v1194
    %vm1242 = vweird.f32 %v1235
    %vm1243 = vmor %vm1241, %vm1242
    %v1244 = vsel %vm1243, %v1235, %v1240
    %v1245 = vmul.f32 %v1160, %v1204
    %v1246 = vmul.f32 %v1161, %v1214
    %v1247 = vmul.f32 %v1162, %v1224
    %v1248 = vmul.f32 %v1163, %v1234
    %v1249 = vmul.f32 %v1164, %v1244
    %v1251 = vperm.slane %v1138, 0
    %v1253 = vmul.f32 %v1245, %v1251
    %v1254 = vmul.f32 %v1246, %v1251
    %v1255 = vmul.f32 %v1247, %v1251
    %v1256 = vmul.f32 %v1248, %v1251
    %v1257 = vmul.f32 %v1249, %v1251
    %v1259 = vperm.slane %v1139, 0
    %v1261 = vadd.f32 %v1253, %v1259
    %v1262 = vadd.f32 %v1254, %v1259
    %v1263 = vadd.f32 %v1255, %v1259
    %v1264 = vadd.f32 %v1256, %v1259
    %v1265 = vadd.f32 %v1257, %v1259
    %v1266 = vld [vmem:[%s9] sm:$0xff]
    %v1267 = vld [vmem:[%s9 + $0x8] sm:$0xff]
    %v1268 = vld [vmem:[%s10] sm:$0x1]
    %v1270 = vperm.slane %v1268, 0
    %v1273 = vsel %vm72, %v1261, 0
    %v1276 = vsel %vm72, %v1262, 0
    %v1279 = vsel %vm72, %v1263, 0
    %v1282 = vsel %vm72, %v1264, 0
    %v1285 = vsel %vm72, %v1265, 0
    %1287 = vmatpush.msra.mxu0 0.0
    %1288 = vmatpush.msra.mxu0 0.0
    %1289 = vmatpush.msra.mxu0 0.0
    %1290 = vmatpush.msra.mxu0 0.0
    %1291 = vmatpush.msra.mxu0 0.0
    %1292 = vmatpush.msra.mxu0 0.0
    %1293 = vmatpush.msra.mxu0 0.0
    %1294 = vmatpush.msra.mxu0 0.0
    %1295 = vmatpush.msra.mxu0 0.0
    %1296 = vmatpush.msra.mxu0 0.0
    %1297 = vmatpush.msra.mxu0 0.0
    %1298 = vmatpush.msra.mxu0 0.0
    %1299 = vmatpush.msra.mxu0 0.0
    %1300 = vmatpush.msra.mxu0 0.0
    %1301 = vmatpush.msra.mxu0 %v1267
    %1302 = vmatpush.msra.mxu0 %v1266
    %1303 = vmatmul.f32.gmra.mxu0 %v1273
    %v1304 = vpop.f32.mrf.mxu0
    %v1305 = vadd.f32 %v1270, %v1304
    %1306 = vmatmul.f32.gmra.mxu0 %v1276
    %v1307 = vpop.f32.mrf.mxu0
    %v1308 = vadd.f32 %v1270, %v1307
    %1309 = vmatmul.f32.gmra.mxu0 %v1279
    %v1310 = vpop.f32.mrf.mxu0
    %v1311 = vadd.f32 %v1270, %v1310
    %1312 = vmatmul.f32.gmra.mxu0 %v1282
    %v1313 = vpop.f32.mrf.mxu0
    %v1314 = vadd.f32 %v1270, %v1313
    %1315 = vmatmul.f32.gmra.mxu0 %v1285
    %v1316 = vpop.f32.mrf.mxu0
    %v1317 = vadd.f32 %v1270, %v1316
    %1318 = vdwg.mxu0
    %v1319 = vmul.f32 %v1305, 0.5
    %v1320 = vmul.f32 %v1308, 0.5
    %v1321 = vmul.f32 %v1311, 0.5
    %v1322 = vmul.f32 %v1314, 0.5
    %v1323 = vmul.f32 %v1317, 0.5
    %v1324 = vmul.f32 %v1305, 0.044715
    %v1325 = vmul.f32 %v1308, 0.044715
    %v1326 = vmul.f32 %v1311, 0.044715
    %v1327 = vmul.f32 %v1314, 0.044715
    %v1328 = vmul.f32 %v1317, 0.044715
    %v1329 = vmul.f32 %v1324, %v1305
    %v1330 = vmul.f32 %v1325, %v1308
    %v1331 = vmul.f32 %v1326, %v1311
    %v1332 = vmul.f32 %v1327, %v1314
    %v1333 = vmul.f32 %v1328, %v1317
    %v1334 = vmul.f32 %v1329, %v1305
    %v1335 = vmul.f32 %v1330, %v1308
    %v1336 = vmul.f32 %v1331, %v1311
    %v1337 = vmul.f32 %v1332, %v1314
    %v1338 = vmul.f32 %v1333, %v1317
    %v1339 = vadd.f32 %v1305, %v1334
    %v1340 = vadd.f32 %v1308, %v1335
    %v1341 = vadd.f32 %v1311, %v1336
    %v1342 = vadd.f32 %v1314, %v1337
    %v1343 = vadd.f32 %v1317, %v1338
    %v1344 = vmul.f32 %v1339, 0.7978846
    %v1345 = vmul.f32 %v1340, 0.7978846
    %v1346 = vmul.f32 %v1341, 0.7978846
    %v1347 = vmul.f32 %v1342, 0.7978846
    %v1348 = vmul.f32 %v1343, 0.7978846
    %v1349 = vtanh.pop %v1344
    %v1350 = vtanh.pop %v1345
    %v1351 = vtanh.pop %v1346
    %v1352 = vtanh.pop %v1347
    %v1353 = vtanh.pop %v1348
    %v1354 = vadd.f32 %v1349, 1.0
    %v1355 = vadd.f32 %v1350, 1.0
    %v1356 = vadd.f32 %v1351, 1.0
    %v1357 = vadd.f32 %v1352, 1.0
    %v1358 = vadd.f32 %v1353, 1.0
    %v1359 = vmul.f32 %v1319, %v1354
    %v1360 = vmul.f32 %v1320, %v1355
    %v1361 = vmul.f32 %v1321, %v1356
    %v1362 = vmul.f32 %v1322, %v1357
    %v1363 = vmul.f32 %v1323, %v1358
    %v1364 = vld [vmem:[%s11] sm:$0xff]
    %v1365 = vld [vmem:[%s11 + $0x8] sm:$0xff]
    %v1366 = vld [vmem:[%s11 + $0x10] sm:$0xff]
    %v1367 = vld [vmem:[%s11 + $0x18] sm:$0xff]
    %v1368 = vld [vmem:[%s11 + $0x20] sm:$0xff]
    %v1369 = vld [vmem:[%s11 + $0x28] sm:$0xff]
    %v1370 = vld [vmem:[%s11 + $0x30] sm:$0xff]
    %v1371 = vld [vmem:[%s11 + $0x38] sm:$0xff]
    %v1372 = vld [vmem:[%s12] sm:$0x1]
    %v1374 = vperm.slane %v1372, 0
    %vm1376 = vcmask 523264
    %v1378 = vsel %vm1376, %v1359, 0
    %v1381 = vsel %vm1376, %v1360, 0
    %v1384 = vsel %vm1376, %v1361, 0
    %v1387 = vsel %vm1376, %v1362, 0
    %v1390 = vsel %vm1376, %v1363, 0
    %1392 = vmatpush.msra.mxu0 0.0
    %1393 = vmatpush.msra.mxu0 0.0
    %1394 = vmatpush.msra.mxu0 0.0
    %1395 = vmatpush.msra.mxu0 0.0
    %1396 = vmatpush.msra.mxu0 0.0
    %1397 = vmatpush.msra.mxu0 0.0
    %1398 = vmatpush.msra.mxu0 0.0
    %1399 = vmatpush.msra.mxu0 0.0
    %1400 = vmatpush.msra.mxu0 %v1371
    %1401 = vmatpush.msra.mxu0 %v1370
    %1402 = vmatpush.msra.mxu0 %v1369
    %1403 = vmatpush.msra.mxu0 %v1368
    %1404 = vmatpush.msra.mxu0 %v1367
    %1405 = vmatpush.msra.mxu0 %v1366
    %1406 = vmatpush.msra.mxu0 %v1365
    %1407 = vmatpush.msra.mxu0 %v1364
    %1408 = vmatmul.f32.gmra.mxu0 %v1378
    %v1409 = vpop.f32.mrf.mxu0
    %v1410 = vadd.f32 %v1374, %v1409
    %1411 = vmatmul.f32.gmra.mxu0 %v1381
    %v1412 = vpop.f32.mrf.mxu0
    %v1413 = vadd.f32 %v1374, %v1412
    %1414 = vmatmul.f32.gmra.mxu0 %v1384
    %v1415 = vpop.f32.mrf.mxu0
    %v1416 = vadd.f32 %v1374, %v1415
    %1417 = vmatmul.f32.gmra.mxu0 %v1387
    %v1418 = vpop.f32.mrf.mxu0
    %v1419 = vadd.f32 %v1374, %v1418
    %1420 = vmatmul.f32.gmra.mxu0 %v1390
    %v1421 = vpop.f32.mrf.mxu0
    %v1422 = vadd.f32 %v1374, %v1421
    %1423 = vdwg.mxu0
    %v1424 = vadd.f32 %v1133, %v1410
    %v1425 = vadd.f32 %v1134, %v1413
    %v1426 = vadd.f32 %v1135, %v1416
    %v1427 = vadd.f32 %v1136, %v1419
    %v1428 = vadd.f32 %v1137, %v1422
    %s1429 = scalar_lea.vmem %s1, 1
    %v1430 = vld [vmem:[%s1429] sm:$0x1]
    %s1431 = scalar_lea.vmem %s2, 1
    %v1432 = vld [vmem:[%s1431] sm:$0x1]
    %v1433 = vsel %vm72, %v1424, 0.0
    %1434 = vadd.xlane.f32.xlu0 %v1433
    %v1435 = vpop.xlane.xlu0 %1434
    %v1436 = vsel %vm72, %v1425, 0.0
    %1437 = vadd.xlane.f32.xlu0 %v1436
    %v1438 = vpop.xlane.xlu0 %1437
    %v1439 = vsel %vm72, %v1426, 0.0
    %1440 = vadd.xlane.f32.xlu0 %v1439
    %v1441 = vpop.xlane.xlu0 %1440
    %v1442 = vsel %vm72, %v1427, 0.0
    %1443 = vadd.xlane.f32.xlu0 %v1442
    %v1444 = vpop.xlane.xlu0 %1443
    %v1445 = vsel %vm85, %v1428, 0.0
    %1446 = vadd.xlane.f32.xlu0 %v1445
    %v1447 = vpop.xlane.xlu0 %1446
    %v1448 = vmul.f32 %v1435, %v95
    %v1449 = vmul.f32 %v1438, %v95
    %v1450 = vmul.f32 %v1441, %v95
    %v1451 = vmul.f32 %v1444, %v95
    %v1452 = vmul.f32 %v1447, %v95
    %v1453 = vsub.f32 %v1424, %v1448
    %v1454 = vsub.f32 %v1425, %v1449
    %v1455 = vsub.f32 %v1426, %v1450
    %v1456 = vsub.f32 %v1427, %v1451
    %v1457 = vsub.f32 %v1428, %v1452
    %v1458 = vmul.f32 %v1453, %v1453
    %v1459 = vmul.f32 %v1454, %v1454
    %v1460 = vmul.f32 %v1455, %v1455
    %v1461 = vmul.f32 %v1456, %v1456
    %v1462 = vmul.f32 %v1457, %v1457
    %v1463 = vsel %vm72, %v1458, 0.0
    %1464 = vadd.xlane.f32.xlu0 %v1463
    %v1465 = vpop.xlane.xlu0 %1464
    %v1466 = vsel %vm72, %v1459, 0.0
    %1467 = vadd.xlane.f32.xlu0 %v1466
    %v1468 = vpop.xlane.xlu0 %1467
    %v1469 = vsel %vm72, %v1460, 0.0
    %1470 = vadd.xlane.f32.xlu0 %v1469
    %v1471 = vpop.xlane.xlu0 %1470
    %v1472 = vsel %vm72, %v1461, 0.0
    %1473 = vadd.xlane.f32.xlu0 %v1472
    %v1474 = vpop.xlane.xlu0 %1473
    %v1475 = vsel %vm85, %v1462, 0.0
    %1476 = vadd.xlane.f32.xlu0 %v1475
    %v1477 = vpop.xlane.xlu0 %1476
    %v1478 = vmul.f32 %v1465, %v95
    %v1479 = vmul.f32 %v1468, %v95
    %v1480 = vmul.f32 %v1471, %v95
    %v1481 = vmul.f32 %v1474, %v95
    %v1482 = vmul.f32 %v1477, %v95
    %v1483 = vadd.f32 %v1478, 1e-05
    %v1484 = vadd.f32 %v1479, 1e-05
    %v1485 = vadd.f32 %v1480, 1e-05
    %v1486 = vadd.f32 %v1481, 1e-05
    %v1487 = vadd.f32 %v1482, 1e-05
    %v1488 = vrsqrt.pop %v1483
    %v1489 = vmul.f32 %v1488, %v1483
    %v1490 = vmul.f32 %v1489, %v1488
    %v1491 = vmul.f32 0.5, %v1490
    %v1492 = vsub.f32 1.5, %v1491
    %v1493 = vmul.f32 %v1488, %v1492
    %vm1494 = vweird.f32 %v1483
    %vm1495 = vweird.f32 %v1488
    %vm1496 = vmor %vm1494, %vm1495
    %v1497 = vsel %vm1496, %v1488, %v1493
    %v1498 = vrsqrt.pop %v1484
    %v1499 = vmul.f32 %v1498, %v1484
    %v1500 = vmul.f32 %v1499, %v1498
    %v1501 = vmul.f32 0.5, %v1500
    %v1502 = vsub.f32 1.5, %v1501
    %v1503 = vmul.f32 %v1498, %v1502
    %vm1504 = vweird.f32 %v1484
    %vm1505 = vweird.f32 %v1498
    %vm1506 = vmor %vm1504, %vm1505
    %v1507 = vsel %vm1506, %v1498, %v1503
    %v1508 = vrsqrt.pop %v1485
    %v1509 = vmul.f32 %v1508, %v1485
    %v1510 = vmul.f32 %v1509, %v1508
    %v1511 = vmul.f32 0.5, %v1510
    %v1512 = vsub.f32 1.5, %v1511
    %v1513 = vmul.f32 %v1508, %v1512
    %vm1514 = vweird.f32 %v1485
    %vm1515 = vweird.f32 %v1508
    %vm1516 = vmor %vm1514, %vm1515
    %v1517 = vsel %vm1516, %v1508, %v1513
    %v1518 = vrsqrt.pop %v1486
    %v1519 = vmul.f32 %v1518, %v1486
    %v1520 = vmul.f32 %v1519, %v1518
    %v1521 = vmul.f32 0.5, %v1520
    %v1522 = vsub.f32 1.5, %v1521
    %v1523 = vmul.f32 %v1518, %v1522
    %vm1524 = vweird.f32 %v1486
    %vm1525 = vweird.f32 %v1518
    %vm1526 = vmor %vm1524, %vm1525
    %v1527 = vsel %vm1526, %v1518, %v1523
    %v1528 = vrsqrt.pop %v1487
    %v1529 = vmul.f32 %v1528, %v1487
    %v1530 = vmul.f32 %v1529, %v1528
    %v1531 = vmul.f32 0.5, %v1530
    %v1532 = vsub.f32 1.5, %v1531
    %v1533 = vmul.f32 %v1528, %v1532
    %vm1534 = vweird.f32 %v1487
    %vm1535 = vweird.f32 %v1528
    %vm1536 = vmor %vm1534, %vm1535
    %v1537 = vsel %vm1536, %v1528, %v1533
    %v1538 = vmul.f32 %v1453, %v1497
    %v1539 = vmul.f32 %v1454, %v1507
    %v1540 = vmul.f32 %v1455, %v1517
    %v1541 = vmul.f32 %v1456, %v1527
    %v1542 = vmul.f32 %v1457, %v1537
    %v1544 = vperm.slane %v1430, 0
    %v1546 = vmul.f32 %v1538, %v1544
    %v1547 = vmul.f32 %v1539, %v1544
    %v1548 = vmul.f32 %v1540, %v1544
    %v1549 = vmul.f32 %v1541, %v1544
    %v1550 = vmul.f32 %v1542, %v1544
    %v1552 = vperm.slane %v1432, 0
    %v1554 = vadd.f32 %v1546, %v1552
    %v1555 = vadd.f32 %v1547, %v1552
    %v1556 = vadd.f32 %v1548, %v1552
    %v1557 = vadd.f32 %v1549, %v1552
    %v1558 = vadd.f32 %v1550, %v1552
    %s1559 = scalar_lea.vmem %s3, 96
    %v1560 = vld [vmem:[%s1559] sm:$0xff]
    %v1561 = vld [vmem:[%s1559 + $0x8] sm:$0xff]
    %s1562 = scalar_lea.vmem %s4, 6
    %v1563 = vld [vmem:[%s1562] sm:$0x1]
    %s1564 = scalar_lea.vmem %s3, 128
    %v1565 = vld [vmem:[%s1564] sm:$0xff]
    %v1566 = vld [vmem:[%s1564 + $0x8] sm:$0xff]
    %s1567 = scalar_lea.vmem %s4, 8
    %v1568 = vld [vmem:[%s1567] sm:$0x1]
    %s1569 = scalar_lea.vmem %s3, 160
    %v1570 = vld [vmem:[%s1569] sm:$0xff]
    %v1571 = vld [vmem:[%s1569 + $0x8] sm:$0xff]
    %s1572 = scalar_lea.vmem %s4, 10
    %v1573 = vld [vmem:[%s1572] sm:$0x1]
    %v1575 = vperm.slane %v1563, 0
    %v1578 = vsel %vm72, %v1554, 0
    %v1581 = vsel %vm72, %v1555, 0
    %v1584 = vsel %vm72, %v1556, 0
    %v1587 = vsel %vm72, %v1557, 0
    %v1590 = vsel %vm72, %v1558, 0
    %1592 = vmatpush.msra.mxu0 0.0
    %1593 = vmatpush.msra.mxu0 0.0
    %1594 = vmatpush.msra.mxu0 0.0
    %1595 = vmatpush.msra.mxu0 0.0
    %1596 = vmatpush.msra.mxu0 0.0
    %1597 = vmatpush.msra.mxu0 0.0
    %1598 = vmatpush.msra.mxu0 0.0
    %1599 = vmatpush.msra.mxu0 0.0
    %1600 = vmatpush.msra.mxu0 0.0
    %1601 = vmatpush.msra.mxu0 0.0
    %1602 = vmatpush.msra.mxu0 0.0
    %1603 = vmatpush.msra.mxu0 0.0
    %1604 = vmatpush.msra.mxu0 0.0
    %1605 = vmatpush.msra.mxu0 0.0
    %1606 = vmatpush.msra.mxu0 %v1561
    %1607 = vmatpush.msra.mxu0 %v1560
    %1608 = vmatmul.f32.gmra.mxu0 %v1578
    %v1609 = vpop.f32.mrf.mxu0
    %v1610 = vadd.f32 %v1575, %v1609
    %1611 = vmatmul.f32.gmra.mxu0 %v1581
    %v1612 = vpop.f32.mrf.mxu0
    %v1613 = vadd.f32 %v1575, %v1612
    %1614 = vmatmul.f32.gmra.mxu0 %v1584
    %v1615 = vpop.f32.mrf.mxu0
    %v1616 = vadd.f32 %v1575, %v1615
    %1617 = vmatmul.f32.gmra.mxu0 %v1587
    %v1618 = vpop.f32.mrf.mxu0
    %v1619 = vadd.f32 %v1575, %v1618
    %1620 = vmatmul.f32.gmra.mxu0 %v1590
    %v1621 = vpop.f32.mrf.mxu0
    %v1622 = vadd.f32 %v1575, %v1621
    %1623 = vdwg.mxu0
    %v1625 = vperm.slane %v1568, 0
    %1627 = vmatpush.msra.mxu0 0.0
    %1628 = vmatpush.msra.mxu0 0.0
    %1629 = vmatpush.msra.mxu0 0.0
    %1630 = vmatpush.msra.mxu0 0.0
    %1631 = vmatpush.msra.mxu0 0.0
    %1632 = vmatpush.msra.mxu0 0.0
    %1633 = vmatpush.msra.mxu0 0.0
    %1634 = vmatpush.msra.mxu0 0.0
    %1635 = vmatpush.msra.mxu0 0.0
    %1636 = vmatpush.msra.mxu0 0.0
    %1637 = vmatpush.msra.mxu0 0.0
    %1638 = vmatpush.msra.mxu0 0.0
    %1639 = vmatpush.msra.mxu0 0.0
    %1640 = vmatpush.msra.mxu0 0.0
    %1641 = vmatpush.msra.mxu0 %v1566
    %1642 = vmatpush.msra.mxu0 %v1565
    %1643 = vmatmul.f32.gmra.mxu0 %v1578
    %v1644 = vpop.f32.mrf.mxu0
    %v1645 = vadd.f32 %v1625, %v1644
    %1646 = vmatmul.f32.gmra.mxu0 %v1581
    %v1647 = vpop.f32.mrf.mxu0
    %v1648 = vadd.f32 %v1625, %v1647
    %1649 = vmatmul.f32.gmra.mxu0 %v1584
    %v1650 = vpop.f32.mrf.mxu0
    %v1651 = vadd.f32 %v1625, %v1650
    %1652 = vmatmul.f32.gmra.mxu0 %v1587
    %v1653 = vpop.f32.mrf.mxu0
    %v1654 = vadd.f32 %v1625, %v1653
    %1655 = vmatmul.f32.gmra.mxu0 %v1590
    %v1656 = vpop.f32.mrf.mxu0
    %v1657 = vadd.f32 %v1625, %v1656
    %1658 = vdwg.mxu0
    %v1660 = vperm.slane %v1573, 0
    %1662 = vmatpush.msra.mxu0 0.0
    %1663 = vmatpush.msra.mxu0 0.0
    %1664 = vmatpush.msra.mxu0 0.0
    %1665 = vmatpush.msra.mxu0 0.0
    %1666 = vmatpush.msra.mxu0 0.0
    %1667 = vmatpush.msra.mxu0 0.0
    %1668 = vmatpush.msra.mxu0 0.0
    %1669 = vmatpush.msra.mxu0 0.0
    %1670 = vmatpush.msra.mxu0 0.0
    %1671 = vmatpush.msra.mxu0 0.0
    %1672 = vmatpush.msra.mxu0 0.0
    %1673 = vmatpush.msra.mxu0 0.0
    %1674 = vmatpush.msra.mxu0 0.0
    %1675 = vmatpush.msra.mxu0 0.0
    %1676 = vmatpush.msra.mxu0 %v1571
    %1677 = vmatpush.msra.mxu0 %v1570
    %1678 = vmatmul.f32.gmra.mxu0 %v1578
    %v1679 = vpop.f32.mrf.mxu0
    %v1680 = vadd.f32 %v1660, %v1679
    %1681 = vmatmul.f32.gmra.mxu0 %v1581
    %v1682 = vpop.f32.mrf.mxu0
    %v1683 = vadd.f32 %v1660, %v1682
    %1684 = vmatmul.f32.gmra.mxu0 %v1584
    %v1685 = vpop.f32.mrf.mxu0
    %v1686 = vadd.f32 %v1660, %v1685
    %1687 = vmatmul.f32.gmra.mxu0 %v1587
    %v1688 = vpop.f32.mrf.mxu0
    %v1689 = vadd.f32 %v1660, %v1688
    %1690 = vmatmul.f32.gmra.mxu0 %v1590
    %v1691 = vpop.f32.mrf.mxu0
    %v1692 = vadd.f32 %v1660, %v1691
    %1693 = vdwg.mxu0
    %s1694 = scalar_lea.vmem %s5, 16
    %v1695 = vld [vmem:[%s1694] sm:$0xff]
    %v1697 = vsel %vm341, %v1610, 0
    %v1700 = vsel %vm341, %v1613, 0
    %v1703 = vsel %vm341, %v1616, 0
    %v1706 = vsel %vm341, %v1645, 0
    %v1709 = vsel %vm341, %v1648, 0
    %v1712 = vsel %vm341, %v1651, 0
    %1714 = vmatpush.xpose.msra.mxu0 0.0
    %1715 = vmatpush.xpose.msra.mxu0 0.0
    %1716 = vmatpush.xpose.msra.mxu0 0.0
    %1717 = vmatpush.xpose.msra.mxu0 0.0
    %1718 = vmatpush.xpose.msra.mxu0 0.0
    %1719 = vmatpush.xpose.msra.mxu0 0.0
    %1720 = vmatpush.xpose.msra.mxu0 0.0
    %1721 = vmatpush.xpose.msra.mxu0 0.0
    %1722 = vmatpush.xpose.msra.mxu0 0.0
    %1723 = vmatpush.xpose.msra.mxu0 0.0
    %1724 = vmatpush.xpose.msra.mxu0 0.0
    %1725 = vmatpush.xpose.msra.mxu0 0.0
    %1726 = vmatpush.xpose.msra.mxu0 0.0
    %1727 = vmatpush.xpose.msra.mxu0 %v1712
    %1728 = vmatpush.xpose.msra.mxu0 %v1709
    %1729 = vmatpush.xpose.msra.mxu0 %v1706
    %1730 = vmatmul.f32.gmra.mxu0 %v1697
    %v1731 = vpop.f32.mrf.mxu0
    %v1732 = vadd.f32 0.0, %v1731
    %1733 = vmatmul.f32.gmra.mxu0 %v1700
    %v1734 = vpop.f32.mrf.mxu0
    %v1735 = vadd.f32 0.0, %v1734
    %1736 = vmatmul.f32.gmra.mxu0 %v1703
    %v1737 = vpop.f32.mrf.mxu0
    %v1738 = vadd.f32 0.0, %v1737
    %1739 = vdwg.mxu0
    %v1740 = vmul.f32 %v1732, 0.35355338
    %v1741 = vmul.f32 %v1735, 0.35355338
    %v1742 = vmul.f32 %v1738, 0.35355338
    %v1743 = vsel %vm389, %v1740, -inf
    %1744 = vmax.xlane.f32.xlu0 %v1743
    %v1745 = vpop.xlane.xlu0 %1744
    %v1746 = vsel %vm389, %v1741, -inf
    %1747 = vmax.xlane.f32.xlu0 %v1746
    %v1748 = vpop.xlane.xlu0 %1747
    %v1749 = vsel %vm396, %v1742, -inf
    %1750 = vmax.xlane.f32.xlu0 %v1749
    %v1751 = vpop.xlane.xlu0 %1750
    %v1752 = vsub.f32 %v1740, %v1745
    %v1753 = vsub.f32 %v1741, %v1748
    %v1754 = vsub.f32 %v1742, %v1751
    %v1755 = vmul.f32 %v1752, 1.442695
    %v1756 = vpow.pop %v1755
    %v1757 = vmul.f32 %v1753, 1.442695
    %v1758 = vpow.pop %v1757
    %v1759 = vmul.f32 %v1754, 1.442695
    %v1760 = vpow.pop %v1759
    %v1761 = vsel %vm389, %v1756, 0.0
    %1762 = vadd.xlane.f32.xlu0 %v1761
    %v1763 = vpop.xlane.xlu0 %1762
    %v1764 = vsel %vm389, %v1758, 0.0
    %1765 = vadd.xlane.f32.xlu0 %v1764
    %v1766 = vpop.xlane.xlu0 %1765
    %v1767 = vsel %vm396, %v1760, 0.0
    %1768 = vadd.xlane.f32.xlu0 %v1767
    %v1769 = vpop.xlane.xlu0 %1768
    %v1770 = vrcp.pop %v1763
    %v1771 = vrcp.pop %v1766
    %v1772 = vrcp.pop %v1769
    %v1773 = vmul.f32 %v1756, %v1770
    %v1774 = vmul.f32 %v1758, %v1771
    %v1775 = vmul.f32 %v1760, %v1772
    %v1777 = vsel %vm389, %v1773, 0
    %v1780 = vsel %vm389, %v1774, 0
    %v1783 = vsel %vm389, %v1775, 0
    %v1786 = vsel %vm433, %v1686, 0
    %1788 = vmatpush.msra.mxu0 0.0
    %1789 = vmatpush.msra.mxu0 0.0
    %1790 = vmatpush.msra.mxu0 0.0
    %1791 = vmatpush.msra.mxu0 0.0
    %1792 = vmatpush.msra.mxu0 0.0
    %1793 = vmatpush.msra.mxu0 0.0
    %1794 = vmatpush.msra.mxu0 0.0
    %1795 = vmatpush.msra.mxu0 0.0
    %1796 = vmatpush.msra.mxu0 0.0
    %1797 = vmatpush.msra.mxu0 0.0
    %1798 = vmatpush.msra.mxu0 0.0
    %1799 = vmatpush.msra.mxu0 0.0
    %1800 = vmatpush.msra.mxu0 0.0
    %1801 = vmatpush.msra.mxu0 %v1786
    %1802 = vmatpush.msra.mxu0 %v1683
    %1803 = vmatpush.msra.mxu0 %v1680
    %1804 = vmatmul.f32.gmra.mxu0 %v1777
    %v1805 = vpop.f32.mrf.mxu0
    %v1806 = vadd.f32 0.0, %v1805
    %1807 = vmatmul.f32.gmra.mxu0 %v1780
    %v1808 = vpop.f32.mrf.mxu0
    %v1809 = vadd.f32 0.0, %v1808
    %1810 = vmatmul.f32.gmra.mxu0 %v1783
    %v1811 = vpop.f32.mrf.mxu0
    %v1812 = vadd.f32 0.0, %v1811
    %1813 = vdwg.mxu0
    %v1816 = vrot.slane %v1616, 1
    %v1817 = vrot.slane %v1619, 1
    %v1818 = vsel %vm465, %v1816, %v1817
    %v1819 = vrot.slane %v1622, 1
    %v1820 = vsel %vm465, %v1817, %v1819
    %v1823 = vrot.slane %v1651, 1
    %v1824 = vrot.slane %v1654, 1
    %v1825 = vsel %vm465, %v1823, %v1824
    %v1826 = vrot.slane %v1657, 1
    %v1827 = vsel %vm465, %v1824, %v1826
    %v1828 = vsel %vm341, %v1818, 0
    %v1830 = vsel %vm341, %v1820, 0
    %v1832 = vsel %vm341, %v1819, 0
    %v1834 = vsel %vm341, %v1825, 0
    %v1836 = vsel %vm341, %v1827, 0
    %v1838 = vsel %vm341, %v1826, 0
    %1840 = vmatpush.xpose.msra.mxu0 0.0
    %1841 = vmatpush.xpose.msra.mxu0 0.0
    %1842 = vmatpush.xpose.msra.mxu0 0.0
    %1843 = vmatpush.xpose.msra.mxu0 0.0
    %1844 = vmatpush.xpose.msra.mxu0 0.0
    %1845 = vmatpush.xpose.msra.mxu0 0.0
    %1846 = vmatpush.xpose.msra.mxu0 0.0
    %1847 = vmatpush.xpose.msra.mxu0 0.0
    %1848 = vmatpush.xpose.msra.mxu0 0.0
    %1849 = vmatpush.xpose.msra.mxu0 0.0
    %1850 = vmatpush.xpose.msra.mxu0 0.0
    %1851 = vmatpush.xpose.msra.mxu0 0.0
    %1852 = vmatpush.xpose.msra.mxu0 0.0
    %1853 = vmatpush.xpose.msra.mxu0 %v1838
    %1854 = vmatpush.xpose.msra.mxu0 %v1836
    %1855 = vmatpush.xpose.msra.mxu0 %v1834
    %1856 = vmatmul.f32.gmra.mxu0 %v1828
    %v1857 = vpop.f32.mrf.mxu0
    %v1858 = vadd.f32 0.0, %v1857
    %1859 = vmatmul.f32.gmra.mxu0 %v1830
    %v1860 = vpop.f32.mrf.mxu0
    %v1861 = vadd.f32 0.0, %v1860
    %1862 = vmatmul.f32.gmra.mxu0 %v1832
    %v1863 = vpop.f32.mrf.mxu0
    %v1864 = vadd.f32 0.0, %v1863
    %1865 = vdwg.mxu0
    %v1866 = vmul.f32 %v1858, 0.35355338
    %v1867 = vmul.f32 %v1861, 0.35355338
    %v1868 = vmul.f32 %v1864, 0.35355338
    %v1869 = vsel %vm389, %v1866, -inf
    %1870 = vmax.xlane.f32.xlu0 %v1869
    %v1871 = vpop.xlane.xlu0 %1870
    %v1872 = vsel %vm389, %v1867, -inf
    %1873 = vmax.xlane.f32.xlu0 %v1872
    %v1874 = vpop.xlane.xlu0 %1873
    %v1875 = vsel %vm396, %v1868, -inf
    %1876 = vmax.xlane.f32.xlu0 %v1875
    %v1877 = vpop.xlane.xlu0 %1876
    %v1878 = vsub.f32 %v1866, %v1871
    %v1879 = vsub.f32 %v1867, %v1874
    %v1880 = vsub.f32 %v1868, %v1877
    %v1881 = vmul.f32 %v1878, 1.442695
    %v1882 = vpow.pop %v1881
    %v1883 = vmul.f32 %v1879, 1.442695
    %v1884 = vpow.pop %v1883
    %v1885 = vmul.f32 %v1880, 1.442695
    %v1886 = vpow.pop %v1885
    %v1887 = vsel %vm389, %v1882, 0.0
    %1888 = vadd.xlane.f32.xlu0 %v1887
    %v1889 = vpop.xlane.xlu0 %1888
    %v1890 = vsel %vm389, %v1884, 0.0
    %1891 = vadd.xlane.f32.xlu0 %v1890
    %v1892 = vpop.xlane.xlu0 %1891
    %v1893 = vsel %vm396, %v1886, 0.0
    %1894 = vadd.xlane.f32.xlu0 %v1893
    %v1895 = vpop.xlane.xlu0 %1894
    %v1896 = vrcp.pop %v1889
    %v1897 = vrcp.pop %v1892
    %v1898 = vrcp.pop %v1895
    %v1899 = vmul.f32 %v1882, %v1896
    %v1900 = vmul.f32 %v1884, %v1897
    %v1901 = vmul.f32 %v1886, %v1898
    %v1904 = vrot.slane %v1686, 1
    %v1905 = vrot.slane %v1689, 1
    %v1906 = vsel %vm465, %v1904, %v1905
    %v1907 = vrot.slane %v1692, 1
    %v1908 = vsel %vm465, %v1905, %v1907
    %v1912 = vsel %vm389, %v1899, 0
    %v1915 = vsel %vm389, %v1900, 0
    %v1918 = vsel %vm389, %v1901, 0
    %v1920 = vsel %vm433, %v1907, 0
    %1922 = vmatpush.msra.mxu0 0.0
    %1923 = vmatpush.msra.mxu0 0.0
    %1924 = vmatpush.msra.mxu0 0.0
    %1925 = vmatpush.msra.mxu0 0.0
    %1926 = vmatpush.msra.mxu0 0.0
    %1927 = vmatpush.msra.mxu0 0.0
    %1928 = vmatpush.msra.mxu0 0.0
    %1929 = vmatpush.msra.mxu0 0.0
    %1930 = vmatpush.msra.mxu0 0.0
    %1931 = vmatpush.msra.mxu0 0.0
    %1932 = vmatpush.msra.mxu0 0.0
    %1933 = vmatpush.msra.mxu0 0.0
    %1934 = vmatpush.msra.mxu0 0.0
    %1935 = vmatpush.msra.mxu0 %v1920
    %1936 = vmatpush.msra.mxu0 %v1908
    %1937 = vmatpush.msra.mxu0 %v1906
    %1938 = vmatmul.f32.gmra.mxu0 %v1912
    %v1939 = vpop.f32.mrf.mxu0
    %v1940 = vadd.f32 0.0, %v1939
    %1941 = vmatmul.f32.gmra.mxu0 %v1915
    %v1942 = vpop.f32.mrf.mxu0
    %v1943 = vadd.f32 0.0, %v1942
    %1944 = vmatmul.f32.gmra.mxu0 %v1918
    %v1945 = vpop.f32.mrf.mxu0
    %v1946 = vadd.f32 0.0, %v1945
    %1947 = vdwg.mxu0
    %s1948 = scalar_lea.vmem %s3, 112
    %v1949 = vld [vmem:[%s1948] sm:$0xff]
    %v1950 = vld [vmem:[%s1948 + $0x8] sm:$0xff]
    %s1951 = scalar_lea.vmem %s4, 7
    %v1952 = vld [vmem:[%s1951] sm:$0x1]
    %s1953 = scalar_lea.vmem %s3, 144
    %v1954 = vld [vmem:[%s1953] sm:$0xff]
    %v1955 = vld [vmem:[%s1953 + $0x8] sm:$0xff]
    %s1956 = scalar_lea.vmem %s4, 9
    %v1957 = vld [vmem:[%s1956] sm:$0x1]
    %s1958 = scalar_lea.vmem %s3, 176
    %v1959 = vld [vmem:[%s1958] sm:$0xff]
    %v1960 = vld [vmem:[%s1958 + $0x8] sm:$0xff]
    %s1961 = scalar_lea.vmem %s4, 11
    %v1962 = vld [vmem:[%s1961] sm:$0x1]
    %v1964 = vperm.slane %v1952, 0
    %1966 = vmatpush.msra.mxu0 0.0
    %1967 = vmatpush.msra.mxu0 0.0
    %1968 = vmatpush.msra.mxu0 0.0
    %1969 = vmatpush.msra.mxu0 0.0
    %1970 = vmatpush.msra.mxu0 0.0
    %1971 = vmatpush.msra.mxu0 0.0
    %1972 = vmatpush.msra.mxu0 0.0
    %1973 = vmatpush.msra.mxu0 0.0
    %1974 = vmatpush.msra.mxu0 0.0
    %1975 = vmatpush.msra.mxu0 0.0
    %1976 = vmatpush.msra.mxu0 0.0
    %1977 = vmatpush.msra.mxu0 0.0
    %1978 = vmatpush.msra.mxu0 0.0
    %1979 = vmatpush.msra.mxu0 0.0
    %1980 = vmatpush.msra.mxu0 %v1950
    %1981 = vmatpush.msra.mxu0 %v1949
    %1982 = vmatmul.f32.gmra.mxu0 %v1578
    %v1983 = vpop.f32.mrf.mxu0
    %v1984 = vadd.f32 %v1964, %v1983
    %1985 = vmatmul.f32.gmra.mxu0 %v1581
    %v1986 = vpop.f32.mrf.mxu0
    %v1987 = vadd.f32 %v1964, %v1986
    %1988 = vmatmul.f32.gmra.mxu0 %v1584
    %v1989 = vpop.f32.mrf.mxu0
    %v1990 = vadd.f32 %v1964, %v1989
    %1991 = vmatmul.f32.gmra.mxu0 %v1587
    %v1992 = vpop.f32.mrf.mxu0
    %v1993 = vadd.f32 %v1964, %v1992
    %1994 = vmatmul.f32.gmra.mxu0 %v1590
    %v1995 = vpop.f32.mrf.mxu0
    %v1996 = vadd.f32 %v1964, %v1995
    %1997 = vdwg.mxu0
    %v1999 = vperm.slane %v1957, 0
    %2001 = vmatpush.msra.mxu0 0.0
    %2002 = vmatpush.msra.mxu0 0.0
    %2003 = vmatpush.msra.mxu0 0.0
    %2004 = vmatpush.msra.mxu0 0.0
    %2005 = vmatpush.msra.mxu0 0.0
    %2006 = vmatpush.msra.mxu0 0.0
    %2007 = vmatpush.msra.mxu0 0.0
    %2008 = vmatpush.msra.mxu0 0.0
    %2009 = vmatpush.msra.mxu0 0.0
    %2010 = vmatpush.msra.mxu0 0.0
    %2011 = vmatpush.msra.mxu0 0.0
    %2012 = vmatpush.msra.mxu0 0.0
    %2013 = vmatpush.msra.mxu0 0.0
    %2014 = vmatpush.msra.mxu0 0.0
    %2015 = vmatpush.msra.mxu0 %v1955
    %2016 = vmatpush.msra.mxu0 %v1954
    %2017 = vmatmul.f32.gmra.mxu0 %v1578
    %v2018 = vpop.f32.mrf.mxu0
    %v2019 = vadd.f32 %v1999, %v2018
    %2020 = vmatmul.f32.gmra.mxu0 %v1581
    %v2021 = vpop.f32.mrf.mxu0
    %v2022 = vadd.f32 %v1999, %v2021
    %2023 = vmatmul.f32.gmra.mxu0 %v1584
    %v2024 = vpop.f32.mrf.mxu0
    %v2025 = vadd.f32 %v1999, %v2024
    %2026 = vmatmul.f32.gmra.mxu0 %v1587
    %v2027 = vpop.f32.mrf.mxu0
    %v2028 = vadd.f32 %v1999, %v2027
    %2029 = vmatmul.f32.gmra.mxu0 %v1590
    %v2030 = vpop.f32.mrf.mxu0
    %v2031 = vadd.f32 %v1999, %v2030
    %2032 = vdwg.mxu0
    %v2034 = vperm.slane %v1962, 0
    %2036 = vmatpush.msra.mxu0 0.0
    %2037 = vmatpush.msra.mxu0 0.0
    %2038 = vmatpush.msra.mxu0 0.0
    %2039 = vmatpush.msra.mxu0 0.0
    %2040 = vmatpush.msra.mxu0 0.0
    %2041 = vmatpush.msra.mxu0 0.0
    %2042 = vmatpush.msra.mxu0 0.0
    %2043 = vmatpush.msra.mxu0 0.0
    %2044 = vmatpush.msra.mxu0 0.0
    %2045 = vmatpush.msra.mxu0 0.0
    %2046 = vmatpush.msra.mxu0 0.0
    %2047 = vmatpush.msra.mxu0 0.0
    %2048 = vmatpush.msra.mxu0 0.0
    %2049 = vmatpush.msra.mxu0 0.0
    %2050 = vmatpush.msra.mxu0 %v1960
    %2051 = vmatpush.msra.mxu0 %v1959
    %2052 = vmatmul.f32.gmra.mxu0 %v1578
    %v2053 = vpop.f32.mrf.mxu0
    %v2054 = vadd.f32 %v2034, %v2053
    %2055 = vmatmul.f32.gmra.mxu0 %v1581
    %v2056 = vpop.f32.mrf.mxu0
    %v2057 = vadd.f32 %v2034, %v2056
    %2058 = vmatmul.f32.gmra.mxu0 %v1584
    %v2059 = vpop.f32.mrf.mxu0
    %v2060 = vadd.f32 %v2034, %v2059
    %2061 = vmatmul.f32.gmra.mxu0 %v1587
    %v2062 = vpop.f32.mrf.mxu0
    %v2063 = vadd.f32 %v2034, %v2062
    %2064 = vmatmul.f32.gmra.mxu0 %v1590
    %v2065 = vpop.f32.mrf.mxu0
    %v2066 = vadd.f32 %v2034, %v2065
    %2067 = vdwg.mxu0
    %s2068 = scalar_lea.vmem %s5, 24
    %v2069 = vld [vmem:[%s2068] sm:$0xff]
    %v2071 = vsel %vm341, %v1984, 0
    %v2074 = vsel %vm341, %v1987, 0
    %v2077 = vsel %vm341, %v1990, 0
    %v2080 = vsel %vm341, %v2019, 0
    %v2083 = vsel %vm341, %v2022, 0
    %v2086 = vsel %vm341, %v2025, 0
    %2088 = vmatpush.xpose.msra.mxu0 0.0
    %2089 = vmatpush.xpose.msra.mxu0 0.0
    %2090 = vmatpush.xpose.msra.mxu0 0.0
    %2091 = vmatpush.xpose.msra.mxu0 0.0
    %2092 = vmatpush.xpose.msra.mxu0 0.0
    %2093 = vmatpush.xpose.msra.mxu0 0.0
    %2094 = vmatpush.xpose.msra.mxu0 0.0
    %2095 = vmatpush.xpose.msra.mxu0 0.0
    %2096 = vmatpush.xpose.msra.mxu0 0.0
    %2097 = vmatpush.xpose.msra.mxu0 0.0
    %2098 = vmatpush.xpose.msra.mxu0 0.0
    %2099 = vmatpush.xpose.msra.mxu0 0.0
    %2100 = vmatpush.xpose.msra.mxu0 0.0
    %2101 = vmatpush.xpose.msra.mxu0 %v2086
    %2102 = vmatpush.xpose.msra.mxu0 %v2083
    %2103 = vmatpush.xpose.msra.mxu0 %v2080
    %2104 = vmatmul.f32.gmra.mxu0 %v2071
    %v2105 = vpop.f32.mrf.mxu0
    %v2106 = vadd.f32 0.0, %v2105
    %2107 = vmatmul.f32.gmra.mxu0 %v2074
    %v2108 = vpop.f32.mrf.mxu0
    %v2109 = vadd.f32 0.0, %v2108
    %2110 = vmatmul.f32.gmra.mxu0 %v2077
    %v2111 = vpop.f32.mrf.mxu0
    %v2112 = vadd.f32 0.0, %v2111
    %2113 = vdwg.mxu0
    %v2114 = vmul.f32 %v2106, 0.35355338
    %v2115 = vmul.f32 %v2109, 0.35355338
    %v2116 = vmul.f32 %v2112, 0.35355338
    %v2117 = vsel %vm389, %v2114, -inf
    %2118 = vmax.xlane.f32.xlu0 %v2117
    %v2119 = vpop.xlane.xlu0 %2118
    %v2120 = vsel %vm389, %v2115, -inf
    %2121 = vmax.xlane.f32.xlu0 %v2120
    %v2122 = vpop.xlane.xlu0 %2121
    %v2123 = vsel %vm396, %v2116, -inf
    %2124 = vmax.xlane.f32.xlu0 %v2123
    %v2125 = vpop.xlane.xlu0 %2124
    %v2126 = vsub.f32 %v2114, %v2119
    %v2127 = vsub.f32 %v2115, %v2122
    %v2128 = vsub.f32 %v2116, %v2125
    %v2129 = vmul.f32 %v2126, 1.442695
    %v2130 = vpow.pop %v2129
    %v2131 = vmul.f32 %v2127, 1.442695
    %v2132 = vpow.pop %v2131
    %v2133 = vmul.f32 %v2128, 1.442695
    %v2134 = vpow.pop %v2133
    %v2135 = vsel %vm389, %v2130, 0.0
    %2136 = vadd.xlane.f32.xlu0 %v2135
    %v2137 = vpop.xlane.xlu0 %2136
    %v2138 = vsel %vm389, %v2132, 0.0
    %2139 = vadd.xlane.f32.xlu0 %v2138
    %v2140 = vpop.xlane.xlu0 %2139
    %v2141 = vsel %vm396, %v2134, 0.0
    %2142 = vadd.xlane.f32.xlu0 %v2141
    %v2143 = vpop.xlane.xlu0 %2142
    %v2144 = vrcp.pop %v2137
    %v2145 = vrcp.pop %v2140
    %v2146 = vrcp.pop %v2143
    %v2147 = vmul.f32 %v2130, %v2144
    %v2148 = vmul.f32 %v2132, %v2145
    %v2149 = vmul.f32 %v2134, %v2146
    %v2151 = vsel %vm389, %v2147, 0
    %v2154 = vsel %vm389, %v2148, 0
    %v2157 = vsel %vm389, %v2149, 0
    %v2160 = vsel %vm433, %v2060, 0
    %2162 = vmatpush.msra.mxu0 0.0
    %2163 = vmatpush.msra.mxu0 0.0
    %2164 = vmatpush.msra.mxu0 0.0
    %2165 = vmatpush.msra.mxu0 0.0
    %2166 = vmatpush.msra.mxu0 0.0
    %2167 = vmatpush.msra.mxu0 0.0
    %2168 = vmatpush.msra.mxu0 0.0
    %2169 = vmatpush.msra.mxu0 0.0
    %2170 = vmatpush.msra.mxu0 0.0
    %2171 = vmatpush.msra.mxu0 0.0
    %2172 = vmatpush.msra.mxu0 0.0
    %2173 = vmatpush.msra.mxu0 0.0
    %2174 = vmatpush.msra.mxu0 0.0
    %2175 = vmatpush.msra.mxu0 %v2160
    %2176 = vmatpush.msra.mxu0 %v2057
    %2177 = vmatpush.msra.mxu0 %v2054
    %2178 = vmatmul.f32.gmra.mxu0 %v2151
    %v2179 = vpop.f32.mrf.mxu0
    %v2180 = vadd.f32 0.0, %v2179
    %2181 = vmatmul.f32.gmra.mxu0 %v2154
    %v2182 = vpop.f32.mrf.mxu0
    %v2183 = vadd.f32 0.0, %v2182
    %2184 = vmatmul.f32.gmra.mxu0 %v2157
    %v2185 = vpop.f32.mrf.mxu0
    %v2186 = vadd.f32 0.0, %v2185
    %2187 = vdwg.mxu0
    %v2189 = vsel %vm341, %v2180, 0
    %v2192 = vsel %vm341, %v2183, 0
    %v2195 = vsel %vm341, %v2186, 0
    %2197 = vmatpush.msra.mxu0 0.0
    %2198 = vmatpush.msra.mxu0 0.0
    %2199 = vmatpush.msra.mxu0 0.0
    %2200 = vmatpush.msra.mxu0 0.0
    %2201 = vmatpush.msra.mxu0 0.0
    %2202 = vmatpush.msra.mxu0 0.0
    %2203 = vmatpush.msra.mxu0 0.0
    %2204 = vmatpush.msra.mxu0 0.0
    %2205 = vmatpush.msra.mxu0 0.0
    %2206 = vmatpush.msra.mxu0 0.0
    %2207 = vmatpush.msra.mxu0 0.0
    %2208 = vmatpush.msra.mxu0 0.0
    %2209 = vmatpush.msra.mxu0 0.0
    %2210 = vmatpush.msra.mxu0 0.0
    %2211 = vmatpush.msra.mxu0 0.0
    %2212 = vmatpush.msra.mxu0 %v2069
    %2213 = vmatmul.f32.gmra.mxu0 %v2189
    %v2214 = vpop.f32.mrf.mxu0
    %v2215 = vadd.f32 0.0, %v2214
    %2216 = vmatmul.f32.gmra.mxu0 %v2192
    %v2217 = vpop.f32.mrf.mxu0
    %v2218 = vadd.f32 0.0, %v2217
    %2219 = vmatmul.f32.gmra.mxu0 %v2195
    %v2220 = vpop.f32.mrf.mxu0
    %v2221 = vadd.f32 0.0, %v2220
    %2222 = vdwg.mxu0
    %v2224 = vsel %vm341, %v1806, 0
    %v2227 = vsel %vm341, %v1809, 0
    %v2230 = vsel %vm341, %v1812, 0
    %2232 = vmatpush.msra.mxu0 0.0
    %2233 = vmatpush.msra.mxu0 0.0
    %2234 = vmatpush.msra.mxu0 0.0
    %2235 = vmatpush.msra.mxu0 0.0
    %2236 = vmatpush.msra.mxu0 0.0
    %2237 = vmatpush.msra.mxu0 0.0
    %2238 = vmatpush.msra.mxu0 0.0
    %2239 = vmatpush.msra.mxu0 0.0
    %2240 = vmatpush.msra.mxu0 0.0
    %2241 = vmatpush.msra.mxu0 0.0
    %2242 = vmatpush.msra.mxu0 0.0
    %2243 = vmatpush.msra.mxu0 0.0
    %2244 = vmatpush.msra.mxu0 0.0
    %2245 = vmatpush.msra.mxu0 0.0
    %2246 = vmatpush.msra.mxu0 0.0
    %2247 = vmatpush.msra.mxu0 %v1695
    %2248 = vmatmul.f32.gmra.mxu0 %v2224
    %v2249 = vpop.f32.mrf.mxu0
    %v2250 = vadd.f32 %v2215, %v2249
    %2251 = vmatmul.f32.gmra.mxu0 %v2227
    %v2252 = vpop.f32.mrf.mxu0
    %v2253 = vadd.f32 %v2218, %v2252
    %2254 = vmatmul.f32.gmra.mxu0 %v2230
    %v2255 = vpop.f32.mrf.mxu0
    %v2256 = vadd.f32 %v2221, %v2255
    %2257 = vdwg.mxu0
    %v2260 = vrot.slane %v1990, 1
    %v2261 = vrot.slane %v1993, 1
    %v2262 = vsel %vm465, %v2260, %v2261
    %v2263 = vrot.slane %v1996, 1
    %v2264 = vsel %vm465, %v2261, %v2263
    %v2267 = vrot.slane %v2025, 1
    %v2268 = vrot.slane %v2028, 1
    %v2269 = vsel %vm465, %v2267, %v2268
    %v2270 = vrot.slane %v2031, 1
    %v2271 = vsel %vm465, %v2268, %v2270
    %v2272 = vsel %vm341, %v2262, 0
    %v2274 = vsel %vm341, %v2264, 0
    %v2276 = vsel %vm341, %v2263, 0
    %v2278 = vsel %vm341, %v2269, 0
    %v2280 = vsel %vm341, %v2271, 0
    %v2282 = vsel %vm341, %v2270, 0
    %2284 = vmatpush.xpose.msra.mxu0 0.0
    %2285 = vmatpush.xpose.msra.mxu0 0.0
    %2286 = vmatpush.xpose.msra.mxu0 0.0
    %2287 = vmatpush.xpose.msra.mxu0 0.0
    %2288 = vmatpush.xpose.msra.mxu0 0.0
    %2289 = vmatpush.xpose.msra.mxu0 0.0
    %2290 = vmatpush.xpose.msra.mxu0 0.0
    %2291 = vmatpush.xpose.msra.mxu0 0.0
    %2292 = vmatpush.xpose.msra.mxu0 0.0
    %2293 = vmatpush.xpose.msra.mxu0 0.0
    %2294 = vmatpush.xpose.msra.mxu0 0.0
    %2295 = vmatpush.xpose.msra.mxu0 0.0
    %2296 = vmatpush.xpose.msra.mxu0 0.0
    %2297 = vmatpush.xpose.msra.mxu0 %v2282
    %2298 = vmatpush.xpose.msra.mxu0 %v2280
    %2299 = vmatpush.xpose.msra.mxu0 %v2278
    %2300 = vmatmul.f32.gmra.mxu0 %v2272
    %v2301 = vpop.f32.mrf.mxu0
    %v2302 = vadd.f32 0.0, %v2301
    %2303 = vmatmul.f32.gmra.mxu0 %v2274
    %v2304 = vpop.f32.mrf.mxu0
    %v2305 = vadd.f32 0.0, %v2304
    %2306 = vmatmul.f32.gmra.mxu0 %v2276
    %v2307 = vpop.f32.mrf.mxu0
    %v2308 = vadd.f32 0.0, %v2307
    %2309 = vdwg.mxu0
    %v2310 = vmul.f32 %v2302, 0.35355338
    %v2311 = vmul.f32 %v2305, 0.35355338
    %v2312 = vmul.f32 %v2308, 0.35355338
    %v2313 = vsel %vm389, %v2310, -inf
    %2314 = vmax.xlane.f32.xlu0 %v2313
    %v2315 = vpop.xlane.xlu0 %2314
    %v2316 = vsel %vm389, %v2311, -inf
    %2317 = vmax.xlane.f32.xlu0 %v2316
    %v2318 = vpop.xlane.xlu0 %2317
    %v2319 = vsel %vm396, %v2312, -inf
    %2320 = vmax.xlane.f32.xlu0 %v2319
    %v2321 = vpop.xlane.xlu0 %2320
    %v2322 = vsub.f32 %v2310, %v2315
    %v2323 = vsub.f32 %v2311, %v2318
    %v2324 = vsub.f32 %v2312, %v2321
    %v2325 = vmul.f32 %v2322, 1.442695
    %v2326 = vpow.pop %v2325
    %v2327 = vmul.f32 %v2323, 1.442695
    %v2328 = vpow.pop %v2327
    %v2329 = vmul.f32 %v2324, 1.442695
    %v2330 = vpow.pop %v2329
    %v2331 = vsel %vm389, %v2326, 0.0
    %2332 = vadd.xlane.f32.xlu0 %v2331
    %v2333 = vpop.xlane.xlu0 %2332
    %v2334 = vsel %vm389, %v2328, 0.0
    %2335 = vadd.xlane.f32.xlu0 %v2334
    %v2336 = vpop.xlane.xlu0 %2335
    %v2337 = vsel %vm396, %v2330, 0.0
    %2338 = vadd.xlane.f32.xlu0 %v2337
    %v2339 = vpop.xlane.xlu0 %2338
    %v2340 = vrcp.pop %v2333
    %v2341 = vrcp.pop %v2336
    %v2342 = vrcp.pop %v2339
    %v2343 = vmul.f32 %v2326, %v2340
    %v2344 = vmul.f32 %v2328, %v2341
    %v2345 = vmul.f32 %v2330, %v2342
    %v2348 = vrot.slane %v2060, 1
    %v2349 = vrot.slane %v2063, 1
    %v2350 = vsel %vm465, %v2348, %v2349
    %v2351 = vrot.slane %v2066, 1
    %v2352 = vsel %vm465, %v2349, %v2351
    %v2356 = vsel %vm389, %v2343, 0
    %v2359 = vsel %vm389, %v2344, 0
    %v2362 = vsel %vm389, %v2345, 0
    %v2364 = vsel %vm433, %v2351, 0
    %2366 = vmatpush.msra.mxu0 0.0
    %2367 = vmatpush.msra.mxu0 0.0
    %2368 = vmatpush.msra.mxu0 0.0
    %2369 = vmatpush.msra.mxu0 0.0
    %2370 = vmatpush.msra.mxu0 0.0
    %2371 = vmatpush.msra.mxu0 0.0
    %2372 = vmatpush.msra.mxu0 0.0
    %2373 = vmatpush.msra.mxu0 0.0
    %2374 = vmatpush.msra.mxu0 0.0
    %2375 = vmatpush.msra.mxu0 0.0
    %2376 = vmatpush.msra.mxu0 0.0
    %2377 = vmatpush.msra.mxu0 0.0
    %2378 = vmatpush.msra.mxu0 0.0
    %2379 = vmatpush.msra.mxu0 %v2364
    %2380 = vmatpush.msra.mxu0 %v2352
    %2381 = vmatpush.msra.mxu0 %v2350
    %2382 = vmatmul.f32.gmra.mxu0 %v2356
    %v2383 = vpop.f32.mrf.mxu0
    %v2384 = vadd.f32 0.0, %v2383
    %2385 = vmatmul.f32.gmra.mxu0 %v2359
    %v2386 = vpop.f32.mrf.mxu0
    %v2387 = vadd.f32 0.0, %v2386
    %2388 = vmatmul.f32.gmra.mxu0 %v2362
    %v2389 = vpop.f32.mrf.mxu0
    %v2390 = vadd.f32 0.0, %v2389
    %2391 = vdwg.mxu0
    %v2393 = vsel %vm341, %v2384, 0
    %v2396 = vsel %vm341, %v2387, 0
    %v2399 = vsel %vm341, %v2390, 0
    %2401 = vmatpush.msra.mxu0 0.0
    %2402 = vmatpush.msra.mxu0 0.0
    %2403 = vmatpush.msra.mxu0 0.0
    %2404 = vmatpush.msra.mxu0 0.0
    %2405 = vmatpush.msra.mxu0 0.0
    %2406 = vmatpush.msra.mxu0 0.0
    %2407 = vmatpush.msra.mxu0 0.0
    %2408 = vmatpush.msra.mxu0 0.0
    %2409 = vmatpush.msra.mxu0 0.0
    %2410 = vmatpush.msra.mxu0 0.0
    %2411 = vmatpush.msra.mxu0 0.0
    %2412 = vmatpush.msra.mxu0 0.0
    %2413 = vmatpush.msra.mxu0 0.0
    %2414 = vmatpush.msra.mxu0 0.0
    %2415 = vmatpush.msra.mxu0 0.0
    %2416 = vmatpush.msra.mxu0 %v2069
    %2417 = vmatmul.f32.gmra.mxu0 %v2393
    %v2418 = vpop.f32.mrf.mxu0
    %v2419 = vadd.f32 0.0, %v2418
    %2420 = vmatmul.f32.gmra.mxu0 %v2396
    %v2421 = vpop.f32.mrf.mxu0
    %v2422 = vadd.f32 0.0, %v2421
    %2423 = vmatmul.f32.gmra.mxu0 %v2399
    %v2424 = vpop.f32.mrf.mxu0
    %v2425 = vadd.f32 0.0, %v2424
    %2426 = vdwg.mxu0
    %v2428 = vsel %vm341, %v1940, 0
    %v2431 = vsel %vm341, %v1943, 0
    %v2434 = vsel %vm341, %v1946, 0
    %2436 = vmatpush.msra.mxu0 0.0
    %2437 = vmatpush.msra.mxu0 0.0
    %2438 = vmatpush.msra.mxu0 0.0
    %2439 = vmatpush.msra.mxu0 0.0
    %2440 = vmatpush.msra.mxu0 0.0
    %2441 = vmatpush.msra.mxu0 0.0
    %2442 = vmatpush.msra.mxu0 0.0
    %2443 = vmatpush.msra.mxu0 0.0
    %2444 = vmatpush.msra.mxu0 0.0
    %2445 = vmatpush.msra.mxu0 0.0
    %2446 = vmatpush.msra.mxu0 0.0
    %2447 = vmatpush.msra.mxu0 0.0
    %2448 = vmatpush.msra.mxu0 0.0
    %2449 = vmatpush.msra.mxu0 0.0
    %2450 = vmatpush.msra.mxu0 0.0
    %2451 = vmatpush.msra.mxu0 %v1695
    %2452 = vmatmul.f32.gmra.mxu0 %v2428
    %v2453 = vpop.f32.mrf.mxu0
    %v2454 = vadd.f32 %v2419, %v2453
    %2455 = vmatmul.f32.gmra.mxu0 %v2431
    %v2456 = vpop.f32.mrf.mxu0
    %v2457 = vadd.f32 %v2422, %v2456
    %2458 = vmatmul.f32.gmra.mxu0 %v2434
    %v2459 = vpop.f32.mrf.mxu0
    %v2460 = vadd.f32 %v2425, %v2459
    %2461 = vdwg.mxu0
    %v2465 = vrot.slane %v2454, 7
    %v2466 = vrot.slane %v2457, 7
    %v2467 = vsel %vm433, %v2465, %v2466
    %v2468 = vrot.slane %v2460, 7
    %v2469 = vsel %vm433, %v2466, %v2468
    %v2473 = vsel %vm433, %v2256, %v2465
    %v2474 = vadd.f32 %v1424, %v2250
    %v2475 = vadd.f32 %v1425, %v2253
    %v2476 = vadd.f32 %v1426, %v2473
    %v2477 = vadd.f32 %v1427, %v2467
    %v2478 = vadd.f32 %v1428, %v2469
    %s2479 = scalar_lea.vmem %s6, 1
    %v2480 = vld [vmem:[%s2479] sm:$0x1]
    %v2482 = vperm.slane %v2480, 0
    %v2484 = vadd.f32 %v2474, %v2482
    %v2485 = vadd.f32 %v2475, %v2482
    %v2486 = vadd.f32 %v2476, %v2482
    %v2487 = vadd.f32 %v2477, %v2482
    %v2488 = vadd.f32 %v2478, %v2482
    %s2489 = scalar_lea.vmem %s7, 1
    %v2490 = vld [vmem:[%s2489] sm:$0x1]
    %s2491 = scalar_lea.vmem %s8, 1
    %v2492 = vld [vmem:[%s2491] sm:$0x1]
    %v2493 = vsel %vm72, %v2484, 0.0
    %2494 = vadd.xlane.f32.xlu0 %v2493
    %v2495 = vpop.xlane.xlu0 %2494
    %v2496 = vsel %vm72, %v2485, 0.0
    %2497 = vadd.xlane.f32.xlu0 %v2496
    %v2498 = vpop.xlane.xlu0 %2497
    %v2499 = vsel %vm72, %v2486, 0.0
    %2500 = vadd.xlane.f32.xlu0 %v2499
    %v2501 = vpop.xlane.xlu0 %2500
    %v2502 = vsel %vm72, %v2487, 0.0
    %2503 = vadd.xlane.f32.xlu0 %v2502
    %v2504 = vpop.xlane.xlu0 %2503
    %v2505 = vsel %vm85, %v2488, 0.0
    %2506 = vadd.xlane.f32.xlu0 %v2505
    %v2507 = vpop.xlane.xlu0 %2506
    %v2508 = vmul.f32 %v2495, %v95
    %v2509 = vmul.f32 %v2498, %v95
    %v2510 = vmul.f32 %v2501, %v95
    %v2511 = vmul.f32 %v2504, %v95
    %v2512 = vmul.f32 %v2507, %v95
    %v2513 = vsub.f32 %v2484, %v2508
    %v2514 = vsub.f32 %v2485, %v2509
    %v2515 = vsub.f32 %v2486, %v2510
    %v2516 = vsub.f32 %v2487, %v2511
    %v2517 = vsub.f32 %v2488, %v2512
    %v2518 = vmul.f32 %v2513, %v2513
    %v2519 = vmul.f32 %v2514, %v2514
    %v2520 = vmul.f32 %v2515, %v2515
    %v2521 = vmul.f32 %v2516, %v2516
    %v2522 = vmul.f32 %v2517, %v2517
    %v2523 = vsel %vm72, %v2518, 0.0
    %2524 = vadd.xlane.f32.xlu0 %v2523
    %v2525 = vpop.xlane.xlu0 %2524
    %v2526 = vsel %vm72, %v2519, 0.0
    %2527 = vadd.xlane.f32.xlu0 %v2526
    %v2528 = vpop.xlane.xlu0 %2527
    %v2529 = vsel %vm72, %v2520, 0.0
    %2530 = vadd.xlane.f32.xlu0 %v2529
    %v2531 = vpop.xlane.xlu0 %2530
    %v2532 = vsel %vm72, %v2521, 0.0
    %2533 = vadd.xlane.f32.xlu0 %v2532
    %v2534 = vpop.xlane.xlu0 %2533
    %v2535 = vsel %vm85, %v2522, 0.0
    %2536 = vadd.xlane.f32.xlu0 %v2535
    %v2537 = vpop.xlane.xlu0 %2536
    %v2538 = vmul.f32 %v2525, %v95
    %v2539 = vmul.f32 %v2528, %v95
    %v2540 = vmul.f32 %v2531, %v95
    %v2541 = vmul.f32 %v2534, %v95
    %v2542 = vmul.f32 %v2537, %v95
    %v2543 = vadd.f32 %v2538, 1e-05
    %v2544 = vadd.f32 %v2539, 1e-05
    %v2545 = vadd.f32 %v2540, 1e-05
    %v2546 = vadd.f32 %v2541, 1e-05
    %v2547 = vadd.f32 %v2542, 1e-05
    %v2548 = vrsqrt.pop %v2543
    %v2549 = vmul.f32 %v2548, %v2543
    %v2550 = vmul.f32 %v2549, %v2548
    %v2551 = vmul.f32 0.5, %v2550
    %v2552 = vsub.f32 1.5, %v2551
    %v2553 = vmul.f32 %v2548, %v2552
    %vm2554 = vweird.f32 %v2543
    %vm2555 = vweird.f32 %v2548
    %vm2556 = vmor %vm2554, %vm2555
    %v2557 = vsel %vm2556, %v2548, %v2553
    %v2558 = vrsqrt.pop %v2544
    %v2559 = vmul.f32 %v2558, %v2544
    %v2560 = vmul.f32 %v2559, %v2558
    %v2561 = vmul.f32 0.5, %v2560
    %v2562 = vsub.f32 1.5, %v2561
    %v2563 = vmul.f32 %v2558, %v2562
    %vm2564 = vweird.f32 %v2544
    %vm2565 = vweird.f32 %v2558
    %vm2566 = vmor %vm2564, %vm2565
    %v2567 = vsel %vm2566, %v2558, %v2563
    %v2568 = vrsqrt.pop %v2545
    %v2569 = vmul.f32 %v2568, %v2545
    %v2570 = vmul.f32 %v2569, %v2568
    %v2571 = vmul.f32 0.5, %v2570
    %v2572 = vsub.f32 1.5, %v2571
    %v2573 = vmul.f32 %v2568, %v2572
    %vm2574 = vweird.f32 %v2545
    %vm2575 = vweird.f32 %v2568
    %vm2576 = vmor %vm2574, %vm2575
    %v2577 = vsel %vm2576, %v2568, %v2573
    %v2578 = vrsqrt.pop %v2546
    %v2579 = vmul.f32 %v2578, %v2546
    %v2580 = vmul.f32 %v2579, %v2578
    %v2581 = vmul.f32 0.5, %v2580
    %v2582 = vsub.f32 1.5, %v2581
    %v2583 = vmul.f32 %v2578, %v2582
    %vm2584 = vweird.f32 %v2546
    %vm2585 = vweird.f32 %v2578
    %vm2586 = vmor %vm2584, %vm2585
    %v2587 = vsel %vm2586, %v2578, %v2583
    %v2588 = vrsqrt.pop %v2547
    %v2589 = vmul.f32 %v2588, %v2547
    %v2590 = vmul.f32 %v2589, %v2588
    %v2591 = vmul.f32 0.5, %v2590
    %v2592 = vsub.f32 1.5, %v2591
    %v2593 = vmul.f32 %v2588, %v2592
    %vm2594 = vweird.f32 %v2547
    %vm2595 = vweird.f32 %v2588
    %vm2596 = vmor %vm2594, %vm2595
    %v2597 = vsel %vm2596, %v2588, %v2593
    %v2598 = vmul.f32 %v2513, %v2557
    %v2599 = vmul.f32 %v2514, %v2567
    %v2600 = vmul.f32 %v2515, %v2577
    %v2601 = vmul.f32 %v2516, %v2587
    %v2602 = vmul.f32 %v2517, %v2597
    %v2604 = vperm.slane %v2490, 0
    %v2606 = vmul.f32 %v2598, %v2604
    %v2607 = vmul.f32 %v2599, %v2604
    %v2608 = vmul.f32 %v2600, %v2604
    %v2609 = vmul.f32 %v2601, %v2604
    %v2610 = vmul.f32 %v2602, %v2604
    %v2612 = vperm.slane %v2492, 0
    %v2614 = vadd.f32 %v2606, %v2612
    %v2615 = vadd.f32 %v2607, %v2612
    %v2616 = vadd.f32 %v2608, %v2612
    %v2617 = vadd.f32 %v2609, %v2612
    %v2618 = vadd.f32 %v2610, %v2612
    %s2619 = scalar_lea.vmem %s9, 16
    %v2620 = vld [vmem:[%s2619] sm:$0xff]
    %v2621 = vld [vmem:[%s2619 + $0x8] sm:$0xff]
    %s2622 = scalar_lea.vmem %s10, 1
    %v2623 = vld [vmem:[%s2622] sm:$0x1]
    %v2625 = vperm.slane %v2623, 0
    %v2628 = vsel %vm72, %v2614, 0
    %v2631 = vsel %vm72, %v2615, 0
    %v2634 = vsel %vm72, %v2616, 0
    %v2637 = vsel %vm72, %v2617, 0
    %v2640 = vsel %vm72, %v2618, 0
    %2642 = vmatpush.msra.mxu0 0.0
    %2643 = vmatpush.msra.mxu0 0.0
    %2644 = vmatpush.msra.mxu0 0.0
    %2645 = vmatpush.msra.mxu0 0.0
    %2646 = vmatpush.msra.mxu0 0.0
    %2647 = vmatpush.msra.mxu0 0.0
    %2648 = vmatpush.msra.mxu0 0.0
    %2649 = vmatpush.msra.mxu0 0.0
    %2650 = vmatpush.msra.mxu0 0.0
    %2651 = vmatpush.msra.mxu0 0.0
    %2652 = vmatpush.msra.mxu0 0.0
    %2653 = vmatpush.msra.mxu0 0.0
    %2654 = vmatpush.msra.mxu0 0.0
    %2655 = vmatpush.msra.mxu0 0.0
    %2656 = vmatpush.msra.mxu0 %v2621
    %2657 = vmatpush.msra.mxu0 %v2620
    %2658 = vmatmul.f32.gmra.mxu0 %v2628
    %v2659 = vpop.f32.mrf.mxu0
    %v2660 = vadd.f32 %v2625, %v2659
    %2661 = vmatmul.f32.gmra.mxu0 %v2631
    %v2662 = vpop.f32.mrf.mxu0
    %v2663 = vadd.f32 %v2625, %v2662
    %2664 = vmatmul.f32.gmra.mxu0 %v2634
    %v2665 = vpop.f32.mrf.mxu0
    %v2666 = vadd.f32 %v2625, %v2665
    %2667 = vmatmul.f32.gmra.mxu0 %v2637
    %v2668 = vpop.f32.mrf.mxu0
    %v2669 = vadd.f32 %v2625, %v2668
    %2670 = vmatmul.f32.gmra.mxu0 %v2640
    %v2671 = vpop.f32.mrf.mxu0
    %v2672 = vadd.f32 %v2625, %v2671
    %2673 = vdwg.mxu0
    %v2674 = vmul.f32 %v2660, 0.5
    %v2675 = vmul.f32 %v2663, 0.5
    %v2676 = vmul.f32 %v2666, 0.5
    %v2677 = vmul.f32 %v2669, 0.5
    %v2678 = vmul.f32 %v2672, 0.5
    %v2679 = vmul.f32 %v2660, 0.044715
    %v2680 = vmul.f32 %v2663, 0.044715
    %v2681 = vmul.f32 %v2666, 0.044715
    %v2682 = vmul.f32 %v2669, 0.044715
    %v2683 = vmul.f32 %v2672, 0.044715
    %v2684 = vmul.f32 %v2679, %v2660
    %v2685 = vmul.f32 %v2680, %v2663
    %v2686 = vmul.f32 %v2681, %v2666
    %v2687 = vmul.f32 %v2682, %v2669
    %v2688 = vmul.f32 %v2683, %v2672
    %v2689 = vmul.f32 %v2684, %v2660
    %v2690 = vmul.f32 %v2685, %v2663
    %v2691 = vmul.f32 %v2686, %v2666
    %v2692 = vmul.f32 %v2687, %v2669
    %v2693 = vmul.f32 %v2688, %v2672
    %v2694 = vadd.f32 %v2660, %v2689
    %v2695 = vadd.f32 %v2663, %v2690
    %v2696 = vadd.f32 %v2666, %v2691
    %v2697 = vadd.f32 %v2669, %v2692
    %v2698 = vadd.f32 %v2672, %v2693
    %v2699 = vmul.f32 %v2694, 0.7978846
    %v2700 = vmul.f32 %v2695, 0.7978846
    %v2701 = vmul.f32 %v2696, 0.7978846
    %v2702 = vmul.f32 %v2697, 0.7978846
    %v2703 = vmul.f32 %v2698, 0.7978846
    %v2704 = vtanh.pop %v2699
    %v2705 = vtanh.pop %v2700
    %v2706 = vtanh.pop %v2701
    %v2707 = vtanh.pop %v2702
    %v2708 = vtanh.pop %v2703
    %v2709 = vadd.f32 %v2704, 1.0
    %v2710 = vadd.f32 %v2705, 1.0
    %v2711 = vadd.f32 %v2706, 1.0
    %v2712 = vadd.f32 %v2707, 1.0
    %v2713 = vadd.f32 %v2708, 1.0
    %v2714 = vmul.f32 %v2674, %v2709
    %v2715 = vmul.f32 %v2675, %v2710
    %v2716 = vmul.f32 %v2676, %v2711
    %v2717 = vmul.f32 %v2677, %v2712
    %v2718 = vmul.f32 %v2678, %v2713
    %s2719 = scalar_lea.vmem %s11, 64
    %v2720 = vld [vmem:[%s2719] sm:$0xff]
    %v2721 = vld [vmem:[%s2719 + $0x8] sm:$0xff]
    %v2722 = vld [vmem:[%s2719 + $0x10] sm:$0xff]
    %v2723 = vld [vmem:[%s2719 + $0x18] sm:$0xff]
    %v2724 = vld [vmem:[%s2719 + $0x20] sm:$0xff]
    %v2725 = vld [vmem:[%s2719 + $0x28] sm:$0xff]
    %v2726 = vld [vmem:[%s2719 + $0x30] sm:$0xff]
    %v2727 = vld [vmem:[%s2719 + $0x38] sm:$0xff]
    %s2728 = scalar_lea.vmem %s12, 1
    %v2729 = vld [vmem:[%s2728] sm:$0x1]
    %v2731 = vperm.slane %v2729, 0
    %v2734 = vsel %vm1376, %v2714, 0
    %v2737 = vsel %vm1376, %v2715, 0
    %v2740 = vsel %vm1376, %v2716, 0
    %v2743 = vsel %vm1376, %v2717, 0
    %v2746 = vsel %vm1376, %v2718, 0
    %2748 = vmatpush.msra.mxu0 0.0
    %2749 = vmatpush.msra.mxu0 0.0
    %2750 = vmatpush.msra.mxu0 0.0
    %2751 = vmatpush.msra.mxu0 0.0
    %2752 = vmatpush.msra.mxu0 0.0
    %2753 = vmatpush.msra.mxu0 0.0
    %2754 = vmatpush.msra.mxu0 0.0
    %2755 = vmatpush.msra.mxu0 0.0
    %2756 = vmatpush.msra.mxu0 %v2727
    %2757 = vmatpush.msra.mxu0 %v2726
    %2758 = vmatpush.msra.mxu0 %v2725
    %2759 = vmatpush.msra.mxu0 %v2724
    %2760 = vmatpush.msra.mxu0 %v2723
    %2761 = vmatpush.msra.mxu0 %v2722
    %2762 = vmatpush.msra.mxu0 %v2721
    %2763 = vmatpush.msra.mxu0 %v2720
    %2764 = vmatmul.f32.gmra.mxu0 %v2734
    %v2765 = vpop.f32.mrf.mxu0
    %v2766 = vadd.f32 %v2731, %v2765
    %2767 = vmatmul.f32.gmra.mxu0 %v2737
    %v2768 = vpop.f32.mrf.mxu0
    %v2769 = vadd.f32 %v2731, %v2768
    %2770 = vmatmul.f32.gmra.mxu0 %v2740
    %v2771 = vpop.f32.mrf.mxu0
    %v2772 = vadd.f32 %v2731, %v2771
    %2773 = vmatmul.f32.gmra.mxu0 %v2743
    %v2774 = vpop.f32.mrf.mxu0
    %v2775 = vadd.f32 %v2731, %v2774
    %2776 = vmatmul.f32.gmra.mxu0 %v2746
    %v2777 = vpop.f32.mrf.mxu0
    %v2778 = vadd.f32 %v2731, %v2777
    %2779 = vdwg.mxu0
    %v2780 = vadd.f32 %v2484, %v2766
    %v2781 = vadd.f32 %v2485, %v2769
    %v2782 = vadd.f32 %v2486, %v2772
    %v2783 = vadd.f32 %v2487, %v2775
    %v2784 = vadd.f32 %v2488, %v2778
    %v2785 = vld [vmem:[%s13] sm:$0x1]
    %v2786 = vld [vmem:[%s14] sm:$0x1]
    %v2787 = vsel %vm72, %v2780, 0.0
    %2788 = vadd.xlane.f32.xlu0 %v2787
    %v2789 = vpop.xlane.xlu0 %2788
    %v2790 = vsel %vm72, %v2781, 0.0
    %2791 = vadd.xlane.f32.xlu0 %v2790
    %v2792 = vpop.xlane.xlu0 %2791
    %v2793 = vsel %vm72, %v2782, 0.0
    %2794 = vadd.xlane.f32.xlu0 %v2793
    %v2795 = vpop.xlane.xlu0 %2794
    %v2796 = vsel %vm72, %v2783, 0.0
    %2797 = vadd.xlane.f32.xlu0 %v2796
    %v2798 = vpop.xlane.xlu0 %2797
    %v2799 = vsel %vm85, %v2784, 0.0
    %2800 = vadd.xlane.f32.xlu0 %v2799
    %v2801 = vpop.xlane.xlu0 %2800
    %v2802 = vmul.f32 %v2789, %v95
    %v2803 = vmul.f32 %v2792, %v95
    %v2804 = vmul.f32 %v2795, %v95
    %v2805 = vmul.f32 %v2798, %v95
    %v2806 = vmul.f32 %v2801, %v95
    %v2807 = vsub.f32 %v2780, %v2802
    %v2808 = vsub.f32 %v2781, %v2803
    %v2809 = vsub.f32 %v2782, %v2804
    %v2810 = vsub.f32 %v2783, %v2805
    %v2811 = vsub.f32 %v2784, %v2806
    %v2812 = vmul.f32 %v2807, %v2807
    %v2813 = vmul.f32 %v2808, %v2808
    %v2814 = vmul.f32 %v2809, %v2809
    %v2815 = vmul.f32 %v2810, %v2810
    %v2816 = vmul.f32 %v2811, %v2811
    %v2817 = vsel %vm72, %v2812, 0.0
    %2818 = vadd.xlane.f32.xlu0 %v2817
    %v2819 = vpop.xlane.xlu0 %2818
    %v2820 = vsel %vm72, %v2813, 0.0
    %2821 = vadd.xlane.f32.xlu0 %v2820
    %v2822 = vpop.xlane.xlu0 %2821
    %v2823 = vsel %vm72, %v2814, 0.0
    %2824 = vadd.xlane.f32.xlu0 %v2823
    %v2825 = vpop.xlane.xlu0 %2824
    %v2826 = vsel %vm72, %v2815, 0.0
    %2827 = vadd.xlane.f32.xlu0 %v2826
    %v2828 = vpop.xlane.xlu0 %2827
    %v2829 = vsel %vm85, %v2816, 0.0
    %2830 = vadd.xlane.f32.xlu0 %v2829
    %v2831 = vpop.xlane.xlu0 %2830
    %v2832 = vmul.f32 %v2819, %v95
    %v2833 = vmul.f32 %v2822, %v95
    %v2834 = vmul.f32 %v2825, %v95
    %v2835 = vmul.f32 %v2828, %v95
    %v2836 = vmul.f32 %v2831, %v95
    %v2837 = vadd.f32 %v2832, 1e-05
    %v2838 = vadd.f32 %v2833, 1e-05
    %v2839 = vadd.f32 %v2834, 1e-05
    %v2840 = vadd.f32 %v2835, 1e-05
    %v2841 = vadd.f32 %v2836, 1e-05
    %v2842 = vrsqrt.pop %v2837
    %v2843 = vmul.f32 %v2842, %v2837
    %v2844 = vmul.f32 %v2843, %v2842
    %v2845 = vmul.f32 0.5, %v2844
    %v2846 = vsub.f32 1.5, %v2845
    %v2847 = vmul.f32 %v2842, %v2846
    %vm2848 = vweird.f32 %v2837
    %vm2849 = vweird.f32 %v2842
    %vm2850 = vmor %vm2848, %vm2849
    %v2851 = vsel %vm2850, %v2842, %v2847
    %v2852 = vrsqrt.pop %v2838
    %v2853 = vmul.f32 %v2852, %v2838
    %v2854 = vmul.f32 %v2853, %v2852
    %v2855 = vmul.f32 0.5, %v2854
    %v2856 = vsub.f32 1.5, %v2855
    %v2857 = vmul.f32 %v2852, %v2856
    %vm2858 = vweird.f32 %v2838
    %vm2859 = vweird.f32 %v2852
    %vm2860 = vmor %vm2858, %vm2859
    %v2861 = vsel %vm2860, %v2852, %v2857
    %v2862 = vrsqrt.pop %v2839
    %v2863 = vmul.f32 %v2862, %v2839
    %v2864 = vmul.f32 %v2863, %v2862
    %v2865 = vmul.f32 0.5, %v2864
    %v2866 = vsub.f32 1.5, %v2865
    %v2867 = vmul.f32 %v2862, %v2866
    %vm2868 = vweird.f32 %v2839
    %vm2869 = vweird.f32 %v2862
    %vm2870 = vmor %vm2868, %vm2869
    %v2871 = vsel %vm2870, %v2862, %v2867
    %v2872 = vrsqrt.pop %v2840
    %v2873 = vmul.f32 %v2872, %v2840
    %v2874 = vmul.f32 %v2873, %v2872
    %v2875 = vmul.f32 0.5, %v2874
    %v2876 = vsub.f32 1.5, %v2875
    %v2877 = vmul.f32 %v2872, %v2876
    %vm2878 = vweird.f32 %v2840
    %vm2879 = vweird.f32 %v2872
    %vm2880 = vmor %vm2878, %vm2879
    %v2881 = vsel %vm2880, %v2872, %v2877
    %v2882 = vrsqrt.pop %v2841
    %v2883 = vmul.f32 %v2882, %v2841
    %v2884 = vmul.f32 %v2883, %v2882
    %v2885 = vmul.f32 0.5, %v2884
    %v2886 = vsub.f32 1.5, %v2885
    %v2887 = vmul.f32 %v2882, %v2886
    %vm2888 = vweird.f32 %v2841
    %vm2889 = vweird.f32 %v2882
    %vm2890 = vmor %vm2888, %vm2889
    %v2891 = vsel %vm2890, %v2882, %v2887
    %v2892 = vmul.f32 %v2807, %v2851
    %v2893 = vmul.f32 %v2808, %v2861
    %v2894 = vmul.f32 %v2809, %v2871
    %v2895 = vmul.f32 %v2810, %v2881
    %v2896 = vmul.f32 %v2811, %v2891
    %v2898 = vperm.slane %v2785, 0
    %v2900 = vmul.f32 %v2892, %v2898
    %v2901 = vmul.f32 %v2893, %v2898
    %v2902 = vmul.f32 %v2894, %v2898
    %v2903 = vmul.f32 %v2895, %v2898
    %v2904 = vmul.f32 %v2896, %v2898
    %v2906 = vperm.slane %v2786, 0
    %v2908 = vadd.f32 %v2900, %v2906
    %v2909 = vadd.f32 %v2901, %v2906
    %v2910 = vadd.f32 %v2902, %v2906
    %v2911 = vadd.f32 %v2903, %v2906
    %v2912 = vadd.f32 %v2904, %v2906
    %v2913 = vld [vmem:[%s15] sm:$0xff]
    %v2914 = vld [vmem:[%s15 + $0x8] sm:$0xff]
    %v2915 = vld [vmem:[%s16] sm:$0x1]
    %v2917 = vperm.slane %v2915, 0
    %v2920 = vsel %vm72, %v2908, 0
    %v2923 = vsel %vm72, %v2909, 0
    %v2926 = vsel %vm72, %v2910, 0
    %v2929 = vsel %vm72, %v2911, 0
    %v2932 = vsel %vm72, %v2912, 0
    %2934 = vmatpush.msra.mxu0 0.0
    %2935 = vmatpush.msra.mxu0 0.0
    %2936 = vmatpush.msra.mxu0 0.0
    %2937 = vmatpush.msra.mxu0 0.0
    %2938 = vmatpush.msra.mxu0 0.0
    %2939 = vmatpush.msra.mxu0 0.0
    %2940 = vmatpush.msra.mxu0 0.0
    %2941 = vmatpush.msra.mxu0 0.0
    %2942 = vmatpush.msra.mxu0 0.0
    %2943 = vmatpush.msra.mxu0 0.0
    %2944 = vmatpush.msra.mxu0 0.0
    %2945 = vmatpush.msra.mxu0 0.0
    %2946 = vmatpush.msra.mxu0 0.0
    %2947 = vmatpush.msra.mxu0 0.0
    %2948 = vmatpush.msra.mxu0 %v2914
    %2949 = vmatpush.msra.mxu0 %v2913
    %2950 = vmatmul.f32.gmra.mxu0 %v2920
    %v2951 = vpop.f32.mrf.mxu0
    %v2952 = vadd.f32 %v2917, %v2951
    %2953 = vmatmul.f32.gmra.mxu0 %v2923
    %v2954 = vpop.f32.mrf.mxu0
    %v2955 = vadd.f32 %v2917, %v2954
    %2956 = vmatmul.f32.gmra.mxu0 %v2926
    %v2957 = vpop.f32.mrf.mxu0
    %v2958 = vadd.f32 %v2917, %v2957
    %2959 = vmatmul.f32.gmra.mxu0 %v2929
    %v2960 = vpop.f32.mrf.mxu0
    %v2961 = vadd.f32 %v2917, %v2960
    %2962 = vmatmul.f32.gmra.mxu0 %v2932
    %v2963 = vpop.f32.mrf.mxu0
    %v2964 = vadd.f32 %v2917, %v2963
    %2965 = vdwg.mxu0
    %vm2966 = vcmask 392192
    %2967 = vst.msk [vmem:[%s19] sm:$0xff] %vm2966, %v2952
    %2968 = vst.msk [vmem:[%s19 + $0x8] sm:$0xff] %vm2966, %v2955
    %2969 = vst.msk [vmem:[%s19 + $0x10] sm:$0xff] %vm2966, %v2958
    %2970 = vst.msk [vmem:[%s19 + $0x18] sm:$0xff] %vm2966, %v2961
    %vm2971 = vcmask 386048
    %2972 = vst.msk [vmem:[%s19 + $0x20] sm:$0x3] %vm2971, %v2964
    %v2973 = vld [vmem:[%s17] sm:$0xff]
    %v2974 = vld [vmem:[%s17 + $0x8] sm:$0xff]
    %v2975 = vld [vmem:[%s17 + $0x10] sm:$0xff]
    %v2976 = vld [vmem:[%s17 + $0x18] sm:$0xff]
    %v2977 = vld [vmem:[%s17 + $0x20] sm:$0x3]
    %v2978 = vsub.f32 %v2952, %v2973
    %v2979 = vsub.f32 %v2955, %v2974
    %v2980 = vsub.f32 %v2958, %v2975
    %v2981 = vsub.f32 %v2961, %v2976
    %v2982 = vsub.f32 %v2964, %v2977
    %v2983 = vmul.f32 %v2978, %v2978
    %v2984 = vmul.f32 %v2979, %v2979
    %v2985 = vmul.f32 %v2980, %v2980
    %v2986 = vmul.f32 %v2981, %v2981
    %v2987 = vmul.f32 %v2982, %v2982
    %v2988 = vsel %vm2966, %v2983, 0.0
    %2989 = vadd.xlane.f32.xlu0 %v2988
    %v2990 = vpop.xlane.xlu0 %2989
    %v2991 = vsel %vm2966, %v2984, 0.0
    %2992 = vadd.xlane.f32.xlu0 %v2991
    %v2993 = vpop.xlane.xlu0 %2992
    %v2994 = vsel %vm2966, %v2985, 0.0
    %2995 = vadd.xlane.f32.xlu0 %v2994
    %v2996 = vpop.xlane.xlu0 %2995
    %v2997 = vsel %vm2966, %v2986, 0.0
    %2998 = vadd.xlane.f32.xlu0 %v2997
    %v2999 = vpop.xlane.xlu0 %2998
    %v3000 = vsel %vm2971, %v2987, 0.0
    %3001 = vadd.xlane.f32.xlu0 %v3000
    %v3002 = vpop.xlane.xlu0 %3001
    %v3003 = vrcp.pop 48.0
    %v3004 = vmul.f32 48.0, %v3003
    %v3005 = vsub.f32 1.0, %v3004
    %v3006 = vmul.f32 %v3003, %v3005
    %v3007 = vadd.f32 %v3003, %v3006
    %vm3008 = vweird.f32 %v3003
    %v3009 = vsel %vm3008, %v3003, %v3007
    %v3010 = vmul.f32 %v2990, %v3009
    %v3011 = vmul.f32 %v2993, %v3009
    %v3012 = vmul.f32 %v2996, %v3009
    %v3013 = vmul.f32 %v2999, %v3009
    %v3014 = vmul.f32 %v3002, %v3009
    %v3015 = vld [vmem:[%s18] sm:$0xff]
    %v3016 = vld [vmem:[%s18 + $0x8] sm:$0xff]
    %v3017 = vld [vmem:[%s18 + $0x10] sm:$0xff]
    %v3018 = vld [vmem:[%s18 + $0x18] sm:$0xff]
    %v3019 = vld [vmem:[%s18 + $0x20] sm:$0x3]
    %v3020 = vmul.f32 %v3010, %v3015
    %v3021 = vmul.f32 %v3011, %v3016
    %v3022 = vmul.f32 %v3012, %v3017
    %v3023 = vmul.f32 %v3013, %v3018
    %v3024 = vmul.f32 %v3014, %v3019
    %vm3025 = vcmask 7168
    %v3026 = vsel %vm3025, %v3020, 0.0
    %v3027 = vsel %vm3025, %v3021, 0.0
    %v3028 = vadd.f32 %v3026, %v3027
    %v3029 = vsel %vm3025, %v3022, 0.0
    %v3030 = vadd.f32 %v3028, %v3029
    %v3031 = vsel %vm3025, %v3023, 0.0
    %v3032 = vadd.f32 %v3030, %v3031
    %vm3033 = vcmask 1024
    %v3034 = vsel %vm3033, %v3024, 0.0
    %v3035 = vadd.f32 %v3032, %v3034
    %3036 = vadd.xlane.f32.xlu0 %v3035
    %v3037 = vpop.xlane.xlu0 %3036
    %v3038 = vrot.slane %v3037, 4
    %v3039 = vadd.f32 %v3037, %v3038
    %v3040 = vrot.slane %v3039, 2
    %v3041 = vadd.f32 %v3039, %v3040
    %v3042 = vrot.slane %v3041, 1
    %v3043 = vadd.f32 %v3041, %v3042
    %s3044 = vtos %v3043
    %v3045 = vstv %s3044
    %v3046 = vsel %vm3025, %v3015, 0.0
    %v3047 = vsel %vm3025, %v3016, 0.0
    %v3048 = vadd.f32 %v3046, %v3047
    %v3049 = vsel %vm3025, %v3017, 0.0
    %v3050 = vadd.f32 %v3048, %v3049
    %v3051 = vsel %vm3025, %v3018, 0.0
    %v3052 = vadd.f32 %v3050, %v3051
    %v3053 = vsel %vm3033, %v3019, 0.0
    %v3054 = vadd.f32 %v3052, %v3053
    %3055 = vadd.xlane.f32.xlu0 %v3054
    %v3056 = vpop.xlane.xlu0 %3055
    %v3057 = vrot.slane %v3056, 4
    %v3058 = vadd.f32 %v3056, %v3057
    %v3059 = vrot.slane %v3058, 2
    %v3060 = vadd.f32 %v3058, %v3059
    %v3061 = vrot.slane %v3060, 1
    %v3062 = vadd.f32 %v3060, %v3061
    %s3063 = vtos %v3062
    %v3064 = vstv %s3063
    %v3065 = vmax.f32 %v3064, 1.0
    %v3066 = vrcp.pop %v3065
    %v3067 = vmul.f32 %v3065, %v3066
    %v3068 = vsub.f32 1.0, %v3067
    %v3069 = vmul.f32 %v3066, %v3068
    %v3070 = vadd.f32 %v3066, %v3069
    %vm3071 = vweird.f32 %v3065
    %vm3072 = vweird.f32 %v3066
    %vm3073 = vmor %vm3071, %vm3072
    %v3074 = vsel %vm3073, %v3066, %v3070
    %v3075 = vand.u32 2147483647, %v3065
    %vm3076 = vcmp.eq.f32.partialorder %v3075, 8.507059e+37
    %v3077 = vand.u32 %v3065, 2147483648
    %v3078 = vor.u32 1.1754944e-38, %v3077
    %v3079 = vsel %vm3076, %v3078, %v3074
    %v3080 = vmul.f32 %v3045, %v3079
    %vm3081 = vcmask 0
    %3082 = vst.msk [vmem:[#allocation2] sm:$0x1] %vm3081, %v3080
    // Predicated region
    $region78: #{mae_forward.3} parent=1 // pred_check
      _
    $region79: #{mae_forward.3} parent=1 // pred_check_branch
      %3084 = sbr.rel (0) target = $region81
    $region80: #{mae_forward.3} parent=1 // pred_region
      _
    $region81: #{mae_forward.3} parent=1 // pred_fallthru
      _
    // Predicated region
    $region82: #{mae_forward.3} parent=1 // pred_check
      _
    $region83: #{mae_forward.3} parent=1 // pred_check_branch
      %3086 = sbr.rel (0) target = $region85
    $region84: #{mae_forward.3} parent=1 // pred_region
      %3088 = vsyncadd [#allocation3], 0
      %s3090 = sshll.u32 [#allocation2], 4
      %s3091 = int_to_ptr.vmem [resolvable:$true] %s3090
      %s3092 = sshll.u32 %s20, 4
      %s3093 = int_to_ptr.hbm [resolvable:$true] %s3092
      %3095 = dma.vmem_to_hbm [thread:$0]  %s3091, 16, %s3093, [#allocation3]
    $region85: #{mae_forward.3} parent=1 // pred_fallthru
      _
    // Predicated region
    $region86: #{mae_forward.3} parent=1 // pred_check
      _
    $region87: #{mae_forward.3} parent=1 // pred_check_branch
      %3097 = sbr.rel (0) target = $region89
    $region88: #{mae_forward.3} parent=1 // pred_region
      _
    $region89: #{mae_forward.3} parent=1 // pred_fallthru
      _
    // Predicated region
    $region90: #{mae_forward.3} parent=1 // pred_check
      _
    $region91: #{mae_forward.3} parent=1 // pred_check_branch
      %3099 = sbr.rel (0) target = $region93
    $region92: #{mae_forward.3} parent=1 // pred_region
      %3101 = dma.done [#allocation3], 16
    $region93: #{mae_forward.3} parent=1 // pred_fallthru
      _
    %3102 = vsyncpa [#allocation3], 1

</llo_original>
